<compile_context>
chip_gen: v6e
topology: v6e:2x2x1
jax: 0.10.0
libtpu: 0.0.40
codegen_flags: <defaults>
</compile_context>

<pallas_src>
import jax
import jax.numpy as jnp
from jax.experimental import pallas as pl
from jax.experimental.pallas import tpu as pltpu


# ---------------------------------------------------------------------------
# Fused LeNet kernel
# ---------------------------------------------------------------------------
def _lenet_kernel(lhs1_ref, w1_ref, b1_ref, w2_ref, b2_ref,
                  wf1_ref, bf1_ref, wf2_ref, bf2_ref, wf3_ref, bf3_ref,
                  o_ref, a1_ref, c2_ref, f1_ref):
    f32, bf16 = jnp.float32, jnp.bfloat16
    N = o_ref.shape[0]
    R = a1_ref.shape[0]          # 13 * N * 16  (conv1 rows: i<13, n, j<16)
    D = c2_ref.shape[0]          # 8 * N * 16   (conv2 rows: oh<8, n, ow<16)

    # ---- conv1 (5x5, 1->6) fused with 2x2 max-pool: one MXU matmul ---------
    # lhs1 rows = (phase p*2+q, i, n, j); cols = kh*5+kw (25 real of 32).
    y1 = jnp.dot(lhs1_ref[...], w1_ref[...], preferred_element_type=f32)  # (4R,128)
    y1 = y1.reshape(4, R, 128)
    a1 = jnp.maximum(jnp.maximum(y1[0], y1[1]), jnp.maximum(y1[2], y1[3]))
    # relu(max(.) + b) == max(relu(. + b)): per-channel constant bias.
    a1 = jnp.maximum(a1 + b1_ref[...], 0.0)            # (R, 128) f32
    a1_ref[...] = a1.astype(bf16)                      # rows=(i,n,j), lanes=ch

    # ---- conv2 im2col: 25 contiguous row-shifted slices into VMEM scratch --
    # dest row d = oh*(N*16) + n*16 + ow ; source row = d + kh*(N*16) + kw.
    c2_ref[...] = jnp.zeros(c2_ref.shape, bf16)        # keep padded K cols finite
    for kh in range(5):
        for kw in range(5):
            tap = kh * 5 + kw
            off = kh * (N * 16) + kw
            c2_ref[:, tap * 8:tap * 8 + 8] = a1_ref[off:off + D, 0:8]

    # ---- conv2 (5x5, 6->16): single wide-K MXU matmul -----------------------
    y2 = jnp.dot(c2_ref[...], w2_ref[...], preferred_element_type=f32)    # (D,128)
    y2 = jnp.maximum(y2 + b2_ref[...], 0.0)            # rows=(oh,n,ow), lanes=oc

    # ---- 2x2 max-pool (8x8 -> 4x4): oh-pairs via aligned block max ----------
    y2 = y2.reshape(4, 2, N * 16, 128)                 # (i2, p, n*16+ow, oc)
    ym = jnp.maximum(y2[:, 0], y2[:, 1])               # (4, N*16, 128)

    # ---- fc1 feature (N, 256): ow-pool fused into the 16 channel extracts ---
    # feature column = (i2*4 + j2)*16 + oc   (wf1 repacked to match host-side).
    for i2 in range(4):
        ymi = ym[i2].reshape(N, 16, 128)
        for j2 in range(4):
            v = jnp.maximum(ymi[:, 2 * j2, :], ymi[:, 2 * j2 + 1, :])     # (N,128)
            c0 = (i2 * 4 + j2) * 16
            f1_ref[:, c0:c0 + 16] = v[:, 0:16].astype(bf16)

    # ---- fc1 -> fc2 -> fc3: single MXU dots, f32 accumulation ---------------
    h1 = jnp.dot(f1_ref[...], wf1_ref[...], preferred_element_type=f32)
    h1 = jnp.maximum(h1 + bf1_ref[...], 0.0)
    h2 = jnp.dot(h1.astype(bf16), wf2_ref[...], preferred_element_type=f32)
    h2 = jnp.maximum(h2 + bf2_ref[...], 0.0)
    h3 = jnp.dot(h2.astype(bf16), wf3_ref[...], preferred_element_type=f32)
    o_ref[...] = (h3 + bf3_ref[...]).astype(o_ref.dtype)    # lane-dense (N,128)


# ---------------------------------------------------------------------------
# One-time host-side weight repack (padding / permutation; PyTorch layouts in)
# ---------------------------------------------------------------------------
def _pad_to(x, shape):
    return jnp.pad(x, [(0, t - s) for s, t in zip(x.shape, shape)])


def prepare_params(params):
    bf16 = jnp.bfloat16
    w1, b1 = params["w1"], params["b1"]          # (6,1,5,5), (6,)
    w2, b2 = params["w2"], params["b2"]          # (16,6,5,5), (16,)
    wf1, bf1 = params["wfc1"], params["bfc1"]    # (120,256), (120,)
    wf2, bf2 = params["wfc2"], params["bfc2"]    # (84,120), (84,)
    wf3, bf3 = params["wfc3"], params["bfc3"]    # (10,84), (10,)

    # conv1: rows = kh*5+kw (25->32), cols = out channel (6->128).
    w1p = _pad_to(jnp.transpose(w1[:, 0], (1, 2, 0)).reshape(25, 6),
                  (32, 128)).astype(bf16)
    b1p = _pad_to(b1.reshape(1, 6), (1, 128))

    # conv2: rows = (kh*5+kw)*8 + ic (200->256), cols = oc (16->128).
    w2p = _pad_to(jnp.transpose(w2, (2, 3, 1, 0)), (5, 5, 8, 128)).reshape(200, 128)
    w2p = _pad_to(w2p, (256, 128)).astype(bf16)
    b2p = _pad_to(b2.reshape(1, 16), (1, 128))

    # fc1: torch flatten index oc*16 + i*4 + j  ->  rows (i*4+j)*16 + oc.
    wf1p = jnp.transpose(wf1.reshape(120, 16, 4, 4), (2, 3, 1, 0)).reshape(256, 120)
    wf1p = _pad_to(wf1p, (256, 128)).astype(bf16)
    bf1p = _pad_to(bf1.reshape(1, 120), (1, 128))

    wf2p = _pad_to(wf2.T, (128, 128)).astype(bf16)
    bf2p = _pad_to(bf2.reshape(1, 84), (1, 128))
    wf3p = _pad_to(wf3.T, (128, 128)).astype(bf16)
    bf3p = _pad_to(bf3.reshape(1, 10), (1, 128))

    return (w1p, b1p, w2p, b2p, wf1p, bf1p, wf2p, bf2p, wf3p, bf3p)


# ---------------------------------------------------------------------------
# Forward
# ---------------------------------------------------------------------------
def lenet_forward(prepped, x_nchw):
    N = x_nchw.shape[0]
    x2 = x_nchw.reshape(N, 28, 28).astype(jnp.float32)

    # conv1 im2col, pool-phase major.  Rows = (phase p*2+q, i<13, n, j<16),
    # cols = kh*5+kw (25 -> 32); i=12 and j>=12 rows are zero padding that lets
    # the in-kernel conv2 im2col use plain contiguous row-shifted slices.
    taps = jnp.stack([x2[:, kh:kh + 24, kw:kw + 24]
                      for kh in range(5) for kw in range(5)], axis=-1)   # (N,24,24,25)
    ph = taps.reshape(N, 12, 2, 12, 2, 25)
    ph = jnp.transpose(ph, (2, 4, 1, 0, 3, 5)).reshape(4, 12, N, 12, 25)
    lhs1 = jnp.pad(ph, ((0, 0), (0, 1), (0, 0), (0, 4), (0, 7)))
    lhs1 = lhs1.reshape(4 * 13 * N * 16, 32).astype(jnp.bfloat16)

    R = 13 * N * 16
    D = 8 * N * 16

    def full_spec(shape):
        nd = len(shape)
        return pl.BlockSpec(shape, lambda i, nd=nd: (0,) * nd)

    operands = (lhs1,) + tuple(prepped)
    out = pl.pallas_call(
        _lenet_kernel,
        out_shape=jax.ShapeDtypeStruct((N, 128), jnp.float32),
        grid=(1,),
        in_specs=[full_spec(op.shape) for op in operands],
        out_specs=full_spec((N, 128)),
        scratch_shapes=[
            pltpu.VMEM((R, 128), jnp.bfloat16),     # a1: pooled conv1 activations
            pltpu.VMEM((D, 256), jnp.bfloat16),     # conv2 im2col
            pltpu.VMEM((N, 256), jnp.bfloat16),     # fc1 feature
        ],
        compiler_params=pltpu.CompilerParams(
            dimension_semantics=("arbitrary",)),
    )(*operands)
    return out[:, :10]


# ---------------------------------------------------------------------------
# Pure-JAX reference (mirrors the PyTorch module) + deterministic init
# ---------------------------------------------------------------------------
def lenet_reference(params, x, compute_dtype=jnp.float32):
    cd = compute_dtype
    hp = jax.lax.Precision.HIGHEST
    dn = ("NCHW", "OIHW", "NCHW")
    f32 = jnp.float32

    def conv(inp, w):
        return jax.lax.conv_general_dilated(
            inp.astype(cd), w.astype(cd), (1, 1), "VALID",
            dimension_numbers=dn, precision=hp, preferred_element_type=f32)

    def dense(inp, w):
        return jnp.dot(inp.astype(cd), w.T.astype(cd), preferred_element_type=f32)

    y = conv(x, params["w1"])
    y = jax.nn.relu(y + params["b1"][None, :, None, None])
    y = jax.lax.reduce_window(y, -jnp.inf, jax.lax.max,
                              (1, 1, 2, 2), (1, 1, 2, 2), "VALID")
    y = conv(y, params["w2"])
    y = jax.nn.relu(y + params["b2"][None, :, None, None])
    y = jax.lax.reduce_window(y, -jnp.inf, jax.lax.max,
                              (1, 1, 2, 2), (1, 1, 2, 2), "VALID")
    y = y.reshape(y.shape[0], -1)                      # NCHW flatten order
    y = jax.nn.relu(dense(y, params["wfc1"]) + params["bfc1"])
    y = jax.nn.relu(dense(y, params["wfc2"]) + params["bfc2"])
    return dense(y, params["wfc3"]) + params["bfc3"]


def init_params(key):
    def uni(k, shape, fan_in):
        bound = 1.0 / float(fan_in) ** 0.5
        return jax.random.uniform(k, shape, jnp.float32, -bound, bound)

    ks = jax.random.split(key, 10)
    return {
        "w1": uni(ks[0], (6, 1, 5, 5), 25),
        "b1": uni(ks[1], (6,), 25),
        "w2": uni(ks[2], (16, 6, 5, 5), 150),
        "b2": uni(ks[3], (16,), 150),
        "wfc1": uni(ks[4], (120, 256), 256),   # PyTorch Linear: (out, in)
        "bfc1": uni(ks[5], (120,), 256),
        "wfc2": uni(ks[6], (84, 120), 120),
        "bfc2": uni(ks[7], (84,), 120),
        "wfc3": uni(ks[8], (10, 84), 84),
        "bfc3": uni(ks[9], (10,), 84),
    }


if __name__ == "__main__":
    key = jax.random.PRNGKey(0)
    pkey, xkey = jax.random.split(key)
    params = init_params(pkey)
    prepped = prepare_params(params)                 # one-time repack
    # LeNet's fc1 (16*4*4) hard-codes 1x28x28 (MNIST) inputs.
    x = jax.random.normal(xkey, (2, 1, 28, 28), dtype=jnp.float32)

    fwd = jax.jit(lenet_forward)
    out = jax.block_until_ready(fwd(prepped, x))
    assert out.shape == (2, 10), out.shape
    assert out.dtype == jnp.float32

    # Check against a full-f32 reference (loose) and a bf16-matmul-matched
    # reference (tight), per the review's tolerance concern.
    ref32 = lenet_reference(params, x, jnp.float32)
    refbf = lenet_reference(params, x, jnp.bfloat16)
    err32 = float(jnp.max(jnp.abs(out - ref32)))
    errbf = float(jnp.max(jnp.abs(out - refbf)))
    assert err32 < 5e-2, f"max abs error vs f32 reference: {err32}"
    assert errbf < 2e-2, f"max abs error vs bf16-matched reference: {errbf}"

    print("KERNEL_OK")
</pallas_src>

<mosaic_0001>
module attributes {stable_mosaic.version = 11 : i64} {
  func.func @_lenet_kernel(%arg0: i32, %arg1: memref<1664x32xbf16, #tpu.memory_space<vmem>>, %arg2: memref<32x128xbf16, #tpu.memory_space<vmem>>, %arg3: memref<1x128xf32, #tpu.memory_space<vmem>>, %arg4: memref<256x128xbf16, #tpu.memory_space<vmem>>, %arg5: memref<1x128xf32, #tpu.memory_space<vmem>>, %arg6: memref<256x128xbf16, #tpu.memory_space<vmem>>, %arg7: memref<1x128xf32, #tpu.memory_space<vmem>>, %arg8: memref<128x128xbf16, #tpu.memory_space<vmem>>, %arg9: memref<1x128xf32, #tpu.memory_space<vmem>>, %arg10: memref<128x128xbf16, #tpu.memory_space<vmem>>, %arg11: memref<1x128xf32, #tpu.memory_space<vmem>>, %arg12: memref<2x128xf32, #tpu.memory_space<vmem>>, %arg13: memref<416x128xbf16, #tpu.memory_space<vmem>>, %arg14: memref<256x256xbf16, #tpu.memory_space<vmem>>, %arg15: memref<2x256xbf16, #tpu.memory_space<vmem>>) attributes {dimension_semantics = [#tpu.dimension_semantics<arbitrary>], iteration_bounds = array<i64: 1>, scalar_prefetch = 0 : i64, scratch_operands = 3 : i64, tpu.core_type = #tpu.core_type<tc>, window_params = [{pipeline_mode = #tpu.pipeline_mode<synchronous>, transform_indices = @transform_0, window_bounds = array<i64: 1664, 32>}, {pipeline_mode = #tpu.pipeline_mode<synchronous>, transform_indices = @transform_1, window_bounds = array<i64: 32, 128>}, {pipeline_mode = #tpu.pipeline_mode<synchronous>, transform_indices = @transform_2, window_bounds = array<i64: 1, 128>}, {pipeline_mode = #tpu.pipeline_mode<synchronous>, transform_indices = @transform_3, window_bounds = array<i64: 256, 128>}, {pipeline_mode = #tpu.pipeline_mode<synchronous>, transform_indices = @transform_4, window_bounds = array<i64: 1, 128>}, {pipeline_mode = #tpu.pipeline_mode<synchronous>, transform_indices = @transform_5, window_bounds = array<i64: 256, 128>}, {pipeline_mode = #tpu.pipeline_mode<synchronous>, transform_indices = @transform_6, window_bounds = array<i64: 1, 128>}, {pipeline_mode = #tpu.pipeline_mode<synchronous>, transform_indices = @transform_7, window_bounds = array<i64: 128, 128>}, {pipeline_mode = #tpu.pipeline_mode<synchronous>, transform_indices = @transform_8, window_bounds = array<i64: 1, 128>}, {pipeline_mode = #tpu.pipeline_mode<synchronous>, transform_indices = @transform_9, window_bounds = array<i64: 128, 128>}, {pipeline_mode = #tpu.pipeline_mode<synchronous>, transform_indices = @transform_10, window_bounds = array<i64: 1, 128>}, {pipeline_mode = #tpu.pipeline_mode<synchronous>, transform_indices = @transform_11, window_bounds = array<i64: 2, 128>}]} {
    %c0 = arith.constant 0 : index
    %c0_0 = arith.constant 0 : index
    %0 = vector.load %arg1[%c0, %c0_0] : memref<1664x32xbf16, #tpu.memory_space<vmem>>, vector<1664x32xbf16>
    %c0_1 = arith.constant 0 : index
    %c0_2 = arith.constant 0 : index
    %1 = vector.load %arg2[%c0_1, %c0_2] : memref<32x128xbf16, #tpu.memory_space<vmem>>, vector<32x128xbf16>
    %cst = arith.constant dense<0.000000e+00> : vector<1664x128xf32>
    %2 = tpu.matmul %0, %1, %cst {dimension_numbers = #tpu.dot_dimension_numbers<[1], [0], [0], [1], [0, 0, 1, 1], [], []>} : vector<1664x32xbf16>, vector<32x128xbf16>, vector<1664x128xf32> -> vector<1664x128xf32>
    %3 = vector.shape_cast %2 : vector<1664x128xf32> to vector<4x416x128xf32>
    %4 = vector.extract_strided_slice %3 {offsets = [0, 0, 0], sizes = [1, 416, 128], strides = [1, 1, 1]} : vector<4x416x128xf32> to vector<1x416x128xf32>
    %5 = vector.shape_cast %4 : vector<1x416x128xf32> to vector<416x128xf32>
    %6 = vector.extract_strided_slice %3 {offsets = [1, 0, 0], sizes = [1, 416, 128], strides = [1, 1, 1]} : vector<4x416x128xf32> to vector<1x416x128xf32>
    %7 = vector.shape_cast %6 : vector<1x416x128xf32> to vector<416x128xf32>
    %8 = arith.maximumf %5, %7 : vector<416x128xf32>
    %9 = vector.extract_strided_slice %3 {offsets = [2, 0, 0], sizes = [1, 416, 128], strides = [1, 1, 1]} : vector<4x416x128xf32> to vector<1x416x128xf32>
    %10 = vector.shape_cast %9 : vector<1x416x128xf32> to vector<416x128xf32>
    %11 = vector.extract_strided_slice %3 {offsets = [3, 0, 0], sizes = [1, 416, 128], strides = [1, 1, 1]} : vector<4x416x128xf32> to vector<1x416x128xf32>
    %12 = vector.shape_cast %11 : vector<1x416x128xf32> to vector<416x128xf32>
    %13 = arith.maximumf %10, %12 : vector<416x128xf32>
    %14 = arith.maximumf %8, %13 : vector<416x128xf32>
    %c0_3 = arith.constant 0 : index
    %c0_4 = arith.constant 0 : index
    %15 = vector.load %arg3[%c0_3, %c0_4] : memref<1x128xf32, #tpu.memory_space<vmem>>, vector<1x128xf32>
    %16 = vector.broadcast %15 : vector<1x128xf32> to vector<416x128xf32>
    %17 = arith.addf %14, %16 : vector<416x128xf32>
    %cst_5 = arith.constant 0.000000e+00 : f32
    %18 = vector.broadcast %cst_5 : f32 to vector<416x128xf32>
    %19 = arith.maximumf %17, %18 : vector<416x128xf32>
    %20 = arith.truncf %19 : vector<416x128xf32> to vector<416x128xbf16>
    %c0_6 = arith.constant 0 : index
    %c0_7 = arith.constant 0 : index
    %21 = vector.load %arg13[%c0_6, %c0_7] : memref<416x128xbf16, #tpu.memory_space<vmem>>, vector<416x128xbf16>
    tpu.vector_store %arg13[%c0_6, %c0_7], %20 {strides = array<i32>} : memref<416x128xbf16, #tpu.memory_space<vmem>>, vector<416x128xbf16>,
    %cst_8 = arith.constant 0.000000e+00 : bf16
    %22 = vector.broadcast %cst_8 : bf16 to vector<256x256xbf16>
    %c0_9 = arith.constant 0 : index
    %c0_10 = arith.constant 0 : index
    %23 = vector.load %arg14[%c0_9, %c0_10] : memref<256x256xbf16, #tpu.memory_space<vmem>>, vector<256x256xbf16>
    tpu.vector_store %arg14[%c0_9, %c0_10], %22 {strides = array<i32>} : memref<256x256xbf16, #tpu.memory_space<vmem>>, vector<256x256xbf16>,
    %c0_11 = arith.constant 0 : index
    %c0_12 = arith.constant 0 : index
    %24 = vector.load %arg13[%c0_11, %c0_12] : memref<416x128xbf16, #tpu.memory_space<vmem>>, vector<256x8xbf16>
    %c0_13 = arith.constant 0 : index
    %c0_14 = arith.constant 0 : index
    %25 = vector.load %arg14[%c0_13, %c0_14] : memref<256x256xbf16, #tpu.memory_space<vmem>>, vector<256x8xbf16>
    tpu.vector_store %arg14[%c0_13, %c0_14], %24 {strides = array<i32>} : memref<256x256xbf16, #tpu.memory_space<vmem>>, vector<256x8xbf16>,
    %c1 = arith.constant 1 : index
    %c0_15 = arith.constant 0 : index
    %26 = vector.load %arg13[%c1, %c0_15] : memref<416x128xbf16, #tpu.memory_space<vmem>>, vector<256x8xbf16>
    %c0_16 = arith.constant 0 : index
    %c8 = arith.constant 8 : index
    %27 = vector.load %arg14[%c0_16, %c8] : memref<256x256xbf16, #tpu.memory_space<vmem>>, vector<256x8xbf16>
    tpu.vector_store %arg14[%c0_16, %c8], %26 {strides = array<i32>} : memref<256x256xbf16, #tpu.memory_space<vmem>>, vector<256x8xbf16>,
    %c2 = arith.constant 2 : index
    %c0_17 = arith.constant 0 : index
    %28 = vector.load %arg13[%c2, %c0_17] : memref<416x128xbf16, #tpu.memory_space<vmem>>, vector<256x8xbf16>
    %c0_18 = arith.constant 0 : index
    %c16 = arith.constant 16 : index
    %29 = vector.load %arg14[%c0_18, %c16] : memref<256x256xbf16, #tpu.memory_space<vmem>>, vector<256x8xbf16>
    tpu.vector_store %arg14[%c0_18, %c16], %28 {strides = array<i32>} : memref<256x256xbf16, #tpu.memory_space<vmem>>, vector<256x8xbf16>,
    %c3 = arith.constant 3 : index
    %c0_19 = arith.constant 0 : index
    %30 = vector.load %arg13[%c3, %c0_19] : memref<416x128xbf16, #tpu.memory_space<vmem>>, vector<256x8xbf16>
    %c0_20 = arith.constant 0 : index
    %c24 = arith.constant 24 : index
    %31 = vector.load %arg14[%c0_20, %c24] : memref<256x256xbf16, #tpu.memory_space<vmem>>, vector<256x8xbf16>
    tpu.vector_store %arg14[%c0_20, %c24], %30 {strides = array<i32>} : memref<256x256xbf16, #tpu.memory_space<vmem>>, vector<256x8xbf16>,
    %c4 = arith.constant 4 : index
    %c0_21 = arith.constant 0 : index
    %32 = vector.load %arg13[%c4, %c0_21] : memref<416x128xbf16, #tpu.memory_space<vmem>>, vector<256x8xbf16>
    %c0_22 = arith.constant 0 : index
    %c32 = arith.constant 32 : index
    %33 = vector.load %arg14[%c0_22, %c32] : memref<256x256xbf16, #tpu.memory_space<vmem>>, vector<256x8xbf16>
    tpu.vector_store %arg14[%c0_22, %c32], %32 {strides = array<i32>} : memref<256x256xbf16, #tpu.memory_space<vmem>>, vector<256x8xbf16>,
    %c32_23 = arith.constant 32 : index
    %c0_24 = arith.constant 0 : index
    %34 = vector.load %arg13[%c32_23, %c0_24] : memref<416x128xbf16, #tpu.memory_space<vmem>>, vector<256x8xbf16>
    %c0_25 = arith.constant 0 : index
    %c40 = arith.constant 40 : index
    %35 = vector.load %arg14[%c0_25, %c40] : memref<256x256xbf16, #tpu.memory_space<vmem>>, vector<256x8xbf16>
    tpu.vector_store %arg14[%c0_25, %c40], %34 {strides = array<i32>} : memref<256x256xbf16, #tpu.memory_space<vmem>>, vector<256x8xbf16>,
    %c33 = arith.constant 33 : index
    %c0_26 = arith.constant 0 : index
    %36 = vector.load %arg13[%c33, %c0_26] : memref<416x128xbf16, #tpu.memory_space<vmem>>, vector<256x8xbf16>
    %c0_27 = arith.constant 0 : index
    %c48 = arith.constant 48 : index
    %37 = vector.load %arg14[%c0_27, %c48] : memref<256x256xbf16, #tpu.memory_space<vmem>>, vector<256x8xbf16>
    tpu.vector_store %arg14[%c0_27, %c48], %36 {strides = array<i32>} : memref<256x256xbf16, #tpu.memory_space<vmem>>, vector<256x8xbf16>,
    %c34 = arith.constant 34 : index
    %c0_28 = arith.constant 0 : index
    %38 = vector.load %arg13[%c34, %c0_28] : memref<416x128xbf16, #tpu.memory_space<vmem>>, vector<256x8xbf16>
    %c0_29 = arith.constant 0 : index
    %c56 = arith.constant 56 : index
    %39 = vector.load %arg14[%c0_29, %c56] : memref<256x256xbf16, #tpu.memory_space<vmem>>, vector<256x8xbf16>
    tpu.vector_store %arg14[%c0_29, %c56], %38 {strides = array<i32>} : memref<256x256xbf16, #tpu.memory_space<vmem>>, vector<256x8xbf16>,
    %c35 = arith.constant 35 : index
    %c0_30 = arith.constant 0 : index
    %40 = vector.load %arg13[%c35, %c0_30] : memref<416x128xbf16, #tpu.memory_space<vmem>>, vector<256x8xbf16>
    %c0_31 = arith.constant 0 : index
    %c64 = arith.constant 64 : index
    %41 = vector.load %arg14[%c0_31, %c64] : memref<256x256xbf16, #tpu.memory_space<vmem>>, vector<256x8xbf16>
    tpu.vector_store %arg14[%c0_31, %c64], %40 {strides = array<i32>} : memref<256x256xbf16, #tpu.memory_space<vmem>>, vector<256x8xbf16>,
    %c36 = arith.constant 36 : index
    %c0_32 = arith.constant 0 : index
    %42 = vector.load %arg13[%c36, %c0_32] : memref<416x128xbf16, #tpu.memory_space<vmem>>, vector<256x8xbf16>
    %c0_33 = arith.constant 0 : index
    %c72 = arith.constant 72 : index
    %43 = vector.load %arg14[%c0_33, %c72] : memref<256x256xbf16, #tpu.memory_space<vmem>>, vector<256x8xbf16>
    tpu.vector_store %arg14[%c0_33, %c72], %42 {strides = array<i32>} : memref<256x256xbf16, #tpu.memory_space<vmem>>, vector<256x8xbf16>,
    %c64_34 = arith.constant 64 : index
    %c0_35 = arith.constant 0 : index
    %44 = vector.load %arg13[%c64_34, %c0_35] : memref<416x128xbf16, #tpu.memory_space<vmem>>, vector<256x8xbf16>
    %c0_36 = arith.constant 0 : index
    %c80 = arith.constant 80 : index
    %45 = vector.load %arg14[%c0_36, %c80] : memref<256x256xbf16, #tpu.memory_space<vmem>>, vector<256x8xbf16>
    tpu.vector_store %arg14[%c0_36, %c80], %44 {strides = array<i32>} : memref<256x256xbf16, #tpu.memory_space<vmem>>, vector<256x8xbf16>,
    %c65 = arith.constant 65 : index
    %c0_37 = arith.constant 0 : index
    %46 = vector.load %arg13[%c65, %c0_37] : memref<416x128xbf16, #tpu.memory_space<vmem>>, vector<256x8xbf16>
    %c0_38 = arith.constant 0 : index
    %c88 = arith.constant 88 : index
    %47 = vector.load %arg14[%c0_38, %c88] : memref<256x256xbf16, #tpu.memory_space<vmem>>, vector<256x8xbf16>
    tpu.vector_store %arg14[%c0_38, %c88], %46 {strides = array<i32>} : memref<256x256xbf16, #tpu.memory_space<vmem>>, vector<256x8xbf16>,
    %c66 = arith.constant 66 : index
    %c0_39 = arith.constant 0 : index
    %48 = vector.load %arg13[%c66, %c0_39] : memref<416x128xbf16, #tpu.memory_space<vmem>>, vector<256x8xbf16>
    %c0_40 = arith.constant 0 : index
    %c96 = arith.constant 96 : index
    %49 = vector.load %arg14[%c0_40, %c96] : memref<256x256xbf16, #tpu.memory_space<vmem>>, vector<256x8xbf16>
    tpu.vector_store %arg14[%c0_40, %c96], %48 {strides = array<i32>} : memref<256x256xbf16, #tpu.memory_space<vmem>>, vector<256x8xbf16>,
    %c67 = arith.constant 67 : index
    %c0_41 = arith.constant 0 : index
    %50 = vector.load %arg13[%c67, %c0_41] : memref<416x128xbf16, #tpu.memory_space<vmem>>, vector<256x8xbf16>
    %c0_42 = arith.constant 0 : index
    %c104 = arith.constant 104 : index
    %51 = vector.load %arg14[%c0_42, %c104] : memref<256x256xbf16, #tpu.memory_space<vmem>>, vector<256x8xbf16>
    tpu.vector_store %arg14[%c0_42, %c104], %50 {strides = array<i32>} : memref<256x256xbf16, #tpu.memory_space<vmem>>, vector<256x8xbf16>,
    %c68 = arith.constant 68 : index
    %c0_43 = arith.constant 0 : index
    %52 = vector.load %arg13[%c68, %c0_43] : memref<416x128xbf16, #tpu.memory_space<vmem>>, vector<256x8xbf16>
    %c0_44 = arith.constant 0 : index
    %c112 = arith.constant 112 : index
    %53 = vector.load %arg14[%c0_44, %c112] : memref<256x256xbf16, #tpu.memory_space<vmem>>, vector<256x8xbf16>
    tpu.vector_store %arg14[%c0_44, %c112], %52 {strides = array<i32>} : memref<256x256xbf16, #tpu.memory_space<vmem>>, vector<256x8xbf16>,
    %c96_45 = arith.constant 96 : index
    %c0_46 = arith.constant 0 : index
    %54 = vector.load %arg13[%c96_45, %c0_46] : memref<416x128xbf16, #tpu.memory_space<vmem>>, vector<256x8xbf16>
    %c0_47 = arith.constant 0 : index
    %c120 = arith.constant 120 : index
    %55 = vector.load %arg14[%c0_47, %c120] : memref<256x256xbf16, #tpu.memory_space<vmem>>, vector<256x8xbf16>
    tpu.vector_store %arg14[%c0_47, %c120], %54 {strides = array<i32>} : memref<256x256xbf16, #tpu.memory_space<vmem>>, vector<256x8xbf16>,
    %c97 = arith.constant 97 : index
    %c0_48 = arith.constant 0 : index
    %56 = vector.load %arg13[%c97, %c0_48] : memref<416x128xbf16, #tpu.memory_space<vmem>>, vector<256x8xbf16>
    %c0_49 = arith.constant 0 : index
    %c128 = arith.constant 128 : index
    %57 = vector.load %arg14[%c0_49, %c128] : memref<256x256xbf16, #tpu.memory_space<vmem>>, vector<256x8xbf16>
    tpu.vector_store %arg14[%c0_49, %c128], %56 {strides = array<i32>} : memref<256x256xbf16, #tpu.memory_space<vmem>>, vector<256x8xbf16>,
    %c98 = arith.constant 98 : index
    %c0_50 = arith.constant 0 : index
    %58 = vector.load %arg13[%c98, %c0_50] : memref<416x128xbf16, #tpu.memory_space<vmem>>, vector<256x8xbf16>
    %c0_51 = arith.constant 0 : index
    %c136 = arith.constant 136 : index
    %59 = vector.load %arg14[%c0_51, %c136] : memref<256x256xbf16, #tpu.memory_space<vmem>>, vector<256x8xbf16>
    tpu.vector_store %arg14[%c0_51, %c136], %58 {strides = array<i32>} : memref<256x256xbf16, #tpu.memory_space<vmem>>, vector<256x8xbf16>,
    %c99 = arith.constant 99 : index
    %c0_52 = arith.constant 0 : index
    %60 = vector.load %arg13[%c99, %c0_52] : memref<416x128xbf16, #tpu.memory_space<vmem>>, vector<256x8xbf16>
    %c0_53 = arith.constant 0 : index
    %c144 = arith.constant 144 : index
    %61 = vector.load %arg14[%c0_53, %c144] : memref<256x256xbf16, #tpu.memory_space<vmem>>, vector<256x8xbf16>
    tpu.vector_store %arg14[%c0_53, %c144], %60 {strides = array<i32>} : memref<256x256xbf16, #tpu.memory_space<vmem>>, vector<256x8xbf16>,
    %c100 = arith.constant 100 : index
    %c0_54 = arith.constant 0 : index
    %62 = vector.load %arg13[%c100, %c0_54] : memref<416x128xbf16, #tpu.memory_space<vmem>>, vector<256x8xbf16>
    %c0_55 = arith.constant 0 : index
    %c152 = arith.constant 152 : index
    %63 = vector.load %arg14[%c0_55, %c152] : memref<256x256xbf16, #tpu.memory_space<vmem>>, vector<256x8xbf16>
    tpu.vector_store %arg14[%c0_55, %c152], %62 {strides = array<i32>} : memref<256x256xbf16, #tpu.memory_space<vmem>>, vector<256x8xbf16>,
    %c128_56 = arith.constant 128 : index
    %c0_57 = arith.constant 0 : index
    %64 = vector.load %arg13[%c128_56, %c0_57] : memref<416x128xbf16, #tpu.memory_space<vmem>>, vector<256x8xbf16>
    %c0_58 = arith.constant 0 : index
    %c160 = arith.constant 160 : index
    %65 = vector.load %arg14[%c0_58, %c160] : memref<256x256xbf16, #tpu.memory_space<vmem>>, vector<256x8xbf16>
    tpu.vector_store %arg14[%c0_58, %c160], %64 {strides = array<i32>} : memref<256x256xbf16, #tpu.memory_space<vmem>>, vector<256x8xbf16>,
    %c129 = arith.constant 129 : index
    %c0_59 = arith.constant 0 : index
    %66 = vector.load %arg13[%c129, %c0_59] : memref<416x128xbf16, #tpu.memory_space<vmem>>, vector<256x8xbf16>
    %c0_60 = arith.constant 0 : index
    %c168 = arith.constant 168 : index
    %67 = vector.load %arg14[%c0_60, %c168] : memref<256x256xbf16, #tpu.memory_space<vmem>>, vector<256x8xbf16>
    tpu.vector_store %arg14[%c0_60, %c168], %66 {strides = array<i32>} : memref<256x256xbf16, #tpu.memory_space<vmem>>, vector<256x8xbf16>,
    %c130 = arith.constant 130 : index
    %c0_61 = arith.constant 0 : index
    %68 = vector.load %arg13[%c130, %c0_61] : memref<416x128xbf16, #tpu.memory_space<vmem>>, vector<256x8xbf16>
    %c0_62 = arith.constant 0 : index
    %c176 = arith.constant 176 : index
    %69 = vector.load %arg14[%c0_62, %c176] : memref<256x256xbf16, #tpu.memory_space<vmem>>, vector<256x8xbf16>
    tpu.vector_store %arg14[%c0_62, %c176], %68 {strides = array<i32>} : memref<256x256xbf16, #tpu.memory_space<vmem>>, vector<256x8xbf16>,
    %c131 = arith.constant 131 : index
    %c0_63 = arith.constant 0 : index
    %70 = vector.load %arg13[%c131, %c0_63] : memref<416x128xbf16, #tpu.memory_space<vmem>>, vector<256x8xbf16>
    %c0_64 = arith.constant 0 : index
    %c184 = arith.constant 184 : index
    %71 = vector.load %arg14[%c0_64, %c184] : memref<256x256xbf16, #tpu.memory_space<vmem>>, vector<256x8xbf16>
    tpu.vector_store %arg14[%c0_64, %c184], %70 {strides = array<i32>} : memref<256x256xbf16, #tpu.memory_space<vmem>>, vector<256x8xbf16>,
    %c132 = arith.constant 132 : index
    %c0_65 = arith.constant 0 : index
    %72 = vector.load %arg13[%c132, %c0_65] : memref<416x128xbf16, #tpu.memory_space<vmem>>, vector<256x8xbf16>
    %c0_66 = arith.constant 0 : index
    %c192 = arith.constant 192 : index
    %73 = vector.load %arg14[%c0_66, %c192] : memref<256x256xbf16, #tpu.memory_space<vmem>>, vector<256x8xbf16>
    tpu.vector_store %arg14[%c0_66, %c192], %72 {strides = array<i32>} : memref<256x256xbf16, #tpu.memory_space<vmem>>, vector<256x8xbf16>,
    %c0_67 = arith.constant 0 : index
    %c0_68 = arith.constant 0 : index
    %74 = vector.load %arg14[%c0_67, %c0_68] : memref<256x256xbf16, #tpu.memory_space<vmem>>, vector<256x256xbf16>
    %c0_69 = arith.constant 0 : index
    %c0_70 = arith.constant 0 : index
    %75 = vector.load %arg4[%c0_69, %c0_70] : memref<256x128xbf16, #tpu.memory_space<vmem>>, vector<256x128xbf16>
    %cst_71 = arith.constant dense<0.000000e+00> : vector<256x128xf32>
    %76 = tpu.matmul %74, %75, %cst_71 {dimension_numbers = #tpu.dot_dimension_numbers<[1], [0], [0], [1], [0, 0, 1, 1], [], []>} : vector<256x256xbf16>, vector<256x128xbf16>, vector<256x128xf32> -> vector<256x128xf32>
    %c0_72 = arith.constant 0 : index
    %c0_73 = arith.constant 0 : index
    %77 = vector.load %arg5[%c0_72, %c0_73] : memref<1x128xf32, #tpu.memory_space<vmem>>, vector<1x128xf32>
    %78 = vector.broadcast %77 : vector<1x128xf32> to vector<256x128xf32>
    %79 = arith.addf %76, %78 : vector<256x128xf32>
    %cst_74 = arith.constant 0.000000e+00 : f32
    %80 = vector.broadcast %cst_74 : f32 to vector<256x128xf32>
    %81 = arith.maximumf %79, %80 : vector<256x128xf32>
    %82 = vector.shape_cast %81 : vector<256x128xf32> to vector<4x2x32x128xf32>
    %83 = vector.extract_strided_slice %82 {offsets = [0, 0, 0, 0], sizes = [4, 1, 32, 128], strides = [1, 1, 1, 1]} : vector<4x2x32x128xf32> to vector<4x1x32x128xf32>
    %84 = vector.shape_cast %83 : vector<4x1x32x128xf32> to vector<4x32x128xf32>
    %85 = vector.extract_strided_slice %82 {offsets = [0, 1, 0, 0], sizes = [4, 1, 32, 128], strides = [1, 1, 1, 1]} : vector<4x2x32x128xf32> to vector<4x1x32x128xf32>
    %86 = vector.shape_cast %85 : vector<4x1x32x128xf32> to vector<4x32x128xf32>
    %87 = arith.maximumf %84, %86 : vector<4x32x128xf32>
    %88 = vector.extract_strided_slice %87 {offsets = [0, 0, 0], sizes = [1, 32, 128], strides = [1, 1, 1]} : vector<4x32x128xf32> to vector<1x32x128xf32>
    %89 = vector.shape_cast %88 : vector<1x32x128xf32> to vector<32x128xf32>
    %90 = vector.shape_cast %89 : vector<32x128xf32> to vector<2x16x128xf32>
    %91 = vector.extract_strided_slice %90 {offsets = [0, 0, 0], sizes = [2, 1, 128], strides = [1, 1, 1]} : vector<2x16x128xf32> to vector<2x1x128xf32>
    %92 = vector.shape_cast %91 : vector<2x1x128xf32> to vector<2x128xf32>
    %93 = vector.extract_strided_slice %90 {offsets = [0, 1, 0], sizes = [2, 1, 128], strides = [1, 1, 1]} : vector<2x16x128xf32> to vector<2x1x128xf32>
    %94 = vector.shape_cast %93 : vector<2x1x128xf32> to vector<2x128xf32>
    %95 = arith.maximumf %92, %94 : vector<2x128xf32>
    %96 = vector.extract_strided_slice %95 {offsets = [0, 0], sizes = [2, 16], strides = [1, 1]} : vector<2x128xf32> to vector<2x16xf32>
    %97 = arith.truncf %96 : vector<2x16xf32> to vector<2x16xbf16>
    %c0_75 = arith.constant 0 : index
    %c0_76 = arith.constant 0 : index
    %98 = vector.load %arg15[%c0_75, %c0_76] : memref<2x256xbf16, #tpu.memory_space<vmem>>, vector<2x16xbf16>
    tpu.vector_store %arg15[%c0_75, %c0_76], %97 {strides = array<i32>} : memref<2x256xbf16, #tpu.memory_space<vmem>>, vector<2x16xbf16>,
    %99 = vector.extract_strided_slice %90 {offsets = [0, 2, 0], sizes = [2, 1, 128], strides = [1, 1, 1]} : vector<2x16x128xf32> to vector<2x1x128xf32>
    %100 = vector.shape_cast %99 : vector<2x1x128xf32> to vector<2x128xf32>
    %101 = vector.extract_strided_slice %90 {offsets = [0, 3, 0], sizes = [2, 1, 128], strides = [1, 1, 1]} : vector<2x16x128xf32> to vector<2x1x128xf32>
    %102 = vector.shape_cast %101 : vector<2x1x128xf32> to vector<2x128xf32>
    %103 = arith.maximumf %100, %102 : vector<2x128xf32>
    %104 = vector.extract_strided_slice %103 {offsets = [0, 0], sizes = [2, 16], strides = [1, 1]} : vector<2x128xf32> to vector<2x16xf32>
    %105 = arith.truncf %104 : vector<2x16xf32> to vector<2x16xbf16>
    %c0_77 = arith.constant 0 : index
    %c16_78 = arith.constant 16 : index
    %106 = vector.load %arg15[%c0_77, %c16_78] : memref<2x256xbf16, #tpu.memory_space<vmem>>, vector<2x16xbf16>
    tpu.vector_store %arg15[%c0_77, %c16_78], %105 {strides = array<i32>} : memref<2x256xbf16, #tpu.memory_space<vmem>>, vector<2x16xbf16>,
    %107 = vector.extract_strided_slice %90 {offsets = [0, 4, 0], sizes = [2, 1, 128], strides = [1, 1, 1]} : vector<2x16x128xf32> to vector<2x1x128xf32>
    %108 = vector.shape_cast %107 : vector<2x1x128xf32> to vector<2x128xf32>
    %109 = vector.extract_strided_slice %90 {offsets = [0, 5, 0], sizes = [2, 1, 128], strides = [1, 1, 1]} : vector<2x16x128xf32> to vector<2x1x128xf32>
    %110 = vector.shape_cast %109 : vector<2x1x128xf32> to vector<2x128xf32>
    %111 = arith.maximumf %108, %110 : vector<2x128xf32>
    %112 = vector.extract_strided_slice %111 {offsets = [0, 0], sizes = [2, 16], strides = [1, 1]} : vector<2x128xf32> to vector<2x16xf32>
    %113 = arith.truncf %112 : vector<2x16xf32> to vector<2x16xbf16>
    %c0_79 = arith.constant 0 : index
    %c32_80 = arith.constant 32 : index
    %114 = vector.load %arg15[%c0_79, %c32_80] : memref<2x256xbf16, #tpu.memory_space<vmem>>, vector<2x16xbf16>
    tpu.vector_store %arg15[%c0_79, %c32_80], %113 {strides = array<i32>} : memref<2x256xbf16, #tpu.memory_space<vmem>>, vector<2x16xbf16>,
    %115 = vector.extract_strided_slice %90 {offsets = [0, 6, 0], sizes = [2, 1, 128], strides = [1, 1, 1]} : vector<2x16x128xf32> to vector<2x1x128xf32>
    %116 = vector.shape_cast %115 : vector<2x1x128xf32> to vector<2x128xf32>
    %117 = vector.extract_strided_slice %90 {offsets = [0, 7, 0], sizes = [2, 1, 128], strides = [1, 1, 1]} : vector<2x16x128xf32> to vector<2x1x128xf32>
    %118 = vector.shape_cast %117 : vector<2x1x128xf32> to vector<2x128xf32>
    %119 = arith.maximumf %116, %118 : vector<2x128xf32>
    %120 = vector.extract_strided_slice %119 {offsets = [0, 0], sizes = [2, 16], strides = [1, 1]} : vector<2x128xf32> to vector<2x16xf32>
    %121 = arith.truncf %120 : vector<2x16xf32> to vector<2x16xbf16>
    %c0_81 = arith.constant 0 : index
    %c48_82 = arith.constant 48 : index
    %122 = vector.load %arg15[%c0_81, %c48_82] : memref<2x256xbf16, #tpu.memory_space<vmem>>, vector<2x16xbf16>
    tpu.vector_store %arg15[%c0_81, %c48_82], %121 {strides = array<i32>} : memref<2x256xbf16, #tpu.memory_space<vmem>>, vector<2x16xbf16>,
    %123 = vector.extract_strided_slice %87 {offsets = [1, 0, 0], sizes = [1, 32, 128], strides = [1, 1, 1]} : vector<4x32x128xf32> to vector<1x32x128xf32>
    %124 = vector.shape_cast %123 : vector<1x32x128xf32> to vector<32x128xf32>
    %125 = vector.shape_cast %124 : vector<32x128xf32> to vector<2x16x128xf32>
    %126 = vector.extract_strided_slice %125 {offsets = [0, 0, 0], sizes = [2, 1, 128], strides = [1, 1, 1]} : vector<2x16x128xf32> to vector<2x1x128xf32>
    %127 = vector.shape_cast %126 : vector<2x1x128xf32> to vector<2x128xf32>
    %128 = vector.extract_strided_slice %125 {offsets = [0, 1, 0], sizes = [2, 1, 128], strides = [1, 1, 1]} : vector<2x16x128xf32> to vector<2x1x128xf32>
    %129 = vector.shape_cast %128 : vector<2x1x128xf32> to vector<2x128xf32>
    %130 = arith.maximumf %127, %129 : vector<2x128xf32>
    %131 = vector.extract_strided_slice %130 {offsets = [0, 0], sizes = [2, 16], strides = [1, 1]} : vector<2x128xf32> to vector<2x16xf32>
    %132 = arith.truncf %131 : vector<2x16xf32> to vector<2x16xbf16>
    %c0_83 = arith.constant 0 : index
    %c64_84 = arith.constant 64 : index
    %133 = vector.load %arg15[%c0_83, %c64_84] : memref<2x256xbf16, #tpu.memory_space<vmem>>, vector<2x16xbf16>
    tpu.vector_store %arg15[%c0_83, %c64_84], %132 {strides = array<i32>} : memref<2x256xbf16, #tpu.memory_space<vmem>>, vector<2x16xbf16>,
    %134 = vector.extract_strided_slice %125 {offsets = [0, 2, 0], sizes = [2, 1, 128], strides = [1, 1, 1]} : vector<2x16x128xf32> to vector<2x1x128xf32>
    %135 = vector.shape_cast %134 : vector<2x1x128xf32> to vector<2x128xf32>
    %136 = vector.extract_strided_slice %125 {offsets = [0, 3, 0], sizes = [2, 1, 128], strides = [1, 1, 1]} : vector<2x16x128xf32> to vector<2x1x128xf32>
    %137 = vector.shape_cast %136 : vector<2x1x128xf32> to vector<2x128xf32>
    %138 = arith.maximumf %135, %137 : vector<2x128xf32>
    %139 = vector.extract_strided_slice %138 {offsets = [0, 0], sizes = [2, 16], strides = [1, 1]} : vector<2x128xf32> to vector<2x16xf32>
    %140 = arith.truncf %139 : vector<2x16xf32> to vector<2x16xbf16>
    %c0_85 = arith.constant 0 : index
    %c80_86 = arith.constant 80 : index
    %141 = vector.load %arg15[%c0_85, %c80_86] : memref<2x256xbf16, #tpu.memory_space<vmem>>, vector<2x16xbf16>
    tpu.vector_store %arg15[%c0_85, %c80_86], %140 {strides = array<i32>} : memref<2x256xbf16, #tpu.memory_space<vmem>>, vector<2x16xbf16>,
    %142 = vector.extract_strided_slice %125 {offsets = [0, 4, 0], sizes = [2, 1, 128], strides = [1, 1, 1]} : vector<2x16x128xf32> to vector<2x1x128xf32>
    %143 = vector.shape_cast %142 : vector<2x1x128xf32> to vector<2x128xf32>
    %144 = vector.extract_strided_slice %125 {offsets = [0, 5, 0], sizes = [2, 1, 128], strides = [1, 1, 1]} : vector<2x16x128xf32> to vector<2x1x128xf32>
    %145 = vector.shape_cast %144 : vector<2x1x128xf32> to vector<2x128xf32>
    %146 = arith.maximumf %143, %145 : vector<2x128xf32>
    %147 = vector.extract_strided_slice %146 {offsets = [0, 0], sizes = [2, 16], strides = [1, 1]} : vector<2x128xf32> to vector<2x16xf32>
    %148 = arith.truncf %147 : vector<2x16xf32> to vector<2x16xbf16>
    %c0_87 = arith.constant 0 : index
    %c96_88 = arith.constant 96 : index
    %149 = vector.load %arg15[%c0_87, %c96_88] : memref<2x256xbf16, #tpu.memory_space<vmem>>, vector<2x16xbf16>
    tpu.vector_store %arg15[%c0_87, %c96_88], %148 {strides = array<i32>} : memref<2x256xbf16, #tpu.memory_space<vmem>>, vector<2x16xbf16>,
    %150 = vector.extract_strided_slice %125 {offsets = [0, 6, 0], sizes = [2, 1, 128], strides = [1, 1, 1]} : vector<2x16x128xf32> to vector<2x1x128xf32>
    %151 = vector.shape_cast %150 : vector<2x1x128xf32> to vector<2x128xf32>
    %152 = vector.extract_strided_slice %125 {offsets = [0, 7, 0], sizes = [2, 1, 128], strides = [1, 1, 1]} : vector<2x16x128xf32> to vector<2x1x128xf32>
    %153 = vector.shape_cast %152 : vector<2x1x128xf32> to vector<2x128xf32>
    %154 = arith.maximumf %151, %153 : vector<2x128xf32>
    %155 = vector.extract_strided_slice %154 {offsets = [0, 0], sizes = [2, 16], strides = [1, 1]} : vector<2x128xf32> to vector<2x16xf32>
    %156 = arith.truncf %155 : vector<2x16xf32> to vector<2x16xbf16>
    %c0_89 = arith.constant 0 : index
    %c112_90 = arith.constant 112 : index
    %157 = vector.load %arg15[%c0_89, %c112_90] : memref<2x256xbf16, #tpu.memory_space<vmem>>, vector<2x16xbf16>
    tpu.vector_store %arg15[%c0_89, %c112_90], %156 {strides = array<i32>} : memref<2x256xbf16, #tpu.memory_space<vmem>>, vector<2x16xbf16>,
    %158 = vector.extract_strided_slice %87 {offsets = [2, 0, 0], sizes = [1, 32, 128], strides = [1, 1, 1]} : vector<4x32x128xf32> to vector<1x32x128xf32>
    %159 = vector.shape_cast %158 : vector<1x32x128xf32> to vector<32x128xf32>
    %160 = vector.shape_cast %159 : vector<32x128xf32> to vector<2x16x128xf32>
    %161 = vector.extract_strided_slice %160 {offsets = [0, 0, 0], sizes = [2, 1, 128], strides = [1, 1, 1]} : vector<2x16x128xf32> to vector<2x1x128xf32>
    %162 = vector.shape_cast %161 : vector<2x1x128xf32> to vector<2x128xf32>
    %163 = vector.extract_strided_slice %160 {offsets = [0, 1, 0], sizes = [2, 1, 128], strides = [1, 1, 1]} : vector<2x16x128xf32> to vector<2x1x128xf32>
    %164 = vector.shape_cast %163 : vector<2x1x128xf32> to vector<2x128xf32>
    %165 = arith.maximumf %162, %164 : vector<2x128xf32>
    %166 = vector.extract_strided_slice %165 {offsets = [0, 0], sizes = [2, 16], strides = [1, 1]} : vector<2x128xf32> to vector<2x16xf32>
    %167 = arith.truncf %166 : vector<2x16xf32> to vector<2x16xbf16>
    %c0_91 = arith.constant 0 : index
    %c128_92 = arith.constant 128 : index
    %168 = vector.load %arg15[%c0_91, %c128_92] : memref<2x256xbf16, #tpu.memory_space<vmem>>, vector<2x16xbf16>
    tpu.vector_store %arg15[%c0_91, %c128_92], %167 {strides = array<i32>} : memref<2x256xbf16, #tpu.memory_space<vmem>>, vector<2x16xbf16>,
    %169 = vector.extract_strided_slice %160 {offsets = [0, 2, 0], sizes = [2, 1, 128], strides = [1, 1, 1]} : vector<2x16x128xf32> to vector<2x1x128xf32>
    %170 = vector.shape_cast %169 : vector<2x1x128xf32> to vector<2x128xf32>
    %171 = vector.extract_strided_slice %160 {offsets = [0, 3, 0], sizes = [2, 1, 128], strides = [1, 1, 1]} : vector<2x16x128xf32> to vector<2x1x128xf32>
    %172 = vector.shape_cast %171 : vector<2x1x128xf32> to vector<2x128xf32>
    %173 = arith.maximumf %170, %172 : vector<2x128xf32>
    %174 = vector.extract_strided_slice %173 {offsets = [0, 0], sizes = [2, 16], strides = [1, 1]} : vector<2x128xf32> to vector<2x16xf32>
    %175 = arith.truncf %174 : vector<2x16xf32> to vector<2x16xbf16>
    %c0_93 = arith.constant 0 : index
    %c144_94 = arith.constant 144 : index
    %176 = vector.load %arg15[%c0_93, %c144_94] : memref<2x256xbf16, #tpu.memory_space<vmem>>, vector<2x16xbf16>
    tpu.vector_store %arg15[%c0_93, %c144_94], %175 {strides = array<i32>} : memref<2x256xbf16, #tpu.memory_space<vmem>>, vector<2x16xbf16>,
    %177 = vector.extract_strided_slice %160 {offsets = [0, 4, 0], sizes = [2, 1, 128], strides = [1, 1, 1]} : vector<2x16x128xf32> to vector<2x1x128xf32>
    %178 = vector.shape_cast %177 : vector<2x1x128xf32> to vector<2x128xf32>
    %179 = vector.extract_strided_slice %160 {offsets = [0, 5, 0], sizes = [2, 1, 128], strides = [1, 1, 1]} : vector<2x16x128xf32> to vector<2x1x128xf32>
    %180 = vector.shape_cast %179 : vector<2x1x128xf32> to vector<2x128xf32>
    %181 = arith.maximumf %178, %180 : vector<2x128xf32>
    %182 = vector.extract_strided_slice %181 {offsets = [0, 0], sizes = [2, 16], strides = [1, 1]} : vector<2x128xf32> to vector<2x16xf32>
    %183 = arith.truncf %182 : vector<2x16xf32> to vector<2x16xbf16>
    %c0_95 = arith.constant 0 : index
    %c160_96 = arith.constant 160 : index
    %184 = vector.load %arg15[%c0_95, %c160_96] : memref<2x256xbf16, #tpu.memory_space<vmem>>, vector<2x16xbf16>
    tpu.vector_store %arg15[%c0_95, %c160_96], %183 {strides = array<i32>} : memref<2x256xbf16, #tpu.memory_space<vmem>>, vector<2x16xbf16>,
    %185 = vector.extract_strided_slice %160 {offsets = [0, 6, 0], sizes = [2, 1, 128], strides = [1, 1, 1]} : vector<2x16x128xf32> to vector<2x1x128xf32>
    %186 = vector.shape_cast %185 : vector<2x1x128xf32> to vector<2x128xf32>
    %187 = vector.extract_strided_slice %160 {offsets = [0, 7, 0], sizes = [2, 1, 128], strides = [1, 1, 1]} : vector<2x16x128xf32> to vector<2x1x128xf32>
    %188 = vector.shape_cast %187 : vector<2x1x128xf32> to vector<2x128xf32>
    %189 = arith.maximumf %186, %188 : vector<2x128xf32>
    %190 = vector.extract_strided_slice %189 {offsets = [0, 0], sizes = [2, 16], strides = [1, 1]} : vector<2x128xf32> to vector<2x16xf32>
    %191 = arith.truncf %190 : vector<2x16xf32> to vector<2x16xbf16>
    %c0_97 = arith.constant 0 : index
    %c176_98 = arith.constant 176 : index
    %192 = vector.load %arg15[%c0_97, %c176_98] : memref<2x256xbf16, #tpu.memory_space<vmem>>, vector<2x16xbf16>
    tpu.vector_store %arg15[%c0_97, %c176_98], %191 {strides = array<i32>} : memref<2x256xbf16, #tpu.memory_space<vmem>>, vector<2x16xbf16>,
    %193 = vector.extract_strided_slice %87 {offsets = [3, 0, 0], sizes = [1, 32, 128], strides = [1, 1, 1]} : vector<4x32x128xf32> to vector<1x32x128xf32>
    %194 = vector.shape_cast %193 : vector<1x32x128xf32> to vector<32x128xf32>
    %195 = vector.shape_cast %194 : vector<32x128xf32> to vector<2x16x128xf32>
    %196 = vector.extract_strided_slice %195 {offsets = [0, 0, 0], sizes = [2, 1, 128], strides = [1, 1, 1]} : vector<2x16x128xf32> to vector<2x1x128xf32>
    %197 = vector.shape_cast %196 : vector<2x1x128xf32> to vector<2x128xf32>
    %198 = vector.extract_strided_slice %195 {offsets = [0, 1, 0], sizes = [2, 1, 128], strides = [1, 1, 1]} : vector<2x16x128xf32> to vector<2x1x128xf32>
    %199 = vector.shape_cast %198 : vector<2x1x128xf32> to vector<2x128xf32>
    %200 = arith.maximumf %197, %199 : vector<2x128xf32>
    %201 = vector.extract_strided_slice %200 {offsets = [0, 0], sizes = [2, 16], strides = [1, 1]} : vector<2x128xf32> to vector<2x16xf32>
    %202 = arith.truncf %201 : vector<2x16xf32> to vector<2x16xbf16>
    %c0_99 = arith.constant 0 : index
    %c192_100 = arith.constant 192 : index
    %203 = vector.load %arg15[%c0_99, %c192_100] : memref<2x256xbf16, #tpu.memory_space<vmem>>, vector<2x16xbf16>
    tpu.vector_store %arg15[%c0_99, %c192_100], %202 {strides = array<i32>} : memref<2x256xbf16, #tpu.memory_space<vmem>>, vector<2x16xbf16>,
    %204 = vector.extract_strided_slice %195 {offsets = [0, 2, 0], sizes = [2, 1, 128], strides = [1, 1, 1]} : vector<2x16x128xf32> to vector<2x1x128xf32>
    %205 = vector.shape_cast %204 : vector<2x1x128xf32> to vector<2x128xf32>
    %206 = vector.extract_strided_slice %195 {offsets = [0, 3, 0], sizes = [2, 1, 128], strides = [1, 1, 1]} : vector<2x16x128xf32> to vector<2x1x128xf32>
    %207 = vector.shape_cast %206 : vector<2x1x128xf32> to vector<2x128xf32>
    %208 = arith.maximumf %205, %207 : vector<2x128xf32>
    %209 = vector.extract_strided_slice %208 {offsets = [0, 0], sizes = [2, 16], strides = [1, 1]} : vector<2x128xf32> to vector<2x16xf32>
    %210 = arith.truncf %209 : vector<2x16xf32> to vector<2x16xbf16>
    %c0_101 = arith.constant 0 : index
    %c208 = arith.constant 208 : index
    %211 = vector.load %arg15[%c0_101, %c208] : memref<2x256xbf16, #tpu.memory_space<vmem>>, vector<2x16xbf16>
    tpu.vector_store %arg15[%c0_101, %c208], %210 {strides = array<i32>} : memref<2x256xbf16, #tpu.memory_space<vmem>>, vector<2x16xbf16>,
    %212 = vector.extract_strided_slice %195 {offsets = [0, 4, 0], sizes = [2, 1, 128], strides = [1, 1, 1]} : vector<2x16x128xf32> to vector<2x1x128xf32>
    %213 = vector.shape_cast %212 : vector<2x1x128xf32> to vector<2x128xf32>
    %214 = vector.extract_strided_slice %195 {offsets = [0, 5, 0], sizes = [2, 1, 128], strides = [1, 1, 1]} : vector<2x16x128xf32> to vector<2x1x128xf32>
    %215 = vector.shape_cast %214 : vector<2x1x128xf32> to vector<2x128xf32>
    %216 = arith.maximumf %213, %215 : vector<2x128xf32>
    %217 = vector.extract_strided_slice %216 {offsets = [0, 0], sizes = [2, 16], strides = [1, 1]} : vector<2x128xf32> to vector<2x16xf32>
    %218 = arith.truncf %217 : vector<2x16xf32> to vector<2x16xbf16>
    %c0_102 = arith.constant 0 : index
    %c224 = arith.constant 224 : index
    %219 = vector.load %arg15[%c0_102, %c224] : memref<2x256xbf16, #tpu.memory_space<vmem>>, vector<2x16xbf16>
    tpu.vector_store %arg15[%c0_102, %c224], %218 {strides = array<i32>} : memref<2x256xbf16, #tpu.memory_space<vmem>>, vector<2x16xbf16>,
    %220 = vector.extract_strided_slice %195 {offsets = [0, 6, 0], sizes = [2, 1, 128], strides = [1, 1, 1]} : vector<2x16x128xf32> to vector<2x1x128xf32>
    %221 = vector.shape_cast %220 : vector<2x1x128xf32> to vector<2x128xf32>
    %222 = vector.extract_strided_slice %195 {offsets = [0, 7, 0], sizes = [2, 1, 128], strides = [1, 1, 1]} : vector<2x16x128xf32> to vector<2x1x128xf32>
    %223 = vector.shape_cast %222 : vector<2x1x128xf32> to vector<2x128xf32>
    %224 = arith.maximumf %221, %223 : vector<2x128xf32>
    %225 = vector.extract_strided_slice %224 {offsets = [0, 0], sizes = [2, 16], strides = [1, 1]} : vector<2x128xf32> to vector<2x16xf32>
    %226 = arith.truncf %225 : vector<2x16xf32> to vector<2x16xbf16>
    %c0_103 = arith.constant 0 : index
    %c240 = arith.constant 240 : index
    %227 = vector.load %arg15[%c0_103, %c240] : memref<2x256xbf16, #tpu.memory_space<vmem>>, vector<2x16xbf16>
    tpu.vector_store %arg15[%c0_103, %c240], %226 {strides = array<i32>} : memref<2x256xbf16, #tpu.memory_space<vmem>>, vector<2x16xbf16>,
    %c0_104 = arith.constant 0 : index
    %c0_105 = arith.constant 0 : index
    %228 = vector.load %arg15[%c0_104, %c0_105] : memref<2x256xbf16, #tpu.memory_space<vmem>>, vector<2x256xbf16>
    %c0_106 = arith.constant 0 : index
    %c0_107 = arith.constant 0 : index
    %229 = vector.load %arg6[%c0_106, %c0_107] : memref<256x128xbf16, #tpu.memory_space<vmem>>, vector<256x128xbf16>
    %cst_108 = arith.constant dense<0.000000e+00> : vector<2x128xf32>
    %230 = tpu.matmul %228, %229, %cst_108 {dimension_numbers = #tpu.dot_dimension_numbers<[1], [0], [0], [1], [0, 0, 1, 1], [], []>} : vector<2x256xbf16>, vector<256x128xbf16>, vector<2x128xf32> -> vector<2x128xf32>
    %c0_109 = arith.constant 0 : index
    %c0_110 = arith.constant 0 : index
    %231 = vector.load %arg7[%c0_109, %c0_110] : memref<1x128xf32, #tpu.memory_space<vmem>>, vector<1x128xf32>
    %232 = vector.broadcast %231 : vector<1x128xf32> to vector<2x128xf32>
    %233 = arith.addf %230, %232 : vector<2x128xf32>
    %cst_111 = arith.constant 0.000000e+00 : f32
    %234 = vector.broadcast %cst_111 : f32 to vector<2x128xf32>
    %235 = arith.maximumf %233, %234 : vector<2x128xf32>
    %236 = arith.truncf %235 : vector<2x128xf32> to vector<2x128xbf16>
    %c0_112 = arith.constant 0 : index
    %c0_113 = arith.constant 0 : index
    %237 = vector.load %arg8[%c0_112, %c0_113] : memref<128x128xbf16, #tpu.memory_space<vmem>>, vector<128x128xbf16>
    %cst_114 = arith.constant dense<0.000000e+00> : vector<2x128xf32>
    %238 = tpu.matmul %236, %237, %cst_114 {dimension_numbers = #tpu.dot_dimension_numbers<[1], [0], [0], [1], [0, 0, 1, 1], [], []>} : vector<2x128xbf16>, vector<128x128xbf16>, vector<2x128xf32> -> vector<2x128xf32>
    %c0_115 = arith.constant 0 : index
    %c0_116 = arith.constant 0 : index
    %239 = vector.load %arg9[%c0_115, %c0_116] : memref<1x128xf32, #tpu.memory_space<vmem>>, vector<1x128xf32>
    %240 = vector.broadcast %239 : vector<1x128xf32> to vector<2x128xf32>
    %241 = arith.addf %238, %240 : vector<2x128xf32>
    %cst_117 = arith.constant 0.000000e+00 : f32
    %242 = vector.broadcast %cst_117 : f32 to vector<2x128xf32>
    %243 = arith.maximumf %241, %242 : vector<2x128xf32>
    %244 = arith.truncf %243 : vector<2x128xf32> to vector<2x128xbf16>
    %c0_118 = arith.constant 0 : index
    %c0_119 = arith.constant 0 : index
    %245 = vector.load %arg10[%c0_118, %c0_119] : memref<128x128xbf16, #tpu.memory_space<vmem>>, vector<128x128xbf16>
    %cst_120 = arith.constant dense<0.000000e+00> : vector<2x128xf32>
    %246 = tpu.matmul %244, %245, %cst_120 {dimension_numbers = #tpu.dot_dimension_numbers<[1], [0], [0], [1], [0, 0, 1, 1], [], []>} : vector<2x128xbf16>, vector<128x128xbf16>, vector<2x128xf32> -> vector<2x128xf32>
    %c0_121 = arith.constant 0 : index
    %c0_122 = arith.constant 0 : index
    %247 = vector.load %arg11[%c0_121, %c0_122] : memref<1x128xf32, #tpu.memory_space<vmem>>, vector<1x128xf32>
    %248 = vector.broadcast %247 : vector<1x128xf32> to vector<2x128xf32>
    %249 = arith.addf %246, %248 : vector<2x128xf32>
    %c0_123 = arith.constant 0 : index
    %c0_124 = arith.constant 0 : index
    %250 = vector.load %arg12[%c0_123, %c0_124] : memref<2x128xf32, #tpu.memory_space<vmem>>, vector<2x128xf32>
    tpu.vector_store %arg12[%c0_123, %c0_124], %249 {strides = array<i32>} : memref<2x128xf32, #tpu.memory_space<vmem>>, vector<2x128xf32>,
    return
  }
  func.func @transform_0(%arg0: i32) -> (i32, i32) {
    %c0_i32 = arith.constant 0 : i32
    %c0_i32_0 = arith.constant 0 : i32
    %c0_i32_1 = arith.constant 0 : i32
    return %c0_i32, %c0_i32_0 : i32, i32
  }
  func.func @transform_1(%arg0: i32) -> (i32, i32) {
    %c0_i32 = arith.constant 0 : i32
    %c0_i32_0 = arith.constant 0 : i32
    %c0_i32_1 = arith.constant 0 : i32
    return %c0_i32, %c0_i32_0 : i32, i32
  }
  func.func @transform_2(%arg0: i32) -> (i32, i32) {
    %c0_i32 = arith.constant 0 : i32
    %c0_i32_0 = arith.constant 0 : i32
    %c0_i32_1 = arith.constant 0 : i32
    return %c0_i32, %c0_i32_0 : i32, i32
  }
  func.func @transform_3(%arg0: i32) -> (i32, i32) {
    %c0_i32 = arith.constant 0 : i32
    %c0_i32_0 = arith.constant 0 : i32
    %c0_i32_1 = arith.constant 0 : i32
    return %c0_i32, %c0_i32_0 : i32, i32
  }
  func.func @transform_4(%arg0: i32) -> (i32, i32) {
    %c0_i32 = arith.constant 0 : i32
    %c0_i32_0 = arith.constant 0 : i32
    %c0_i32_1 = arith.constant 0 : i32
    return %c0_i32, %c0_i32_0 : i32, i32
  }
  func.func @transform_5(%arg0: i32) -> (i32, i32) {
    %c0_i32 = arith.constant 0 : i32
    %c0_i32_0 = arith.constant 0 : i32
    %c0_i32_1 = arith.constant 0 : i32
    return %c0_i32, %c0_i32_0 : i32, i32
  }
  func.func @transform_6(%arg0: i32) -> (i32, i32) {
    %c0_i32 = arith.constant 0 : i32
    %c0_i32_0 = arith.constant 0 : i32
    %c0_i32_1 = arith.constant 0 : i32
    return %c0_i32, %c0_i32_0 : i32, i32
  }
  func.func @transform_7(%arg0: i32) -> (i32, i32) {
    %c0_i32 = arith.constant 0 : i32
    %c0_i32_0 = arith.constant 0 : i32
    %c0_i32_1 = arith.constant 0 : i32
    return %c0_i32, %c0_i32_0 : i32, i32
  }
  func.func @transform_8(%arg0: i32) -> (i32, i32) {
    %c0_i32 = arith.constant 0 : i32
    %c0_i32_0 = arith.constant 0 : i32
    %c0_i32_1 = arith.constant 0 : i32
    return %c0_i32, %c0_i32_0 : i32, i32
  }
  func.func @transform_9(%arg0: i32) -> (i32, i32) {
    %c0_i32 = arith.constant 0 : i32
    %c0_i32_0 = arith.constant 0 : i32
    %c0_i32_1 = arith.constant 0 : i32
    return %c0_i32, %c0_i32_0 : i32, i32
  }
  func.func @transform_10(%arg0: i32) -> (i32, i32) {
    %c0_i32 = arith.constant 0 : i32
    %c0_i32_0 = arith.constant 0 : i32
    %c0_i32_1 = arith.constant 0 : i32
    return %c0_i32, %c0_i32_0 : i32, i32
  }
  func.func @transform_11(%arg0: i32) -> (i32, i32) {
    %c0_i32 = arith.constant 0 : i32
    %c0_i32_0 = arith.constant 0 : i32
    %c0_i32_1 = arith.constant 0 : i32
    return %c0_i32, %c0_i32_0 : i32, i32
  }
}

</mosaic_0001>

<llo_original>
// kernel: lenet_forward.1
$region0: #{lenet_forward.1}
  #allocation0 [shape = 'u32[]', space=smem, size = 0x4, offset = 0x4, fixed_abs, tag = 'smem constant byte address 0x4 - core index']
  #allocation1 [shape = 'u32[144,128]{1,0:T(1,128)}', space=vmem, size = 0x12000, scoped, tag = 'internal scratch']
  #allocation2 [shape = 'bf16[416,128]{1,0:T(8,128)(2,1)}', space=vmem, size = 0x1a000, scoped, tag = 'scratch operand']
  #allocation3 [shape = 'bf16[256,256]{1,0:T(8,128)(2,1)}', space=vmem, size = 0x20000, scoped, tag = 'scratch operand']
  #allocation4 [shape = 'bf16[2,256]{1,0:T(2,128)(2,1)}', space=vmem, size = 0x400, scoped, tag = 'scratch operand']
  %s0 = inlined_call_operand.vmem [shape: bf16[1664,32], index: 0, kind: input, shape index: {}]
  %s1 = inlined_call_operand.vmem [shape: bf16[32,128], index: 1, kind: input, shape index: {}]
  %s2 = inlined_call_operand.vmem [shape: f32[1,128], index: 2, kind: input, shape index: {}]
  %s3 = inlined_call_operand.vmem [shape: bf16[256,128], index: 3, kind: input, shape index: {}]
  %s4 = inlined_call_operand.vmem [shape: f32[1,128], index: 4, kind: input, shape index: {}]
  %s5 = inlined_call_operand.vmem [shape: bf16[256,128], index: 5, kind: input, shape index: {}]
  %s6 = inlined_call_operand.vmem [shape: f32[1,128], index: 6, kind: input, shape index: {}]
  %s7 = inlined_call_operand.vmem [shape: bf16[128,128], index: 7, kind: input, shape index: {}]
  %s8 = inlined_call_operand.vmem [shape: f32[1,128], index: 8, kind: input, shape index: {}]
  %s9 = inlined_call_operand.vmem [shape: bf16[128,128], index: 9, kind: input, shape index: {}]
  %s10 = inlined_call_operand.vmem [shape: f32[1,128], index: 10, kind: input, shape index: {}]
  %s11 = inlined_call_operand.hbm [shape: f32[2,128], index: 11, kind: output, shape index: {}]
  %s12 = sld [smem:[#allocation0]]
  $region54: #{lenet_forward.1} parent=0
    _
  %s14 = ssub.s32 1, %s12
  %s15 = scalar_select 0, %s14, %s12
  $region1: #{lenet_forward.1} parent=0
    #allocation5 [shape = 'u8[1024]{0}', space=vmem, size = 0x400, scoped, tag = 'output window, operand 0, single buffered']
    #allocation6 [shape = 's32[1]{0}', space=sflag, size = 0x4, scoped, tag = 'scoped memory for lenet_forward.1']
    %16 = vsyncpa [#allocation6], 0
    // Predicated region
    $region2: #{lenet_forward.1} parent=1 // pred_check
      _
    $region3: #{lenet_forward.1} parent=1 // pred_check_branch
      %18 = sbr.rel (0) target = $region5
    $region4: #{lenet_forward.1} parent=1 // pred_region
      _
    $region5: #{lenet_forward.1} parent=1 // pred_fallthru
      _
    // Predicated region
    $region6: #{lenet_forward.1} parent=1 // pred_check
      _
    $region7: #{lenet_forward.1} parent=1 // pred_check_branch
      %20 = sbr.rel (0) target = $region9
    $region8: #{lenet_forward.1} parent=1 // pred_region
      _
    $region9: #{lenet_forward.1} parent=1 // pred_fallthru
      _
    // Predicated region
    $region10: #{lenet_forward.1} parent=1 // pred_check
      _
    $region11: #{lenet_forward.1} parent=1 // pred_check_branch
      %22 = sbr.rel (0) target = $region13
    $region12: #{lenet_forward.1} parent=1 // pred_region
      _
    $region13: #{lenet_forward.1} parent=1 // pred_fallthru
      _
    // Predicated region
    $region14: #{lenet_forward.1} parent=1 // pred_check
      _
    $region15: #{lenet_forward.1} parent=1 // pred_check_branch
      %24 = sbr.rel (0) target = $region17
    $region16: #{lenet_forward.1} parent=1 // pred_region
      _
    $region17: #{lenet_forward.1} parent=1 // pred_fallthru
      _
    // Predicated region
    $region18: #{lenet_forward.1} parent=1 // pred_check
      _
    $region19: #{lenet_forward.1} parent=1 // pred_check_branch
      %26 = sbr.rel (0) target = $region21
    $region20: #{lenet_forward.1} parent=1 // pred_region
      _
    $region21: #{lenet_forward.1} parent=1 // pred_fallthru
      _
    // Predicated region
    $region22: #{lenet_forward.1} parent=1 // pred_check
      _
    $region23: #{lenet_forward.1} parent=1 // pred_check_branch
      %28 = sbr.rel (0) target = $region25
    $region24: #{lenet_forward.1} parent=1 // pred_region
      _
    $region25: #{lenet_forward.1} parent=1 // pred_fallthru
      _
    // Predicated region
    $region26: #{lenet_forward.1} parent=1 // pred_check
      _
    $region27: #{lenet_forward.1} parent=1 // pred_check_branch
      %30 = sbr.rel (0) target = $region29
    $region28: #{lenet_forward.1} parent=1 // pred_region
      _
    $region29: #{lenet_forward.1} parent=1 // pred_fallthru
      _
    // Predicated region
    $region30: #{lenet_forward.1} parent=1 // pred_check
      _
    $region31: #{lenet_forward.1} parent=1 // pred_check_branch
      %32 = sbr.rel (0) target = $region33
    $region32: #{lenet_forward.1} parent=1 // pred_region
      _
    $region33: #{lenet_forward.1} parent=1 // pred_fallthru
      _
    // Predicated region
    $region34: #{lenet_forward.1} parent=1 // pred_check
      _
    $region35: #{lenet_forward.1} parent=1 // pred_check_branch
      %34 = sbr.rel (0) target = $region37
    $region36: #{lenet_forward.1} parent=1 // pred_region
      _
    $region37: #{lenet_forward.1} parent=1 // pred_fallthru
      _
    // Predicated region
    $region38: #{lenet_forward.1} parent=1 // pred_check
      _
    $region39: #{lenet_forward.1} parent=1 // pred_check_branch
      %36 = sbr.rel (0) target = $region41
    $region40: #{lenet_forward.1} parent=1 // pred_region
      _
    $region41: #{lenet_forward.1} parent=1 // pred_fallthru
      _
    // Predicated region
    $region42: #{lenet_forward.1} parent=1 // pred_check
      _
    $region43: #{lenet_forward.1} parent=1 // pred_check_branch
      %38 = sbr.rel (0) target = $region45
    $region44: #{lenet_forward.1} parent=1 // pred_region
      _
    $region45: #{lenet_forward.1} parent=1 // pred_fallthru
      _
    %v40 = vld [vmem:[%s0] sm:$0xf]
    %v41 = vld [vmem:[%s0 + $0x4] sm:$0xf]
    %v42 = vld [vmem:[%s0 + $0x8] sm:$0xf]
    %v43 = vld [vmem:[%s0 + $0xc] sm:$0xf]
    %v44 = vld [vmem:[%s0 + $0x10] sm:$0xf]
    %v45 = vld [vmem:[%s0 + $0x14] sm:$0xf]
    %v46 = vld [vmem:[%s0 + $0x18] sm:$0xf]
    %v47 = vld [vmem:[%s0 + $0x1c] sm:$0xf]
    %v48 = vld [vmem:[%s0 + $0x20] sm:$0xf]
    %v49 = vld [vmem:[%s0 + $0x24] sm:$0xf]
    %v50 = vld [vmem:[%s0 + $0x28] sm:$0xf]
    %v51 = vld [vmem:[%s0 + $0x2c] sm:$0xf]
    %v52 = vld [vmem:[%s0 + $0x30] sm:$0xf]
    %v53 = vld [vmem:[%s0 + $0x34] sm:$0xf]
    %v54 = vld [vmem:[%s0 + $0x38] sm:$0xf]
    %v55 = vld [vmem:[%s0 + $0x3c] sm:$0xf]
    %v56 = vld [vmem:[%s0 + $0x40] sm:$0xf]
    %v57 = vld [vmem:[%s0 + $0x44] sm:$0xf]
    %v58 = vld [vmem:[%s0 + $0x48] sm:$0xf]
    %v59 = vld [vmem:[%s0 + $0x4c] sm:$0xf]
    %v60 = vld [vmem:[%s0 + $0x50] sm:$0xf]
    %v61 = vld [vmem:[%s0 + $0x54] sm:$0xf]
    %v62 = vld [vmem:[%s0 + $0x58] sm:$0xf]
    %v63 = vld [vmem:[%s0 + $0x5c] sm:$0xf]
    %v64 = vld [vmem:[%s0 + $0x60] sm:$0xf]
    %v65 = vld [vmem:[%s0 + $0x64] sm:$0xf]
    %v66 = vld [vmem:[%s0 + $0x68] sm:$0xf]
    %v67 = vld [vmem:[%s0 + $0x6c] sm:$0xf]
    %v68 = vld [vmem:[%s0 + $0x70] sm:$0xf]
    %v69 = vld [vmem:[%s0 + $0x74] sm:$0xf]
    %v70 = vld [vmem:[%s0 + $0x78] sm:$0xf]
    %v71 = vld [vmem:[%s0 + $0x7c] sm:$0xf]
    %v72 = vld [vmem:[%s0 + $0x80] sm:$0xf]
    %v73 = vld [vmem:[%s0 + $0x84] sm:$0xf]
    %v74 = vld [vmem:[%s0 + $0x88] sm:$0xf]
    %v75 = vld [vmem:[%s0 + $0x8c] sm:$0xf]
    %v76 = vld [vmem:[%s0 + $0x90] sm:$0xf]
    %v77 = vld [vmem:[%s0 + $0x94] sm:$0xf]
    %v78 = vld [vmem:[%s0 + $0x98] sm:$0xf]
    %v79 = vld [vmem:[%s0 + $0x9c] sm:$0xf]
    %v80 = vld [vmem:[%s0 + $0xa0] sm:$0xf]
    %v81 = vld [vmem:[%s0 + $0xa4] sm:$0xf]
    %v82 = vld [vmem:[%s0 + $0xa8] sm:$0xf]
    %v83 = vld [vmem:[%s0 + $0xac] sm:$0xf]
    %v84 = vld [vmem:[%s0 + $0xb0] sm:$0xf]
    %v85 = vld [vmem:[%s0 + $0xb4] sm:$0xf]
    %v86 = vld [vmem:[%s0 + $0xb8] sm:$0xf]
    %v87 = vld [vmem:[%s0 + $0xbc] sm:$0xf]
    %v88 = vld [vmem:[%s0 + $0xc0] sm:$0xf]
    %v89 = vld [vmem:[%s0 + $0xc4] sm:$0xf]
    %v90 = vld [vmem:[%s0 + $0xc8] sm:$0xf]
    %v91 = vld [vmem:[%s0 + $0xcc] sm:$0xf]
    %v92 = vld [vmem:[%s0 + $0xd0] sm:$0xf]
    %v93 = vld [vmem:[%s0 + $0xd4] sm:$0xf]
    %v94 = vld [vmem:[%s0 + $0xd8] sm:$0xf]
    %v95 = vld [vmem:[%s0 + $0xdc] sm:$0xf]
    %v96 = vld [vmem:[%s0 + $0xe0] sm:$0xf]
    %v97 = vld [vmem:[%s0 + $0xe4] sm:$0xf]
    %v98 = vld [vmem:[%s0 + $0xe8] sm:$0xf]
    %v99 = vld [vmem:[%s0 + $0xec] sm:$0xf]
    %v100 = vld [vmem:[%s0 + $0xf0] sm:$0xf]
    %v101 = vld [vmem:[%s0 + $0xf4] sm:$0xf]
    %v102 = vld [vmem:[%s0 + $0xf8] sm:$0xf]
    %v103 = vld [vmem:[%s0 + $0xfc] sm:$0xf]
    %v104 = vld [vmem:[%s0 + $0x100] sm:$0xf]
    %v105 = vld [vmem:[%s0 + $0x104] sm:$0xf]
    %v106 = vld [vmem:[%s0 + $0x108] sm:$0xf]
    %v107 = vld [vmem:[%s0 + $0x10c] sm:$0xf]
    %v108 = vld [vmem:[%s0 + $0x110] sm:$0xf]
    %v109 = vld [vmem:[%s0 + $0x114] sm:$0xf]
    %v110 = vld [vmem:[%s0 + $0x118] sm:$0xf]
    %v111 = vld [vmem:[%s0 + $0x11c] sm:$0xf]
    %v112 = vld [vmem:[%s0 + $0x120] sm:$0xf]
    %v113 = vld [vmem:[%s0 + $0x124] sm:$0xf]
    %v114 = vld [vmem:[%s0 + $0x128] sm:$0xf]
    %v115 = vld [vmem:[%s0 + $0x12c] sm:$0xf]
    %v116 = vld [vmem:[%s0 + $0x130] sm:$0xf]
    %v117 = vld [vmem:[%s0 + $0x134] sm:$0xf]
    %v118 = vld [vmem:[%s0 + $0x138] sm:$0xf]
    %v119 = vld [vmem:[%s0 + $0x13c] sm:$0xf]
    %v120 = vld [vmem:[%s0 + $0x140] sm:$0xf]
    %v121 = vld [vmem:[%s0 + $0x144] sm:$0xf]
    %v122 = vld [vmem:[%s0 + $0x148] sm:$0xf]
    %v123 = vld [vmem:[%s0 + $0x14c] sm:$0xf]
    %v124 = vld [vmem:[%s0 + $0x150] sm:$0xf]
    %v125 = vld [vmem:[%s0 + $0x154] sm:$0xf]
    %v126 = vld [vmem:[%s0 + $0x158] sm:$0xf]
    %v127 = vld [vmem:[%s0 + $0x15c] sm:$0xf]
    %v128 = vld [vmem:[%s0 + $0x160] sm:$0xf]
    %v129 = vld [vmem:[%s0 + $0x164] sm:$0xf]
    %v130 = vld [vmem:[%s0 + $0x168] sm:$0xf]
    %v131 = vld [vmem:[%s0 + $0x16c] sm:$0xf]
    %v132 = vld [vmem:[%s0 + $0x170] sm:$0xf]
    %v133 = vld [vmem:[%s0 + $0x174] sm:$0xf]
    %v134 = vld [vmem:[%s0 + $0x178] sm:$0xf]
    %v135 = vld [vmem:[%s0 + $0x17c] sm:$0xf]
    %v136 = vld [vmem:[%s0 + $0x180] sm:$0xf]
    %v137 = vld [vmem:[%s0 + $0x184] sm:$0xf]
    %v138 = vld [vmem:[%s0 + $0x188] sm:$0xf]
    %v139 = vld [vmem:[%s0 + $0x18c] sm:$0xf]
    %v140 = vld [vmem:[%s0 + $0x190] sm:$0xf]
    %v141 = vld [vmem:[%s0 + $0x194] sm:$0xf]
    %v142 = vld [vmem:[%s0 + $0x198] sm:$0xf]
    %v143 = vld [vmem:[%s0 + $0x19c] sm:$0xf]
    %v144 = vld [vmem:[%s0 + $0x1a0] sm:$0xf]
    %v145 = vld [vmem:[%s0 + $0x1a4] sm:$0xf]
    %v146 = vld [vmem:[%s0 + $0x1a8] sm:$0xf]
    %v147 = vld [vmem:[%s0 + $0x1ac] sm:$0xf]
    %v148 = vld [vmem:[%s0 + $0x1b0] sm:$0xf]
    %v149 = vld [vmem:[%s0 + $0x1b4] sm:$0xf]
    %v150 = vld [vmem:[%s0 + $0x1b8] sm:$0xf]
    %v151 = vld [vmem:[%s0 + $0x1bc] sm:$0xf]
    %v152 = vld [vmem:[%s0 + $0x1c0] sm:$0xf]
    %v153 = vld [vmem:[%s0 + $0x1c4] sm:$0xf]
    %v154 = vld [vmem:[%s0 + $0x1c8] sm:$0xf]
    %v155 = vld [vmem:[%s0 + $0x1cc] sm:$0xf]
    %v156 = vld [vmem:[%s0 + $0x1d0] sm:$0xf]
    %v157 = vld [vmem:[%s0 + $0x1d4] sm:$0xf]
    %v158 = vld [vmem:[%s0 + $0x1d8] sm:$0xf]
    %v159 = vld [vmem:[%s0 + $0x1dc] sm:$0xf]
    %v160 = vld [vmem:[%s0 + $0x1e0] sm:$0xf]
    %v161 = vld [vmem:[%s0 + $0x1e4] sm:$0xf]
    %v162 = vld [vmem:[%s0 + $0x1e8] sm:$0xf]
    %v163 = vld [vmem:[%s0 + $0x1ec] sm:$0xf]
    %v164 = vld [vmem:[%s0 + $0x1f0] sm:$0xf]
    %v165 = vld [vmem:[%s0 + $0x1f4] sm:$0xf]
    %v166 = vld [vmem:[%s0 + $0x1f8] sm:$0xf]
    %v167 = vld [vmem:[%s0 + $0x1fc] sm:$0xf]
    %v168 = vld [vmem:[%s0 + $0x200] sm:$0xf]
    %v169 = vld [vmem:[%s0 + $0x204] sm:$0xf]
    %v170 = vld [vmem:[%s0 + $0x208] sm:$0xf]
    %v171 = vld [vmem:[%s0 + $0x20c] sm:$0xf]
    %v172 = vld [vmem:[%s0 + $0x210] sm:$0xf]
    %v173 = vld [vmem:[%s0 + $0x214] sm:$0xf]
    %v174 = vld [vmem:[%s0 + $0x218] sm:$0xf]
    %v175 = vld [vmem:[%s0 + $0x21c] sm:$0xf]
    %v176 = vld [vmem:[%s0 + $0x220] sm:$0xf]
    %v177 = vld [vmem:[%s0 + $0x224] sm:$0xf]
    %v178 = vld [vmem:[%s0 + $0x228] sm:$0xf]
    %v179 = vld [vmem:[%s0 + $0x22c] sm:$0xf]
    %v180 = vld [vmem:[%s0 + $0x230] sm:$0xf]
    %v181 = vld [vmem:[%s0 + $0x234] sm:$0xf]
    %v182 = vld [vmem:[%s0 + $0x238] sm:$0xf]
    %v183 = vld [vmem:[%s0 + $0x23c] sm:$0xf]
    %v184 = vld [vmem:[%s0 + $0x240] sm:$0xf]
    %v185 = vld [vmem:[%s0 + $0x244] sm:$0xf]
    %v186 = vld [vmem:[%s0 + $0x248] sm:$0xf]
    %v187 = vld [vmem:[%s0 + $0x24c] sm:$0xf]
    %v188 = vld [vmem:[%s0 + $0x250] sm:$0xf]
    %v189 = vld [vmem:[%s0 + $0x254] sm:$0xf]
    %v190 = vld [vmem:[%s0 + $0x258] sm:$0xf]
    %v191 = vld [vmem:[%s0 + $0x25c] sm:$0xf]
    %v192 = vld [vmem:[%s0 + $0x260] sm:$0xf]
    %v193 = vld [vmem:[%s0 + $0x264] sm:$0xf]
    %v194 = vld [vmem:[%s0 + $0x268] sm:$0xf]
    %v195 = vld [vmem:[%s0 + $0x26c] sm:$0xf]
    %v196 = vld [vmem:[%s0 + $0x270] sm:$0xf]
    %v197 = vld [vmem:[%s0 + $0x274] sm:$0xf]
    %v198 = vld [vmem:[%s0 + $0x278] sm:$0xf]
    %v199 = vld [vmem:[%s0 + $0x27c] sm:$0xf]
    %v200 = vld [vmem:[%s0 + $0x280] sm:$0xf]
    %v201 = vld [vmem:[%s0 + $0x284] sm:$0xf]
    %v202 = vld [vmem:[%s0 + $0x288] sm:$0xf]
    %v203 = vld [vmem:[%s0 + $0x28c] sm:$0xf]
    %v204 = vld [vmem:[%s0 + $0x290] sm:$0xf]
    %v205 = vld [vmem:[%s0 + $0x294] sm:$0xf]
    %v206 = vld [vmem:[%s0 + $0x298] sm:$0xf]
    %v207 = vld [vmem:[%s0 + $0x29c] sm:$0xf]
    %v208 = vld [vmem:[%s0 + $0x2a0] sm:$0xf]
    %v209 = vld [vmem:[%s0 + $0x2a4] sm:$0xf]
    %v210 = vld [vmem:[%s0 + $0x2a8] sm:$0xf]
    %v211 = vld [vmem:[%s0 + $0x2ac] sm:$0xf]
    %v212 = vld [vmem:[%s0 + $0x2b0] sm:$0xf]
    %v213 = vld [vmem:[%s0 + $0x2b4] sm:$0xf]
    %v214 = vld [vmem:[%s0 + $0x2b8] sm:$0xf]
    %v215 = vld [vmem:[%s0 + $0x2bc] sm:$0xf]
    %v216 = vld [vmem:[%s0 + $0x2c0] sm:$0xf]
    %v217 = vld [vmem:[%s0 + $0x2c4] sm:$0xf]
    %v218 = vld [vmem:[%s0 + $0x2c8] sm:$0xf]
    %v219 = vld [vmem:[%s0 + $0x2cc] sm:$0xf]
    %v220 = vld [vmem:[%s0 + $0x2d0] sm:$0xf]
    %v221 = vld [vmem:[%s0 + $0x2d4] sm:$0xf]
    %v222 = vld [vmem:[%s0 + $0x2d8] sm:$0xf]
    %v223 = vld [vmem:[%s0 + $0x2dc] sm:$0xf]
    %v224 = vld [vmem:[%s0 + $0x2e0] sm:$0xf]
    %v225 = vld [vmem:[%s0 + $0x2e4] sm:$0xf]
    %v226 = vld [vmem:[%s0 + $0x2e8] sm:$0xf]
    %v227 = vld [vmem:[%s0 + $0x2ec] sm:$0xf]
    %v228 = vld [vmem:[%s0 + $0x2f0] sm:$0xf]
    %v229 = vld [vmem:[%s0 + $0x2f4] sm:$0xf]
    %v230 = vld [vmem:[%s0 + $0x2f8] sm:$0xf]
    %v231 = vld [vmem:[%s0 + $0x2fc] sm:$0xf]
    %v232 = vld [vmem:[%s0 + $0x300] sm:$0xf]
    %v233 = vld [vmem:[%s0 + $0x304] sm:$0xf]
    %v234 = vld [vmem:[%s0 + $0x308] sm:$0xf]
    %v235 = vld [vmem:[%s0 + $0x30c] sm:$0xf]
    %v236 = vld [vmem:[%s0 + $0x310] sm:$0xf]
    %v237 = vld [vmem:[%s0 + $0x314] sm:$0xf]
    %v238 = vld [vmem:[%s0 + $0x318] sm:$0xf]
    %v239 = vld [vmem:[%s0 + $0x31c] sm:$0xf]
    %v240 = vld [vmem:[%s0 + $0x320] sm:$0xf]
    %v241 = vld [vmem:[%s0 + $0x324] sm:$0xf]
    %v242 = vld [vmem:[%s0 + $0x328] sm:$0xf]
    %v243 = vld [vmem:[%s0 + $0x32c] sm:$0xf]
    %v244 = vld [vmem:[%s0 + $0x330] sm:$0xf]
    %v245 = vld [vmem:[%s0 + $0x334] sm:$0xf]
    %v246 = vld [vmem:[%s0 + $0x338] sm:$0xf]
    %v247 = vld [vmem:[%s0 + $0x33c] sm:$0xf]
    %v248 = vld [vmem:[%s1] sm:$0xf]
    %v249 = vld [vmem:[%s1 + $0x4] sm:$0xf]
    %v250 = vld [vmem:[%s1 + $0x8] sm:$0xf]
    %v251 = vld [vmem:[%s1 + $0xc] sm:$0xf]
    %v460 = vunpack.c.l.b16 %v40
    %v461 = vunpack.c.l.b16 %v41
    %v462 = vunpack.c.l.b16 %v42
    %v463 = vunpack.c.l.b16 %v43
    %v464 = vunpack.c.l.b16 %v44
    %v465 = vunpack.c.l.b16 %v45
    %v466 = vunpack.c.l.b16 %v46
    %v467 = vunpack.c.l.b16 %v47
    %v468 = vunpack.c.l.b16 %v48
    %v469 = vunpack.c.l.b16 %v49
    %v470 = vunpack.c.l.b16 %v50
    %v471 = vunpack.c.l.b16 %v51
    %v472 = vunpack.c.l.b16 %v52
    %v473 = vunpack.c.l.b16 %v53
    %v474 = vunpack.c.l.b16 %v54
    %v475 = vunpack.c.l.b16 %v55
    %v476 = vunpack.c.l.b16 %v56
    %v477 = vunpack.c.l.b16 %v57
    %v478 = vunpack.c.l.b16 %v58
    %v479 = vunpack.c.l.b16 %v59
    %v480 = vunpack.c.l.b16 %v60
    %v481 = vunpack.c.l.b16 %v61
    %v482 = vunpack.c.l.b16 %v62
    %v483 = vunpack.c.l.b16 %v63
    %v484 = vunpack.c.l.b16 %v64
    %v485 = vunpack.c.l.b16 %v65
    %v486 = vunpack.c.l.b16 %v66
    %v487 = vunpack.c.l.b16 %v67
    %v488 = vunpack.c.l.b16 %v68
    %v489 = vunpack.c.l.b16 %v69
    %v490 = vunpack.c.l.b16 %v70
    %v491 = vunpack.c.l.b16 %v71
    %v492 = vunpack.c.l.b16 %v72
    %v493 = vunpack.c.l.b16 %v73
    %v494 = vunpack.c.l.b16 %v74
    %v495 = vunpack.c.l.b16 %v75
    %v496 = vunpack.c.l.b16 %v76
    %v497 = vunpack.c.l.b16 %v77
    %v498 = vunpack.c.l.b16 %v78
    %v499 = vunpack.c.l.b16 %v79
    %v500 = vunpack.c.l.b16 %v80
    %v501 = vunpack.c.l.b16 %v81
    %v502 = vunpack.c.l.b16 %v82
    %v503 = vunpack.c.l.b16 %v83
    %v504 = vunpack.c.l.b16 %v84
    %v505 = vunpack.c.l.b16 %v85
    %v506 = vunpack.c.l.b16 %v86
    %v507 = vunpack.c.l.b16 %v87
    %v508 = vunpack.c.l.b16 %v88
    %v509 = vunpack.c.l.b16 %v89
    %v510 = vunpack.c.l.b16 %v90
    %v511 = vunpack.c.l.b16 %v91
    %v512 = vunpack.c.l.b16 %v92
    %v513 = vunpack.c.l.b16 %v93
    %v514 = vunpack.c.l.b16 %v94
    %v515 = vunpack.c.l.b16 %v95
    %v516 = vunpack.c.l.b16 %v96
    %v517 = vunpack.c.l.b16 %v97
    %v518 = vunpack.c.l.b16 %v98
    %v519 = vunpack.c.l.b16 %v99
    %v520 = vunpack.c.l.b16 %v100
    %v521 = vunpack.c.l.b16 %v101
    %v522 = vunpack.c.l.b16 %v102
    %v523 = vunpack.c.l.b16 %v103
    %v524 = vunpack.c.l.b16 %v104
    %v525 = vunpack.c.l.b16 %v105
    %v526 = vunpack.c.l.b16 %v106
    %v527 = vunpack.c.l.b16 %v107
    %v528 = vunpack.c.l.b16 %v108
    %v529 = vunpack.c.l.b16 %v109
    %v530 = vunpack.c.l.b16 %v110
    %v531 = vunpack.c.l.b16 %v111
    %v532 = vunpack.c.l.b16 %v112
    %v533 = vunpack.c.l.b16 %v113
    %v534 = vunpack.c.l.b16 %v114
    %v535 = vunpack.c.l.b16 %v115
    %v536 = vunpack.c.l.b16 %v116
    %v537 = vunpack.c.l.b16 %v117
    %v538 = vunpack.c.l.b16 %v118
    %v539 = vunpack.c.l.b16 %v119
    %v540 = vunpack.c.l.b16 %v120
    %v541 = vunpack.c.l.b16 %v121
    %v542 = vunpack.c.l.b16 %v122
    %v543 = vunpack.c.l.b16 %v123
    %v544 = vunpack.c.l.b16 %v124
    %v545 = vunpack.c.l.b16 %v125
    %v546 = vunpack.c.l.b16 %v126
    %v547 = vunpack.c.l.b16 %v127
    %v548 = vunpack.c.l.b16 %v128
    %v549 = vunpack.c.l.b16 %v129
    %v550 = vunpack.c.l.b16 %v130
    %v551 = vunpack.c.l.b16 %v131
    %v552 = vunpack.c.l.b16 %v132
    %v553 = vunpack.c.l.b16 %v133
    %v554 = vunpack.c.l.b16 %v134
    %v555 = vunpack.c.l.b16 %v135
    %v556 = vunpack.c.l.b16 %v136
    %v557 = vunpack.c.l.b16 %v137
    %v558 = vunpack.c.l.b16 %v138
    %v559 = vunpack.c.l.b16 %v139
    %v560 = vunpack.c.l.b16 %v140
    %v561 = vunpack.c.l.b16 %v141
    %v562 = vunpack.c.l.b16 %v142
    %v563 = vunpack.c.l.b16 %v143
    %v564 = vunpack.c.l.b16 %v144
    %v565 = vunpack.c.l.b16 %v145
    %v566 = vunpack.c.l.b16 %v146
    %v567 = vunpack.c.l.b16 %v147
    %v568 = vunpack.c.l.b16 %v148
    %v569 = vunpack.c.l.b16 %v149
    %v570 = vunpack.c.l.b16 %v150
    %v571 = vunpack.c.l.b16 %v151
    %v572 = vunpack.c.l.b16 %v152
    %v573 = vunpack.c.l.b16 %v153
    %v574 = vunpack.c.l.b16 %v154
    %v575 = vunpack.c.l.b16 %v155
    %v576 = vunpack.c.l.b16 %v156
    %v577 = vunpack.c.l.b16 %v157
    %v578 = vunpack.c.l.b16 %v158
    %v579 = vunpack.c.l.b16 %v159
    %v580 = vunpack.c.l.b16 %v160
    %v581 = vunpack.c.l.b16 %v161
    %v582 = vunpack.c.l.b16 %v162
    %v583 = vunpack.c.l.b16 %v163
    %v584 = vunpack.c.l.b16 %v164
    %v585 = vunpack.c.l.b16 %v165
    %v586 = vunpack.c.l.b16 %v166
    %v587 = vunpack.c.l.b16 %v167
    %v588 = vunpack.c.l.b16 %v168
    %v589 = vunpack.c.l.b16 %v169
    %v590 = vunpack.c.l.b16 %v170
    %v591 = vunpack.c.l.b16 %v171
    %v592 = vunpack.c.l.b16 %v172
    %v593 = vunpack.c.l.b16 %v173
    %v594 = vunpack.c.l.b16 %v174
    %v595 = vunpack.c.l.b16 %v175
    %v596 = vunpack.c.l.b16 %v176
    %v597 = vunpack.c.l.b16 %v177
    %v598 = vunpack.c.l.b16 %v178
    %v599 = vunpack.c.l.b16 %v179
    %v600 = vunpack.c.l.b16 %v180
    %v601 = vunpack.c.l.b16 %v181
    %v602 = vunpack.c.l.b16 %v182
    %v603 = vunpack.c.l.b16 %v183
    %v604 = vunpack.c.l.b16 %v184
    %v605 = vunpack.c.l.b16 %v185
    %v606 = vunpack.c.l.b16 %v186
    %v607 = vunpack.c.l.b16 %v187
    %v608 = vunpack.c.l.b16 %v188
    %v609 = vunpack.c.l.b16 %v189
    %v610 = vunpack.c.l.b16 %v190
    %v611 = vunpack.c.l.b16 %v191
    %v612 = vunpack.c.l.b16 %v192
    %v613 = vunpack.c.l.b16 %v193
    %v614 = vunpack.c.l.b16 %v194
    %v615 = vunpack.c.l.b16 %v195
    %v616 = vunpack.c.l.b16 %v196
    %v617 = vunpack.c.l.b16 %v197
    %v618 = vunpack.c.l.b16 %v198
    %v619 = vunpack.c.l.b16 %v199
    %v620 = vunpack.c.l.b16 %v200
    %v621 = vunpack.c.l.b16 %v201
    %v622 = vunpack.c.l.b16 %v202
    %v623 = vunpack.c.l.b16 %v203
    %v624 = vunpack.c.l.b16 %v204
    %v625 = vunpack.c.l.b16 %v205
    %v626 = vunpack.c.l.b16 %v206
    %v627 = vunpack.c.l.b16 %v207
    %v628 = vunpack.c.l.b16 %v208
    %v629 = vunpack.c.l.b16 %v209
    %v630 = vunpack.c.l.b16 %v210
    %v631 = vunpack.c.l.b16 %v211
    %v632 = vunpack.c.l.b16 %v212
    %v633 = vunpack.c.l.b16 %v213
    %v634 = vunpack.c.l.b16 %v214
    %v635 = vunpack.c.l.b16 %v215
    %v636 = vunpack.c.l.b16 %v216
    %v637 = vunpack.c.l.b16 %v217
    %v638 = vunpack.c.l.b16 %v218
    %v639 = vunpack.c.l.b16 %v219
    %v640 = vunpack.c.l.b16 %v220
    %v641 = vunpack.c.l.b16 %v221
    %v642 = vunpack.c.l.b16 %v222
    %v643 = vunpack.c.l.b16 %v223
    %v644 = vunpack.c.l.b16 %v224
    %v645 = vunpack.c.l.b16 %v225
    %v646 = vunpack.c.l.b16 %v226
    %v647 = vunpack.c.l.b16 %v227
    %v648 = vunpack.c.l.b16 %v228
    %v649 = vunpack.c.l.b16 %v229
    %v650 = vunpack.c.l.b16 %v230
    %v651 = vunpack.c.l.b16 %v231
    %v652 = vunpack.c.l.b16 %v232
    %v653 = vunpack.c.l.b16 %v233
    %v654 = vunpack.c.l.b16 %v234
    %v655 = vunpack.c.l.b16 %v235
    %v656 = vunpack.c.l.b16 %v236
    %v657 = vunpack.c.l.b16 %v237
    %v658 = vunpack.c.l.b16 %v238
    %v659 = vunpack.c.l.b16 %v239
    %v660 = vunpack.c.l.b16 %v240
    %v661 = vunpack.c.l.b16 %v241
    %v662 = vunpack.c.l.b16 %v242
    %v663 = vunpack.c.l.b16 %v243
    %v664 = vunpack.c.l.b16 %v244
    %v665 = vunpack.c.l.b16 %v245
    %v666 = vunpack.c.l.b16 %v246
    %v667 = vunpack.c.l.b16 %v247
    %v668 = vpack.c.b16 %v461, %v460
    %v669 = vpack.c.b16 %v463, %v462
    %v670 = vpack.c.b16 %v465, %v464
    %v671 = vpack.c.b16 %v467, %v466
    %v672 = vpack.c.b16 %v469, %v468
    %v673 = vpack.c.b16 %v471, %v470
    %v674 = vpack.c.b16 %v473, %v472
    %v675 = vpack.c.b16 %v475, %v474
    %v676 = vpack.c.b16 %v477, %v476
    %v677 = vpack.c.b16 %v479, %v478
    %v678 = vpack.c.b16 %v481, %v480
    %v679 = vpack.c.b16 %v483, %v482
    %v680 = vpack.c.b16 %v485, %v484
    %v681 = vpack.c.b16 %v487, %v486
    %v682 = vpack.c.b16 %v489, %v488
    %v683 = vpack.c.b16 %v491, %v490
    %v684 = vpack.c.b16 %v493, %v492
    %v685 = vpack.c.b16 %v495, %v494
    %v686 = vpack.c.b16 %v497, %v496
    %v687 = vpack.c.b16 %v499, %v498
    %v688 = vpack.c.b16 %v501, %v500
    %v689 = vpack.c.b16 %v503, %v502
    %v690 = vpack.c.b16 %v505, %v504
    %v691 = vpack.c.b16 %v507, %v506
    %v692 = vpack.c.b16 %v509, %v508
    %v693 = vpack.c.b16 %v511, %v510
    %v694 = vpack.c.b16 %v513, %v512
    %v695 = vpack.c.b16 %v515, %v514
    %v696 = vpack.c.b16 %v517, %v516
    %v697 = vpack.c.b16 %v519, %v518
    %v698 = vpack.c.b16 %v521, %v520
    %v699 = vpack.c.b16 %v523, %v522
    %v700 = vpack.c.b16 %v525, %v524
    %v701 = vpack.c.b16 %v527, %v526
    %v702 = vpack.c.b16 %v529, %v528
    %v703 = vpack.c.b16 %v531, %v530
    %v704 = vpack.c.b16 %v533, %v532
    %v705 = vpack.c.b16 %v535, %v534
    %v706 = vpack.c.b16 %v537, %v536
    %v707 = vpack.c.b16 %v539, %v538
    %v708 = vpack.c.b16 %v541, %v540
    %v709 = vpack.c.b16 %v543, %v542
    %v710 = vpack.c.b16 %v545, %v544
    %v711 = vpack.c.b16 %v547, %v546
    %v712 = vpack.c.b16 %v549, %v548
    %v713 = vpack.c.b16 %v551, %v550
    %v714 = vpack.c.b16 %v553, %v552
    %v715 = vpack.c.b16 %v555, %v554
    %v716 = vpack.c.b16 %v557, %v556
    %v717 = vpack.c.b16 %v559, %v558
    %v718 = vpack.c.b16 %v561, %v560
    %v719 = vpack.c.b16 %v563, %v562
    %v720 = vpack.c.b16 %v565, %v564
    %v721 = vpack.c.b16 %v567, %v566
    %v722 = vpack.c.b16 %v569, %v568
    %v723 = vpack.c.b16 %v571, %v570
    %v724 = vpack.c.b16 %v573, %v572
    %v725 = vpack.c.b16 %v575, %v574
    %v726 = vpack.c.b16 %v577, %v576
    %v727 = vpack.c.b16 %v579, %v578
    %v728 = vpack.c.b16 %v581, %v580
    %v729 = vpack.c.b16 %v583, %v582
    %v730 = vpack.c.b16 %v585, %v584
    %v731 = vpack.c.b16 %v587, %v586
    %v732 = vpack.c.b16 %v589, %v588
    %v733 = vpack.c.b16 %v591, %v590
    %v734 = vpack.c.b16 %v593, %v592
    %v735 = vpack.c.b16 %v595, %v594
    %v736 = vpack.c.b16 %v597, %v596
    %v737 = vpack.c.b16 %v599, %v598
    %v738 = vpack.c.b16 %v601, %v600
    %v739 = vpack.c.b16 %v603, %v602
    %v740 = vpack.c.b16 %v605, %v604
    %v741 = vpack.c.b16 %v607, %v606
    %v742 = vpack.c.b16 %v609, %v608
    %v743 = vpack.c.b16 %v611, %v610
    %v744 = vpack.c.b16 %v613, %v612
    %v745 = vpack.c.b16 %v615, %v614
    %v746 = vpack.c.b16 %v617, %v616
    %v747 = vpack.c.b16 %v619, %v618
    %v748 = vpack.c.b16 %v621, %v620
    %v749 = vpack.c.b16 %v623, %v622
    %v750 = vpack.c.b16 %v625, %v624
    %v751 = vpack.c.b16 %v627, %v626
    %v752 = vpack.c.b16 %v629, %v628
    %v753 = vpack.c.b16 %v631, %v630
    %v754 = vpack.c.b16 %v633, %v632
    %v755 = vpack.c.b16 %v635, %v634
    %v756 = vpack.c.b16 %v637, %v636
    %v757 = vpack.c.b16 %v639, %v638
    %v758 = vpack.c.b16 %v641, %v640
    %v759 = vpack.c.b16 %v643, %v642
    %v760 = vpack.c.b16 %v645, %v644
    %v761 = vpack.c.b16 %v647, %v646
    %v762 = vpack.c.b16 %v649, %v648
    %v763 = vpack.c.b16 %v651, %v650
    %v764 = vpack.c.b16 %v653, %v652
    %v765 = vpack.c.b16 %v655, %v654
    %v766 = vpack.c.b16 %v657, %v656
    %v767 = vpack.c.b16 %v659, %v658
    %v768 = vpack.c.b16 %v661, %v660
    %v769 = vpack.c.b16 %v663, %v662
    %v770 = vpack.c.b16 %v665, %v664
    %v771 = vpack.c.b16 %v667, %v666
    %v776 = vunpack.c.l.b16 %v248
    %v777 = vunpack.c.l.b16 %v249
    %v778 = vunpack.c.l.b16 %v250
    %v779 = vunpack.c.l.b16 %v251
    %v780 = vpack.c.b16 %v777, %v776
    %v781 = vpack.c.b16 %v779, %v778
    %vm784 = vcmask 261120
    %v786 = vsel %vm784, %v668, 0
    %v789 = vsel %vm784, %v669, 0
    %v792 = vsel %vm784, %v670, 0
    %v795 = vsel %vm784, %v671, 0
    %v798 = vsel %vm784, %v672, 0
    %v801 = vsel %vm784, %v673, 0
    %v804 = vsel %vm784, %v674, 0
    %v807 = vsel %vm784, %v675, 0
    %v810 = vsel %vm784, %v676, 0
    %v813 = vsel %vm784, %v677, 0
    %v816 = vsel %vm784, %v678, 0
    %v819 = vsel %vm784, %v679, 0
    %v822 = vsel %vm784, %v680, 0
    %v825 = vsel %vm784, %v681, 0
    %v828 = vsel %vm784, %v682, 0
    %v831 = vsel %vm784, %v683, 0
    %v834 = vsel %vm784, %v684, 0
    %v837 = vsel %vm784, %v685, 0
    %v840 = vsel %vm784, %v686, 0
    %v843 = vsel %vm784, %v687, 0
    %v846 = vsel %vm784, %v688, 0
    %v849 = vsel %vm784, %v689, 0
    %v852 = vsel %vm784, %v690, 0
    %v855 = vsel %vm784, %v691, 0
    %v858 = vsel %vm784, %v692, 0
    %v861 = vsel %vm784, %v693, 0
    %v864 = vsel %vm784, %v694, 0
    %v867 = vsel %vm784, %v695, 0
    %v870 = vsel %vm784, %v696, 0
    %v873 = vsel %vm784, %v697, 0
    %v876 = vsel %vm784, %v698, 0
    %v879 = vsel %vm784, %v699, 0
    %v882 = vsel %vm784, %v700, 0
    %v885 = vsel %vm784, %v701, 0
    %v888 = vsel %vm784, %v702, 0
    %v891 = vsel %vm784, %v703, 0
    %v894 = vsel %vm784, %v704, 0
    %v897 = vsel %vm784, %v705, 0
    %v900 = vsel %vm784, %v706, 0
    %v903 = vsel %vm784, %v707, 0
    %v906 = vsel %vm784, %v708, 0
    %v909 = vsel %vm784, %v709, 0
    %v912 = vsel %vm784, %v710, 0
    %v915 = vsel %vm784, %v711, 0
    %v918 = vsel %vm784, %v712, 0
    %v921 = vsel %vm784, %v713, 0
    %v924 = vsel %vm784, %v714, 0
    %v927 = vsel %vm784, %v715, 0
    %v930 = vsel %vm784, %v716, 0
    %v933 = vsel %vm784, %v717, 0
    %v936 = vsel %vm784, %v718, 0
    %v939 = vsel %vm784, %v719, 0
    %v942 = vsel %vm784, %v720, 0
    %v945 = vsel %vm784, %v721, 0
    %v948 = vsel %vm784, %v722, 0
    %v951 = vsel %vm784, %v723, 0
    %v954 = vsel %vm784, %v724, 0
    %v957 = vsel %vm784, %v725, 0
    %v960 = vsel %vm784, %v726, 0
    %v963 = vsel %vm784, %v727, 0
    %v966 = vsel %vm784, %v728, 0
    %v969 = vsel %vm784, %v729, 0
    %v972 = vsel %vm784, %v730, 0
    %v975 = vsel %vm784, %v731, 0
    %v978 = vsel %vm784, %v732, 0
    %v981 = vsel %vm784, %v733, 0
    %v984 = vsel %vm784, %v734, 0
    %v987 = vsel %vm784, %v735, 0
    %v990 = vsel %vm784, %v736, 0
    %v993 = vsel %vm784, %v737, 0
    %v996 = vsel %vm784, %v738, 0
    %v999 = vsel %vm784, %v739, 0
    %v1002 = vsel %vm784, %v740, 0
    %v1005 = vsel %vm784, %v741, 0
    %v1008 = vsel %vm784, %v742, 0
    %v1011 = vsel %vm784, %v743, 0
    %v1014 = vsel %vm784, %v744, 0
    %v1017 = vsel %vm784, %v745, 0
    %v1020 = vsel %vm784, %v746, 0
    %v1023 = vsel %vm784, %v747, 0
    %v1026 = vsel %vm784, %v748, 0
    %v1029 = vsel %vm784, %v749, 0
    %v1032 = vsel %vm784, %v750, 0
    %v1035 = vsel %vm784, %v751, 0
    %v1038 = vsel %vm784, %v752, 0
    %v1041 = vsel %vm784, %v753, 0
    %v1044 = vsel %vm784, %v754, 0
    %v1047 = vsel %vm784, %v755, 0
    %v1050 = vsel %vm784, %v756, 0
    %v1053 = vsel %vm784, %v757, 0
    %v1056 = vsel %vm784, %v758, 0
    %v1059 = vsel %vm784, %v759, 0
    %v1062 = vsel %vm784, %v760, 0
    %v1065 = vsel %vm784, %v761, 0
    %v1068 = vsel %vm784, %v762, 0
    %v1071 = vsel %vm784, %v763, 0
    %v1074 = vsel %vm784, %v764, 0
    %v1077 = vsel %vm784, %v765, 0
    %v1080 = vsel %vm784, %v766, 0
    %v1083 = vsel %vm784, %v767, 0
    %v1086 = vsel %vm784, %v768, 0
    %v1089 = vsel %vm784, %v769, 0
    %v1092 = vsel %vm784, %v770, 0
    %v1095 = vsel %vm784, %v771, 0
    %1097 = vmatprep.subr.bf16.mxu0 0
    %1098 = vmatpush1.bf16.msra.mxu0 0
    %1099 = vmatprep.subr.bf16.mxu0 0
    %1100 = vmatpush1.bf16.msra.mxu0 0
    %1101 = vmatprep.subr.bf16.mxu0 0
    %1102 = vmatpush1.bf16.msra.mxu0 0
    %1103 = vmatprep.subr.bf16.mxu0 0
    %1104 = vmatpush1.bf16.msra.mxu0 0
    %1105 = vmatprep.subr.bf16.mxu0 0
    %1106 = vmatpush1.bf16.msra.mxu0 0
    %1107 = vmatprep.subr.bf16.mxu0 0
    %1108 = vmatpush1.bf16.msra.mxu0 0
    %1109 = vmatprep.subr.bf16.mxu0 0
    %1110 = vmatpush1.bf16.msra.mxu0 %v781
    %1111 = vmatprep.subr.bf16.mxu0 0
    %1112 = vmatpush1.bf16.msra.mxu0 %v780
    %1113 = vmatprep.subr.bf16.mxu0 0
    %1114 = vmatpush2.bf16.msra.mxu0 0
    %1115 = vmatprep.subr.bf16.mxu0 0
    %1116 = vmatpush2.bf16.msra.mxu0 0
    %1117 = vmatprep.subr.bf16.mxu0 0
    %1118 = vmatpush2.bf16.msra.mxu0 0
    %1119 = vmatprep.subr.bf16.mxu0 0
    %1120 = vmatpush2.bf16.msra.mxu0 0
    %1121 = vmatprep.subr.bf16.mxu0 0
    %1122 = vmatpush2.bf16.msra.mxu0 0
    %1123 = vmatprep.subr.bf16.mxu0 0
    %1124 = vmatpush2.bf16.msra.mxu0 0
    %1125 = vmatprep.subr.bf16.mxu0 0
    %1126 = vmatpush2.bf16.msra.mxu0 0
    %1127 = vmatprep.subr.bf16.mxu0 0
    %1128 = vmatpush2.bf16.msra.mxu0 0
    %1129 = vmatprep.mubr.bf16.mxu0 0
    %1130 = vmatmul.mubr.bf16.gmra.mxu0 %v786
    %v1131 = vpop.f32.mrf.mxu0
    %v1132 = vadd.f32 0.0, %v1131
    %v1133 = vpop.f32.mrf.mxu0
    %v1134 = vpop.f32.mrf.mxu0
    %v1135 = vadd.f32 0.0, %v1134
    %v1136 = vpop.f32.mrf.mxu0
    %1137 = vmatprep.mubr.bf16.mxu0 0
    %1138 = vmatmul.mubr.bf16.gmra.mxu0 %v789
    %v1139 = vpop.f32.mrf.mxu0
    %v1140 = vadd.f32 0.0, %v1139
    %v1141 = vpop.f32.mrf.mxu0
    %v1142 = vpop.f32.mrf.mxu0
    %v1143 = vadd.f32 0.0, %v1142
    %v1144 = vpop.f32.mrf.mxu0
    %1145 = vmatprep.mubr.bf16.mxu0 0
    %1146 = vmatmul.mubr.bf16.gmra.mxu0 %v792
    %v1147 = vpop.f32.mrf.mxu0
    %v1148 = vadd.f32 0.0, %v1147
    %v1149 = vpop.f32.mrf.mxu0
    %v1150 = vpop.f32.mrf.mxu0
    %v1151 = vadd.f32 0.0, %v1150
    %v1152 = vpop.f32.mrf.mxu0
    %1153 = vmatprep.mubr.bf16.mxu0 0
    %1154 = vmatmul.mubr.bf16.gmra.mxu0 %v795
    %v1155 = vpop.f32.mrf.mxu0
    %v1156 = vadd.f32 0.0, %v1155
    %v1157 = vpop.f32.mrf.mxu0
    %v1158 = vpop.f32.mrf.mxu0
    %v1159 = vadd.f32 0.0, %v1158
    %v1160 = vpop.f32.mrf.mxu0
    %1161 = vmatprep.mubr.bf16.mxu0 0
    %1162 = vmatmul.mubr.bf16.gmra.mxu0 %v798
    %v1163 = vpop.f32.mrf.mxu0
    %v1164 = vadd.f32 0.0, %v1163
    %v1165 = vpop.f32.mrf.mxu0
    %v1166 = vpop.f32.mrf.mxu0
    %v1167 = vadd.f32 0.0, %v1166
    %v1168 = vpop.f32.mrf.mxu0
    %1169 = vmatprep.mubr.bf16.mxu0 0
    %1170 = vmatmul.mubr.bf16.gmra.mxu0 %v801
    %v1171 = vpop.f32.mrf.mxu0
    %v1172 = vadd.f32 0.0, %v1171
    %v1173 = vpop.f32.mrf.mxu0
    %v1174 = vpop.f32.mrf.mxu0
    %v1175 = vadd.f32 0.0, %v1174
    %v1176 = vpop.f32.mrf.mxu0
    %1177 = vmatprep.mubr.bf16.mxu0 0
    %1178 = vmatmul.mubr.bf16.gmra.mxu0 %v804
    %v1179 = vpop.f32.mrf.mxu0
    %v1180 = vadd.f32 0.0, %v1179
    %v1181 = vpop.f32.mrf.mxu0
    %v1182 = vpop.f32.mrf.mxu0
    %v1183 = vadd.f32 0.0, %v1182
    %v1184 = vpop.f32.mrf.mxu0
    %1185 = vmatprep.mubr.bf16.mxu0 0
    %1186 = vmatmul.mubr.bf16.gmra.mxu0 %v807
    %v1187 = vpop.f32.mrf.mxu0
    %v1188 = vadd.f32 0.0, %v1187
    %v1189 = vpop.f32.mrf.mxu0
    %v1190 = vpop.f32.mrf.mxu0
    %v1191 = vadd.f32 0.0, %v1190
    %v1192 = vpop.f32.mrf.mxu0
    %1193 = vmatprep.mubr.bf16.mxu0 0
    %1194 = vmatmul.mubr.bf16.gmra.mxu0 %v810
    %v1195 = vpop.f32.mrf.mxu0
    %v1196 = vadd.f32 0.0, %v1195
    %v1197 = vpop.f32.mrf.mxu0
    %v1198 = vpop.f32.mrf.mxu0
    %v1199 = vadd.f32 0.0, %v1198
    %v1200 = vpop.f32.mrf.mxu0
    %1201 = vmatprep.mubr.bf16.mxu0 0
    %1202 = vmatmul.mubr.bf16.gmra.mxu0 %v813
    %v1203 = vpop.f32.mrf.mxu0
    %v1204 = vadd.f32 0.0, %v1203
    %v1205 = vpop.f32.mrf.mxu0
    %v1206 = vpop.f32.mrf.mxu0
    %v1207 = vadd.f32 0.0, %v1206
    %v1208 = vpop.f32.mrf.mxu0
    %1209 = vmatprep.mubr.bf16.mxu0 0
    %1210 = vmatmul.mubr.bf16.gmra.mxu0 %v816
    %v1211 = vpop.f32.mrf.mxu0
    %v1212 = vadd.f32 0.0, %v1211
    %v1213 = vpop.f32.mrf.mxu0
    %v1214 = vpop.f32.mrf.mxu0
    %v1215 = vadd.f32 0.0, %v1214
    %v1216 = vpop.f32.mrf.mxu0
    %1217 = vmatprep.mubr.bf16.mxu0 0
    %1218 = vmatmul.mubr.bf16.gmra.mxu0 %v819
    %v1219 = vpop.f32.mrf.mxu0
    %v1220 = vadd.f32 0.0, %v1219
    %v1221 = vpop.f32.mrf.mxu0
    %v1222 = vpop.f32.mrf.mxu0
    %v1223 = vadd.f32 0.0, %v1222
    %v1224 = vpop.f32.mrf.mxu0
    %1225 = vmatprep.mubr.bf16.mxu0 0
    %1226 = vmatmul.mubr.bf16.gmra.mxu0 %v822
    %v1227 = vpop.f32.mrf.mxu0
    %v1228 = vadd.f32 0.0, %v1227
    %v1229 = vpop.f32.mrf.mxu0
    %v1230 = vpop.f32.mrf.mxu0
    %v1231 = vadd.f32 0.0, %v1230
    %v1232 = vpop.f32.mrf.mxu0
    %1233 = vmatprep.mubr.bf16.mxu0 0
    %1234 = vmatmul.mubr.bf16.gmra.mxu0 %v825
    %v1235 = vpop.f32.mrf.mxu0
    %v1236 = vadd.f32 0.0, %v1235
    %v1237 = vpop.f32.mrf.mxu0
    %v1238 = vpop.f32.mrf.mxu0
    %v1239 = vadd.f32 0.0, %v1238
    %v1240 = vpop.f32.mrf.mxu0
    %1241 = vmatprep.mubr.bf16.mxu0 0
    %1242 = vmatmul.mubr.bf16.gmra.mxu0 %v828
    %v1243 = vpop.f32.mrf.mxu0
    %v1244 = vadd.f32 0.0, %v1243
    %v1245 = vpop.f32.mrf.mxu0
    %v1246 = vpop.f32.mrf.mxu0
    %v1247 = vadd.f32 0.0, %v1246
    %v1248 = vpop.f32.mrf.mxu0
    %1249 = vmatprep.mubr.bf16.mxu0 0
    %1250 = vmatmul.mubr.bf16.gmra.mxu0 %v831
    %v1251 = vpop.f32.mrf.mxu0
    %v1252 = vadd.f32 0.0, %v1251
    %v1253 = vpop.f32.mrf.mxu0
    %v1254 = vpop.f32.mrf.mxu0
    %v1255 = vadd.f32 0.0, %v1254
    %v1256 = vpop.f32.mrf.mxu0
    %1257 = vmatprep.mubr.bf16.mxu0 0
    %1258 = vmatmul.mubr.bf16.gmra.mxu0 %v834
    %v1259 = vpop.f32.mrf.mxu0
    %v1260 = vadd.f32 0.0, %v1259
    %v1261 = vpop.f32.mrf.mxu0
    %v1262 = vpop.f32.mrf.mxu0
    %v1263 = vadd.f32 0.0, %v1262
    %v1264 = vpop.f32.mrf.mxu0
    %1265 = vmatprep.mubr.bf16.mxu0 0
    %1266 = vmatmul.mubr.bf16.gmra.mxu0 %v837
    %v1267 = vpop.f32.mrf.mxu0
    %v1268 = vadd.f32 0.0, %v1267
    %v1269 = vpop.f32.mrf.mxu0
    %v1270 = vpop.f32.mrf.mxu0
    %v1271 = vadd.f32 0.0, %v1270
    %v1272 = vpop.f32.mrf.mxu0
    %1273 = vmatprep.mubr.bf16.mxu0 0
    %1274 = vmatmul.mubr.bf16.gmra.mxu0 %v840
    %v1275 = vpop.f32.mrf.mxu0
    %v1276 = vadd.f32 0.0, %v1275
    %v1277 = vpop.f32.mrf.mxu0
    %v1278 = vpop.f32.mrf.mxu0
    %v1279 = vadd.f32 0.0, %v1278
    %v1280 = vpop.f32.mrf.mxu0
    %1281 = vmatprep.mubr.bf16.mxu0 0
    %1282 = vmatmul.mubr.bf16.gmra.mxu0 %v843
    %v1283 = vpop.f32.mrf.mxu0
    %v1284 = vadd.f32 0.0, %v1283
    %v1285 = vpop.f32.mrf.mxu0
    %v1286 = vpop.f32.mrf.mxu0
    %v1287 = vadd.f32 0.0, %v1286
    %v1288 = vpop.f32.mrf.mxu0
    %1289 = vmatprep.mubr.bf16.mxu0 0
    %1290 = vmatmul.mubr.bf16.gmra.mxu0 %v846
    %v1291 = vpop.f32.mrf.mxu0
    %v1292 = vadd.f32 0.0, %v1291
    %v1293 = vpop.f32.mrf.mxu0
    %v1294 = vpop.f32.mrf.mxu0
    %v1295 = vadd.f32 0.0, %v1294
    %v1296 = vpop.f32.mrf.mxu0
    %1297 = vmatprep.mubr.bf16.mxu0 0
    %1298 = vmatmul.mubr.bf16.gmra.mxu0 %v849
    %v1299 = vpop.f32.mrf.mxu0
    %v1300 = vadd.f32 0.0, %v1299
    %v1301 = vpop.f32.mrf.mxu0
    %v1302 = vpop.f32.mrf.mxu0
    %v1303 = vadd.f32 0.0, %v1302
    %v1304 = vpop.f32.mrf.mxu0
    %1305 = vmatprep.mubr.bf16.mxu0 0
    %1306 = vmatmul.mubr.bf16.gmra.mxu0 %v852
    %v1307 = vpop.f32.mrf.mxu0
    %v1308 = vadd.f32 0.0, %v1307
    %v1309 = vpop.f32.mrf.mxu0
    %v1310 = vpop.f32.mrf.mxu0
    %v1311 = vadd.f32 0.0, %v1310
    %v1312 = vpop.f32.mrf.mxu0
    %1313 = vmatprep.mubr.bf16.mxu0 0
    %1314 = vmatmul.mubr.bf16.gmra.mxu0 %v855
    %v1315 = vpop.f32.mrf.mxu0
    %v1316 = vadd.f32 0.0, %v1315
    %v1317 = vpop.f32.mrf.mxu0
    %v1318 = vpop.f32.mrf.mxu0
    %v1319 = vadd.f32 0.0, %v1318
    %v1320 = vpop.f32.mrf.mxu0
    %1321 = vmatprep.mubr.bf16.mxu0 0
    %1322 = vmatmul.mubr.bf16.gmra.mxu0 %v858
    %v1323 = vpop.f32.mrf.mxu0
    %v1324 = vadd.f32 0.0, %v1323
    %v1325 = vpop.f32.mrf.mxu0
    %v1326 = vpop.f32.mrf.mxu0
    %v1327 = vadd.f32 0.0, %v1326
    %v1328 = vpop.f32.mrf.mxu0
    %1329 = vmatprep.mubr.bf16.mxu0 0
    %1330 = vmatmul.mubr.bf16.gmra.mxu0 %v861
    %v1331 = vpop.f32.mrf.mxu0
    %v1332 = vadd.f32 0.0, %v1331
    %v1333 = vpop.f32.mrf.mxu0
    %v1334 = vpop.f32.mrf.mxu0
    %v1335 = vadd.f32 0.0, %v1334
    %v1336 = vpop.f32.mrf.mxu0
    %1337 = vmatprep.mubr.bf16.mxu0 0
    %1338 = vmatmul.mubr.bf16.gmra.mxu0 %v864
    %v1339 = vpop.f32.mrf.mxu0
    %v1340 = vadd.f32 0.0, %v1339
    %v1341 = vpop.f32.mrf.mxu0
    %v1342 = vpop.f32.mrf.mxu0
    %v1343 = vadd.f32 0.0, %v1342
    %v1344 = vpop.f32.mrf.mxu0
    %1345 = vmatprep.mubr.bf16.mxu0 0
    %1346 = vmatmul.mubr.bf16.gmra.mxu0 %v867
    %v1347 = vpop.f32.mrf.mxu0
    %v1348 = vadd.f32 0.0, %v1347
    %v1349 = vpop.f32.mrf.mxu0
    %v1350 = vpop.f32.mrf.mxu0
    %v1351 = vadd.f32 0.0, %v1350
    %v1352 = vpop.f32.mrf.mxu0
    %1353 = vmatprep.mubr.bf16.mxu0 0
    %1354 = vmatmul.mubr.bf16.gmra.mxu0 %v870
    %v1355 = vpop.f32.mrf.mxu0
    %v1356 = vadd.f32 0.0, %v1355
    %v1357 = vpop.f32.mrf.mxu0
    %v1358 = vpop.f32.mrf.mxu0
    %v1359 = vadd.f32 0.0, %v1358
    %v1360 = vpop.f32.mrf.mxu0
    %1361 = vmatprep.mubr.bf16.mxu0 0
    %1362 = vmatmul.mubr.bf16.gmra.mxu0 %v873
    %v1363 = vpop.f32.mrf.mxu0
    %v1364 = vadd.f32 0.0, %v1363
    %v1365 = vpop.f32.mrf.mxu0
    %v1366 = vpop.f32.mrf.mxu0
    %v1367 = vadd.f32 0.0, %v1366
    %v1368 = vpop.f32.mrf.mxu0
    %1369 = vmatprep.mubr.bf16.mxu0 0
    %1370 = vmatmul.mubr.bf16.gmra.mxu0 %v876
    %v1371 = vpop.f32.mrf.mxu0
    %v1372 = vadd.f32 0.0, %v1371
    %v1373 = vpop.f32.mrf.mxu0
    %v1374 = vpop.f32.mrf.mxu0
    %v1375 = vadd.f32 0.0, %v1374
    %v1376 = vpop.f32.mrf.mxu0
    %1377 = vmatprep.mubr.bf16.mxu0 0
    %1378 = vmatmul.mubr.bf16.gmra.mxu0 %v879
    %v1379 = vpop.f32.mrf.mxu0
    %v1380 = vadd.f32 0.0, %v1379
    %v1381 = vpop.f32.mrf.mxu0
    %v1382 = vpop.f32.mrf.mxu0
    %v1383 = vadd.f32 0.0, %v1382
    %v1384 = vpop.f32.mrf.mxu0
    %1385 = vmatprep.mubr.bf16.mxu0 0
    %1386 = vmatmul.mubr.bf16.gmra.mxu0 %v882
    %v1387 = vpop.f32.mrf.mxu0
    %v1388 = vadd.f32 0.0, %v1387
    %v1389 = vpop.f32.mrf.mxu0
    %v1390 = vpop.f32.mrf.mxu0
    %v1391 = vadd.f32 0.0, %v1390
    %v1392 = vpop.f32.mrf.mxu0
    %1393 = vmatprep.mubr.bf16.mxu0 0
    %1394 = vmatmul.mubr.bf16.gmra.mxu0 %v885
    %v1395 = vpop.f32.mrf.mxu0
    %v1396 = vadd.f32 0.0, %v1395
    %v1397 = vpop.f32.mrf.mxu0
    %v1398 = vpop.f32.mrf.mxu0
    %v1399 = vadd.f32 0.0, %v1398
    %v1400 = vpop.f32.mrf.mxu0
    %1401 = vmatprep.mubr.bf16.mxu0 0
    %1402 = vmatmul.mubr.bf16.gmra.mxu0 %v888
    %v1403 = vpop.f32.mrf.mxu0
    %v1404 = vadd.f32 0.0, %v1403
    %v1405 = vpop.f32.mrf.mxu0
    %v1406 = vpop.f32.mrf.mxu0
    %v1407 = vadd.f32 0.0, %v1406
    %v1408 = vpop.f32.mrf.mxu0
    %1409 = vmatprep.mubr.bf16.mxu0 0
    %1410 = vmatmul.mubr.bf16.gmra.mxu0 %v891
    %v1411 = vpop.f32.mrf.mxu0
    %v1412 = vadd.f32 0.0, %v1411
    %v1413 = vpop.f32.mrf.mxu0
    %v1414 = vpop.f32.mrf.mxu0
    %v1415 = vadd.f32 0.0, %v1414
    %v1416 = vpop.f32.mrf.mxu0
    %1417 = vmatprep.mubr.bf16.mxu0 0
    %1418 = vmatmul.mubr.bf16.gmra.mxu0 %v894
    %v1419 = vpop.f32.mrf.mxu0
    %v1420 = vadd.f32 0.0, %v1419
    %v1421 = vpop.f32.mrf.mxu0
    %v1422 = vpop.f32.mrf.mxu0
    %v1423 = vadd.f32 0.0, %v1422
    %v1424 = vpop.f32.mrf.mxu0
    %1425 = vmatprep.mubr.bf16.mxu0 0
    %1426 = vmatmul.mubr.bf16.gmra.mxu0 %v897
    %v1427 = vpop.f32.mrf.mxu0
    %v1428 = vadd.f32 0.0, %v1427
    %v1429 = vpop.f32.mrf.mxu0
    %v1430 = vpop.f32.mrf.mxu0
    %v1431 = vadd.f32 0.0, %v1430
    %v1432 = vpop.f32.mrf.mxu0
    %1433 = vmatprep.mubr.bf16.mxu0 0
    %1434 = vmatmul.mubr.bf16.gmra.mxu0 %v900
    %v1435 = vpop.f32.mrf.mxu0
    %v1436 = vadd.f32 0.0, %v1435
    %v1437 = vpop.f32.mrf.mxu0
    %v1438 = vpop.f32.mrf.mxu0
    %v1439 = vadd.f32 0.0, %v1438
    %v1440 = vpop.f32.mrf.mxu0
    %1441 = vmatprep.mubr.bf16.mxu0 0
    %1442 = vmatmul.mubr.bf16.gmra.mxu0 %v903
    %v1443 = vpop.f32.mrf.mxu0
    %v1444 = vadd.f32 0.0, %v1443
    %v1445 = vpop.f32.mrf.mxu0
    %v1446 = vpop.f32.mrf.mxu0
    %v1447 = vadd.f32 0.0, %v1446
    %v1448 = vpop.f32.mrf.mxu0
    %1449 = vmatprep.mubr.bf16.mxu0 0
    %1450 = vmatmul.mubr.bf16.gmra.mxu0 %v906
    %v1451 = vpop.f32.mrf.mxu0
    %v1452 = vadd.f32 0.0, %v1451
    %v1453 = vpop.f32.mrf.mxu0
    %v1454 = vpop.f32.mrf.mxu0
    %v1455 = vadd.f32 0.0, %v1454
    %v1456 = vpop.f32.mrf.mxu0
    %1457 = vmatprep.mubr.bf16.mxu0 0
    %1458 = vmatmul.mubr.bf16.gmra.mxu0 %v909
    %v1459 = vpop.f32.mrf.mxu0
    %v1460 = vadd.f32 0.0, %v1459
    %v1461 = vpop.f32.mrf.mxu0
    %v1462 = vpop.f32.mrf.mxu0
    %v1463 = vadd.f32 0.0, %v1462
    %v1464 = vpop.f32.mrf.mxu0
    %1465 = vmatprep.mubr.bf16.mxu0 0
    %1466 = vmatmul.mubr.bf16.gmra.mxu0 %v912
    %v1467 = vpop.f32.mrf.mxu0
    %v1468 = vadd.f32 0.0, %v1467
    %v1469 = vpop.f32.mrf.mxu0
    %v1470 = vpop.f32.mrf.mxu0
    %v1471 = vadd.f32 0.0, %v1470
    %v1472 = vpop.f32.mrf.mxu0
    %1473 = vmatprep.mubr.bf16.mxu0 0
    %1474 = vmatmul.mubr.bf16.gmra.mxu0 %v915
    %v1475 = vpop.f32.mrf.mxu0
    %v1476 = vadd.f32 0.0, %v1475
    %v1477 = vpop.f32.mrf.mxu0
    %v1478 = vpop.f32.mrf.mxu0
    %v1479 = vadd.f32 0.0, %v1478
    %v1480 = vpop.f32.mrf.mxu0
    %1481 = vmatprep.mubr.bf16.mxu0 0
    %1482 = vmatmul.mubr.bf16.gmra.mxu0 %v918
    %v1483 = vpop.f32.mrf.mxu0
    %v1484 = vadd.f32 0.0, %v1483
    %v1485 = vpop.f32.mrf.mxu0
    %v1486 = vpop.f32.mrf.mxu0
    %v1487 = vadd.f32 0.0, %v1486
    %v1488 = vpop.f32.mrf.mxu0
    %1489 = vmatprep.mubr.bf16.mxu0 0
    %1490 = vmatmul.mubr.bf16.gmra.mxu0 %v921
    %v1491 = vpop.f32.mrf.mxu0
    %v1492 = vadd.f32 0.0, %v1491
    %v1493 = vpop.f32.mrf.mxu0
    %v1494 = vpop.f32.mrf.mxu0
    %v1495 = vadd.f32 0.0, %v1494
    %v1496 = vpop.f32.mrf.mxu0
    %1497 = vmatprep.mubr.bf16.mxu0 0
    %1498 = vmatmul.mubr.bf16.gmra.mxu0 %v924
    %v1499 = vpop.f32.mrf.mxu0
    %v1500 = vadd.f32 0.0, %v1499
    %v1501 = vpop.f32.mrf.mxu0
    %v1502 = vpop.f32.mrf.mxu0
    %v1503 = vadd.f32 0.0, %v1502
    %v1504 = vpop.f32.mrf.mxu0
    %1505 = vmatprep.mubr.bf16.mxu0 0
    %1506 = vmatmul.mubr.bf16.gmra.mxu0 %v927
    %v1507 = vpop.f32.mrf.mxu0
    %v1508 = vadd.f32 0.0, %v1507
    %v1509 = vpop.f32.mrf.mxu0
    %v1510 = vpop.f32.mrf.mxu0
    %v1511 = vadd.f32 0.0, %v1510
    %v1512 = vpop.f32.mrf.mxu0
    %1513 = vmatprep.mubr.bf16.mxu0 0
    %1514 = vmatmul.mubr.bf16.gmra.mxu0 %v930
    %v1515 = vpop.f32.mrf.mxu0
    %v1516 = vadd.f32 0.0, %v1515
    %v1517 = vpop.f32.mrf.mxu0
    %v1518 = vpop.f32.mrf.mxu0
    %v1519 = vadd.f32 0.0, %v1518
    %v1520 = vpop.f32.mrf.mxu0
    %1521 = vmatprep.mubr.bf16.mxu0 0
    %1522 = vmatmul.mubr.bf16.gmra.mxu0 %v933
    %v1523 = vpop.f32.mrf.mxu0
    %v1524 = vadd.f32 0.0, %v1523
    %v1525 = vpop.f32.mrf.mxu0
    %v1526 = vpop.f32.mrf.mxu0
    %v1527 = vadd.f32 0.0, %v1526
    %v1528 = vpop.f32.mrf.mxu0
    %1529 = vmatprep.mubr.bf16.mxu0 0
    %1530 = vmatmul.mubr.bf16.gmra.mxu0 %v936
    %v1531 = vpop.f32.mrf.mxu0
    %v1532 = vadd.f32 0.0, %v1531
    %v1533 = vpop.f32.mrf.mxu0
    %v1534 = vpop.f32.mrf.mxu0
    %v1535 = vadd.f32 0.0, %v1534
    %v1536 = vpop.f32.mrf.mxu0
    %1537 = vmatprep.mubr.bf16.mxu0 0
    %1538 = vmatmul.mubr.bf16.gmra.mxu0 %v939
    %v1539 = vpop.f32.mrf.mxu0
    %v1540 = vadd.f32 0.0, %v1539
    %v1541 = vpop.f32.mrf.mxu0
    %v1542 = vpop.f32.mrf.mxu0
    %v1543 = vadd.f32 0.0, %v1542
    %v1544 = vpop.f32.mrf.mxu0
    %1545 = vmatprep.mubr.bf16.mxu0 0
    %1546 = vmatmul.mubr.bf16.gmra.mxu0 %v942
    %v1547 = vpop.f32.mrf.mxu0
    %v1548 = vadd.f32 0.0, %v1547
    %v1549 = vpop.f32.mrf.mxu0
    %v1550 = vpop.f32.mrf.mxu0
    %v1551 = vadd.f32 0.0, %v1550
    %v1552 = vpop.f32.mrf.mxu0
    %1553 = vmatprep.mubr.bf16.mxu0 0
    %1554 = vmatmul.mubr.bf16.gmra.mxu0 %v945
    %v1555 = vpop.f32.mrf.mxu0
    %v1556 = vadd.f32 0.0, %v1555
    %v1557 = vpop.f32.mrf.mxu0
    %v1558 = vpop.f32.mrf.mxu0
    %v1559 = vadd.f32 0.0, %v1558
    %v1560 = vpop.f32.mrf.mxu0
    %1561 = vmatprep.mubr.bf16.mxu0 0
    %1562 = vmatmul.mubr.bf16.gmra.mxu0 %v948
    %v1563 = vpop.f32.mrf.mxu0
    %v1564 = vadd.f32 0.0, %v1563
    %v1565 = vpop.f32.mrf.mxu0
    %v1566 = vpop.f32.mrf.mxu0
    %v1567 = vadd.f32 0.0, %v1566
    %v1568 = vpop.f32.mrf.mxu0
    %1569 = vmatprep.mubr.bf16.mxu0 0
    %1570 = vmatmul.mubr.bf16.gmra.mxu0 %v951
    %v1571 = vpop.f32.mrf.mxu0
    %v1572 = vadd.f32 0.0, %v1571
    %v1573 = vpop.f32.mrf.mxu0
    %v1574 = vpop.f32.mrf.mxu0
    %v1575 = vadd.f32 0.0, %v1574
    %v1576 = vpop.f32.mrf.mxu0
    %1577 = vmatprep.mubr.bf16.mxu0 0
    %1578 = vmatmul.mubr.bf16.gmra.mxu0 %v954
    %v1579 = vpop.f32.mrf.mxu0
    %v1580 = vadd.f32 0.0, %v1579
    %v1581 = vpop.f32.mrf.mxu0
    %v1582 = vpop.f32.mrf.mxu0
    %v1583 = vadd.f32 0.0, %v1582
    %v1584 = vpop.f32.mrf.mxu0
    %1585 = vmatprep.mubr.bf16.mxu0 0
    %1586 = vmatmul.mubr.bf16.gmra.mxu0 %v957
    %v1587 = vpop.f32.mrf.mxu0
    %v1588 = vadd.f32 0.0, %v1587
    %v1589 = vpop.f32.mrf.mxu0
    %v1590 = vpop.f32.mrf.mxu0
    %v1591 = vadd.f32 0.0, %v1590
    %v1592 = vpop.f32.mrf.mxu0
    %1593 = vmatprep.mubr.bf16.mxu0 0
    %1594 = vmatmul.mubr.bf16.gmra.mxu0 %v960
    %v1595 = vpop.f32.mrf.mxu0
    %v1596 = vadd.f32 0.0, %v1595
    %v1597 = vpop.f32.mrf.mxu0
    %v1598 = vpop.f32.mrf.mxu0
    %v1599 = vadd.f32 0.0, %v1598
    %v1600 = vpop.f32.mrf.mxu0
    %1601 = vmatprep.mubr.bf16.mxu0 0
    %1602 = vmatmul.mubr.bf16.gmra.mxu0 %v963
    %v1603 = vpop.f32.mrf.mxu0
    %v1604 = vadd.f32 0.0, %v1603
    %v1605 = vpop.f32.mrf.mxu0
    %v1606 = vpop.f32.mrf.mxu0
    %v1607 = vadd.f32 0.0, %v1606
    %v1608 = vpop.f32.mrf.mxu0
    %1609 = vmatprep.mubr.bf16.mxu0 0
    %1610 = vmatmul.mubr.bf16.gmra.mxu0 %v966
    %v1611 = vpop.f32.mrf.mxu0
    %v1612 = vadd.f32 0.0, %v1611
    %v1613 = vpop.f32.mrf.mxu0
    %v1614 = vpop.f32.mrf.mxu0
    %v1615 = vadd.f32 0.0, %v1614
    %v1616 = vpop.f32.mrf.mxu0
    %1617 = vmatprep.mubr.bf16.mxu0 0
    %1618 = vmatmul.mubr.bf16.gmra.mxu0 %v969
    %v1619 = vpop.f32.mrf.mxu0
    %v1620 = vadd.f32 0.0, %v1619
    %v1621 = vpop.f32.mrf.mxu0
    %v1622 = vpop.f32.mrf.mxu0
    %v1623 = vadd.f32 0.0, %v1622
    %v1624 = vpop.f32.mrf.mxu0
    %1625 = vmatprep.mubr.bf16.mxu0 0
    %1626 = vmatmul.mubr.bf16.gmra.mxu0 %v972
    %v1627 = vpop.f32.mrf.mxu0
    %v1628 = vadd.f32 0.0, %v1627
    %v1629 = vpop.f32.mrf.mxu0
    %v1630 = vpop.f32.mrf.mxu0
    %v1631 = vadd.f32 0.0, %v1630
    %v1632 = vpop.f32.mrf.mxu0
    %1633 = vmatprep.mubr.bf16.mxu0 0
    %1634 = vmatmul.mubr.bf16.gmra.mxu0 %v975
    %v1635 = vpop.f32.mrf.mxu0
    %v1636 = vadd.f32 0.0, %v1635
    %v1637 = vpop.f32.mrf.mxu0
    %v1638 = vpop.f32.mrf.mxu0
    %v1639 = vadd.f32 0.0, %v1638
    %v1640 = vpop.f32.mrf.mxu0
    %1641 = vmatprep.mubr.bf16.mxu0 0
    %1642 = vmatmul.mubr.bf16.gmra.mxu0 %v978
    %v1643 = vpop.f32.mrf.mxu0
    %v1644 = vadd.f32 0.0, %v1643
    %v1645 = vpop.f32.mrf.mxu0
    %v1646 = vpop.f32.mrf.mxu0
    %v1647 = vadd.f32 0.0, %v1646
    %v1648 = vpop.f32.mrf.mxu0
    %1649 = vmatprep.mubr.bf16.mxu0 0
    %1650 = vmatmul.mubr.bf16.gmra.mxu0 %v981
    %v1651 = vpop.f32.mrf.mxu0
    %v1652 = vadd.f32 0.0, %v1651
    %v1653 = vpop.f32.mrf.mxu0
    %v1654 = vpop.f32.mrf.mxu0
    %v1655 = vadd.f32 0.0, %v1654
    %v1656 = vpop.f32.mrf.mxu0
    %1657 = vmatprep.mubr.bf16.mxu0 0
    %1658 = vmatmul.mubr.bf16.gmra.mxu0 %v984
    %v1659 = vpop.f32.mrf.mxu0
    %v1660 = vadd.f32 0.0, %v1659
    %v1661 = vpop.f32.mrf.mxu0
    %v1662 = vpop.f32.mrf.mxu0
    %v1663 = vadd.f32 0.0, %v1662
    %v1664 = vpop.f32.mrf.mxu0
    %1665 = vmatprep.mubr.bf16.mxu0 0
    %1666 = vmatmul.mubr.bf16.gmra.mxu0 %v987
    %v1667 = vpop.f32.mrf.mxu0
    %v1668 = vadd.f32 0.0, %v1667
    %v1669 = vpop.f32.mrf.mxu0
    %v1670 = vpop.f32.mrf.mxu0
    %v1671 = vadd.f32 0.0, %v1670
    %v1672 = vpop.f32.mrf.mxu0
    %1673 = vmatprep.mubr.bf16.mxu0 0
    %1674 = vmatmul.mubr.bf16.gmra.mxu0 %v990
    %v1675 = vpop.f32.mrf.mxu0
    %v1676 = vadd.f32 0.0, %v1675
    %v1677 = vpop.f32.mrf.mxu0
    %v1678 = vpop.f32.mrf.mxu0
    %v1679 = vadd.f32 0.0, %v1678
    %v1680 = vpop.f32.mrf.mxu0
    %1681 = vmatprep.mubr.bf16.mxu0 0
    %1682 = vmatmul.mubr.bf16.gmra.mxu0 %v993
    %v1683 = vpop.f32.mrf.mxu0
    %v1684 = vadd.f32 0.0, %v1683
    %v1685 = vpop.f32.mrf.mxu0
    %v1686 = vpop.f32.mrf.mxu0
    %v1687 = vadd.f32 0.0, %v1686
    %v1688 = vpop.f32.mrf.mxu0
    %1689 = vmatprep.mubr.bf16.mxu0 0
    %1690 = vmatmul.mubr.bf16.gmra.mxu0 %v996
    %v1691 = vpop.f32.mrf.mxu0
    %v1692 = vadd.f32 0.0, %v1691
    %v1693 = vpop.f32.mrf.mxu0
    %v1694 = vpop.f32.mrf.mxu0
    %v1695 = vadd.f32 0.0, %v1694
    %v1696 = vpop.f32.mrf.mxu0
    %1697 = vmatprep.mubr.bf16.mxu0 0
    %1698 = vmatmul.mubr.bf16.gmra.mxu0 %v999
    %v1699 = vpop.f32.mrf.mxu0
    %v1700 = vadd.f32 0.0, %v1699
    %v1701 = vpop.f32.mrf.mxu0
    %v1702 = vpop.f32.mrf.mxu0
    %v1703 = vadd.f32 0.0, %v1702
    %v1704 = vpop.f32.mrf.mxu0
    %1705 = vmatprep.mubr.bf16.mxu0 0
    %1706 = vmatmul.mubr.bf16.gmra.mxu0 %v1002
    %v1707 = vpop.f32.mrf.mxu0
    %v1708 = vadd.f32 0.0, %v1707
    %v1709 = vpop.f32.mrf.mxu0
    %v1710 = vpop.f32.mrf.mxu0
    %v1711 = vadd.f32 0.0, %v1710
    %v1712 = vpop.f32.mrf.mxu0
    %1713 = vmatprep.mubr.bf16.mxu0 0
    %1714 = vmatmul.mubr.bf16.gmra.mxu0 %v1005
    %v1715 = vpop.f32.mrf.mxu0
    %v1716 = vadd.f32 0.0, %v1715
    %v1717 = vpop.f32.mrf.mxu0
    %v1718 = vpop.f32.mrf.mxu0
    %v1719 = vadd.f32 0.0, %v1718
    %v1720 = vpop.f32.mrf.mxu0
    %1721 = vmatprep.mubr.bf16.mxu0 0
    %1722 = vmatmul.mubr.bf16.gmra.mxu0 %v1008
    %v1723 = vpop.f32.mrf.mxu0
    %v1724 = vadd.f32 0.0, %v1723
    %v1725 = vpop.f32.mrf.mxu0
    %v1726 = vpop.f32.mrf.mxu0
    %v1727 = vadd.f32 0.0, %v1726
    %v1728 = vpop.f32.mrf.mxu0
    %1729 = vmatprep.mubr.bf16.mxu0 0
    %1730 = vmatmul.mubr.bf16.gmra.mxu0 %v1011
    %v1731 = vpop.f32.mrf.mxu0
    %v1732 = vadd.f32 0.0, %v1731
    %v1733 = vpop.f32.mrf.mxu0
    %v1734 = vpop.f32.mrf.mxu0
    %v1735 = vadd.f32 0.0, %v1734
    %v1736 = vpop.f32.mrf.mxu0
    %1737 = vmatprep.mubr.bf16.mxu0 0
    %1738 = vmatmul.mubr.bf16.gmra.mxu0 %v1014
    %v1739 = vpop.f32.mrf.mxu0
    %v1740 = vadd.f32 0.0, %v1739
    %v1741 = vpop.f32.mrf.mxu0
    %v1742 = vpop.f32.mrf.mxu0
    %v1743 = vadd.f32 0.0, %v1742
    %v1744 = vpop.f32.mrf.mxu0
    %1745 = vmatprep.mubr.bf16.mxu0 0
    %1746 = vmatmul.mubr.bf16.gmra.mxu0 %v1017
    %v1747 = vpop.f32.mrf.mxu0
    %v1748 = vadd.f32 0.0, %v1747
    %v1749 = vpop.f32.mrf.mxu0
    %v1750 = vpop.f32.mrf.mxu0
    %v1751 = vadd.f32 0.0, %v1750
    %v1752 = vpop.f32.mrf.mxu0
    %1753 = vmatprep.mubr.bf16.mxu0 0
    %1754 = vmatmul.mubr.bf16.gmra.mxu0 %v1020
    %v1755 = vpop.f32.mrf.mxu0
    %v1756 = vadd.f32 0.0, %v1755
    %v1757 = vpop.f32.mrf.mxu0
    %v1758 = vpop.f32.mrf.mxu0
    %v1759 = vadd.f32 0.0, %v1758
    %v1760 = vpop.f32.mrf.mxu0
    %1761 = vmatprep.mubr.bf16.mxu0 0
    %1762 = vmatmul.mubr.bf16.gmra.mxu0 %v1023
    %v1763 = vpop.f32.mrf.mxu0
    %v1764 = vadd.f32 0.0, %v1763
    %v1765 = vpop.f32.mrf.mxu0
    %v1766 = vpop.f32.mrf.mxu0
    %v1767 = vadd.f32 0.0, %v1766
    %v1768 = vpop.f32.mrf.mxu0
    %1769 = vmatprep.mubr.bf16.mxu0 0
    %1770 = vmatmul.mubr.bf16.gmra.mxu0 %v1026
    %v1771 = vpop.f32.mrf.mxu0
    %v1772 = vadd.f32 0.0, %v1771
    %v1773 = vpop.f32.mrf.mxu0
    %v1774 = vpop.f32.mrf.mxu0
    %v1775 = vadd.f32 0.0, %v1774
    %v1776 = vpop.f32.mrf.mxu0
    %1777 = vmatprep.mubr.bf16.mxu0 0
    %1778 = vmatmul.mubr.bf16.gmra.mxu0 %v1029
    %v1779 = vpop.f32.mrf.mxu0
    %v1780 = vadd.f32 0.0, %v1779
    %v1781 = vpop.f32.mrf.mxu0
    %v1782 = vpop.f32.mrf.mxu0
    %v1783 = vadd.f32 0.0, %v1782
    %v1784 = vpop.f32.mrf.mxu0
    %1785 = vmatprep.mubr.bf16.mxu0 0
    %1786 = vmatmul.mubr.bf16.gmra.mxu0 %v1032
    %v1787 = vpop.f32.mrf.mxu0
    %v1788 = vadd.f32 0.0, %v1787
    %v1789 = vpop.f32.mrf.mxu0
    %v1790 = vpop.f32.mrf.mxu0
    %v1791 = vadd.f32 0.0, %v1790
    %v1792 = vpop.f32.mrf.mxu0
    %1793 = vmatprep.mubr.bf16.mxu0 0
    %1794 = vmatmul.mubr.bf16.gmra.mxu0 %v1035
    %v1795 = vpop.f32.mrf.mxu0
    %v1796 = vadd.f32 0.0, %v1795
    %v1797 = vpop.f32.mrf.mxu0
    %v1798 = vpop.f32.mrf.mxu0
    %v1799 = vadd.f32 0.0, %v1798
    %v1800 = vpop.f32.mrf.mxu0
    %1801 = vmatprep.mubr.bf16.mxu0 0
    %1802 = vmatmul.mubr.bf16.gmra.mxu0 %v1038
    %v1803 = vpop.f32.mrf.mxu0
    %v1804 = vadd.f32 0.0, %v1803
    %v1805 = vpop.f32.mrf.mxu0
    %v1806 = vpop.f32.mrf.mxu0
    %v1807 = vadd.f32 0.0, %v1806
    %v1808 = vpop.f32.mrf.mxu0
    %1809 = vmatprep.mubr.bf16.mxu0 0
    %1810 = vmatmul.mubr.bf16.gmra.mxu0 %v1041
    %v1811 = vpop.f32.mrf.mxu0
    %v1812 = vadd.f32 0.0, %v1811
    %v1813 = vpop.f32.mrf.mxu0
    %v1814 = vpop.f32.mrf.mxu0
    %v1815 = vadd.f32 0.0, %v1814
    %v1816 = vpop.f32.mrf.mxu0
    %1817 = vmatprep.mubr.bf16.mxu0 0
    %1818 = vmatmul.mubr.bf16.gmra.mxu0 %v1044
    %v1819 = vpop.f32.mrf.mxu0
    %v1820 = vadd.f32 0.0, %v1819
    %v1821 = vpop.f32.mrf.mxu0
    %v1822 = vpop.f32.mrf.mxu0
    %v1823 = vadd.f32 0.0, %v1822
    %v1824 = vpop.f32.mrf.mxu0
    %1825 = vmatprep.mubr.bf16.mxu0 0
    %1826 = vmatmul.mubr.bf16.gmra.mxu0 %v1047
    %v1827 = vpop.f32.mrf.mxu0
    %v1828 = vadd.f32 0.0, %v1827
    %v1829 = vpop.f32.mrf.mxu0
    %v1830 = vpop.f32.mrf.mxu0
    %v1831 = vadd.f32 0.0, %v1830
    %v1832 = vpop.f32.mrf.mxu0
    %1833 = vmatprep.mubr.bf16.mxu0 0
    %1834 = vmatmul.mubr.bf16.gmra.mxu0 %v1050
    %v1835 = vpop.f32.mrf.mxu0
    %v1836 = vadd.f32 0.0, %v1835
    %v1837 = vpop.f32.mrf.mxu0
    %v1838 = vpop.f32.mrf.mxu0
    %v1839 = vadd.f32 0.0, %v1838
    %v1840 = vpop.f32.mrf.mxu0
    %1841 = vmatprep.mubr.bf16.mxu0 0
    %1842 = vmatmul.mubr.bf16.gmra.mxu0 %v1053
    %v1843 = vpop.f32.mrf.mxu0
    %v1844 = vadd.f32 0.0, %v1843
    %v1845 = vpop.f32.mrf.mxu0
    %v1846 = vpop.f32.mrf.mxu0
    %v1847 = vadd.f32 0.0, %v1846
    %v1848 = vpop.f32.mrf.mxu0
    %1849 = vmatprep.mubr.bf16.mxu0 0
    %1850 = vmatmul.mubr.bf16.gmra.mxu0 %v1056
    %v1851 = vpop.f32.mrf.mxu0
    %v1852 = vadd.f32 0.0, %v1851
    %v1853 = vpop.f32.mrf.mxu0
    %v1854 = vpop.f32.mrf.mxu0
    %v1855 = vadd.f32 0.0, %v1854
    %v1856 = vpop.f32.mrf.mxu0
    %1857 = vmatprep.mubr.bf16.mxu0 0
    %1858 = vmatmul.mubr.bf16.gmra.mxu0 %v1059
    %v1859 = vpop.f32.mrf.mxu0
    %v1860 = vadd.f32 0.0, %v1859
    %v1861 = vpop.f32.mrf.mxu0
    %v1862 = vpop.f32.mrf.mxu0
    %v1863 = vadd.f32 0.0, %v1862
    %v1864 = vpop.f32.mrf.mxu0
    %1865 = vmatprep.mubr.bf16.mxu0 0
    %1866 = vmatmul.mubr.bf16.gmra.mxu0 %v1062
    %v1867 = vpop.f32.mrf.mxu0
    %v1868 = vadd.f32 0.0, %v1867
    %v1869 = vpop.f32.mrf.mxu0
    %v1870 = vpop.f32.mrf.mxu0
    %v1871 = vadd.f32 0.0, %v1870
    %v1872 = vpop.f32.mrf.mxu0
    %1873 = vmatprep.mubr.bf16.mxu0 0
    %1874 = vmatmul.mubr.bf16.gmra.mxu0 %v1065
    %v1875 = vpop.f32.mrf.mxu0
    %v1876 = vadd.f32 0.0, %v1875
    %v1877 = vpop.f32.mrf.mxu0
    %v1878 = vpop.f32.mrf.mxu0
    %v1879 = vadd.f32 0.0, %v1878
    %v1880 = vpop.f32.mrf.mxu0
    %1881 = vmatprep.mubr.bf16.mxu0 0
    %1882 = vmatmul.mubr.bf16.gmra.mxu0 %v1068
    %v1883 = vpop.f32.mrf.mxu0
    %v1884 = vadd.f32 0.0, %v1883
    %v1885 = vpop.f32.mrf.mxu0
    %v1886 = vpop.f32.mrf.mxu0
    %v1887 = vadd.f32 0.0, %v1886
    %v1888 = vpop.f32.mrf.mxu0
    %1889 = vmatprep.mubr.bf16.mxu0 0
    %1890 = vmatmul.mubr.bf16.gmra.mxu0 %v1071
    %v1891 = vpop.f32.mrf.mxu0
    %v1892 = vadd.f32 0.0, %v1891
    %v1893 = vpop.f32.mrf.mxu0
    %v1894 = vpop.f32.mrf.mxu0
    %v1895 = vadd.f32 0.0, %v1894
    %v1896 = vpop.f32.mrf.mxu0
    %1897 = vmatprep.mubr.bf16.mxu0 0
    %1898 = vmatmul.mubr.bf16.gmra.mxu0 %v1074
    %v1899 = vpop.f32.mrf.mxu0
    %v1900 = vadd.f32 0.0, %v1899
    %v1901 = vpop.f32.mrf.mxu0
    %v1902 = vpop.f32.mrf.mxu0
    %v1903 = vadd.f32 0.0, %v1902
    %v1904 = vpop.f32.mrf.mxu0
    %1905 = vmatprep.mubr.bf16.mxu0 0
    %1906 = vmatmul.mubr.bf16.gmra.mxu0 %v1077
    %v1907 = vpop.f32.mrf.mxu0
    %v1908 = vadd.f32 0.0, %v1907
    %v1909 = vpop.f32.mrf.mxu0
    %v1910 = vpop.f32.mrf.mxu0
    %v1911 = vadd.f32 0.0, %v1910
    %v1912 = vpop.f32.mrf.mxu0
    %1913 = vmatprep.mubr.bf16.mxu0 0
    %1914 = vmatmul.mubr.bf16.gmra.mxu0 %v1080
    %v1915 = vpop.f32.mrf.mxu0
    %v1916 = vadd.f32 0.0, %v1915
    %v1917 = vpop.f32.mrf.mxu0
    %v1918 = vpop.f32.mrf.mxu0
    %v1919 = vadd.f32 0.0, %v1918
    %v1920 = vpop.f32.mrf.mxu0
    %1921 = vmatprep.mubr.bf16.mxu0 0
    %1922 = vmatmul.mubr.bf16.gmra.mxu0 %v1083
    %v1923 = vpop.f32.mrf.mxu0
    %v1924 = vadd.f32 0.0, %v1923
    %v1925 = vpop.f32.mrf.mxu0
    %v1926 = vpop.f32.mrf.mxu0
    %v1927 = vadd.f32 0.0, %v1926
    %v1928 = vpop.f32.mrf.mxu0
    %1929 = vmatprep.mubr.bf16.mxu0 0
    %1930 = vmatmul.mubr.bf16.gmra.mxu0 %v1086
    %v1931 = vpop.f32.mrf.mxu0
    %v1932 = vadd.f32 0.0, %v1931
    %v1933 = vpop.f32.mrf.mxu0
    %v1934 = vpop.f32.mrf.mxu0
    %v1935 = vadd.f32 0.0, %v1934
    %v1936 = vpop.f32.mrf.mxu0
    %1937 = vmatprep.mubr.bf16.mxu0 0
    %1938 = vmatmul.mubr.bf16.gmra.mxu0 %v1089
    %v1939 = vpop.f32.mrf.mxu0
    %v1940 = vadd.f32 0.0, %v1939
    %v1941 = vpop.f32.mrf.mxu0
    %v1942 = vpop.f32.mrf.mxu0
    %v1943 = vadd.f32 0.0, %v1942
    %v1944 = vpop.f32.mrf.mxu0
    %1945 = vmatprep.mubr.bf16.mxu0 0
    %1946 = vmatmul.mubr.bf16.gmra.mxu0 %v1092
    %v1947 = vpop.f32.mrf.mxu0
    %v1948 = vadd.f32 0.0, %v1947
    %v1949 = vpop.f32.mrf.mxu0
    %v1950 = vpop.f32.mrf.mxu0
    %v1951 = vadd.f32 0.0, %v1950
    %v1952 = vpop.f32.mrf.mxu0
    %1953 = vmatprep.mubr.bf16.mxu0 0
    %1954 = vmatmul.mubr.bf16.gmra.mxu0 %v1095
    %v1955 = vpop.f32.mrf.mxu0
    %v1956 = vadd.f32 0.0, %v1955
    %v1957 = vpop.f32.mrf.mxu0
    %v1958 = vpop.f32.mrf.mxu0
    %v1959 = vadd.f32 0.0, %v1958
    %v1960 = vpop.f32.mrf.mxu0
    %1961 = vdwg.mxu0
    %v1962 = vmax.f32 %v1132, %v1340
    %v1963 = vmax.f32 %v1135, %v1343
    %v1964 = vmax.f32 %v1140, %v1348
    %v1965 = vmax.f32 %v1143, %v1351
    %v1966 = vmax.f32 %v1148, %v1356
    %v1967 = vmax.f32 %v1151, %v1359
    %v1968 = vmax.f32 %v1156, %v1364
    %v1969 = vmax.f32 %v1159, %v1367
    %v1970 = vmax.f32 %v1164, %v1372
    %v1971 = vmax.f32 %v1167, %v1375
    %v1972 = vmax.f32 %v1172, %v1380
    %v1973 = vmax.f32 %v1175, %v1383
    %v1974 = vmax.f32 %v1180, %v1388
    %v1975 = vmax.f32 %v1183, %v1391
    %v1976 = vmax.f32 %v1188, %v1396
    %v1977 = vmax.f32 %v1191, %v1399
    %v1978 = vmax.f32 %v1196, %v1404
    %v1979 = vmax.f32 %v1199, %v1407
    %v1980 = vmax.f32 %v1204, %v1412
    %v1981 = vmax.f32 %v1207, %v1415
    %v1982 = vmax.f32 %v1212, %v1420
    %v1983 = vmax.f32 %v1215, %v1423
    %v1984 = vmax.f32 %v1220, %v1428
    %v1985 = vmax.f32 %v1223, %v1431
    %v1986 = vmax.f32 %v1228, %v1436
    %v1987 = vmax.f32 %v1231, %v1439
    %v1988 = vmax.f32 %v1236, %v1444
    %v1989 = vmax.f32 %v1239, %v1447
    %v1990 = vmax.f32 %v1244, %v1452
    %v1991 = vmax.f32 %v1247, %v1455
    %v1992 = vmax.f32 %v1252, %v1460
    %v1993 = vmax.f32 %v1255, %v1463
    %v1994 = vmax.f32 %v1260, %v1468
    %v1995 = vmax.f32 %v1263, %v1471
    %v1996 = vmax.f32 %v1268, %v1476
    %v1997 = vmax.f32 %v1271, %v1479
    %v1998 = vmax.f32 %v1276, %v1484
    %v1999 = vmax.f32 %v1279, %v1487
    %v2000 = vmax.f32 %v1284, %v1492
    %v2001 = vmax.f32 %v1287, %v1495
    %v2002 = vmax.f32 %v1292, %v1500
    %v2003 = vmax.f32 %v1295, %v1503
    %v2004 = vmax.f32 %v1300, %v1508
    %v2005 = vmax.f32 %v1303, %v1511
    %v2006 = vmax.f32 %v1308, %v1516
    %v2007 = vmax.f32 %v1311, %v1519
    %v2008 = vmax.f32 %v1316, %v1524
    %v2009 = vmax.f32 %v1319, %v1527
    %v2010 = vmax.f32 %v1324, %v1532
    %v2011 = vmax.f32 %v1327, %v1535
    %v2012 = vmax.f32 %v1332, %v1540
    %v2013 = vmax.f32 %v1335, %v1543
    %v2014 = vmax.f32 %v1548, %v1756
    %v2015 = vmax.f32 %v1551, %v1759
    %v2016 = vmax.f32 %v1556, %v1764
    %v2017 = vmax.f32 %v1559, %v1767
    %v2018 = vmax.f32 %v1564, %v1772
    %v2019 = vmax.f32 %v1567, %v1775
    %v2020 = vmax.f32 %v1572, %v1780
    %v2021 = vmax.f32 %v1575, %v1783
    %v2022 = vmax.f32 %v1580, %v1788
    %v2023 = vmax.f32 %v1583, %v1791
    %v2024 = vmax.f32 %v1588, %v1796
    %v2025 = vmax.f32 %v1591, %v1799
    %v2026 = vmax.f32 %v1596, %v1804
    %v2027 = vmax.f32 %v1599, %v1807
    %v2028 = vmax.f32 %v1604, %v1812
    %v2029 = vmax.f32 %v1607, %v1815
    %v2030 = vmax.f32 %v1612, %v1820
    %v2031 = vmax.f32 %v1615, %v1823
    %v2032 = vmax.f32 %v1620, %v1828
    %v2033 = vmax.f32 %v1623, %v1831
    %v2034 = vmax.f32 %v1628, %v1836
    %v2035 = vmax.f32 %v1631, %v1839
    %v2036 = vmax.f32 %v1636, %v1844
    %v2037 = vmax.f32 %v1639, %v1847
    %v2038 = vmax.f32 %v1644, %v1852
    %v2039 = vmax.f32 %v1647, %v1855
    %v2040 = vmax.f32 %v1652, %v1860
    %v2041 = vmax.f32 %v1655, %v1863
    %v2042 = vmax.f32 %v1660, %v1868
    %v2043 = vmax.f32 %v1663, %v1871
    %v2044 = vmax.f32 %v1668, %v1876
    %v2045 = vmax.f32 %v1671, %v1879
    %v2046 = vmax.f32 %v1676, %v1884
    %v2047 = vmax.f32 %v1679, %v1887
    %v2048 = vmax.f32 %v1684, %v1892
    %v2049 = vmax.f32 %v1687, %v1895
    %v2050 = vmax.f32 %v1692, %v1900
    %v2051 = vmax.f32 %v1695, %v1903
    %v2052 = vmax.f32 %v1700, %v1908
    %v2053 = vmax.f32 %v1703, %v1911
    %v2054 = vmax.f32 %v1708, %v1916
    %v2055 = vmax.f32 %v1711, %v1919
    %v2056 = vmax.f32 %v1716, %v1924
    %v2057 = vmax.f32 %v1719, %v1927
    %v2058 = vmax.f32 %v1724, %v1932
    %v2059 = vmax.f32 %v1727, %v1935
    %v2060 = vmax.f32 %v1732, %v1940
    %v2061 = vmax.f32 %v1735, %v1943
    %v2062 = vmax.f32 %v1740, %v1948
    %v2063 = vmax.f32 %v1743, %v1951
    %v2064 = vmax.f32 %v1748, %v1956
    %v2065 = vmax.f32 %v1751, %v1959
    %v2066 = vmax.f32 %v1962, %v2014
    %v2067 = vmax.f32 %v1963, %v2015
    %v2068 = vmax.f32 %v1964, %v2016
    %v2069 = vmax.f32 %v1965, %v2017
    %v2070 = vmax.f32 %v1966, %v2018
    %v2071 = vmax.f32 %v1967, %v2019
    %v2072 = vmax.f32 %v1968, %v2020
    %v2073 = vmax.f32 %v1969, %v2021
    %v2074 = vmax.f32 %v1970, %v2022
    %v2075 = vmax.f32 %v1971, %v2023
    %v2076 = vmax.f32 %v1972, %v2024
    %v2077 = vmax.f32 %v1973, %v2025
    %v2078 = vmax.f32 %v1974, %v2026
    %v2079 = vmax.f32 %v1975, %v2027
    %v2080 = vmax.f32 %v1976, %v2028
    %v2081 = vmax.f32 %v1977, %v2029
    %v2082 = vmax.f32 %v1978, %v2030
    %v2083 = vmax.f32 %v1979, %v2031
    %v2084 = vmax.f32 %v1980, %v2032
    %v2085 = vmax.f32 %v1981, %v2033
    %v2086 = vmax.f32 %v1982, %v2034
    %v2087 = vmax.f32 %v1983, %v2035
    %v2088 = vmax.f32 %v1984, %v2036
    %v2089 = vmax.f32 %v1985, %v2037
    %v2090 = vmax.f32 %v1986, %v2038
    %v2091 = vmax.f32 %v1987, %v2039
    %v2092 = vmax.f32 %v1988, %v2040
    %v2093 = vmax.f32 %v1989, %v2041
    %v2094 = vmax.f32 %v1990, %v2042
    %v2095 = vmax.f32 %v1991, %v2043
    %v2096 = vmax.f32 %v1992, %v2044
    %v2097 = vmax.f32 %v1993, %v2045
    %v2098 = vmax.f32 %v1994, %v2046
    %v2099 = vmax.f32 %v1995, %v2047
    %v2100 = vmax.f32 %v1996, %v2048
    %v2101 = vmax.f32 %v1997, %v2049
    %v2102 = vmax.f32 %v1998, %v2050
    %v2103 = vmax.f32 %v1999, %v2051
    %v2104 = vmax.f32 %v2000, %v2052
    %v2105 = vmax.f32 %v2001, %v2053
    %v2106 = vmax.f32 %v2002, %v2054
    %v2107 = vmax.f32 %v2003, %v2055
    %v2108 = vmax.f32 %v2004, %v2056
    %v2109 = vmax.f32 %v2005, %v2057
    %v2110 = vmax.f32 %v2006, %v2058
    %v2111 = vmax.f32 %v2007, %v2059
    %v2112 = vmax.f32 %v2008, %v2060
    %v2113 = vmax.f32 %v2009, %v2061
    %v2114 = vmax.f32 %v2010, %v2062
    %v2115 = vmax.f32 %v2011, %v2063
    %v2116 = vmax.f32 %v2012, %v2064
    %v2117 = vmax.f32 %v2013, %v2065
    %v2118 = vld [vmem:[%s2] sm:$0x1]
    %v2120 = vlaneseq
    %v2121 = vshrl.u32 %v2120, 7
    %v2122 = vsub.s32 0, %v2121
    %v2123 = vrot.slane %v2118, %v2122
    %v2125 = vadd.f32 %v2066, %v2123
    %v2126 = vadd.f32 %v2067, %v2123
    %v2127 = vadd.f32 %v2068, %v2123
    %v2128 = vadd.f32 %v2069, %v2123
    %v2129 = vadd.f32 %v2070, %v2123
    %v2130 = vadd.f32 %v2071, %v2123
    %v2131 = vadd.f32 %v2072, %v2123
    %v2132 = vadd.f32 %v2073, %v2123
    %v2133 = vadd.f32 %v2074, %v2123
    %v2134 = vadd.f32 %v2075, %v2123
    %v2135 = vadd.f32 %v2076, %v2123
    %v2136 = vadd.f32 %v2077, %v2123
    %v2137 = vadd.f32 %v2078, %v2123
    %v2138 = vadd.f32 %v2079, %v2123
    %v2139 = vadd.f32 %v2080, %v2123
    %v2140 = vadd.f32 %v2081, %v2123
    %v2141 = vadd.f32 %v2082, %v2123
    %v2142 = vadd.f32 %v2083, %v2123
    %v2143 = vadd.f32 %v2084, %v2123
    %v2144 = vadd.f32 %v2085, %v2123
    %v2145 = vadd.f32 %v2086, %v2123
    %v2146 = vadd.f32 %v2087, %v2123
    %v2147 = vadd.f32 %v2088, %v2123
    %v2148 = vadd.f32 %v2089, %v2123
    %v2149 = vadd.f32 %v2090, %v2123
    %v2150 = vadd.f32 %v2091, %v2123
    %v2151 = vadd.f32 %v2092, %v2123
    %v2152 = vadd.f32 %v2093, %v2123
    %v2153 = vadd.f32 %v2094, %v2123
    %v2154 = vadd.f32 %v2095, %v2123
    %v2155 = vadd.f32 %v2096, %v2123
    %v2156 = vadd.f32 %v2097, %v2123
    %v2157 = vadd.f32 %v2098, %v2123
    %v2158 = vadd.f32 %v2099, %v2123
    %v2159 = vadd.f32 %v2100, %v2123
    %v2160 = vadd.f32 %v2101, %v2123
    %v2161 = vadd.f32 %v2102, %v2123
    %v2162 = vadd.f32 %v2103, %v2123
    %v2163 = vadd.f32 %v2104, %v2123
    %v2164 = vadd.f32 %v2105, %v2123
    %v2165 = vadd.f32 %v2106, %v2123
    %v2166 = vadd.f32 %v2107, %v2123
    %v2167 = vadd.f32 %v2108, %v2123
    %v2168 = vadd.f32 %v2109, %v2123
    %v2169 = vadd.f32 %v2110, %v2123
    %v2170 = vadd.f32 %v2111, %v2123
    %v2171 = vadd.f32 %v2112, %v2123
    %v2172 = vadd.f32 %v2113, %v2123
    %v2173 = vadd.f32 %v2114, %v2123
    %v2174 = vadd.f32 %v2115, %v2123
    %v2175 = vadd.f32 %v2116, %v2123
    %v2176 = vadd.f32 %v2117, %v2123
    %v2177 = vmax.f32 %v2125, 0.0
    %v2178 = vmax.f32 %v2126, 0.0
    %v2179 = vmax.f32 %v2127, 0.0
    %v2180 = vmax.f32 %v2128, 0.0
    %v2181 = vmax.f32 %v2129, 0.0
    %v2182 = vmax.f32 %v2130, 0.0
    %v2183 = vmax.f32 %v2131, 0.0
    %v2184 = vmax.f32 %v2132, 0.0
    %v2185 = vmax.f32 %v2133, 0.0
    %v2186 = vmax.f32 %v2134, 0.0
    %v2187 = vmax.f32 %v2135, 0.0
    %v2188 = vmax.f32 %v2136, 0.0
    %v2189 = vmax.f32 %v2137, 0.0
    %v2190 = vmax.f32 %v2138, 0.0
    %v2191 = vmax.f32 %v2139, 0.0
    %v2192 = vmax.f32 %v2140, 0.0
    %v2193 = vmax.f32 %v2141, 0.0
    %v2194 = vmax.f32 %v2142, 0.0
    %v2195 = vmax.f32 %v2143, 0.0
    %v2196 = vmax.f32 %v2144, 0.0
    %v2197 = vmax.f32 %v2145, 0.0
    %v2198 = vmax.f32 %v2146, 0.0
    %v2199 = vmax.f32 %v2147, 0.0
    %v2200 = vmax.f32 %v2148, 0.0
    %v2201 = vmax.f32 %v2149, 0.0
    %v2202 = vmax.f32 %v2150, 0.0
    %v2203 = vmax.f32 %v2151, 0.0
    %v2204 = vmax.f32 %v2152, 0.0
    %v2205 = vmax.f32 %v2153, 0.0
    %v2206 = vmax.f32 %v2154, 0.0
    %v2207 = vmax.f32 %v2155, 0.0
    %v2208 = vmax.f32 %v2156, 0.0
    %v2209 = vmax.f32 %v2157, 0.0
    %v2210 = vmax.f32 %v2158, 0.0
    %v2211 = vmax.f32 %v2159, 0.0
    %v2212 = vmax.f32 %v2160, 0.0
    %v2213 = vmax.f32 %v2161, 0.0
    %v2214 = vmax.f32 %v2162, 0.0
    %v2215 = vmax.f32 %v2163, 0.0
    %v2216 = vmax.f32 %v2164, 0.0
    %v2217 = vmax.f32 %v2165, 0.0
    %v2218 = vmax.f32 %v2166, 0.0
    %v2219 = vmax.f32 %v2167, 0.0
    %v2220 = vmax.f32 %v2168, 0.0
    %v2221 = vmax.f32 %v2169, 0.0
    %v2222 = vmax.f32 %v2170, 0.0
    %v2223 = vmax.f32 %v2171, 0.0
    %v2224 = vmax.f32 %v2172, 0.0
    %v2225 = vmax.f32 %v2173, 0.0
    %v2226 = vmax.f32 %v2174, 0.0
    %v2227 = vmax.f32 %v2175, 0.0
    %v2228 = vmax.f32 %v2176, 0.0
    %v2229 = vpack.c.bf16 %v2178, %v2177
    %v2230 = vpack.c.bf16 %v2180, %v2179
    %v2231 = vpack.c.bf16 %v2182, %v2181
    %v2232 = vpack.c.bf16 %v2184, %v2183
    %v2233 = vpack.c.bf16 %v2186, %v2185
    %v2234 = vpack.c.bf16 %v2188, %v2187
    %v2235 = vpack.c.bf16 %v2190, %v2189
    %v2236 = vpack.c.bf16 %v2192, %v2191
    %v2237 = vpack.c.bf16 %v2194, %v2193
    %v2238 = vpack.c.bf16 %v2196, %v2195
    %v2239 = vpack.c.bf16 %v2198, %v2197
    %v2240 = vpack.c.bf16 %v2200, %v2199
    %v2241 = vpack.c.bf16 %v2202, %v2201
    %v2242 = vpack.c.bf16 %v2204, %v2203
    %v2243 = vpack.c.bf16 %v2206, %v2205
    %v2244 = vpack.c.bf16 %v2208, %v2207
    %v2245 = vpack.c.bf16 %v2210, %v2209
    %v2246 = vpack.c.bf16 %v2212, %v2211
    %v2247 = vpack.c.bf16 %v2214, %v2213
    %v2248 = vpack.c.bf16 %v2216, %v2215
    %v2249 = vpack.c.bf16 %v2218, %v2217
    %v2250 = vpack.c.bf16 %v2220, %v2219
    %v2251 = vpack.c.bf16 %v2222, %v2221
    %v2252 = vpack.c.bf16 %v2224, %v2223
    %v2253 = vpack.c.bf16 %v2226, %v2225
    %v2254 = vpack.c.bf16 %v2228, %v2227
    %v2281 = vunpack.c.l.b16 %v2229
    %v2282 = vunpack.c.h.b16 %v2229
    %v2283 = vunpack.c.l.b16 %v2230
    %v2284 = vunpack.c.h.b16 %v2230
    %v2285 = vunpack.c.l.b16 %v2231
    %v2286 = vunpack.c.h.b16 %v2231
    %v2287 = vunpack.c.l.b16 %v2232
    %v2288 = vunpack.c.h.b16 %v2232
    %v2289 = vunpack.c.l.b16 %v2233
    %v2290 = vunpack.c.h.b16 %v2233
    %v2291 = vunpack.c.l.b16 %v2234
    %v2292 = vunpack.c.h.b16 %v2234
    %v2293 = vunpack.c.l.b16 %v2235
    %v2294 = vunpack.c.h.b16 %v2235
    %v2295 = vunpack.c.l.b16 %v2236
    %v2296 = vunpack.c.h.b16 %v2236
    %v2297 = vunpack.c.l.b16 %v2237
    %v2298 = vunpack.c.h.b16 %v2237
    %v2299 = vunpack.c.l.b16 %v2238
    %v2300 = vunpack.c.h.b16 %v2238
    %v2301 = vunpack.c.l.b16 %v2239
    %v2302 = vunpack.c.h.b16 %v2239
    %v2303 = vunpack.c.l.b16 %v2240
    %v2304 = vunpack.c.h.b16 %v2240
    %v2305 = vunpack.c.l.b16 %v2241
    %v2306 = vunpack.c.h.b16 %v2241
    %v2307 = vunpack.c.l.b16 %v2242
    %v2308 = vunpack.c.h.b16 %v2242
    %v2309 = vunpack.c.l.b16 %v2243
    %v2310 = vunpack.c.h.b16 %v2243
    %v2311 = vunpack.c.l.b16 %v2244
    %v2312 = vunpack.c.h.b16 %v2244
    %v2313 = vunpack.c.l.b16 %v2245
    %v2314 = vunpack.c.h.b16 %v2245
    %v2315 = vunpack.c.l.b16 %v2246
    %v2316 = vunpack.c.h.b16 %v2246
    %v2317 = vunpack.c.l.b16 %v2247
    %v2318 = vunpack.c.h.b16 %v2247
    %v2319 = vunpack.c.l.b16 %v2248
    %v2320 = vunpack.c.h.b16 %v2248
    %v2321 = vunpack.c.l.b16 %v2249
    %v2322 = vunpack.c.h.b16 %v2249
    %v2323 = vunpack.c.l.b16 %v2250
    %v2324 = vunpack.c.h.b16 %v2250
    %v2325 = vunpack.c.l.b16 %v2251
    %v2326 = vunpack.c.h.b16 %v2251
    %v2327 = vunpack.c.l.b16 %v2252
    %v2328 = vunpack.c.h.b16 %v2252
    %v2329 = vunpack.c.l.b16 %v2253
    %v2330 = vunpack.c.h.b16 %v2253
    %v2331 = vunpack.c.l.b16 %v2254
    %v2332 = vunpack.c.h.b16 %v2254
    %v2333 = vpack.c.b16 %v2281, %v2281
    %v2334 = vpack.c.b16 %v2282, %v2282
    %v2335 = vpack.c.b16 %v2283, %v2283
    %v2336 = vpack.c.b16 %v2284, %v2284
    %v2337 = vpack.c.b16 %v2285, %v2285
    %v2338 = vpack.c.b16 %v2286, %v2286
    %v2339 = vpack.c.b16 %v2287, %v2287
    %v2340 = vpack.c.b16 %v2288, %v2288
    %v2341 = vpack.c.b16 %v2289, %v2289
    %v2342 = vpack.c.b16 %v2290, %v2290
    %v2343 = vpack.c.b16 %v2291, %v2291
    %v2344 = vpack.c.b16 %v2292, %v2292
    %v2345 = vpack.c.b16 %v2293, %v2293
    %v2346 = vpack.c.b16 %v2294, %v2294
    %v2347 = vpack.c.b16 %v2295, %v2295
    %v2348 = vpack.c.b16 %v2296, %v2296
    %v2349 = vpack.c.b16 %v2297, %v2297
    %v2350 = vpack.c.b16 %v2298, %v2298
    %v2351 = vpack.c.b16 %v2299, %v2299
    %v2352 = vpack.c.b16 %v2300, %v2300
    %v2353 = vpack.c.b16 %v2301, %v2301
    %v2354 = vpack.c.b16 %v2302, %v2302
    %v2355 = vpack.c.b16 %v2303, %v2303
    %v2356 = vpack.c.b16 %v2304, %v2304
    %v2357 = vpack.c.b16 %v2305, %v2305
    %v2358 = vpack.c.b16 %v2306, %v2306
    %v2359 = vpack.c.b16 %v2307, %v2307
    %v2360 = vpack.c.b16 %v2308, %v2308
    %v2361 = vpack.c.b16 %v2309, %v2309
    %v2362 = vpack.c.b16 %v2310, %v2310
    %v2363 = vpack.c.b16 %v2311, %v2311
    %v2364 = vpack.c.b16 %v2312, %v2312
    %v2365 = vpack.c.b16 %v2313, %v2313
    %v2366 = vpack.c.b16 %v2314, %v2314
    %v2367 = vpack.c.b16 %v2315, %v2315
    %v2368 = vpack.c.b16 %v2316, %v2316
    %v2369 = vpack.c.b16 %v2317, %v2317
    %v2370 = vpack.c.b16 %v2318, %v2318
    %v2371 = vpack.c.b16 %v2319, %v2319
    %v2372 = vpack.c.b16 %v2320, %v2320
    %v2373 = vpack.c.b16 %v2321, %v2321
    %v2374 = vpack.c.b16 %v2322, %v2322
    %v2375 = vpack.c.b16 %v2323, %v2323
    %v2376 = vpack.c.b16 %v2324, %v2324
    %v2377 = vpack.c.b16 %v2325, %v2325
    %v2378 = vpack.c.b16 %v2326, %v2326
    %v2379 = vpack.c.b16 %v2327, %v2327
    %v2380 = vpack.c.b16 %v2328, %v2328
    %v2381 = vpack.c.b16 %v2329, %v2329
    %v2382 = vpack.c.b16 %v2330, %v2330
    %v2383 = vpack.c.b16 %v2331, %v2331
    %v2384 = vpack.c.b16 %v2332, %v2332
    %2437 = vst [vmem:[#allocation2] sm:$0xf] %v2333
    %2438 = vst [vmem:[#allocation2 + $0x4] sm:$0xf] %v2334
    %2439 = vst [vmem:[#allocation2 + $0x8] sm:$0xf] %v2335
    %2440 = vst [vmem:[#allocation2 + $0xc] sm:$0xf] %v2336
    %2441 = vst [vmem:[#allocation2 + $0x10] sm:$0xf] %v2337
    %2442 = vst [vmem:[#allocation2 + $0x14] sm:$0xf] %v2338
    %2443 = vst [vmem:[#allocation2 + $0x18] sm:$0xf] %v2339
    %2444 = vst [vmem:[#allocation2 + $0x1c] sm:$0xf] %v2340
    %2445 = vst [vmem:[#allocation2 + $0x20] sm:$0xf] %v2341
    %2446 = vst [vmem:[#allocation2 + $0x24] sm:$0xf] %v2342
    %2447 = vst [vmem:[#allocation2 + $0x28] sm:$0xf] %v2343
    %2448 = vst [vmem:[#allocation2 + $0x2c] sm:$0xf] %v2344
    %2449 = vst [vmem:[#allocation2 + $0x30] sm:$0xf] %v2345
    %2450 = vst [vmem:[#allocation2 + $0x34] sm:$0xf] %v2346
    %2451 = vst [vmem:[#allocation2 + $0x38] sm:$0xf] %v2347
    %2452 = vst [vmem:[#allocation2 + $0x3c] sm:$0xf] %v2348
    %2453 = vst [vmem:[#allocation2 + $0x40] sm:$0xf] %v2349
    %2454 = vst [vmem:[#allocation2 + $0x44] sm:$0xf] %v2350
    %2455 = vst [vmem:[#allocation2 + $0x48] sm:$0xf] %v2351
    %2456 = vst [vmem:[#allocation2 + $0x4c] sm:$0xf] %v2352
    %2457 = vst [vmem:[#allocation2 + $0x50] sm:$0xf] %v2353
    %2458 = vst [vmem:[#allocation2 + $0x54] sm:$0xf] %v2354
    %2459 = vst [vmem:[#allocation2 + $0x58] sm:$0xf] %v2355
    %2460 = vst [vmem:[#allocation2 + $0x5c] sm:$0xf] %v2356
    %2461 = vst [vmem:[#allocation2 + $0x60] sm:$0xf] %v2357
    %2462 = vst [vmem:[#allocation2 + $0x64] sm:$0xf] %v2358
    %2463 = vst [vmem:[#allocation2 + $0x68] sm:$0xf] %v2359
    %2464 = vst [vmem:[#allocation2 + $0x6c] sm:$0xf] %v2360
    %2465 = vst [vmem:[#allocation2 + $0x70] sm:$0xf] %v2361
    %2466 = vst [vmem:[#allocation2 + $0x74] sm:$0xf] %v2362
    %2467 = vst [vmem:[#allocation2 + $0x78] sm:$0xf] %v2363
    %2468 = vst [vmem:[#allocation2 + $0x7c] sm:$0xf] %v2364
    %2469 = vst [vmem:[#allocation2 + $0x80] sm:$0xf] %v2365
    %2470 = vst [vmem:[#allocation2 + $0x84] sm:$0xf] %v2366
    %2471 = vst [vmem:[#allocation2 + $0x88] sm:$0xf] %v2367
    %2472 = vst [vmem:[#allocation2 + $0x8c] sm:$0xf] %v2368
    %2473 = vst [vmem:[#allocation2 + $0x90] sm:$0xf] %v2369
    %2474 = vst [vmem:[#allocation2 + $0x94] sm:$0xf] %v2370
    %2475 = vst [vmem:[#allocation2 + $0x98] sm:$0xf] %v2371
    %2476 = vst [vmem:[#allocation2 + $0x9c] sm:$0xf] %v2372
    %2477 = vst [vmem:[#allocation2 + $0xa0] sm:$0xf] %v2373
    %2478 = vst [vmem:[#allocation2 + $0xa4] sm:$0xf] %v2374
    %2479 = vst [vmem:[#allocation2 + $0xa8] sm:$0xf] %v2375
    %2480 = vst [vmem:[#allocation2 + $0xac] sm:$0xf] %v2376
    %2481 = vst [vmem:[#allocation2 + $0xb0] sm:$0xf] %v2377
    %2482 = vst [vmem:[#allocation2 + $0xb4] sm:$0xf] %v2378
    %2483 = vst [vmem:[#allocation2 + $0xb8] sm:$0xf] %v2379
    %2484 = vst [vmem:[#allocation2 + $0xbc] sm:$0xf] %v2380
    %2485 = vst [vmem:[#allocation2 + $0xc0] sm:$0xf] %v2381
    %2486 = vst [vmem:[#allocation2 + $0xc4] sm:$0xf] %v2382
    %2487 = vst [vmem:[#allocation2 + $0xc8] sm:$0xf] %v2383
    %2488 = vst [vmem:[#allocation2 + $0xcc] sm:$0xf] %v2384
    %2489 = vst [vmem:[#allocation3] sm:$0xff] 0
    %2490 = vst [vmem:[#allocation3 + $0x8] sm:$0xff] 0
    %2491 = vst [vmem:[#allocation3 + $0x10] sm:$0xff] 0
    %2492 = vst [vmem:[#allocation3 + $0x18] sm:$0xff] 0
    %2493 = vst [vmem:[#allocation3 + $0x20] sm:$0xff] 0
    %2494 = vst [vmem:[#allocation3 + $0x28] sm:$0xff] 0
    %2495 = vst [vmem:[#allocation3 + $0x30] sm:$0xff] 0
    %2496 = vst [vmem:[#allocation3 + $0x38] sm:$0xff] 0
    %2497 = vst [vmem:[#allocation3 + $0x40] sm:$0xff] 0
    %2498 = vst [vmem:[#allocation3 + $0x48] sm:$0xff] 0
    %2499 = vst [vmem:[#allocation3 + $0x50] sm:$0xff] 0
    %2500 = vst [vmem:[#allocation3 + $0x58] sm:$0xff] 0
    %2501 = vst [vmem:[#allocation3 + $0x60] sm:$0xff] 0
    %2502 = vst [vmem:[#allocation3 + $0x68] sm:$0xff] 0
    %2503 = vst [vmem:[#allocation3 + $0x70] sm:$0xff] 0
    %2504 = vst [vmem:[#allocation3 + $0x78] sm:$0xff] 0
    %2505 = vst [vmem:[#allocation3 + $0x80] sm:$0xff] 0
    %2506 = vst [vmem:[#allocation3 + $0x88] sm:$0xff] 0
    %2507 = vst [vmem:[#allocation3 + $0x90] sm:$0xff] 0
    %2508 = vst [vmem:[#allocation3 + $0x98] sm:$0xff] 0
    %2509 = vst [vmem:[#allocation3 + $0xa0] sm:$0xff] 0
    %2510 = vst [vmem:[#allocation3 + $0xa8] sm:$0xff] 0
    %2511 = vst [vmem:[#allocation3 + $0xb0] sm:$0xff] 0
    %2512 = vst [vmem:[#allocation3 + $0xb8] sm:$0xff] 0
    %2513 = vst [vmem:[#allocation3 + $0xc0] sm:$0xff] 0
    %2514 = vst [vmem:[#allocation3 + $0xc8] sm:$0xff] 0
    %2515 = vst [vmem:[#allocation3 + $0xd0] sm:$0xff] 0
    %2516 = vst [vmem:[#allocation3 + $0xd8] sm:$0xff] 0
    %2517 = vst [vmem:[#allocation3 + $0xe0] sm:$0xff] 0
    %2518 = vst [vmem:[#allocation3 + $0xe8] sm:$0xff] 0
    %2519 = vst [vmem:[#allocation3 + $0xf0] sm:$0xff] 0
    %2520 = vst [vmem:[#allocation3 + $0xf8] sm:$0xff] 0
    %v2521 = vld [vmem:[#allocation2] sm:$0xf]
    %v2522 = vld [vmem:[#allocation2 + $0x4] sm:$0xf]
    %v2523 = vld [vmem:[#allocation2 + $0x8] sm:$0xf]
    %v2524 = vld [vmem:[#allocation2 + $0xc] sm:$0xf]
    %v2525 = vld [vmem:[#allocation2 + $0x10] sm:$0xf]
    %v2526 = vld [vmem:[#allocation2 + $0x14] sm:$0xf]
    %v2527 = vld [vmem:[#allocation2 + $0x18] sm:$0xf]
    %v2528 = vld [vmem:[#allocation2 + $0x1c] sm:$0xf]
    %v2529 = vld [vmem:[#allocation2 + $0x20] sm:$0xf]
    %v2530 = vld [vmem:[#allocation2 + $0x24] sm:$0xf]
    %v2531 = vld [vmem:[#allocation2 + $0x28] sm:$0xf]
    %v2532 = vld [vmem:[#allocation2 + $0x2c] sm:$0xf]
    %v2533 = vld [vmem:[#allocation2 + $0x30] sm:$0xf]
    %v2534 = vld [vmem:[#allocation2 + $0x34] sm:$0xf]
    %v2535 = vld [vmem:[#allocation2 + $0x38] sm:$0xf]
    %v2536 = vld [vmem:[#allocation2 + $0x3c] sm:$0xf]
    %v2537 = vld [vmem:[#allocation2 + $0x40] sm:$0xf]
    %v2538 = vld [vmem:[#allocation2 + $0x44] sm:$0xf]
    %v2539 = vld [vmem:[#allocation2 + $0x48] sm:$0xf]
    %v2540 = vld [vmem:[#allocation2 + $0x4c] sm:$0xf]
    %v2541 = vld [vmem:[#allocation2 + $0x50] sm:$0xf]
    %v2542 = vld [vmem:[#allocation2 + $0x54] sm:$0xf]
    %v2543 = vld [vmem:[#allocation2 + $0x58] sm:$0xf]
    %v2544 = vld [vmem:[#allocation2 + $0x5c] sm:$0xf]
    %v2545 = vld [vmem:[#allocation2 + $0x60] sm:$0xf]
    %v2546 = vld [vmem:[#allocation2 + $0x64] sm:$0xf]
    %v2547 = vld [vmem:[#allocation2 + $0x68] sm:$0xf]
    %v2548 = vld [vmem:[#allocation2 + $0x6c] sm:$0xf]
    %v2549 = vld [vmem:[#allocation2 + $0x70] sm:$0xf]
    %v2550 = vld [vmem:[#allocation2 + $0x74] sm:$0xf]
    %v2551 = vld [vmem:[#allocation2 + $0x78] sm:$0xf]
    %v2552 = vld [vmem:[#allocation2 + $0x7c] sm:$0xf]
    %vm2553 = vcmask 60416
    %2554 = vst.msk [vmem:[#allocation3] sm:$0xf] %vm2553, %v2521
    %2555 = vst.msk [vmem:[#allocation3 + $0x8] sm:$0xf] %vm2553, %v2522
    %2556 = vst.msk [vmem:[#allocation3 + $0x10] sm:$0xf] %vm2553, %v2523
    %2557 = vst.msk [vmem:[#allocation3 + $0x18] sm:$0xf] %vm2553, %v2524
    %2558 = vst.msk [vmem:[#allocation3 + $0x20] sm:$0xf] %vm2553, %v2525
    %2559 = vst.msk [vmem:[#allocation3 + $0x28] sm:$0xf] %vm2553, %v2526
    %2560 = vst.msk [vmem:[#allocation3 + $0x30] sm:$0xf] %vm2553, %v2527
    %2561 = vst.msk [vmem:[#allocation3 + $0x38] sm:$0xf] %vm2553, %v2528
    %2562 = vst.msk [vmem:[#allocation3 + $0x40] sm:$0xf] %vm2553, %v2529
    %2563 = vst.msk [vmem:[#allocation3 + $0x48] sm:$0xf] %vm2553, %v2530
    %2564 = vst.msk [vmem:[#allocation3 + $0x50] sm:$0xf] %vm2553, %v2531
    %2565 = vst.msk [vmem:[#allocation3 + $0x58] sm:$0xf] %vm2553, %v2532
    %2566 = vst.msk [vmem:[#allocation3 + $0x60] sm:$0xf] %vm2553, %v2533
    %2567 = vst.msk [vmem:[#allocation3 + $0x68] sm:$0xf] %vm2553, %v2534
    %2568 = vst.msk [vmem:[#allocation3 + $0x70] sm:$0xf] %vm2553, %v2535
    %2569 = vst.msk [vmem:[#allocation3 + $0x78] sm:$0xf] %vm2553, %v2536
    %2570 = vst.msk [vmem:[#allocation3 + $0x80] sm:$0xf] %vm2553, %v2537
    %2571 = vst.msk [vmem:[#allocation3 + $0x88] sm:$0xf] %vm2553, %v2538
    %2572 = vst.msk [vmem:[#allocation3 + $0x90] sm:$0xf] %vm2553, %v2539
    %2573 = vst.msk [vmem:[#allocation3 + $0x98] sm:$0xf] %vm2553, %v2540
    %2574 = vst.msk [vmem:[#allocation3 + $0xa0] sm:$0xf] %vm2553, %v2541
    %2575 = vst.msk [vmem:[#allocation3 + $0xa8] sm:$0xf] %vm2553, %v2542
    %2576 = vst.msk [vmem:[#allocation3 + $0xb0] sm:$0xf] %vm2553, %v2543
    %2577 = vst.msk [vmem:[#allocation3 + $0xb8] sm:$0xf] %vm2553, %v2544
    %2578 = vst.msk [vmem:[#allocation3 + $0xc0] sm:$0xf] %vm2553, %v2545
    %2579 = vst.msk [vmem:[#allocation3 + $0xc8] sm:$0xf] %vm2553, %v2546
    %2580 = vst.msk [vmem:[#allocation3 + $0xd0] sm:$0xf] %vm2553, %v2547
    %2581 = vst.msk [vmem:[#allocation3 + $0xd8] sm:$0xf] %vm2553, %v2548
    %2582 = vst.msk [vmem:[#allocation3 + $0xe0] sm:$0xf] %vm2553, %v2549
    %2583 = vst.msk [vmem:[#allocation3 + $0xe8] sm:$0xf] %vm2553, %v2550
    %2584 = vst.msk [vmem:[#allocation3 + $0xf0] sm:$0xf] %vm2553, %v2551
    %2585 = vst.msk [vmem:[#allocation3 + $0xf8] sm:$0xf] %vm2553, %v2552
    %v2586 = vld [vmem:[#allocation2] sm:$0xf]
    %v2587 = vld [vmem:[#allocation2 + $0x4] sm:$0xf]
    %v2588 = vld [vmem:[#allocation2 + $0x8] sm:$0xf]
    %v2589 = vld [vmem:[#allocation2 + $0xc] sm:$0xf]
    %v2590 = vld [vmem:[#allocation2 + $0x10] sm:$0xf]
    %v2591 = vld [vmem:[#allocation2 + $0x14] sm:$0xf]
    %v2592 = vld [vmem:[#allocation2 + $0x18] sm:$0xf]
    %v2593 = vld [vmem:[#allocation2 + $0x1c] sm:$0xf]
    %v2594 = vld [vmem:[#allocation2 + $0x20] sm:$0xf]
    %v2595 = vld [vmem:[#allocation2 + $0x24] sm:$0xf]
    %v2596 = vld [vmem:[#allocation2 + $0x28] sm:$0xf]
    %v2597 = vld [vmem:[#allocation2 + $0x2c] sm:$0xf]
    %v2598 = vld [vmem:[#allocation2 + $0x30] sm:$0xf]
    %v2599 = vld [vmem:[#allocation2 + $0x34] sm:$0xf]
    %v2600 = vld [vmem:[#allocation2 + $0x38] sm:$0xf]
    %v2601 = vld [vmem:[#allocation2 + $0x3c] sm:$0xf]
    %v2602 = vld [vmem:[#allocation2 + $0x40] sm:$0xf]
    %v2603 = vld [vmem:[#allocation2 + $0x44] sm:$0xf]
    %v2604 = vld [vmem:[#allocation2 + $0x48] sm:$0xf]
    %v2605 = vld [vmem:[#allocation2 + $0x4c] sm:$0xf]
    %v2606 = vld [vmem:[#allocation2 + $0x50] sm:$0xf]
    %v2607 = vld [vmem:[#allocation2 + $0x54] sm:$0xf]
    %v2608 = vld [vmem:[#allocation2 + $0x58] sm:$0xf]
    %v2609 = vld [vmem:[#allocation2 + $0x5c] sm:$0xf]
    %v2610 = vld [vmem:[#allocation2 + $0x60] sm:$0xf]
    %v2611 = vld [vmem:[#allocation2 + $0x64] sm:$0xf]
    %v2612 = vld [vmem:[#allocation2 + $0x68] sm:$0xf]
    %v2613 = vld [vmem:[#allocation2 + $0x6c] sm:$0xf]
    %v2614 = vld [vmem:[#allocation2 + $0x70] sm:$0xf]
    %v2615 = vld [vmem:[#allocation2 + $0x74] sm:$0xf]
    %v2616 = vld [vmem:[#allocation2 + $0x78] sm:$0xf]
    %v2617 = vld [vmem:[#allocation2 + $0x7c] sm:$0xf]
    %v2618 = vld [vmem:[#allocation2 + $0x80] sm:$0x1]
    %vm2619 = vsmask.f32 3328
    %vm2620 = vsmask.f32 7440
    %vm2621 = vmor %vm2619, %vm2620
    %v2623 = vshrl.u32 %v2586, 16
    %v2625 = vrot.slane %v2623, 4
    %v2626 = vshll.u32 %v2586, 16
    %v2628 = vrot.slane %v2626, 5
    %v2629 = vor.u32 %v2625, %v2628
    %v2630 = vrot.slane %v2629, 4
    %v2632 = vshll.u32 %v2587, 16
    %v2634 = vrot.slane %v2632, 5
    %v2635 = vsel %vm2621, %v2630, %v2634
    %v2636 = vshrl.u32 %v2587, 16
    %v2638 = vrot.slane %v2636, 4
    %v2639 = vor.u32 %v2638, %v2634
    %v2640 = vrot.slane %v2639, 4
    %v2642 = vshll.u32 %v2588, 16
    %v2644 = vrot.slane %v2642, 5
    %v2645 = vsel %vm2621, %v2640, %v2644
    %v2646 = vshrl.u32 %v2588, 16
    %v2648 = vrot.slane %v2646, 4
    %v2649 = vor.u32 %v2648, %v2644
    %v2650 = vrot.slane %v2649, 4
    %v2652 = vshll.u32 %v2589, 16
    %v2654 = vrot.slane %v2652, 5
    %v2655 = vsel %vm2621, %v2650, %v2654
    %v2656 = vshrl.u32 %v2589, 16
    %v2658 = vrot.slane %v2656, 4
    %v2659 = vor.u32 %v2658, %v2654
    %v2660 = vrot.slane %v2659, 4
    %v2662 = vshll.u32 %v2590, 16
    %v2664 = vrot.slane %v2662, 5
    %v2665 = vsel %vm2621, %v2660, %v2664
    %v2666 = vshrl.u32 %v2590, 16
    %v2668 = vrot.slane %v2666, 4
    %v2669 = vor.u32 %v2668, %v2664
    %v2670 = vrot.slane %v2669, 4
    %v2672 = vshll.u32 %v2591, 16
    %v2674 = vrot.slane %v2672, 5
    %v2675 = vsel %vm2621, %v2670, %v2674
    %v2676 = vshrl.u32 %v2591, 16
    %v2678 = vrot.slane %v2676, 4
    %v2679 = vor.u32 %v2678, %v2674
    %v2680 = vrot.slane %v2679, 4
    %v2682 = vshll.u32 %v2592, 16
    %v2684 = vrot.slane %v2682, 5
    %v2685 = vsel %vm2621, %v2680, %v2684
    %v2686 = vshrl.u32 %v2592, 16
    %v2688 = vrot.slane %v2686, 4
    %v2689 = vor.u32 %v2688, %v2684
    %v2690 = vrot.slane %v2689, 4
    %v2692 = vshll.u32 %v2593, 16
    %v2694 = vrot.slane %v2692, 5
    %v2695 = vsel %vm2621, %v2690, %v2694
    %v2696 = vshrl.u32 %v2593, 16
    %v2698 = vrot.slane %v2696, 4
    %v2699 = vor.u32 %v2698, %v2694
    %v2700 = vrot.slane %v2699, 4
    %v2702 = vshll.u32 %v2594, 16
    %v2704 = vrot.slane %v2702, 5
    %v2705 = vsel %vm2621, %v2700, %v2704
    %v2706 = vshrl.u32 %v2594, 16
    %v2708 = vrot.slane %v2706, 4
    %v2709 = vor.u32 %v2708, %v2704
    %v2710 = vrot.slane %v2709, 4
    %v2712 = vshll.u32 %v2595, 16
    %v2714 = vrot.slane %v2712, 5
    %v2715 = vsel %vm2621, %v2710, %v2714
    %v2716 = vshrl.u32 %v2595, 16
    %v2718 = vrot.slane %v2716, 4
    %v2719 = vor.u32 %v2718, %v2714
    %v2720 = vrot.slane %v2719, 4
    %v2722 = vshll.u32 %v2596, 16
    %v2724 = vrot.slane %v2722, 5
    %v2725 = vsel %vm2621, %v2720, %v2724
    %v2726 = vshrl.u32 %v2596, 16
    %v2728 = vrot.slane %v2726, 4
    %v2729 = vor.u32 %v2728, %v2724
    %v2730 = vrot.slane %v2729, 4
    %v2732 = vshll.u32 %v2597, 16
    %v2734 = vrot.slane %v2732, 5
    %v2735 = vsel %vm2621, %v2730, %v2734
    %v2736 = vshrl.u32 %v2597, 16
    %v2738 = vrot.slane %v2736, 4
    %v2739 = vor.u32 %v2738, %v2734
    %v2740 = vrot.slane %v2739, 4
    %v2742 = vshll.u32 %v2598, 16
    %v2744 = vrot.slane %v2742, 5
    %v2745 = vsel %vm2621, %v2740, %v2744
    %v2746 = vshrl.u32 %v2598, 16
    %v2748 = vrot.slane %v2746, 4
    %v2749 = vor.u32 %v2748, %v2744
    %v2750 = vrot.slane %v2749, 4
    %v2752 = vshll.u32 %v2599, 16
    %v2754 = vrot.slane %v2752, 5
    %v2755 = vsel %vm2621, %v2750, %v2754
    %v2756 = vshrl.u32 %v2599, 16
    %v2758 = vrot.slane %v2756, 4
    %v2759 = vor.u32 %v2758, %v2754
    %v2760 = vrot.slane %v2759, 4
    %v2762 = vshll.u32 %v2600, 16
    %v2764 = vrot.slane %v2762, 5
    %v2765 = vsel %vm2621, %v2760, %v2764
    %v2766 = vshrl.u32 %v2600, 16
    %v2768 = vrot.slane %v2766, 4
    %v2769 = vor.u32 %v2768, %v2764
    %v2770 = vrot.slane %v2769, 4
    %v2772 = vshll.u32 %v2601, 16
    %v2774 = vrot.slane %v2772, 5
    %v2775 = vsel %vm2621, %v2770, %v2774
    %v2776 = vshrl.u32 %v2601, 16
    %v2778 = vrot.slane %v2776, 4
    %v2779 = vor.u32 %v2778, %v2774
    %v2780 = vrot.slane %v2779, 4
    %v2782 = vshll.u32 %v2602, 16
    %v2784 = vrot.slane %v2782, 5
    %v2785 = vsel %vm2621, %v2780, %v2784
    %v2786 = vshrl.u32 %v2602, 16
    %v2788 = vrot.slane %v2786, 4
    %v2789 = vor.u32 %v2788, %v2784
    %v2790 = vrot.slane %v2789, 4
    %v2792 = vshll.u32 %v2603, 16
    %v2794 = vrot.slane %v2792, 5
    %v2795 = vsel %vm2621, %v2790, %v2794
    %v2796 = vshrl.u32 %v2603, 16
    %v2798 = vrot.slane %v2796, 4
    %v2799 = vor.u32 %v2798, %v2794
    %v2800 = vrot.slane %v2799, 4
    %v2802 = vshll.u32 %v2604, 16
    %v2804 = vrot.slane %v2802, 5
    %v2805 = vsel %vm2621, %v2800, %v2804
    %v2806 = vshrl.u32 %v2604, 16
    %v2808 = vrot.slane %v2806, 4
    %v2809 = vor.u32 %v2808, %v2804
    %v2810 = vrot.slane %v2809, 4
    %v2812 = vshll.u32 %v2605, 16
    %v2814 = vrot.slane %v2812, 5
    %v2815 = vsel %vm2621, %v2810, %v2814
    %v2816 = vshrl.u32 %v2605, 16
    %v2818 = vrot.slane %v2816, 4
    %v2819 = vor.u32 %v2818, %v2814
    %v2820 = vrot.slane %v2819, 4
    %v2822 = vshll.u32 %v2606, 16
    %v2824 = vrot.slane %v2822, 5
    %v2825 = vsel %vm2621, %v2820, %v2824
    %v2826 = vshrl.u32 %v2606, 16
    %v2828 = vrot.slane %v2826, 4
    %v2829 = vor.u32 %v2828, %v2824
    %v2830 = vrot.slane %v2829, 4
    %v2832 = vshll.u32 %v2607, 16
    %v2834 = vrot.slane %v2832, 5
    %v2835 = vsel %vm2621, %v2830, %v2834
    %v2836 = vshrl.u32 %v2607, 16
    %v2838 = vrot.slane %v2836, 4
    %v2839 = vor.u32 %v2838, %v2834
    %v2840 = vrot.slane %v2839, 4
    %v2842 = vshll.u32 %v2608, 16
    %v2844 = vrot.slane %v2842, 5
    %v2845 = vsel %vm2621, %v2840, %v2844
    %v2846 = vshrl.u32 %v2608, 16
    %v2848 = vrot.slane %v2846, 4
    %v2849 = vor.u32 %v2848, %v2844
    %v2850 = vrot.slane %v2849, 4
    %v2852 = vshll.u32 %v2609, 16
    %v2854 = vrot.slane %v2852, 5
    %v2855 = vsel %vm2621, %v2850, %v2854
    %v2856 = vshrl.u32 %v2609, 16
    %v2858 = vrot.slane %v2856, 4
    %v2859 = vor.u32 %v2858, %v2854
    %v2860 = vrot.slane %v2859, 4
    %v2862 = vshll.u32 %v2610, 16
    %v2864 = vrot.slane %v2862, 5
    %v2865 = vsel %vm2621, %v2860, %v2864
    %v2866 = vshrl.u32 %v2610, 16
    %v2868 = vrot.slane %v2866, 4
    %v2869 = vor.u32 %v2868, %v2864
    %v2870 = vrot.slane %v2869, 4
    %v2872 = vshll.u32 %v2611, 16
    %v2874 = vrot.slane %v2872, 5
    %v2875 = vsel %vm2621, %v2870, %v2874
    %v2876 = vshrl.u32 %v2611, 16
    %v2878 = vrot.slane %v2876, 4
    %v2879 = vor.u32 %v2878, %v2874
    %v2880 = vrot.slane %v2879, 4
    %v2882 = vshll.u32 %v2612, 16
    %v2884 = vrot.slane %v2882, 5
    %v2885 = vsel %vm2621, %v2880, %v2884
    %v2886 = vshrl.u32 %v2612, 16
    %v2888 = vrot.slane %v2886, 4
    %v2889 = vor.u32 %v2888, %v2884
    %v2890 = vrot.slane %v2889, 4
    %v2892 = vshll.u32 %v2613, 16
    %v2894 = vrot.slane %v2892, 5
    %v2895 = vsel %vm2621, %v2890, %v2894
    %v2896 = vshrl.u32 %v2613, 16
    %v2898 = vrot.slane %v2896, 4
    %v2899 = vor.u32 %v2898, %v2894
    %v2900 = vrot.slane %v2899, 4
    %v2902 = vshll.u32 %v2614, 16
    %v2904 = vrot.slane %v2902, 5
    %v2905 = vsel %vm2621, %v2900, %v2904
    %v2906 = vshrl.u32 %v2614, 16
    %v2908 = vrot.slane %v2906, 4
    %v2909 = vor.u32 %v2908, %v2904
    %v2910 = vrot.slane %v2909, 4
    %v2912 = vshll.u32 %v2615, 16
    %v2914 = vrot.slane %v2912, 5
    %v2915 = vsel %vm2621, %v2910, %v2914
    %v2916 = vshrl.u32 %v2615, 16
    %v2918 = vrot.slane %v2916, 4
    %v2919 = vor.u32 %v2918, %v2914
    %v2920 = vrot.slane %v2919, 4
    %v2922 = vshll.u32 %v2616, 16
    %v2924 = vrot.slane %v2922, 5
    %v2925 = vsel %vm2621, %v2920, %v2924
    %v2926 = vshrl.u32 %v2616, 16
    %v2928 = vrot.slane %v2926, 4
    %v2929 = vor.u32 %v2928, %v2924
    %v2930 = vrot.slane %v2929, 4
    %v2932 = vshll.u32 %v2617, 16
    %v2934 = vrot.slane %v2932, 5
    %v2935 = vsel %vm2621, %v2930, %v2934
    %v2936 = vshrl.u32 %v2617, 16
    %v2938 = vrot.slane %v2936, 4
    %v2939 = vor.u32 %v2938, %v2934
    %v2940 = vrot.slane %v2939, 4
    %v2942 = vshll.u32 %v2618, 16
    %v2944 = vrot.slane %v2942, 5
    %v2945 = vsel %vm2621, %v2940, %v2944
    %2946 = vrot.lane.b32.xlu0 %v2635, 8
    %v2947 = vpop.permute.xlu0 %2946
    %2948 = vrot.lane.b32.xlu0 %v2645, 8
    %v2949 = vpop.permute.xlu0 %2948
    %2950 = vrot.lane.b32.xlu0 %v2655, 8
    %v2951 = vpop.permute.xlu0 %2950
    %2952 = vrot.lane.b32.xlu0 %v2665, 8
    %v2953 = vpop.permute.xlu0 %2952
    %2954 = vrot.lane.b32.xlu0 %v2675, 8
    %v2955 = vpop.permute.xlu0 %2954
    %2956 = vrot.lane.b32.xlu0 %v2685, 8
    %v2957 = vpop.permute.xlu0 %2956
    %2958 = vrot.lane.b32.xlu0 %v2695, 8
    %v2959 = vpop.permute.xlu0 %2958
    %2960 = vrot.lane.b32.xlu0 %v2705, 8
    %v2961 = vpop.permute.xlu0 %2960
    %2962 = vrot.lane.b32.xlu0 %v2715, 8
    %v2963 = vpop.permute.xlu0 %2962
    %2964 = vrot.lane.b32.xlu0 %v2725, 8
    %v2965 = vpop.permute.xlu0 %2964
    %2966 = vrot.lane.b32.xlu0 %v2735, 8
    %v2967 = vpop.permute.xlu0 %2966
    %2968 = vrot.lane.b32.xlu0 %v2745, 8
    %v2969 = vpop.permute.xlu0 %2968
    %2970 = vrot.lane.b32.xlu0 %v2755, 8
    %v2971 = vpop.permute.xlu0 %2970
    %2972 = vrot.lane.b32.xlu0 %v2765, 8
    %v2973 = vpop.permute.xlu0 %2972
    %2974 = vrot.lane.b32.xlu0 %v2775, 8
    %v2975 = vpop.permute.xlu0 %2974
    %2976 = vrot.lane.b32.xlu0 %v2785, 8
    %v2977 = vpop.permute.xlu0 %2976
    %2978 = vrot.lane.b32.xlu0 %v2795, 8
    %v2979 = vpop.permute.xlu0 %2978
    %2980 = vrot.lane.b32.xlu0 %v2805, 8
    %v2981 = vpop.permute.xlu0 %2980
    %2982 = vrot.lane.b32.xlu0 %v2815, 8
    %v2983 = vpop.permute.xlu0 %2982
    %2984 = vrot.lane.b32.xlu0 %v2825, 8
    %v2985 = vpop.permute.xlu0 %2984
    %2986 = vrot.lane.b32.xlu0 %v2835, 8
    %v2987 = vpop.permute.xlu0 %2986
    %2988 = vrot.lane.b32.xlu0 %v2845, 8
    %v2989 = vpop.permute.xlu0 %2988
    %2990 = vrot.lane.b32.xlu0 %v2855, 8
    %v2991 = vpop.permute.xlu0 %2990
    %2992 = vrot.lane.b32.xlu0 %v2865, 8
    %v2993 = vpop.permute.xlu0 %2992
    %2994 = vrot.lane.b32.xlu0 %v2875, 8
    %v2995 = vpop.permute.xlu0 %2994
    %2996 = vrot.lane.b32.xlu0 %v2885, 8
    %v2997 = vpop.permute.xlu0 %2996
    %2998 = vrot.lane.b32.xlu0 %v2895, 8
    %v2999 = vpop.permute.xlu0 %2998
    %3000 = vrot.lane.b32.xlu0 %v2905, 8
    %v3001 = vpop.permute.xlu0 %3000
    %3002 = vrot.lane.b32.xlu0 %v2915, 8
    %v3003 = vpop.permute.xlu0 %3002
    %3004 = vrot.lane.b32.xlu0 %v2925, 8
    %v3005 = vpop.permute.xlu0 %3004
    %3006 = vrot.lane.b32.xlu0 %v2935, 8
    %v3007 = vpop.permute.xlu0 %3006
    %3008 = vrot.lane.b32.xlu0 %v2945, 8
    %v3009 = vpop.permute.xlu0 %3008
    %vm3042 = vcmask 126016
    %3043 = vst.msk [vmem:[#allocation3] sm:$0xf] %vm3042, %v2947
    %3044 = vst.msk [vmem:[#allocation3 + $0x8] sm:$0xf] %vm3042, %v2949
    %3045 = vst.msk [vmem:[#allocation3 + $0x10] sm:$0xf] %vm3042, %v2951
    %3046 = vst.msk [vmem:[#allocation3 + $0x18] sm:$0xf] %vm3042, %v2953
    %3047 = vst.msk [vmem:[#allocation3 + $0x20] sm:$0xf] %vm3042, %v2955
    %3048 = vst.msk [vmem:[#allocation3 + $0x28] sm:$0xf] %vm3042, %v2957
    %3049 = vst.msk [vmem:[#allocation3 + $0x30] sm:$0xf] %vm3042, %v2959
    %3050 = vst.msk [vmem:[#allocation3 + $0x38] sm:$0xf] %vm3042, %v2961
    %3051 = vst.msk [vmem:[#allocation3 + $0x40] sm:$0xf] %vm3042, %v2963
    %3052 = vst.msk [vmem:[#allocation3 + $0x48] sm:$0xf] %vm3042, %v2965
    %3053 = vst.msk [vmem:[#allocation3 + $0x50] sm:$0xf] %vm3042, %v2967
    %3054 = vst.msk [vmem:[#allocation3 + $0x58] sm:$0xf] %vm3042, %v2969
    %3055 = vst.msk [vmem:[#allocation3 + $0x60] sm:$0xf] %vm3042, %v2971
    %3056 = vst.msk [vmem:[#allocation3 + $0x68] sm:$0xf] %vm3042, %v2973
    %3057 = vst.msk [vmem:[#allocation3 + $0x70] sm:$0xf] %vm3042, %v2975
    %3058 = vst.msk [vmem:[#allocation3 + $0x78] sm:$0xf] %vm3042, %v2977
    %3059 = vst.msk [vmem:[#allocation3 + $0x80] sm:$0xf] %vm3042, %v2979
    %3060 = vst.msk [vmem:[#allocation3 + $0x88] sm:$0xf] %vm3042, %v2981
    %3061 = vst.msk [vmem:[#allocation3 + $0x90] sm:$0xf] %vm3042, %v2983
    %3062 = vst.msk [vmem:[#allocation3 + $0x98] sm:$0xf] %vm3042, %v2985
    %3063 = vst.msk [vmem:[#allocation3 + $0xa0] sm:$0xf] %vm3042, %v2987
    %3064 = vst.msk [vmem:[#allocation3 + $0xa8] sm:$0xf] %vm3042, %v2989
    %3065 = vst.msk [vmem:[#allocation3 + $0xb0] sm:$0xf] %vm3042, %v2991
    %3066 = vst.msk [vmem:[#allocation3 + $0xb8] sm:$0xf] %vm3042, %v2993
    %3067 = vst.msk [vmem:[#allocation3 + $0xc0] sm:$0xf] %vm3042, %v2995
    %3068 = vst.msk [vmem:[#allocation3 + $0xc8] sm:$0xf] %vm3042, %v2997
    %3069 = vst.msk [vmem:[#allocation3 + $0xd0] sm:$0xf] %vm3042, %v2999
    %3070 = vst.msk [vmem:[#allocation3 + $0xd8] sm:$0xf] %vm3042, %v3001
    %3071 = vst.msk [vmem:[#allocation3 + $0xe0] sm:$0xf] %vm3042, %v3003
    %3072 = vst.msk [vmem:[#allocation3 + $0xe8] sm:$0xf] %vm3042, %v3005
    %3073 = vst.msk [vmem:[#allocation3 + $0xf0] sm:$0xf] %vm3042, %v3007
    %3074 = vst.msk [vmem:[#allocation3 + $0xf8] sm:$0xf] %vm3042, %v3009
    %v3075 = vld [vmem:[#allocation2] sm:$0xe]
    %v3076 = vld [vmem:[#allocation2 + $0x4] sm:$0xf]
    %v3077 = vld [vmem:[#allocation2 + $0x8] sm:$0xf]
    %v3078 = vld [vmem:[#allocation2 + $0xc] sm:$0xf]
    %v3079 = vld [vmem:[#allocation2 + $0x10] sm:$0xf]
    %v3080 = vld [vmem:[#allocation2 + $0x14] sm:$0xf]
    %v3081 = vld [vmem:[#allocation2 + $0x18] sm:$0xf]
    %v3082 = vld [vmem:[#allocation2 + $0x1c] sm:$0xf]
    %v3083 = vld [vmem:[#allocation2 + $0x20] sm:$0xf]
    %v3084 = vld [vmem:[#allocation2 + $0x24] sm:$0xf]
    %v3085 = vld [vmem:[#allocation2 + $0x28] sm:$0xf]
    %v3086 = vld [vmem:[#allocation2 + $0x2c] sm:$0xf]
    %v3087 = vld [vmem:[#allocation2 + $0x30] sm:$0xf]
    %v3088 = vld [vmem:[#allocation2 + $0x34] sm:$0xf]
    %v3089 = vld [vmem:[#allocation2 + $0x38] sm:$0xf]
    %v3090 = vld [vmem:[#allocation2 + $0x3c] sm:$0xf]
    %v3091 = vld [vmem:[#allocation2 + $0x40] sm:$0xf]
    %v3092 = vld [vmem:[#allocation2 + $0x44] sm:$0xf]
    %v3093 = vld [vmem:[#allocation2 + $0x48] sm:$0xf]
    %v3094 = vld [vmem:[#allocation2 + $0x4c] sm:$0xf]
    %v3095 = vld [vmem:[#allocation2 + $0x50] sm:$0xf]
    %v3096 = vld [vmem:[#allocation2 + $0x54] sm:$0xf]
    %v3097 = vld [vmem:[#allocation2 + $0x58] sm:$0xf]
    %v3098 = vld [vmem:[#allocation2 + $0x5c] sm:$0xf]
    %v3099 = vld [vmem:[#allocation2 + $0x60] sm:$0xf]
    %v3100 = vld [vmem:[#allocation2 + $0x64] sm:$0xf]
    %v3101 = vld [vmem:[#allocation2 + $0x68] sm:$0xf]
    %v3102 = vld [vmem:[#allocation2 + $0x6c] sm:$0xf]
    %v3103 = vld [vmem:[#allocation2 + $0x70] sm:$0xf]
    %v3104 = vld [vmem:[#allocation2 + $0x74] sm:$0xf]
    %v3105 = vld [vmem:[#allocation2 + $0x78] sm:$0xf]
    %v3106 = vld [vmem:[#allocation2 + $0x7c] sm:$0xf]
    %v3107 = vld [vmem:[#allocation2 + $0x80] sm:$0x1]
    %vm3141 = vcmask 1042432
    %vm3142 = vcmask 1046532
    %vm3143 = vmor %vm3141, %vm3142
    %v3144 = vrot.slane %v3075, 5
    %v3145 = vrot.slane %v3144, 4
    %v3146 = vrot.slane %v3076, 5
    %v3147 = vsel %vm3143, %v3145, %v3146
    %v3148 = vrot.slane %v3146, 4
    %v3149 = vrot.slane %v3077, 5
    %v3150 = vsel %vm3143, %v3148, %v3149
    %v3151 = vrot.slane %v3149, 4
    %v3152 = vrot.slane %v3078, 5
    %v3153 = vsel %vm3143, %v3151, %v3152
    %v3154 = vrot.slane %v3152, 4
    %v3155 = vrot.slane %v3079, 5
    %v3156 = vsel %vm3143, %v3154, %v3155
    %v3157 = vrot.slane %v3155, 4
    %v3158 = vrot.slane %v3080, 5
    %v3159 = vsel %vm3143, %v3157, %v3158
    %v3160 = vrot.slane %v3158, 4
    %v3161 = vrot.slane %v3081, 5
    %v3162 = vsel %vm3143, %v3160, %v3161
    %v3163 = vrot.slane %v3161, 4
    %v3164 = vrot.slane %v3082, 5
    %v3165 = vsel %vm3143, %v3163, %v3164
    %v3166 = vrot.slane %v3164, 4
    %v3167 = vrot.slane %v3083, 5
    %v3168 = vsel %vm3143, %v3166, %v3167
    %v3169 = vrot.slane %v3167, 4
    %v3170 = vrot.slane %v3084, 5
    %v3171 = vsel %vm3143, %v3169, %v3170
    %v3172 = vrot.slane %v3170, 4
    %v3173 = vrot.slane %v3085, 5
    %v3174 = vsel %vm3143, %v3172, %v3173
    %v3175 = vrot.slane %v3173, 4
    %v3176 = vrot.slane %v3086, 5
    %v3177 = vsel %vm3143, %v3175, %v3176
    %v3178 = vrot.slane %v3176, 4
    %v3179 = vrot.slane %v3087, 5
    %v3180 = vsel %vm3143, %v3178, %v3179
    %v3181 = vrot.slane %v3179, 4
    %v3182 = vrot.slane %v3088, 5
    %v3183 = vsel %vm3143, %v3181, %v3182
    %v3184 = vrot.slane %v3182, 4
    %v3185 = vrot.slane %v3089, 5
    %v3186 = vsel %vm3143, %v3184, %v3185
    %v3187 = vrot.slane %v3185, 4
    %v3188 = vrot.slane %v3090, 5
    %v3189 = vsel %vm3143, %v3187, %v3188
    %v3190 = vrot.slane %v3188, 4
    %v3191 = vrot.slane %v3091, 5
    %v3192 = vsel %vm3143, %v3190, %v3191
    %v3193 = vrot.slane %v3191, 4
    %v3194 = vrot.slane %v3092, 5
    %v3195 = vsel %vm3143, %v3193, %v3194
    %v3196 = vrot.slane %v3194, 4
    %v3197 = vrot.slane %v3093, 5
    %v3198 = vsel %vm3143, %v3196, %v3197
    %v3199 = vrot.slane %v3197, 4
    %v3200 = vrot.slane %v3094, 5
    %v3201 = vsel %vm3143, %v3199, %v3200
    %v3202 = vrot.slane %v3200, 4
    %v3203 = vrot.slane %v3095, 5
    %v3204 = vsel %vm3143, %v3202, %v3203
    %v3205 = vrot.slane %v3203, 4
    %v3206 = vrot.slane %v3096, 5
    %v3207 = vsel %vm3143, %v3205, %v3206
    %v3208 = vrot.slane %v3206, 4
    %v3209 = vrot.slane %v3097, 5
    %v3210 = vsel %vm3143, %v3208, %v3209
    %v3211 = vrot.slane %v3209, 4
    %v3212 = vrot.slane %v3098, 5
    %v3213 = vsel %vm3143, %v3211, %v3212
    %v3214 = vrot.slane %v3212, 4
    %v3215 = vrot.slane %v3099, 5
    %v3216 = vsel %vm3143, %v3214, %v3215
    %v3217 = vrot.slane %v3215, 4
    %v3218 = vrot.slane %v3100, 5
    %v3219 = vsel %vm3143, %v3217, %v3218
    %v3220 = vrot.slane %v3218, 4
    %v3221 = vrot.slane %v3101, 5
    %v3222 = vsel %vm3143, %v3220, %v3221
    %v3223 = vrot.slane %v3221, 4
    %v3224 = vrot.slane %v3102, 5
    %v3225 = vsel %vm3143, %v3223, %v3224
    %v3226 = vrot.slane %v3224, 4
    %v3227 = vrot.slane %v3103, 5
    %v3228 = vsel %vm3143, %v3226, %v3227
    %v3229 = vrot.slane %v3227, 4
    %v3230 = vrot.slane %v3104, 5
    %v3231 = vsel %vm3143, %v3229, %v3230
    %v3232 = vrot.slane %v3230, 4
    %v3233 = vrot.slane %v3105, 5
    %v3234 = vsel %vm3143, %v3232, %v3233
    %v3235 = vrot.slane %v3233, 4
    %v3236 = vrot.slane %v3106, 5
    %v3237 = vsel %vm3143, %v3235, %v3236
    %v3238 = vrot.slane %v3236, 4
    %v3239 = vrot.slane %v3107, 5
    %v3240 = vsel %vm3143, %v3238, %v3239
    %3241 = vrot.lane.b32.xlu0 %v3147, 16
    %v3242 = vpop.permute.xlu0 %3241
    %3243 = vrot.lane.b32.xlu0 %v3150, 16
    %v3244 = vpop.permute.xlu0 %3243
    %3245 = vrot.lane.b32.xlu0 %v3153, 16
    %v3246 = vpop.permute.xlu0 %3245
    %3247 = vrot.lane.b32.xlu0 %v3156, 16
    %v3248 = vpop.permute.xlu0 %3247
    %3249 = vrot.lane.b32.xlu0 %v3159, 16
    %v3250 = vpop.permute.xlu0 %3249
    %3251 = vrot.lane.b32.xlu0 %v3162, 16
    %v3252 = vpop.permute.xlu0 %3251
    %3253 = vrot.lane.b32.xlu0 %v3165, 16
    %v3254 = vpop.permute.xlu0 %3253
    %3255 = vrot.lane.b32.xlu0 %v3168, 16
    %v3256 = vpop.permute.xlu0 %3255
    %3257 = vrot.lane.b32.xlu0 %v3171, 16
    %v3258 = vpop.permute.xlu0 %3257
    %3259 = vrot.lane.b32.xlu0 %v3174, 16
    %v3260 = vpop.permute.xlu0 %3259
    %3261 = vrot.lane.b32.xlu0 %v3177, 16
    %v3262 = vpop.permute.xlu0 %3261
    %3263 = vrot.lane.b32.xlu0 %v3180, 16
    %v3264 = vpop.permute.xlu0 %3263
    %3265 = vrot.lane.b32.xlu0 %v3183, 16
    %v3266 = vpop.permute.xlu0 %3265
    %3267 = vrot.lane.b32.xlu0 %v3186, 16
    %v3268 = vpop.permute.xlu0 %3267
    %3269 = vrot.lane.b32.xlu0 %v3189, 16
    %v3270 = vpop.permute.xlu0 %3269
    %3271 = vrot.lane.b32.xlu0 %v3192, 16
    %v3272 = vpop.permute.xlu0 %3271
    %3273 = vrot.lane.b32.xlu0 %v3195, 16
    %v3274 = vpop.permute.xlu0 %3273
    %3275 = vrot.lane.b32.xlu0 %v3198, 16
    %v3276 = vpop.permute.xlu0 %3275
    %3277 = vrot.lane.b32.xlu0 %v3201, 16
    %v3278 = vpop.permute.xlu0 %3277
    %3279 = vrot.lane.b32.xlu0 %v3204, 16
    %v3280 = vpop.permute.xlu0 %3279
    %3281 = vrot.lane.b32.xlu0 %v3207, 16
    %v3282 = vpop.permute.xlu0 %3281
    %3283 = vrot.lane.b32.xlu0 %v3210, 16
    %v3284 = vpop.permute.xlu0 %3283
    %3285 = vrot.lane.b32.xlu0 %v3213, 16
    %v3286 = vpop.permute.xlu0 %3285
    %3287 = vrot.lane.b32.xlu0 %v3216, 16
    %v3288 = vpop.permute.xlu0 %3287
    %3289 = vrot.lane.b32.xlu0 %v3219, 16
    %v3290 = vpop.permute.xlu0 %3289
    %3291 = vrot.lane.b32.xlu0 %v3222, 16
    %v3292 = vpop.permute.xlu0 %3291
    %3293 = vrot.lane.b32.xlu0 %v3225, 16
    %v3294 = vpop.permute.xlu0 %3293
    %3295 = vrot.lane.b32.xlu0 %v3228, 16
    %v3296 = vpop.permute.xlu0 %3295
    %3297 = vrot.lane.b32.xlu0 %v3231, 16
    %v3298 = vpop.permute.xlu0 %3297
    %3299 = vrot.lane.b32.xlu0 %v3234, 16
    %v3300 = vpop.permute.xlu0 %3299
    %3301 = vrot.lane.b32.xlu0 %v3237, 16
    %v3302 = vpop.permute.xlu0 %3301
    %3303 = vrot.lane.b32.xlu0 %v3240, 16
    %v3304 = vpop.permute.xlu0 %3303
    %vm3337 = vcmask 191616
    %3338 = vst.msk [vmem:[#allocation3] sm:$0xf] %vm3337, %v3242
    %3339 = vst.msk [vmem:[#allocation3 + $0x8] sm:$0xf] %vm3337, %v3244
    %3340 = vst.msk [vmem:[#allocation3 + $0x10] sm:$0xf] %vm3337, %v3246
    %3341 = vst.msk [vmem:[#allocation3 + $0x18] sm:$0xf] %vm3337, %v3248
    %3342 = vst.msk [vmem:[#allocation3 + $0x20] sm:$0xf] %vm3337, %v3250
    %3343 = vst.msk [vmem:[#allocation3 + $0x28] sm:$0xf] %vm3337, %v3252
    %3344 = vst.msk [vmem:[#allocation3 + $0x30] sm:$0xf] %vm3337, %v3254
    %3345 = vst.msk [vmem:[#allocation3 + $0x38] sm:$0xf] %vm3337, %v3256
    %3346 = vst.msk [vmem:[#allocation3 + $0x40] sm:$0xf] %vm3337, %v3258
    %3347 = vst.msk [vmem:[#allocation3 + $0x48] sm:$0xf] %vm3337, %v3260
    %3348 = vst.msk [vmem:[#allocation3 + $0x50] sm:$0xf] %vm3337, %v3262
    %3349 = vst.msk [vmem:[#allocation3 + $0x58] sm:$0xf] %vm3337, %v3264
    %3350 = vst.msk [vmem:[#allocation3 + $0x60] sm:$0xf] %vm3337, %v3266
    %3351 = vst.msk [vmem:[#allocation3 + $0x68] sm:$0xf] %vm3337, %v3268
    %3352 = vst.msk [vmem:[#allocation3 + $0x70] sm:$0xf] %vm3337, %v3270
    %3353 = vst.msk [vmem:[#allocation3 + $0x78] sm:$0xf] %vm3337, %v3272
    %3354 = vst.msk [vmem:[#allocation3 + $0x80] sm:$0xf] %vm3337, %v3274
    %3355 = vst.msk [vmem:[#allocation3 + $0x88] sm:$0xf] %vm3337, %v3276
    %3356 = vst.msk [vmem:[#allocation3 + $0x90] sm:$0xf] %vm3337, %v3278
    %3357 = vst.msk [vmem:[#allocation3 + $0x98] sm:$0xf] %vm3337, %v3280
    %3358 = vst.msk [vmem:[#allocation3 + $0xa0] sm:$0xf] %vm3337, %v3282
    %3359 = vst.msk [vmem:[#allocation3 + $0xa8] sm:$0xf] %vm3337, %v3284
    %3360 = vst.msk [vmem:[#allocation3 + $0xb0] sm:$0xf] %vm3337, %v3286
    %3361 = vst.msk [vmem:[#allocation3 + $0xb8] sm:$0xf] %vm3337, %v3288
    %3362 = vst.msk [vmem:[#allocation3 + $0xc0] sm:$0xf] %vm3337, %v3290
    %3363 = vst.msk [vmem:[#allocation3 + $0xc8] sm:$0xf] %vm3337, %v3292
    %3364 = vst.msk [vmem:[#allocation3 + $0xd0] sm:$0xf] %vm3337, %v3294
    %3365 = vst.msk [vmem:[#allocation3 + $0xd8] sm:$0xf] %vm3337, %v3296
    %3366 = vst.msk [vmem:[#allocation3 + $0xe0] sm:$0xf] %vm3337, %v3298
    %3367 = vst.msk [vmem:[#allocation3 + $0xe8] sm:$0xf] %vm3337, %v3300
    %3368 = vst.msk [vmem:[#allocation3 + $0xf0] sm:$0xf] %vm3337, %v3302
    %3369 = vst.msk [vmem:[#allocation3 + $0xf8] sm:$0xf] %vm3337, %v3304
    %v3370 = vld [vmem:[#allocation2] sm:$0xe]
    %v3371 = vld [vmem:[#allocation2 + $0x4] sm:$0xf]
    %v3372 = vld [vmem:[#allocation2 + $0x8] sm:$0xf]
    %v3373 = vld [vmem:[#allocation2 + $0xc] sm:$0xf]
    %v3374 = vld [vmem:[#allocation2 + $0x10] sm:$0xf]
    %v3375 = vld [vmem:[#allocation2 + $0x14] sm:$0xf]
    %v3376 = vld [vmem:[#allocation2 + $0x18] sm:$0xf]
    %v3377 = vld [vmem:[#allocation2 + $0x1c] sm:$0xf]
    %v3378 = vld [vmem:[#allocation2 + $0x20] sm:$0xf]
    %v3379 = vld [vmem:[#allocation2 + $0x24] sm:$0xf]
    %v3380 = vld [vmem:[#allocation2 + $0x28] sm:$0xf]
    %v3381 = vld [vmem:[#allocation2 + $0x2c] sm:$0xf]
    %v3382 = vld [vmem:[#allocation2 + $0x30] sm:$0xf]
    %v3383 = vld [vmem:[#allocation2 + $0x34] sm:$0xf]
    %v3384 = vld [vmem:[#allocation2 + $0x38] sm:$0xf]
    %v3385 = vld [vmem:[#allocation2 + $0x3c] sm:$0xf]
    %v3386 = vld [vmem:[#allocation2 + $0x40] sm:$0xf]
    %v3387 = vld [vmem:[#allocation2 + $0x44] sm:$0xf]
    %v3388 = vld [vmem:[#allocation2 + $0x48] sm:$0xf]
    %v3389 = vld [vmem:[#allocation2 + $0x4c] sm:$0xf]
    %v3390 = vld [vmem:[#allocation2 + $0x50] sm:$0xf]
    %v3391 = vld [vmem:[#allocation2 + $0x54] sm:$0xf]
    %v3392 = vld [vmem:[#allocation2 + $0x58] sm:$0xf]
    %v3393 = vld [vmem:[#allocation2 + $0x5c] sm:$0xf]
    %v3394 = vld [vmem:[#allocation2 + $0x60] sm:$0xf]
    %v3395 = vld [vmem:[#allocation2 + $0x64] sm:$0xf]
    %v3396 = vld [vmem:[#allocation2 + $0x68] sm:$0xf]
    %v3397 = vld [vmem:[#allocation2 + $0x6c] sm:$0xf]
    %v3398 = vld [vmem:[#allocation2 + $0x70] sm:$0xf]
    %v3399 = vld [vmem:[#allocation2 + $0x74] sm:$0xf]
    %v3400 = vld [vmem:[#allocation2 + $0x78] sm:$0xf]
    %v3401 = vld [vmem:[#allocation2 + $0x7c] sm:$0xf]
    %v3402 = vld [vmem:[#allocation2 + $0x80] sm:$0x3]
    %vm3403 = vsmask.f32 2304
    %vm3404 = vsmask.f32 6416
    %vm3405 = vmor %vm3403, %vm3404
    %v3407 = vshrl.u32 %v3370, 16
    %v3409 = vrot.slane %v3407, 5
    %v3410 = vshll.u32 %v3370, 16
    %v3412 = vrot.slane %v3410, 6
    %v3413 = vor.u32 %v3409, %v3412
    %v3414 = vrot.slane %v3413, 4
    %v3416 = vshrl.u32 %v3371, 16
    %v3418 = vrot.slane %v3416, 5
    %v3419 = vshll.u32 %v3371, 16
    %v3421 = vrot.slane %v3419, 6
    %v3422 = vor.u32 %v3418, %v3421
    %v3423 = vsel %vm3405, %v3414, %v3422
    %v3424 = vrot.slane %v3422, 4
    %v3426 = vshrl.u32 %v3372, 16
    %v3428 = vrot.slane %v3426, 5
    %v3429 = vshll.u32 %v3372, 16
    %v3431 = vrot.slane %v3429, 6
    %v3432 = vor.u32 %v3428, %v3431
    %v3433 = vsel %vm3405, %v3424, %v3432
    %v3434 = vrot.slane %v3432, 4
    %v3436 = vshrl.u32 %v3373, 16
    %v3438 = vrot.slane %v3436, 5
    %v3439 = vshll.u32 %v3373, 16
    %v3441 = vrot.slane %v3439, 6
    %v3442 = vor.u32 %v3438, %v3441
    %v3443 = vsel %vm3405, %v3434, %v3442
    %v3444 = vrot.slane %v3442, 4
    %v3446 = vshrl.u32 %v3374, 16
    %v3448 = vrot.slane %v3446, 5
    %v3449 = vshll.u32 %v3374, 16
    %v3451 = vrot.slane %v3449, 6
    %v3452 = vor.u32 %v3448, %v3451
    %v3453 = vsel %vm3405, %v3444, %v3452
    %v3454 = vrot.slane %v3452, 4
    %v3456 = vshrl.u32 %v3375, 16
    %v3458 = vrot.slane %v3456, 5
    %v3459 = vshll.u32 %v3375, 16
    %v3461 = vrot.slane %v3459, 6
    %v3462 = vor.u32 %v3458, %v3461
    %v3463 = vsel %vm3405, %v3454, %v3462
    %v3464 = vrot.slane %v3462, 4
    %v3466 = vshrl.u32 %v3376, 16
    %v3468 = vrot.slane %v3466, 5
    %v3469 = vshll.u32 %v3376, 16
    %v3471 = vrot.slane %v3469, 6
    %v3472 = vor.u32 %v3468, %v3471
    %v3473 = vsel %vm3405, %v3464, %v3472
    %v3474 = vrot.slane %v3472, 4
    %v3476 = vshrl.u32 %v3377, 16
    %v3478 = vrot.slane %v3476, 5
    %v3479 = vshll.u32 %v3377, 16
    %v3481 = vrot.slane %v3479, 6
    %v3482 = vor.u32 %v3478, %v3481
    %v3483 = vsel %vm3405, %v3474, %v3482
    %v3484 = vrot.slane %v3482, 4
    %v3486 = vshrl.u32 %v3378, 16
    %v3488 = vrot.slane %v3486, 5
    %v3489 = vshll.u32 %v3378, 16
    %v3491 = vrot.slane %v3489, 6
    %v3492 = vor.u32 %v3488, %v3491
    %v3493 = vsel %vm3405, %v3484, %v3492
    %v3494 = vrot.slane %v3492, 4
    %v3496 = vshrl.u32 %v3379, 16
    %v3498 = vrot.slane %v3496, 5
    %v3499 = vshll.u32 %v3379, 16
    %v3501 = vrot.slane %v3499, 6
    %v3502 = vor.u32 %v3498, %v3501
    %v3503 = vsel %vm3405, %v3494, %v3502
    %v3504 = vrot.slane %v3502, 4
    %v3506 = vshrl.u32 %v3380, 16
    %v3508 = vrot.slane %v3506, 5
    %v3509 = vshll.u32 %v3380, 16
    %v3511 = vrot.slane %v3509, 6
    %v3512 = vor.u32 %v3508, %v3511
    %v3513 = vsel %vm3405, %v3504, %v3512
    %v3514 = vrot.slane %v3512, 4
    %v3516 = vshrl.u32 %v3381, 16
    %v3518 = vrot.slane %v3516, 5
    %v3519 = vshll.u32 %v3381, 16
    %v3521 = vrot.slane %v3519, 6
    %v3522 = vor.u32 %v3518, %v3521
    %v3523 = vsel %vm3405, %v3514, %v3522
    %v3524 = vrot.slane %v3522, 4
    %v3526 = vshrl.u32 %v3382, 16
    %v3528 = vrot.slane %v3526, 5
    %v3529 = vshll.u32 %v3382, 16
    %v3531 = vrot.slane %v3529, 6
    %v3532 = vor.u32 %v3528, %v3531
    %v3533 = vsel %vm3405, %v3524, %v3532
    %v3534 = vrot.slane %v3532, 4
    %v3536 = vshrl.u32 %v3383, 16
    %v3538 = vrot.slane %v3536, 5
    %v3539 = vshll.u32 %v3383, 16
    %v3541 = vrot.slane %v3539, 6
    %v3542 = vor.u32 %v3538, %v3541
    %v3543 = vsel %vm3405, %v3534, %v3542
    %v3544 = vrot.slane %v3542, 4
    %v3546 = vshrl.u32 %v3384, 16
    %v3548 = vrot.slane %v3546, 5
    %v3549 = vshll.u32 %v3384, 16
    %v3551 = vrot.slane %v3549, 6
    %v3552 = vor.u32 %v3548, %v3551
    %v3553 = vsel %vm3405, %v3544, %v3552
    %v3554 = vrot.slane %v3552, 4
    %v3556 = vshrl.u32 %v3385, 16
    %v3558 = vrot.slane %v3556, 5
    %v3559 = vshll.u32 %v3385, 16
    %v3561 = vrot.slane %v3559, 6
    %v3562 = vor.u32 %v3558, %v3561
    %v3563 = vsel %vm3405, %v3554, %v3562
    %v3564 = vrot.slane %v3562, 4
    %v3566 = vshrl.u32 %v3386, 16
    %v3568 = vrot.slane %v3566, 5
    %v3569 = vshll.u32 %v3386, 16
    %v3571 = vrot.slane %v3569, 6
    %v3572 = vor.u32 %v3568, %v3571
    %v3573 = vsel %vm3405, %v3564, %v3572
    %v3574 = vrot.slane %v3572, 4
    %v3576 = vshrl.u32 %v3387, 16
    %v3578 = vrot.slane %v3576, 5
    %v3579 = vshll.u32 %v3387, 16
    %v3581 = vrot.slane %v3579, 6
    %v3582 = vor.u32 %v3578, %v3581
    %v3583 = vsel %vm3405, %v3574, %v3582
    %v3584 = vrot.slane %v3582, 4
    %v3586 = vshrl.u32 %v3388, 16
    %v3588 = vrot.slane %v3586, 5
    %v3589 = vshll.u32 %v3388, 16
    %v3591 = vrot.slane %v3589, 6
    %v3592 = vor.u32 %v3588, %v3591
    %v3593 = vsel %vm3405, %v3584, %v3592
    %v3594 = vrot.slane %v3592, 4
    %v3596 = vshrl.u32 %v3389, 16
    %v3598 = vrot.slane %v3596, 5
    %v3599 = vshll.u32 %v3389, 16
    %v3601 = vrot.slane %v3599, 6
    %v3602 = vor.u32 %v3598, %v3601
    %v3603 = vsel %vm3405, %v3594, %v3602
    %v3604 = vrot.slane %v3602, 4
    %v3606 = vshrl.u32 %v3390, 16
    %v3608 = vrot.slane %v3606, 5
    %v3609 = vshll.u32 %v3390, 16
    %v3611 = vrot.slane %v3609, 6
    %v3612 = vor.u32 %v3608, %v3611
    %v3613 = vsel %vm3405, %v3604, %v3612
    %v3614 = vrot.slane %v3612, 4
    %v3616 = vshrl.u32 %v3391, 16
    %v3618 = vrot.slane %v3616, 5
    %v3619 = vshll.u32 %v3391, 16
    %v3621 = vrot.slane %v3619, 6
    %v3622 = vor.u32 %v3618, %v3621
    %v3623 = vsel %vm3405, %v3614, %v3622
    %v3624 = vrot.slane %v3622, 4
    %v3626 = vshrl.u32 %v3392, 16
    %v3628 = vrot.slane %v3626, 5
    %v3629 = vshll.u32 %v3392, 16
    %v3631 = vrot.slane %v3629, 6
    %v3632 = vor.u32 %v3628, %v3631
    %v3633 = vsel %vm3405, %v3624, %v3632
    %v3634 = vrot.slane %v3632, 4
    %v3636 = vshrl.u32 %v3393, 16
    %v3638 = vrot.slane %v3636, 5
    %v3639 = vshll.u32 %v3393, 16
    %v3641 = vrot.slane %v3639, 6
    %v3642 = vor.u32 %v3638, %v3641
    %v3643 = vsel %vm3405, %v3634, %v3642
    %v3644 = vrot.slane %v3642, 4
    %v3646 = vshrl.u32 %v3394, 16
    %v3648 = vrot.slane %v3646, 5
    %v3649 = vshll.u32 %v3394, 16
    %v3651 = vrot.slane %v3649, 6
    %v3652 = vor.u32 %v3648, %v3651
    %v3653 = vsel %vm3405, %v3644, %v3652
    %v3654 = vrot.slane %v3652, 4
    %v3656 = vshrl.u32 %v3395, 16
    %v3658 = vrot.slane %v3656, 5
    %v3659 = vshll.u32 %v3395, 16
    %v3661 = vrot.slane %v3659, 6
    %v3662 = vor.u32 %v3658, %v3661
    %v3663 = vsel %vm3405, %v3654, %v3662
    %v3664 = vrot.slane %v3662, 4
    %v3666 = vshrl.u32 %v3396, 16
    %v3668 = vrot.slane %v3666, 5
    %v3669 = vshll.u32 %v3396, 16
    %v3671 = vrot.slane %v3669, 6
    %v3672 = vor.u32 %v3668, %v3671
    %v3673 = vsel %vm3405, %v3664, %v3672
    %v3674 = vrot.slane %v3672, 4
    %v3676 = vshrl.u32 %v3397, 16
    %v3678 = vrot.slane %v3676, 5
    %v3679 = vshll.u32 %v3397, 16
    %v3681 = vrot.slane %v3679, 6
    %v3682 = vor.u32 %v3678, %v3681
    %v3683 = vsel %vm3405, %v3674, %v3682
    %v3684 = vrot.slane %v3682, 4
    %v3686 = vshrl.u32 %v3398, 16
    %v3688 = vrot.slane %v3686, 5
    %v3689 = vshll.u32 %v3398, 16
    %v3691 = vrot.slane %v3689, 6
    %v3692 = vor.u32 %v3688, %v3691
    %v3693 = vsel %vm3405, %v3684, %v3692
    %v3694 = vrot.slane %v3692, 4
    %v3696 = vshrl.u32 %v3399, 16
    %v3698 = vrot.slane %v3696, 5
    %v3699 = vshll.u32 %v3399, 16
    %v3701 = vrot.slane %v3699, 6
    %v3702 = vor.u32 %v3698, %v3701
    %v3703 = vsel %vm3405, %v3694, %v3702
    %v3704 = vrot.slane %v3702, 4
    %v3706 = vshrl.u32 %v3400, 16
    %v3708 = vrot.slane %v3706, 5
    %v3709 = vshll.u32 %v3400, 16
    %v3711 = vrot.slane %v3709, 6
    %v3712 = vor.u32 %v3708, %v3711
    %v3713 = vsel %vm3405, %v3704, %v3712
    %v3714 = vrot.slane %v3712, 4
    %v3716 = vshrl.u32 %v3401, 16
    %v3718 = vrot.slane %v3716, 5
    %v3719 = vshll.u32 %v3401, 16
    %v3721 = vrot.slane %v3719, 6
    %v3722 = vor.u32 %v3718, %v3721
    %v3723 = vsel %vm3405, %v3714, %v3722
    %v3724 = vrot.slane %v3722, 4
    %v3726 = vshrl.u32 %v3402, 16
    %v3728 = vrot.slane %v3726, 5
    %v3729 = vshll.u32 %v3402, 16
    %v3731 = vrot.slane %v3729, 6
    %v3732 = vor.u32 %v3728, %v3731
    %v3733 = vsel %vm3405, %v3724, %v3732
    %3734 = vrot.lane.b32.xlu0 %v3423, 24
    %v3735 = vpop.permute.xlu0 %3734
    %3736 = vrot.lane.b32.xlu0 %v3433, 24
    %v3737 = vpop.permute.xlu0 %3736
    %3738 = vrot.lane.b32.xlu0 %v3443, 24
    %v3739 = vpop.permute.xlu0 %3738
    %3740 = vrot.lane.b32.xlu0 %v3453, 24
    %v3741 = vpop.permute.xlu0 %3740
    %3742 = vrot.lane.b32.xlu0 %v3463, 24
    %v3743 = vpop.permute.xlu0 %3742
    %3744 = vrot.lane.b32.xlu0 %v3473, 24
    %v3745 = vpop.permute.xlu0 %3744
    %3746 = vrot.lane.b32.xlu0 %v3483, 24
    %v3747 = vpop.permute.xlu0 %3746
    %3748 = vrot.lane.b32.xlu0 %v3493, 24
    %v3749 = vpop.permute.xlu0 %3748
    %3750 = vrot.lane.b32.xlu0 %v3503, 24
    %v3751 = vpop.permute.xlu0 %3750
    %3752 = vrot.lane.b32.xlu0 %v3513, 24
    %v3753 = vpop.permute.xlu0 %3752
    %3754 = vrot.lane.b32.xlu0 %v3523, 24
    %v3755 = vpop.permute.xlu0 %3754
    %3756 = vrot.lane.b32.xlu0 %v3533, 24
    %v3757 = vpop.permute.xlu0 %3756
    %3758 = vrot.lane.b32.xlu0 %v3543, 24
    %v3759 = vpop.permute.xlu0 %3758
    %3760 = vrot.lane.b32.xlu0 %v3553, 24
    %v3761 = vpop.permute.xlu0 %3760
    %3762 = vrot.lane.b32.xlu0 %v3563, 24
    %v3763 = vpop.permute.xlu0 %3762
    %3764 = vrot.lane.b32.xlu0 %v3573, 24
    %v3765 = vpop.permute.xlu0 %3764
    %3766 = vrot.lane.b32.xlu0 %v3583, 24
    %v3767 = vpop.permute.xlu0 %3766
    %3768 = vrot.lane.b32.xlu0 %v3593, 24
    %v3769 = vpop.permute.xlu0 %3768
    %3770 = vrot.lane.b32.xlu0 %v3603, 24
    %v3771 = vpop.permute.xlu0 %3770
    %3772 = vrot.lane.b32.xlu0 %v3613, 24
    %v3773 = vpop.permute.xlu0 %3772
    %3774 = vrot.lane.b32.xlu0 %v3623, 24
    %v3775 = vpop.permute.xlu0 %3774
    %3776 = vrot.lane.b32.xlu0 %v3633, 24
    %v3777 = vpop.permute.xlu0 %3776
    %3778 = vrot.lane.b32.xlu0 %v3643, 24
    %v3779 = vpop.permute.xlu0 %3778
    %3780 = vrot.lane.b32.xlu0 %v3653, 24
    %v3781 = vpop.permute.xlu0 %3780
    %3782 = vrot.lane.b32.xlu0 %v3663, 24
    %v3783 = vpop.permute.xlu0 %3782
    %3784 = vrot.lane.b32.xlu0 %v3673, 24
    %v3785 = vpop.permute.xlu0 %3784
    %3786 = vrot.lane.b32.xlu0 %v3683, 24
    %v3787 = vpop.permute.xlu0 %3786
    %3788 = vrot.lane.b32.xlu0 %v3693, 24
    %v3789 = vpop.permute.xlu0 %3788
    %3790 = vrot.lane.b32.xlu0 %v3703, 24
    %v3791 = vpop.permute.xlu0 %3790
    %3792 = vrot.lane.b32.xlu0 %v3713, 24
    %v3793 = vpop.permute.xlu0 %3792
    %3794 = vrot.lane.b32.xlu0 %v3723, 24
    %v3795 = vpop.permute.xlu0 %3794
    %3796 = vrot.lane.b32.xlu0 %v3733, 24
    %v3797 = vpop.permute.xlu0 %3796
    %vm3830 = vcmask 257216
    %3831 = vst.msk [vmem:[#allocation3] sm:$0xf] %vm3830, %v3735
    %3832 = vst.msk [vmem:[#allocation3 + $0x8] sm:$0xf] %vm3830, %v3737
    %3833 = vst.msk [vmem:[#allocation3 + $0x10] sm:$0xf] %vm3830, %v3739
    %3834 = vst.msk [vmem:[#allocation3 + $0x18] sm:$0xf] %vm3830, %v3741
    %3835 = vst.msk [vmem:[#allocation3 + $0x20] sm:$0xf] %vm3830, %v3743
    %3836 = vst.msk [vmem:[#allocation3 + $0x28] sm:$0xf] %vm3830, %v3745
    %3837 = vst.msk [vmem:[#allocation3 + $0x30] sm:$0xf] %vm3830, %v3747
    %3838 = vst.msk [vmem:[#allocation3 + $0x38] sm:$0xf] %vm3830, %v3749
    %3839 = vst.msk [vmem:[#allocation3 + $0x40] sm:$0xf] %vm3830, %v3751
    %3840 = vst.msk [vmem:[#allocation3 + $0x48] sm:$0xf] %vm3830, %v3753
    %3841 = vst.msk [vmem:[#allocation3 + $0x50] sm:$0xf] %vm3830, %v3755
    %3842 = vst.msk [vmem:[#allocation3 + $0x58] sm:$0xf] %vm3830, %v3757
    %3843 = vst.msk [vmem:[#allocation3 + $0x60] sm:$0xf] %vm3830, %v3759
    %3844 = vst.msk [vmem:[#allocation3 + $0x68] sm:$0xf] %vm3830, %v3761
    %3845 = vst.msk [vmem:[#allocation3 + $0x70] sm:$0xf] %vm3830, %v3763
    %3846 = vst.msk [vmem:[#allocation3 + $0x78] sm:$0xf] %vm3830, %v3765
    %3847 = vst.msk [vmem:[#allocation3 + $0x80] sm:$0xf] %vm3830, %v3767
    %3848 = vst.msk [vmem:[#allocation3 + $0x88] sm:$0xf] %vm3830, %v3769
    %3849 = vst.msk [vmem:[#allocation3 + $0x90] sm:$0xf] %vm3830, %v3771
    %3850 = vst.msk [vmem:[#allocation3 + $0x98] sm:$0xf] %vm3830, %v3773
    %3851 = vst.msk [vmem:[#allocation3 + $0xa0] sm:$0xf] %vm3830, %v3775
    %3852 = vst.msk [vmem:[#allocation3 + $0xa8] sm:$0xf] %vm3830, %v3777
    %3853 = vst.msk [vmem:[#allocation3 + $0xb0] sm:$0xf] %vm3830, %v3779
    %3854 = vst.msk [vmem:[#allocation3 + $0xb8] sm:$0xf] %vm3830, %v3781
    %3855 = vst.msk [vmem:[#allocation3 + $0xc0] sm:$0xf] %vm3830, %v3783
    %3856 = vst.msk [vmem:[#allocation3 + $0xc8] sm:$0xf] %vm3830, %v3785
    %3857 = vst.msk [vmem:[#allocation3 + $0xd0] sm:$0xf] %vm3830, %v3787
    %3858 = vst.msk [vmem:[#allocation3 + $0xd8] sm:$0xf] %vm3830, %v3789
    %3859 = vst.msk [vmem:[#allocation3 + $0xe0] sm:$0xf] %vm3830, %v3791
    %3860 = vst.msk [vmem:[#allocation3 + $0xe8] sm:$0xf] %vm3830, %v3793
    %3861 = vst.msk [vmem:[#allocation3 + $0xf0] sm:$0xf] %vm3830, %v3795
    %3862 = vst.msk [vmem:[#allocation3 + $0xf8] sm:$0xf] %vm3830, %v3797
    %v3863 = vld [vmem:[#allocation2] sm:$0xc]
    %v3864 = vld [vmem:[#allocation2 + $0x4] sm:$0xf]
    %v3865 = vld [vmem:[#allocation2 + $0x8] sm:$0xf]
    %v3866 = vld [vmem:[#allocation2 + $0xc] sm:$0xf]
    %v3867 = vld [vmem:[#allocation2 + $0x10] sm:$0xf]
    %v3868 = vld [vmem:[#allocation2 + $0x14] sm:$0xf]
    %v3869 = vld [vmem:[#allocation2 + $0x18] sm:$0xf]
    %v3870 = vld [vmem:[#allocation2 + $0x1c] sm:$0xf]
    %v3871 = vld [vmem:[#allocation2 + $0x20] sm:$0xf]
    %v3872 = vld [vmem:[#allocation2 + $0x24] sm:$0xf]
    %v3873 = vld [vmem:[#allocation2 + $0x28] sm:$0xf]
    %v3874 = vld [vmem:[#allocation2 + $0x2c] sm:$0xf]
    %v3875 = vld [vmem:[#allocation2 + $0x30] sm:$0xf]
    %v3876 = vld [vmem:[#allocation2 + $0x34] sm:$0xf]
    %v3877 = vld [vmem:[#allocation2 + $0x38] sm:$0xf]
    %v3878 = vld [vmem:[#allocation2 + $0x3c] sm:$0xf]
    %v3879 = vld [vmem:[#allocation2 + $0x40] sm:$0xf]
    %v3880 = vld [vmem:[#allocation2 + $0x44] sm:$0xf]
    %v3881 = vld [vmem:[#allocation2 + $0x48] sm:$0xf]
    %v3882 = vld [vmem:[#allocation2 + $0x4c] sm:$0xf]
    %v3883 = vld [vmem:[#allocation2 + $0x50] sm:$0xf]
    %v3884 = vld [vmem:[#allocation2 + $0x54] sm:$0xf]
    %v3885 = vld [vmem:[#allocation2 + $0x58] sm:$0xf]
    %v3886 = vld [vmem:[#allocation2 + $0x5c] sm:$0xf]
    %v3887 = vld [vmem:[#allocation2 + $0x60] sm:$0xf]
    %v3888 = vld [vmem:[#allocation2 + $0x64] sm:$0xf]
    %v3889 = vld [vmem:[#allocation2 + $0x68] sm:$0xf]
    %v3890 = vld [vmem:[#allocation2 + $0x6c] sm:$0xf]
    %v3891 = vld [vmem:[#allocation2 + $0x70] sm:$0xf]
    %v3892 = vld [vmem:[#allocation2 + $0x74] sm:$0xf]
    %v3893 = vld [vmem:[#allocation2 + $0x78] sm:$0xf]
    %v3894 = vld [vmem:[#allocation2 + $0x7c] sm:$0xf]
    %v3895 = vld [vmem:[#allocation2 + $0x80] sm:$0x3]
    %vm3929 = vcmask 1041408
    %vm3930 = vcmask 1045508
    %vm3931 = vmor %vm3929, %vm3930
    %v3932 = vrot.slane %v3863, 6
    %v3933 = vrot.slane %v3932, 4
    %v3934 = vrot.slane %v3864, 6
    %v3935 = vsel %vm3931, %v3933, %v3934
    %v3936 = vrot.slane %v3934, 4
    %v3937 = vrot.slane %v3865, 6
    %v3938 = vsel %vm3931, %v3936, %v3937
    %v3939 = vrot.slane %v3937, 4
    %v3940 = vrot.slane %v3866, 6
    %v3941 = vsel %vm3931, %v3939, %v3940
    %v3942 = vrot.slane %v3940, 4
    %v3943 = vrot.slane %v3867, 6
    %v3944 = vsel %vm3931, %v3942, %v3943
    %v3945 = vrot.slane %v3943, 4
    %v3946 = vrot.slane %v3868, 6
    %v3947 = vsel %vm3931, %v3945, %v3946
    %v3948 = vrot.slane %v3946, 4
    %v3949 = vrot.slane %v3869, 6
    %v3950 = vsel %vm3931, %v3948, %v3949
    %v3951 = vrot.slane %v3949, 4
    %v3952 = vrot.slane %v3870, 6
    %v3953 = vsel %vm3931, %v3951, %v3952
    %v3954 = vrot.slane %v3952, 4
    %v3955 = vrot.slane %v3871, 6
    %v3956 = vsel %vm3931, %v3954, %v3955
    %v3957 = vrot.slane %v3955, 4
    %v3958 = vrot.slane %v3872, 6
    %v3959 = vsel %vm3931, %v3957, %v3958
    %v3960 = vrot.slane %v3958, 4
    %v3961 = vrot.slane %v3873, 6
    %v3962 = vsel %vm3931, %v3960, %v3961
    %v3963 = vrot.slane %v3961, 4
    %v3964 = vrot.slane %v3874, 6
    %v3965 = vsel %vm3931, %v3963, %v3964
    %v3966 = vrot.slane %v3964, 4
    %v3967 = vrot.slane %v3875, 6
    %v3968 = vsel %vm3931, %v3966, %v3967
    %v3969 = vrot.slane %v3967, 4
    %v3970 = vrot.slane %v3876, 6
    %v3971 = vsel %vm3931, %v3969, %v3970
    %v3972 = vrot.slane %v3970, 4
    %v3973 = vrot.slane %v3877, 6
    %v3974 = vsel %vm3931, %v3972, %v3973
    %v3975 = vrot.slane %v3973, 4
    %v3976 = vrot.slane %v3878, 6
    %v3977 = vsel %vm3931, %v3975, %v3976
    %v3978 = vrot.slane %v3976, 4
    %v3979 = vrot.slane %v3879, 6
    %v3980 = vsel %vm3931, %v3978, %v3979
    %v3981 = vrot.slane %v3979, 4
    %v3982 = vrot.slane %v3880, 6
    %v3983 = vsel %vm3931, %v3981, %v3982
    %v3984 = vrot.slane %v3982, 4
    %v3985 = vrot.slane %v3881, 6
    %v3986 = vsel %vm3931, %v3984, %v3985
    %v3987 = vrot.slane %v3985, 4
    %v3988 = vrot.slane %v3882, 6
    %v3989 = vsel %vm3931, %v3987, %v3988
    %v3990 = vrot.slane %v3988, 4
    %v3991 = vrot.slane %v3883, 6
    %v3992 = vsel %vm3931, %v3990, %v3991
    %v3993 = vrot.slane %v3991, 4
    %v3994 = vrot.slane %v3884, 6
    %v3995 = vsel %vm3931, %v3993, %v3994
    %v3996 = vrot.slane %v3994, 4
    %v3997 = vrot.slane %v3885, 6
    %v3998 = vsel %vm3931, %v3996, %v3997
    %v3999 = vrot.slane %v3997, 4
    %v4000 = vrot.slane %v3886, 6
    %v4001 = vsel %vm3931, %v3999, %v4000
    %v4002 = vrot.slane %v4000, 4
    %v4003 = vrot.slane %v3887, 6
    %v4004 = vsel %vm3931, %v4002, %v4003
    %v4005 = vrot.slane %v4003, 4
    %v4006 = vrot.slane %v3888, 6
    %v4007 = vsel %vm3931, %v4005, %v4006
    %v4008 = vrot.slane %v4006, 4
    %v4009 = vrot.slane %v3889, 6
    %v4010 = vsel %vm3931, %v4008, %v4009
    %v4011 = vrot.slane %v4009, 4
    %v4012 = vrot.slane %v3890, 6
    %v4013 = vsel %vm3931, %v4011, %v4012
    %v4014 = vrot.slane %v4012, 4
    %v4015 = vrot.slane %v3891, 6
    %v4016 = vsel %vm3931, %v4014, %v4015
    %v4017 = vrot.slane %v4015, 4
    %v4018 = vrot.slane %v3892, 6
    %v4019 = vsel %vm3931, %v4017, %v4018
    %v4020 = vrot.slane %v4018, 4
    %v4021 = vrot.slane %v3893, 6
    %v4022 = vsel %vm3931, %v4020, %v4021
    %v4023 = vrot.slane %v4021, 4
    %v4024 = vrot.slane %v3894, 6
    %v4025 = vsel %vm3931, %v4023, %v4024
    %v4026 = vrot.slane %v4024, 4
    %v4027 = vrot.slane %v3895, 6
    %v4028 = vsel %vm3931, %v4026, %v4027
    %4029 = vrot.lane.b32.xlu0 %v3935, 32
    %v4030 = vpop.permute.xlu0 %4029
    %4031 = vrot.lane.b32.xlu0 %v3938, 32
    %v4032 = vpop.permute.xlu0 %4031
    %4033 = vrot.lane.b32.xlu0 %v3941, 32
    %v4034 = vpop.permute.xlu0 %4033
    %4035 = vrot.lane.b32.xlu0 %v3944, 32
    %v4036 = vpop.permute.xlu0 %4035
    %4037 = vrot.lane.b32.xlu0 %v3947, 32
    %v4038 = vpop.permute.xlu0 %4037
    %4039 = vrot.lane.b32.xlu0 %v3950, 32
    %v4040 = vpop.permute.xlu0 %4039
    %4041 = vrot.lane.b32.xlu0 %v3953, 32
    %v4042 = vpop.permute.xlu0 %4041
    %4043 = vrot.lane.b32.xlu0 %v3956, 32
    %v4044 = vpop.permute.xlu0 %4043
    %4045 = vrot.lane.b32.xlu0 %v3959, 32
    %v4046 = vpop.permute.xlu0 %4045
    %4047 = vrot.lane.b32.xlu0 %v3962, 32
    %v4048 = vpop.permute.xlu0 %4047
    %4049 = vrot.lane.b32.xlu0 %v3965, 32
    %v4050 = vpop.permute.xlu0 %4049
    %4051 = vrot.lane.b32.xlu0 %v3968, 32
    %v4052 = vpop.permute.xlu0 %4051
    %4053 = vrot.lane.b32.xlu0 %v3971, 32
    %v4054 = vpop.permute.xlu0 %4053
    %4055 = vrot.lane.b32.xlu0 %v3974, 32
    %v4056 = vpop.permute.xlu0 %4055
    %4057 = vrot.lane.b32.xlu0 %v3977, 32
    %v4058 = vpop.permute.xlu0 %4057
    %4059 = vrot.lane.b32.xlu0 %v3980, 32
    %v4060 = vpop.permute.xlu0 %4059
    %4061 = vrot.lane.b32.xlu0 %v3983, 32
    %v4062 = vpop.permute.xlu0 %4061
    %4063 = vrot.lane.b32.xlu0 %v3986, 32
    %v4064 = vpop.permute.xlu0 %4063
    %4065 = vrot.lane.b32.xlu0 %v3989, 32
    %v4066 = vpop.permute.xlu0 %4065
    %4067 = vrot.lane.b32.xlu0 %v3992, 32
    %v4068 = vpop.permute.xlu0 %4067
    %4069 = vrot.lane.b32.xlu0 %v3995, 32
    %v4070 = vpop.permute.xlu0 %4069
    %4071 = vrot.lane.b32.xlu0 %v3998, 32
    %v4072 = vpop.permute.xlu0 %4071
    %4073 = vrot.lane.b32.xlu0 %v4001, 32
    %v4074 = vpop.permute.xlu0 %4073
    %4075 = vrot.lane.b32.xlu0 %v4004, 32
    %v4076 = vpop.permute.xlu0 %4075
    %4077 = vrot.lane.b32.xlu0 %v4007, 32
    %v4078 = vpop.permute.xlu0 %4077
    %4079 = vrot.lane.b32.xlu0 %v4010, 32
    %v4080 = vpop.permute.xlu0 %4079
    %4081 = vrot.lane.b32.xlu0 %v4013, 32
    %v4082 = vpop.permute.xlu0 %4081
    %4083 = vrot.lane.b32.xlu0 %v4016, 32
    %v4084 = vpop.permute.xlu0 %4083
    %4085 = vrot.lane.b32.xlu0 %v4019, 32
    %v4086 = vpop.permute.xlu0 %4085
    %4087 = vrot.lane.b32.xlu0 %v4022, 32
    %v4088 = vpop.permute.xlu0 %4087
    %4089 = vrot.lane.b32.xlu0 %v4025, 32
    %v4090 = vpop.permute.xlu0 %4089
    %4091 = vrot.lane.b32.xlu0 %v4028, 32
    %v4092 = vpop.permute.xlu0 %4091
    %vm4125 = vcmask 322816
    %4126 = vst.msk [vmem:[#allocation3] sm:$0xf] %vm4125, %v4030
    %4127 = vst.msk [vmem:[#allocation3 + $0x8] sm:$0xf] %vm4125, %v4032
    %4128 = vst.msk [vmem:[#allocation3 + $0x10] sm:$0xf] %vm4125, %v4034
    %4129 = vst.msk [vmem:[#allocation3 + $0x18] sm:$0xf] %vm4125, %v4036
    %4130 = vst.msk [vmem:[#allocation3 + $0x20] sm:$0xf] %vm4125, %v4038
    %4131 = vst.msk [vmem:[#allocation3 + $0x28] sm:$0xf] %vm4125, %v4040
    %4132 = vst.msk [vmem:[#allocation3 + $0x30] sm:$0xf] %vm4125, %v4042
    %4133 = vst.msk [vmem:[#allocation3 + $0x38] sm:$0xf] %vm4125, %v4044
    %4134 = vst.msk [vmem:[#allocation3 + $0x40] sm:$0xf] %vm4125, %v4046
    %4135 = vst.msk [vmem:[#allocation3 + $0x48] sm:$0xf] %vm4125, %v4048
    %4136 = vst.msk [vmem:[#allocation3 + $0x50] sm:$0xf] %vm4125, %v4050
    %4137 = vst.msk [vmem:[#allocation3 + $0x58] sm:$0xf] %vm4125, %v4052
    %4138 = vst.msk [vmem:[#allocation3 + $0x60] sm:$0xf] %vm4125, %v4054
    %4139 = vst.msk [vmem:[#allocation3 + $0x68] sm:$0xf] %vm4125, %v4056
    %4140 = vst.msk [vmem:[#allocation3 + $0x70] sm:$0xf] %vm4125, %v4058
    %4141 = vst.msk [vmem:[#allocation3 + $0x78] sm:$0xf] %vm4125, %v4060
    %4142 = vst.msk [vmem:[#allocation3 + $0x80] sm:$0xf] %vm4125, %v4062
    %4143 = vst.msk [vmem:[#allocation3 + $0x88] sm:$0xf] %vm4125, %v4064
    %4144 = vst.msk [vmem:[#allocation3 + $0x90] sm:$0xf] %vm4125, %v4066
    %4145 = vst.msk [vmem:[#allocation3 + $0x98] sm:$0xf] %vm4125, %v4068
    %4146 = vst.msk [vmem:[#allocation3 + $0xa0] sm:$0xf] %vm4125, %v4070
    %4147 = vst.msk [vmem:[#allocation3 + $0xa8] sm:$0xf] %vm4125, %v4072
    %4148 = vst.msk [vmem:[#allocation3 + $0xb0] sm:$0xf] %vm4125, %v4074
    %4149 = vst.msk [vmem:[#allocation3 + $0xb8] sm:$0xf] %vm4125, %v4076
    %4150 = vst.msk [vmem:[#allocation3 + $0xc0] sm:$0xf] %vm4125, %v4078
    %4151 = vst.msk [vmem:[#allocation3 + $0xc8] sm:$0xf] %vm4125, %v4080
    %4152 = vst.msk [vmem:[#allocation3 + $0xd0] sm:$0xf] %vm4125, %v4082
    %4153 = vst.msk [vmem:[#allocation3 + $0xd8] sm:$0xf] %vm4125, %v4084
    %4154 = vst.msk [vmem:[#allocation3 + $0xe0] sm:$0xf] %vm4125, %v4086
    %4155 = vst.msk [vmem:[#allocation3 + $0xe8] sm:$0xf] %vm4125, %v4088
    %4156 = vst.msk [vmem:[#allocation3 + $0xf0] sm:$0xf] %vm4125, %v4090
    %4157 = vst.msk [vmem:[#allocation3 + $0xf8] sm:$0xf] %vm4125, %v4092
    %v4158 = vld [vmem:[#allocation2 + $0x10] sm:$0xf]
    %v4159 = vld [vmem:[#allocation2 + $0x14] sm:$0xf]
    %v4160 = vld [vmem:[#allocation2 + $0x18] sm:$0xf]
    %v4161 = vld [vmem:[#allocation2 + $0x1c] sm:$0xf]
    %v4162 = vld [vmem:[#allocation2 + $0x20] sm:$0xf]
    %v4163 = vld [vmem:[#allocation2 + $0x24] sm:$0xf]
    %v4164 = vld [vmem:[#allocation2 + $0x28] sm:$0xf]
    %v4165 = vld [vmem:[#allocation2 + $0x2c] sm:$0xf]
    %v4166 = vld [vmem:[#allocation2 + $0x30] sm:$0xf]
    %v4167 = vld [vmem:[#allocation2 + $0x34] sm:$0xf]
    %v4168 = vld [vmem:[#allocation2 + $0x38] sm:$0xf]
    %v4169 = vld [vmem:[#allocation2 + $0x3c] sm:$0xf]
    %v4170 = vld [vmem:[#allocation2 + $0x40] sm:$0xf]
    %v4171 = vld [vmem:[#allocation2 + $0x44] sm:$0xf]
    %v4172 = vld [vmem:[#allocation2 + $0x48] sm:$0xf]
    %v4173 = vld [vmem:[#allocation2 + $0x4c] sm:$0xf]
    %v4174 = vld [vmem:[#allocation2 + $0x50] sm:$0xf]
    %v4175 = vld [vmem:[#allocation2 + $0x54] sm:$0xf]
    %v4176 = vld [vmem:[#allocation2 + $0x58] sm:$0xf]
    %v4177 = vld [vmem:[#allocation2 + $0x5c] sm:$0xf]
    %v4178 = vld [vmem:[#allocation2 + $0x60] sm:$0xf]
    %v4179 = vld [vmem:[#allocation2 + $0x64] sm:$0xf]
    %v4180 = vld [vmem:[#allocation2 + $0x68] sm:$0xf]
    %v4181 = vld [vmem:[#allocation2 + $0x6c] sm:$0xf]
    %v4182 = vld [vmem:[#allocation2 + $0x70] sm:$0xf]
    %v4183 = vld [vmem:[#allocation2 + $0x74] sm:$0xf]
    %v4184 = vld [vmem:[#allocation2 + $0x78] sm:$0xf]
    %v4185 = vld [vmem:[#allocation2 + $0x7c] sm:$0xf]
    %v4186 = vld [vmem:[#allocation2 + $0x80] sm:$0xf]
    %v4187 = vld [vmem:[#allocation2 + $0x84] sm:$0xf]
    %v4188 = vld [vmem:[#allocation2 + $0x88] sm:$0xf]
    %v4189 = vld [vmem:[#allocation2 + $0x8c] sm:$0xf]
    %4222 = vrot.lane.b32.xlu0 %v4158, 40
    %v4223 = vpop.permute.xlu0 %4222
    %4224 = vrot.lane.b32.xlu0 %v4159, 40
    %v4225 = vpop.permute.xlu0 %4224
    %4226 = vrot.lane.b32.xlu0 %v4160, 40
    %v4227 = vpop.permute.xlu0 %4226
    %4228 = vrot.lane.b32.xlu0 %v4161, 40
    %v4229 = vpop.permute.xlu0 %4228
    %4230 = vrot.lane.b32.xlu0 %v4162, 40
    %v4231 = vpop.permute.xlu0 %4230
    %4232 = vrot.lane.b32.xlu0 %v4163, 40
    %v4233 = vpop.permute.xlu0 %4232
    %4234 = vrot.lane.b32.xlu0 %v4164, 40
    %v4235 = vpop.permute.xlu0 %4234
    %4236 = vrot.lane.b32.xlu0 %v4165, 40
    %v4237 = vpop.permute.xlu0 %4236
    %4238 = vrot.lane.b32.xlu0 %v4166, 40
    %v4239 = vpop.permute.xlu0 %4238
    %4240 = vrot.lane.b32.xlu0 %v4167, 40
    %v4241 = vpop.permute.xlu0 %4240
    %4242 = vrot.lane.b32.xlu0 %v4168, 40
    %v4243 = vpop.permute.xlu0 %4242
    %4244 = vrot.lane.b32.xlu0 %v4169, 40
    %v4245 = vpop.permute.xlu0 %4244
    %4246 = vrot.lane.b32.xlu0 %v4170, 40
    %v4247 = vpop.permute.xlu0 %4246
    %4248 = vrot.lane.b32.xlu0 %v4171, 40
    %v4249 = vpop.permute.xlu0 %4248
    %4250 = vrot.lane.b32.xlu0 %v4172, 40
    %v4251 = vpop.permute.xlu0 %4250
    %4252 = vrot.lane.b32.xlu0 %v4173, 40
    %v4253 = vpop.permute.xlu0 %4252
    %4254 = vrot.lane.b32.xlu0 %v4174, 40
    %v4255 = vpop.permute.xlu0 %4254
    %4256 = vrot.lane.b32.xlu0 %v4175, 40
    %v4257 = vpop.permute.xlu0 %4256
    %4258 = vrot.lane.b32.xlu0 %v4176, 40
    %v4259 = vpop.permute.xlu0 %4258
    %4260 = vrot.lane.b32.xlu0 %v4177, 40
    %v4261 = vpop.permute.xlu0 %4260
    %4262 = vrot.lane.b32.xlu0 %v4178, 40
    %v4263 = vpop.permute.xlu0 %4262
    %4264 = vrot.lane.b32.xlu0 %v4179, 40
    %v4265 = vpop.permute.xlu0 %4264
    %4266 = vrot.lane.b32.xlu0 %v4180, 40
    %v4267 = vpop.permute.xlu0 %4266
    %4268 = vrot.lane.b32.xlu0 %v4181, 40
    %v4269 = vpop.permute.xlu0 %4268
    %4270 = vrot.lane.b32.xlu0 %v4182, 40
    %v4271 = vpop.permute.xlu0 %4270
    %4272 = vrot.lane.b32.xlu0 %v4183, 40
    %v4273 = vpop.permute.xlu0 %4272
    %4274 = vrot.lane.b32.xlu0 %v4184, 40
    %v4275 = vpop.permute.xlu0 %4274
    %4276 = vrot.lane.b32.xlu0 %v4185, 40
    %v4277 = vpop.permute.xlu0 %4276
    %4278 = vrot.lane.b32.xlu0 %v4186, 40
    %v4279 = vpop.permute.xlu0 %4278
    %4280 = vrot.lane.b32.xlu0 %v4187, 40
    %v4281 = vpop.permute.xlu0 %4280
    %4282 = vrot.lane.b32.xlu0 %v4188, 40
    %v4283 = vpop.permute.xlu0 %4282
    %4284 = vrot.lane.b32.xlu0 %v4189, 40
    %v4285 = vpop.permute.xlu0 %4284
    %vm4318 = vcmask 388416
    %4319 = vst.msk [vmem:[#allocation3] sm:$0xf] %vm4318, %v4223
    %4320 = vst.msk [vmem:[#allocation3 + $0x8] sm:$0xf] %vm4318, %v4225
    %4321 = vst.msk [vmem:[#allocation3 + $0x10] sm:$0xf] %vm4318, %v4227
    %4322 = vst.msk [vmem:[#allocation3 + $0x18] sm:$0xf] %vm4318, %v4229
    %4323 = vst.msk [vmem:[#allocation3 + $0x20] sm:$0xf] %vm4318, %v4231
    %4324 = vst.msk [vmem:[#allocation3 + $0x28] sm:$0xf] %vm4318, %v4233
    %4325 = vst.msk [vmem:[#allocation3 + $0x30] sm:$0xf] %vm4318, %v4235
    %4326 = vst.msk [vmem:[#allocation3 + $0x38] sm:$0xf] %vm4318, %v4237
    %4327 = vst.msk [vmem:[#allocation3 + $0x40] sm:$0xf] %vm4318, %v4239
    %4328 = vst.msk [vmem:[#allocation3 + $0x48] sm:$0xf] %vm4318, %v4241
    %4329 = vst.msk [vmem:[#allocation3 + $0x50] sm:$0xf] %vm4318, %v4243
    %4330 = vst.msk [vmem:[#allocation3 + $0x58] sm:$0xf] %vm4318, %v4245
    %4331 = vst.msk [vmem:[#allocation3 + $0x60] sm:$0xf] %vm4318, %v4247
    %4332 = vst.msk [vmem:[#allocation3 + $0x68] sm:$0xf] %vm4318, %v4249
    %4333 = vst.msk [vmem:[#allocation3 + $0x70] sm:$0xf] %vm4318, %v4251
    %4334 = vst.msk [vmem:[#allocation3 + $0x78] sm:$0xf] %vm4318, %v4253
    %4335 = vst.msk [vmem:[#allocation3 + $0x80] sm:$0xf] %vm4318, %v4255
    %4336 = vst.msk [vmem:[#allocation3 + $0x88] sm:$0xf] %vm4318, %v4257
    %4337 = vst.msk [vmem:[#allocation3 + $0x90] sm:$0xf] %vm4318, %v4259
    %4338 = vst.msk [vmem:[#allocation3 + $0x98] sm:$0xf] %vm4318, %v4261
    %4339 = vst.msk [vmem:[#allocation3 + $0xa0] sm:$0xf] %vm4318, %v4263
    %4340 = vst.msk [vmem:[#allocation3 + $0xa8] sm:$0xf] %vm4318, %v4265
    %4341 = vst.msk [vmem:[#allocation3 + $0xb0] sm:$0xf] %vm4318, %v4267
    %4342 = vst.msk [vmem:[#allocation3 + $0xb8] sm:$0xf] %vm4318, %v4269
    %4343 = vst.msk [vmem:[#allocation3 + $0xc0] sm:$0xf] %vm4318, %v4271
    %4344 = vst.msk [vmem:[#allocation3 + $0xc8] sm:$0xf] %vm4318, %v4273
    %4345 = vst.msk [vmem:[#allocation3 + $0xd0] sm:$0xf] %vm4318, %v4275
    %4346 = vst.msk [vmem:[#allocation3 + $0xd8] sm:$0xf] %vm4318, %v4277
    %4347 = vst.msk [vmem:[#allocation3 + $0xe0] sm:$0xf] %vm4318, %v4279
    %4348 = vst.msk [vmem:[#allocation3 + $0xe8] sm:$0xf] %vm4318, %v4281
    %4349 = vst.msk [vmem:[#allocation3 + $0xf0] sm:$0xf] %vm4318, %v4283
    %4350 = vst.msk [vmem:[#allocation3 + $0xf8] sm:$0xf] %vm4318, %v4285
    %v4351 = vld [vmem:[#allocation2 + $0x10] sm:$0xf]
    %v4352 = vld [vmem:[#allocation2 + $0x14] sm:$0xf]
    %v4353 = vld [vmem:[#allocation2 + $0x18] sm:$0xf]
    %v4354 = vld [vmem:[#allocation2 + $0x1c] sm:$0xf]
    %v4355 = vld [vmem:[#allocation2 + $0x20] sm:$0xf]
    %v4356 = vld [vmem:[#allocation2 + $0x24] sm:$0xf]
    %v4357 = vld [vmem:[#allocation2 + $0x28] sm:$0xf]
    %v4358 = vld [vmem:[#allocation2 + $0x2c] sm:$0xf]
    %v4359 = vld [vmem:[#allocation2 + $0x30] sm:$0xf]
    %v4360 = vld [vmem:[#allocation2 + $0x34] sm:$0xf]
    %v4361 = vld [vmem:[#allocation2 + $0x38] sm:$0xf]
    %v4362 = vld [vmem:[#allocation2 + $0x3c] sm:$0xf]
    %v4363 = vld [vmem:[#allocation2 + $0x40] sm:$0xf]
    %v4364 = vld [vmem:[#allocation2 + $0x44] sm:$0xf]
    %v4365 = vld [vmem:[#allocation2 + $0x48] sm:$0xf]
    %v4366 = vld [vmem:[#allocation2 + $0x4c] sm:$0xf]
    %v4367 = vld [vmem:[#allocation2 + $0x50] sm:$0xf]
    %v4368 = vld [vmem:[#allocation2 + $0x54] sm:$0xf]
    %v4369 = vld [vmem:[#allocation2 + $0x58] sm:$0xf]
    %v4370 = vld [vmem:[#allocation2 + $0x5c] sm:$0xf]
    %v4371 = vld [vmem:[#allocation2 + $0x60] sm:$0xf]
    %v4372 = vld [vmem:[#allocation2 + $0x64] sm:$0xf]
    %v4373 = vld [vmem:[#allocation2 + $0x68] sm:$0xf]
    %v4374 = vld [vmem:[#allocation2 + $0x6c] sm:$0xf]
    %v4375 = vld [vmem:[#allocation2 + $0x70] sm:$0xf]
    %v4376 = vld [vmem:[#allocation2 + $0x74] sm:$0xf]
    %v4377 = vld [vmem:[#allocation2 + $0x78] sm:$0xf]
    %v4378 = vld [vmem:[#allocation2 + $0x7c] sm:$0xf]
    %v4379 = vld [vmem:[#allocation2 + $0x80] sm:$0xf]
    %v4380 = vld [vmem:[#allocation2 + $0x84] sm:$0xf]
    %v4381 = vld [vmem:[#allocation2 + $0x88] sm:$0xf]
    %v4382 = vld [vmem:[#allocation2 + $0x8c] sm:$0xf]
    %v4383 = vld [vmem:[#allocation2 + $0x90] sm:$0x1]
    %v4385 = vshrl.u32 %v4351, 16
    %v4387 = vrot.slane %v4385, 4
    %v4388 = vshll.u32 %v4351, 16
    %v4390 = vrot.slane %v4388, 5
    %v4391 = vor.u32 %v4387, %v4390
    %v4392 = vrot.slane %v4391, 4
    %v4394 = vshll.u32 %v4352, 16
    %v4396 = vrot.slane %v4394, 5
    %v4397 = vsel %vm2621, %v4392, %v4396
    %v4398 = vshrl.u32 %v4352, 16
    %v4400 = vrot.slane %v4398, 4
    %v4401 = vor.u32 %v4400, %v4396
    %v4402 = vrot.slane %v4401, 4
    %v4404 = vshll.u32 %v4353, 16
    %v4406 = vrot.slane %v4404, 5
    %v4407 = vsel %vm2621, %v4402, %v4406
    %v4408 = vshrl.u32 %v4353, 16
    %v4410 = vrot.slane %v4408, 4
    %v4411 = vor.u32 %v4410, %v4406
    %v4412 = vrot.slane %v4411, 4
    %v4414 = vshll.u32 %v4354, 16
    %v4416 = vrot.slane %v4414, 5
    %v4417 = vsel %vm2621, %v4412, %v4416
    %v4418 = vshrl.u32 %v4354, 16
    %v4420 = vrot.slane %v4418, 4
    %v4421 = vor.u32 %v4420, %v4416
    %v4422 = vrot.slane %v4421, 4
    %v4424 = vshll.u32 %v4355, 16
    %v4426 = vrot.slane %v4424, 5
    %v4427 = vsel %vm2621, %v4422, %v4426
    %v4428 = vshrl.u32 %v4355, 16
    %v4430 = vrot.slane %v4428, 4
    %v4431 = vor.u32 %v4430, %v4426
    %v4432 = vrot.slane %v4431, 4
    %v4434 = vshll.u32 %v4356, 16
    %v4436 = vrot.slane %v4434, 5
    %v4437 = vsel %vm2621, %v4432, %v4436
    %v4438 = vshrl.u32 %v4356, 16
    %v4440 = vrot.slane %v4438, 4
    %v4441 = vor.u32 %v4440, %v4436
    %v4442 = vrot.slane %v4441, 4
    %v4444 = vshll.u32 %v4357, 16
    %v4446 = vrot.slane %v4444, 5
    %v4447 = vsel %vm2621, %v4442, %v4446
    %v4448 = vshrl.u32 %v4357, 16
    %v4450 = vrot.slane %v4448, 4
    %v4451 = vor.u32 %v4450, %v4446
    %v4452 = vrot.slane %v4451, 4
    %v4454 = vshll.u32 %v4358, 16
    %v4456 = vrot.slane %v4454, 5
    %v4457 = vsel %vm2621, %v4452, %v4456
    %v4458 = vshrl.u32 %v4358, 16
    %v4460 = vrot.slane %v4458, 4
    %v4461 = vor.u32 %v4460, %v4456
    %v4462 = vrot.slane %v4461, 4
    %v4464 = vshll.u32 %v4359, 16
    %v4466 = vrot.slane %v4464, 5
    %v4467 = vsel %vm2621, %v4462, %v4466
    %v4468 = vshrl.u32 %v4359, 16
    %v4470 = vrot.slane %v4468, 4
    %v4471 = vor.u32 %v4470, %v4466
    %v4472 = vrot.slane %v4471, 4
    %v4474 = vshll.u32 %v4360, 16
    %v4476 = vrot.slane %v4474, 5
    %v4477 = vsel %vm2621, %v4472, %v4476
    %v4478 = vshrl.u32 %v4360, 16
    %v4480 = vrot.slane %v4478, 4
    %v4481 = vor.u32 %v4480, %v4476
    %v4482 = vrot.slane %v4481, 4
    %v4484 = vshll.u32 %v4361, 16
    %v4486 = vrot.slane %v4484, 5
    %v4487 = vsel %vm2621, %v4482, %v4486
    %v4488 = vshrl.u32 %v4361, 16
    %v4490 = vrot.slane %v4488, 4
    %v4491 = vor.u32 %v4490, %v4486
    %v4492 = vrot.slane %v4491, 4
    %v4494 = vshll.u32 %v4362, 16
    %v4496 = vrot.slane %v4494, 5
    %v4497 = vsel %vm2621, %v4492, %v4496
    %v4498 = vshrl.u32 %v4362, 16
    %v4500 = vrot.slane %v4498, 4
    %v4501 = vor.u32 %v4500, %v4496
    %v4502 = vrot.slane %v4501, 4
    %v4504 = vshll.u32 %v4363, 16
    %v4506 = vrot.slane %v4504, 5
    %v4507 = vsel %vm2621, %v4502, %v4506
    %v4508 = vshrl.u32 %v4363, 16
    %v4510 = vrot.slane %v4508, 4
    %v4511 = vor.u32 %v4510, %v4506
    %v4512 = vrot.slane %v4511, 4
    %v4514 = vshll.u32 %v4364, 16
    %v4516 = vrot.slane %v4514, 5
    %v4517 = vsel %vm2621, %v4512, %v4516
    %v4518 = vshrl.u32 %v4364, 16
    %v4520 = vrot.slane %v4518, 4
    %v4521 = vor.u32 %v4520, %v4516
    %v4522 = vrot.slane %v4521, 4
    %v4524 = vshll.u32 %v4365, 16
    %v4526 = vrot.slane %v4524, 5
    %v4527 = vsel %vm2621, %v4522, %v4526
    %v4528 = vshrl.u32 %v4365, 16
    %v4530 = vrot.slane %v4528, 4
    %v4531 = vor.u32 %v4530, %v4526
    %v4532 = vrot.slane %v4531, 4
    %v4534 = vshll.u32 %v4366, 16
    %v4536 = vrot.slane %v4534, 5
    %v4537 = vsel %vm2621, %v4532, %v4536
    %v4538 = vshrl.u32 %v4366, 16
    %v4540 = vrot.slane %v4538, 4
    %v4541 = vor.u32 %v4540, %v4536
    %v4542 = vrot.slane %v4541, 4
    %v4544 = vshll.u32 %v4367, 16
    %v4546 = vrot.slane %v4544, 5
    %v4547 = vsel %vm2621, %v4542, %v4546
    %v4548 = vshrl.u32 %v4367, 16
    %v4550 = vrot.slane %v4548, 4
    %v4551 = vor.u32 %v4550, %v4546
    %v4552 = vrot.slane %v4551, 4
    %v4554 = vshll.u32 %v4368, 16
    %v4556 = vrot.slane %v4554, 5
    %v4557 = vsel %vm2621, %v4552, %v4556
    %v4558 = vshrl.u32 %v4368, 16
    %v4560 = vrot.slane %v4558, 4
    %v4561 = vor.u32 %v4560, %v4556
    %v4562 = vrot.slane %v4561, 4
    %v4564 = vshll.u32 %v4369, 16
    %v4566 = vrot.slane %v4564, 5
    %v4567 = vsel %vm2621, %v4562, %v4566
    %v4568 = vshrl.u32 %v4369, 16
    %v4570 = vrot.slane %v4568, 4
    %v4571 = vor.u32 %v4570, %v4566
    %v4572 = vrot.slane %v4571, 4
    %v4574 = vshll.u32 %v4370, 16
    %v4576 = vrot.slane %v4574, 5
    %v4577 = vsel %vm2621, %v4572, %v4576
    %v4578 = vshrl.u32 %v4370, 16
    %v4580 = vrot.slane %v4578, 4
    %v4581 = vor.u32 %v4580, %v4576
    %v4582 = vrot.slane %v4581, 4
    %v4584 = vshll.u32 %v4371, 16
    %v4586 = vrot.slane %v4584, 5
    %v4587 = vsel %vm2621, %v4582, %v4586
    %v4588 = vshrl.u32 %v4371, 16
    %v4590 = vrot.slane %v4588, 4
    %v4591 = vor.u32 %v4590, %v4586
    %v4592 = vrot.slane %v4591, 4
    %v4594 = vshll.u32 %v4372, 16
    %v4596 = vrot.slane %v4594, 5
    %v4597 = vsel %vm2621, %v4592, %v4596
    %v4598 = vshrl.u32 %v4372, 16
    %v4600 = vrot.slane %v4598, 4
    %v4601 = vor.u32 %v4600, %v4596
    %v4602 = vrot.slane %v4601, 4
    %v4604 = vshll.u32 %v4373, 16
    %v4606 = vrot.slane %v4604, 5
    %v4607 = vsel %vm2621, %v4602, %v4606
    %v4608 = vshrl.u32 %v4373, 16
    %v4610 = vrot.slane %v4608, 4
    %v4611 = vor.u32 %v4610, %v4606
    %v4612 = vrot.slane %v4611, 4
    %v4614 = vshll.u32 %v4374, 16
    %v4616 = vrot.slane %v4614, 5
    %v4617 = vsel %vm2621, %v4612, %v4616
    %v4618 = vshrl.u32 %v4374, 16
    %v4620 = vrot.slane %v4618, 4
    %v4621 = vor.u32 %v4620, %v4616
    %v4622 = vrot.slane %v4621, 4
    %v4624 = vshll.u32 %v4375, 16
    %v4626 = vrot.slane %v4624, 5
    %v4627 = vsel %vm2621, %v4622, %v4626
    %v4628 = vshrl.u32 %v4375, 16
    %v4630 = vrot.slane %v4628, 4
    %v4631 = vor.u32 %v4630, %v4626
    %v4632 = vrot.slane %v4631, 4
    %v4634 = vshll.u32 %v4376, 16
    %v4636 = vrot.slane %v4634, 5
    %v4637 = vsel %vm2621, %v4632, %v4636
    %v4638 = vshrl.u32 %v4376, 16
    %v4640 = vrot.slane %v4638, 4
    %v4641 = vor.u32 %v4640, %v4636
    %v4642 = vrot.slane %v4641, 4
    %v4644 = vshll.u32 %v4377, 16
    %v4646 = vrot.slane %v4644, 5
    %v4647 = vsel %vm2621, %v4642, %v4646
    %v4648 = vshrl.u32 %v4377, 16
    %v4650 = vrot.slane %v4648, 4
    %v4651 = vor.u32 %v4650, %v4646
    %v4652 = vrot.slane %v4651, 4
    %v4654 = vshll.u32 %v4378, 16
    %v4656 = vrot.slane %v4654, 5
    %v4657 = vsel %vm2621, %v4652, %v4656
    %v4658 = vshrl.u32 %v4378, 16
    %v4660 = vrot.slane %v4658, 4
    %v4661 = vor.u32 %v4660, %v4656
    %v4662 = vrot.slane %v4661, 4
    %v4664 = vshll.u32 %v4379, 16
    %v4666 = vrot.slane %v4664, 5
    %v4667 = vsel %vm2621, %v4662, %v4666
    %v4668 = vshrl.u32 %v4379, 16
    %v4670 = vrot.slane %v4668, 4
    %v4671 = vor.u32 %v4670, %v4666
    %v4672 = vrot.slane %v4671, 4
    %v4674 = vshll.u32 %v4380, 16
    %v4676 = vrot.slane %v4674, 5
    %v4677 = vsel %vm2621, %v4672, %v4676
    %v4678 = vshrl.u32 %v4380, 16
    %v4680 = vrot.slane %v4678, 4
    %v4681 = vor.u32 %v4680, %v4676
    %v4682 = vrot.slane %v4681, 4
    %v4684 = vshll.u32 %v4381, 16
    %v4686 = vrot.slane %v4684, 5
    %v4687 = vsel %vm2621, %v4682, %v4686
    %v4688 = vshrl.u32 %v4381, 16
    %v4690 = vrot.slane %v4688, 4
    %v4691 = vor.u32 %v4690, %v4686
    %v4692 = vrot.slane %v4691, 4
    %v4694 = vshll.u32 %v4382, 16
    %v4696 = vrot.slane %v4694, 5
    %v4697 = vsel %vm2621, %v4692, %v4696
    %v4698 = vshrl.u32 %v4382, 16
    %v4700 = vrot.slane %v4698, 4
    %v4701 = vor.u32 %v4700, %v4696
    %v4702 = vrot.slane %v4701, 4
    %v4704 = vshll.u32 %v4383, 16
    %v4706 = vrot.slane %v4704, 5
    %v4707 = vsel %vm2621, %v4702, %v4706
    %4708 = vrot.lane.b32.xlu0 %v4397, 48
    %v4709 = vpop.permute.xlu0 %4708
    %4710 = vrot.lane.b32.xlu0 %v4407, 48
    %v4711 = vpop.permute.xlu0 %4710
    %4712 = vrot.lane.b32.xlu0 %v4417, 48
    %v4713 = vpop.permute.xlu0 %4712
    %4714 = vrot.lane.b32.xlu0 %v4427, 48
    %v4715 = vpop.permute.xlu0 %4714
    %4716 = vrot.lane.b32.xlu0 %v4437, 48
    %v4717 = vpop.permute.xlu0 %4716
    %4718 = vrot.lane.b32.xlu0 %v4447, 48
    %v4719 = vpop.permute.xlu0 %4718
    %4720 = vrot.lane.b32.xlu0 %v4457, 48
    %v4721 = vpop.permute.xlu0 %4720
    %4722 = vrot.lane.b32.xlu0 %v4467, 48
    %v4723 = vpop.permute.xlu0 %4722
    %4724 = vrot.lane.b32.xlu0 %v4477, 48
    %v4725 = vpop.permute.xlu0 %4724
    %4726 = vrot.lane.b32.xlu0 %v4487, 48
    %v4727 = vpop.permute.xlu0 %4726
    %4728 = vrot.lane.b32.xlu0 %v4497, 48
    %v4729 = vpop.permute.xlu0 %4728
    %4730 = vrot.lane.b32.xlu0 %v4507, 48
    %v4731 = vpop.permute.xlu0 %4730
    %4732 = vrot.lane.b32.xlu0 %v4517, 48
    %v4733 = vpop.permute.xlu0 %4732
    %4734 = vrot.lane.b32.xlu0 %v4527, 48
    %v4735 = vpop.permute.xlu0 %4734
    %4736 = vrot.lane.b32.xlu0 %v4537, 48
    %v4737 = vpop.permute.xlu0 %4736
    %4738 = vrot.lane.b32.xlu0 %v4547, 48
    %v4739 = vpop.permute.xlu0 %4738
    %4740 = vrot.lane.b32.xlu0 %v4557, 48
    %v4741 = vpop.permute.xlu0 %4740
    %4742 = vrot.lane.b32.xlu0 %v4567, 48
    %v4743 = vpop.permute.xlu0 %4742
    %4744 = vrot.lane.b32.xlu0 %v4577, 48
    %v4745 = vpop.permute.xlu0 %4744
    %4746 = vrot.lane.b32.xlu0 %v4587, 48
    %v4747 = vpop.permute.xlu0 %4746
    %4748 = vrot.lane.b32.xlu0 %v4597, 48
    %v4749 = vpop.permute.xlu0 %4748
    %4750 = vrot.lane.b32.xlu0 %v4607, 48
    %v4751 = vpop.permute.xlu0 %4750
    %4752 = vrot.lane.b32.xlu0 %v4617, 48
    %v4753 = vpop.permute.xlu0 %4752
    %4754 = vrot.lane.b32.xlu0 %v4627, 48
    %v4755 = vpop.permute.xlu0 %4754
    %4756 = vrot.lane.b32.xlu0 %v4637, 48
    %v4757 = vpop.permute.xlu0 %4756
    %4758 = vrot.lane.b32.xlu0 %v4647, 48
    %v4759 = vpop.permute.xlu0 %4758
    %4760 = vrot.lane.b32.xlu0 %v4657, 48
    %v4761 = vpop.permute.xlu0 %4760
    %4762 = vrot.lane.b32.xlu0 %v4667, 48
    %v4763 = vpop.permute.xlu0 %4762
    %4764 = vrot.lane.b32.xlu0 %v4677, 48
    %v4765 = vpop.permute.xlu0 %4764
    %4766 = vrot.lane.b32.xlu0 %v4687, 48
    %v4767 = vpop.permute.xlu0 %4766
    %4768 = vrot.lane.b32.xlu0 %v4697, 48
    %v4769 = vpop.permute.xlu0 %4768
    %4770 = vrot.lane.b32.xlu0 %v4707, 48
    %v4771 = vpop.permute.xlu0 %4770
    %vm4804 = vcmask 454016
    %4805 = vst.msk [vmem:[#allocation3] sm:$0xf] %vm4804, %v4709
    %4806 = vst.msk [vmem:[#allocation3 + $0x8] sm:$0xf] %vm4804, %v4711
    %4807 = vst.msk [vmem:[#allocation3 + $0x10] sm:$0xf] %vm4804, %v4713
    %4808 = vst.msk [vmem:[#allocation3 + $0x18] sm:$0xf] %vm4804, %v4715
    %4809 = vst.msk [vmem:[#allocation3 + $0x20] sm:$0xf] %vm4804, %v4717
    %4810 = vst.msk [vmem:[#allocation3 + $0x28] sm:$0xf] %vm4804, %v4719
    %4811 = vst.msk [vmem:[#allocation3 + $0x30] sm:$0xf] %vm4804, %v4721
    %4812 = vst.msk [vmem:[#allocation3 + $0x38] sm:$0xf] %vm4804, %v4723
    %4813 = vst.msk [vmem:[#allocation3 + $0x40] sm:$0xf] %vm4804, %v4725
    %4814 = vst.msk [vmem:[#allocation3 + $0x48] sm:$0xf] %vm4804, %v4727
    %4815 = vst.msk [vmem:[#allocation3 + $0x50] sm:$0xf] %vm4804, %v4729
    %4816 = vst.msk [vmem:[#allocation3 + $0x58] sm:$0xf] %vm4804, %v4731
    %4817 = vst.msk [vmem:[#allocation3 + $0x60] sm:$0xf] %vm4804, %v4733
    %4818 = vst.msk [vmem:[#allocation3 + $0x68] sm:$0xf] %vm4804, %v4735
    %4819 = vst.msk [vmem:[#allocation3 + $0x70] sm:$0xf] %vm4804, %v4737
    %4820 = vst.msk [vmem:[#allocation3 + $0x78] sm:$0xf] %vm4804, %v4739
    %4821 = vst.msk [vmem:[#allocation3 + $0x80] sm:$0xf] %vm4804, %v4741
    %4822 = vst.msk [vmem:[#allocation3 + $0x88] sm:$0xf] %vm4804, %v4743
    %4823 = vst.msk [vmem:[#allocation3 + $0x90] sm:$0xf] %vm4804, %v4745
    %4824 = vst.msk [vmem:[#allocation3 + $0x98] sm:$0xf] %vm4804, %v4747
    %4825 = vst.msk [vmem:[#allocation3 + $0xa0] sm:$0xf] %vm4804, %v4749
    %4826 = vst.msk [vmem:[#allocation3 + $0xa8] sm:$0xf] %vm4804, %v4751
    %4827 = vst.msk [vmem:[#allocation3 + $0xb0] sm:$0xf] %vm4804, %v4753
    %4828 = vst.msk [vmem:[#allocation3 + $0xb8] sm:$0xf] %vm4804, %v4755
    %4829 = vst.msk [vmem:[#allocation3 + $0xc0] sm:$0xf] %vm4804, %v4757
    %4830 = vst.msk [vmem:[#allocation3 + $0xc8] sm:$0xf] %vm4804, %v4759
    %4831 = vst.msk [vmem:[#allocation3 + $0xd0] sm:$0xf] %vm4804, %v4761
    %4832 = vst.msk [vmem:[#allocation3 + $0xd8] sm:$0xf] %vm4804, %v4763
    %4833 = vst.msk [vmem:[#allocation3 + $0xe0] sm:$0xf] %vm4804, %v4765
    %4834 = vst.msk [vmem:[#allocation3 + $0xe8] sm:$0xf] %vm4804, %v4767
    %4835 = vst.msk [vmem:[#allocation3 + $0xf0] sm:$0xf] %vm4804, %v4769
    %4836 = vst.msk [vmem:[#allocation3 + $0xf8] sm:$0xf] %vm4804, %v4771
    %v4837 = vld [vmem:[#allocation2 + $0x10] sm:$0xe]
    %v4838 = vld [vmem:[#allocation2 + $0x14] sm:$0xf]
    %v4839 = vld [vmem:[#allocation2 + $0x18] sm:$0xf]
    %v4840 = vld [vmem:[#allocation2 + $0x1c] sm:$0xf]
    %v4841 = vld [vmem:[#allocation2 + $0x20] sm:$0xf]
    %v4842 = vld [vmem:[#allocation2 + $0x24] sm:$0xf]
    %v4843 = vld [vmem:[#allocation2 + $0x28] sm:$0xf]
    %v4844 = vld [vmem:[#allocation2 + $0x2c] sm:$0xf]
    %v4845 = vld [vmem:[#allocation2 + $0x30] sm:$0xf]
    %v4846 = vld [vmem:[#allocation2 + $0x34] sm:$0xf]
    %v4847 = vld [vmem:[#allocation2 + $0x38] sm:$0xf]
    %v4848 = vld [vmem:[#allocation2 + $0x3c] sm:$0xf]
    %v4849 = vld [vmem:[#allocation2 + $0x40] sm:$0xf]
    %v4850 = vld [vmem:[#allocation2 + $0x44] sm:$0xf]
    %v4851 = vld [vmem:[#allocation2 + $0x48] sm:$0xf]
    %v4852 = vld [vmem:[#allocation2 + $0x4c] sm:$0xf]
    %v4853 = vld [vmem:[#allocation2 + $0x50] sm:$0xf]
    %v4854 = vld [vmem:[#allocation2 + $0x54] sm:$0xf]
    %v4855 = vld [vmem:[#allocation2 + $0x58] sm:$0xf]
    %v4856 = vld [vmem:[#allocation2 + $0x5c] sm:$0xf]
    %v4857 = vld [vmem:[#allocation2 + $0x60] sm:$0xf]
    %v4858 = vld [vmem:[#allocation2 + $0x64] sm:$0xf]
    %v4859 = vld [vmem:[#allocation2 + $0x68] sm:$0xf]
    %v4860 = vld [vmem:[#allocation2 + $0x6c] sm:$0xf]
    %v4861 = vld [vmem:[#allocation2 + $0x70] sm:$0xf]
    %v4862 = vld [vmem:[#allocation2 + $0x74] sm:$0xf]
    %v4863 = vld [vmem:[#allocation2 + $0x78] sm:$0xf]
    %v4864 = vld [vmem:[#allocation2 + $0x7c] sm:$0xf]
    %v4865 = vld [vmem:[#allocation2 + $0x80] sm:$0xf]
    %v4866 = vld [vmem:[#allocation2 + $0x84] sm:$0xf]
    %v4867 = vld [vmem:[#allocation2 + $0x88] sm:$0xf]
    %v4868 = vld [vmem:[#allocation2 + $0x8c] sm:$0xf]
    %v4869 = vld [vmem:[#allocation2 + $0x90] sm:$0x1]
    %v4903 = vrot.slane %v4837, 5
    %v4904 = vrot.slane %v4903, 4
    %v4905 = vrot.slane %v4838, 5
    %v4906 = vsel %vm3143, %v4904, %v4905
    %v4907 = vrot.slane %v4905, 4
    %v4908 = vrot.slane %v4839, 5
    %v4909 = vsel %vm3143, %v4907, %v4908
    %v4910 = vrot.slane %v4908, 4
    %v4911 = vrot.slane %v4840, 5
    %v4912 = vsel %vm3143, %v4910, %v4911
    %v4913 = vrot.slane %v4911, 4
    %v4914 = vrot.slane %v4841, 5
    %v4915 = vsel %vm3143, %v4913, %v4914
    %v4916 = vrot.slane %v4914, 4
    %v4917 = vrot.slane %v4842, 5
    %v4918 = vsel %vm3143, %v4916, %v4917
    %v4919 = vrot.slane %v4917, 4
    %v4920 = vrot.slane %v4843, 5
    %v4921 = vsel %vm3143, %v4919, %v4920
    %v4922 = vrot.slane %v4920, 4
    %v4923 = vrot.slane %v4844, 5
    %v4924 = vsel %vm3143, %v4922, %v4923
    %v4925 = vrot.slane %v4923, 4
    %v4926 = vrot.slane %v4845, 5
    %v4927 = vsel %vm3143, %v4925, %v4926
    %v4928 = vrot.slane %v4926, 4
    %v4929 = vrot.slane %v4846, 5
    %v4930 = vsel %vm3143, %v4928, %v4929
    %v4931 = vrot.slane %v4929, 4
    %v4932 = vrot.slane %v4847, 5
    %v4933 = vsel %vm3143, %v4931, %v4932
    %v4934 = vrot.slane %v4932, 4
    %v4935 = vrot.slane %v4848, 5
    %v4936 = vsel %vm3143, %v4934, %v4935
    %v4937 = vrot.slane %v4935, 4
    %v4938 = vrot.slane %v4849, 5
    %v4939 = vsel %vm3143, %v4937, %v4938
    %v4940 = vrot.slane %v4938, 4
    %v4941 = vrot.slane %v4850, 5
    %v4942 = vsel %vm3143, %v4940, %v4941
    %v4943 = vrot.slane %v4941, 4
    %v4944 = vrot.slane %v4851, 5
    %v4945 = vsel %vm3143, %v4943, %v4944
    %v4946 = vrot.slane %v4944, 4
    %v4947 = vrot.slane %v4852, 5
    %v4948 = vsel %vm3143, %v4946, %v4947
    %v4949 = vrot.slane %v4947, 4
    %v4950 = vrot.slane %v4853, 5
    %v4951 = vsel %vm3143, %v4949, %v4950
    %v4952 = vrot.slane %v4950, 4
    %v4953 = vrot.slane %v4854, 5
    %v4954 = vsel %vm3143, %v4952, %v4953
    %v4955 = vrot.slane %v4953, 4
    %v4956 = vrot.slane %v4855, 5
    %v4957 = vsel %vm3143, %v4955, %v4956
    %v4958 = vrot.slane %v4956, 4
    %v4959 = vrot.slane %v4856, 5
    %v4960 = vsel %vm3143, %v4958, %v4959
    %v4961 = vrot.slane %v4959, 4
    %v4962 = vrot.slane %v4857, 5
    %v4963 = vsel %vm3143, %v4961, %v4962
    %v4964 = vrot.slane %v4962, 4
    %v4965 = vrot.slane %v4858, 5
    %v4966 = vsel %vm3143, %v4964, %v4965
    %v4967 = vrot.slane %v4965, 4
    %v4968 = vrot.slane %v4859, 5
    %v4969 = vsel %vm3143, %v4967, %v4968
    %v4970 = vrot.slane %v4968, 4
    %v4971 = vrot.slane %v4860, 5
    %v4972 = vsel %vm3143, %v4970, %v4971
    %v4973 = vrot.slane %v4971, 4
    %v4974 = vrot.slane %v4861, 5
    %v4975 = vsel %vm3143, %v4973, %v4974
    %v4976 = vrot.slane %v4974, 4
    %v4977 = vrot.slane %v4862, 5
    %v4978 = vsel %vm3143, %v4976, %v4977
    %v4979 = vrot.slane %v4977, 4
    %v4980 = vrot.slane %v4863, 5
    %v4981 = vsel %vm3143, %v4979, %v4980
    %v4982 = vrot.slane %v4980, 4
    %v4983 = vrot.slane %v4864, 5
    %v4984 = vsel %vm3143, %v4982, %v4983
    %v4985 = vrot.slane %v4983, 4
    %v4986 = vrot.slane %v4865, 5
    %v4987 = vsel %vm3143, %v4985, %v4986
    %v4988 = vrot.slane %v4986, 4
    %v4989 = vrot.slane %v4866, 5
    %v4990 = vsel %vm3143, %v4988, %v4989
    %v4991 = vrot.slane %v4989, 4
    %v4992 = vrot.slane %v4867, 5
    %v4993 = vsel %vm3143, %v4991, %v4992
    %v4994 = vrot.slane %v4992, 4
    %v4995 = vrot.slane %v4868, 5
    %v4996 = vsel %vm3143, %v4994, %v4995
    %v4997 = vrot.slane %v4995, 4
    %v4998 = vrot.slane %v4869, 5
    %v4999 = vsel %vm3143, %v4997, %v4998
    %5000 = vrot.lane.b32.xlu0 %v4906, 56
    %v5001 = vpop.permute.xlu0 %5000
    %5002 = vrot.lane.b32.xlu0 %v4909, 56
    %v5003 = vpop.permute.xlu0 %5002
    %5004 = vrot.lane.b32.xlu0 %v4912, 56
    %v5005 = vpop.permute.xlu0 %5004
    %5006 = vrot.lane.b32.xlu0 %v4915, 56
    %v5007 = vpop.permute.xlu0 %5006
    %5008 = vrot.lane.b32.xlu0 %v4918, 56
    %v5009 = vpop.permute.xlu0 %5008
    %5010 = vrot.lane.b32.xlu0 %v4921, 56
    %v5011 = vpop.permute.xlu0 %5010
    %5012 = vrot.lane.b32.xlu0 %v4924, 56
    %v5013 = vpop.permute.xlu0 %5012
    %5014 = vrot.lane.b32.xlu0 %v4927, 56
    %v5015 = vpop.permute.xlu0 %5014
    %5016 = vrot.lane.b32.xlu0 %v4930, 56
    %v5017 = vpop.permute.xlu0 %5016
    %5018 = vrot.lane.b32.xlu0 %v4933, 56
    %v5019 = vpop.permute.xlu0 %5018
    %5020 = vrot.lane.b32.xlu0 %v4936, 56
    %v5021 = vpop.permute.xlu0 %5020
    %5022 = vrot.lane.b32.xlu0 %v4939, 56
    %v5023 = vpop.permute.xlu0 %5022
    %5024 = vrot.lane.b32.xlu0 %v4942, 56
    %v5025 = vpop.permute.xlu0 %5024
    %5026 = vrot.lane.b32.xlu0 %v4945, 56
    %v5027 = vpop.permute.xlu0 %5026
    %5028 = vrot.lane.b32.xlu0 %v4948, 56
    %v5029 = vpop.permute.xlu0 %5028
    %5030 = vrot.lane.b32.xlu0 %v4951, 56
    %v5031 = vpop.permute.xlu0 %5030
    %5032 = vrot.lane.b32.xlu0 %v4954, 56
    %v5033 = vpop.permute.xlu0 %5032
    %5034 = vrot.lane.b32.xlu0 %v4957, 56
    %v5035 = vpop.permute.xlu0 %5034
    %5036 = vrot.lane.b32.xlu0 %v4960, 56
    %v5037 = vpop.permute.xlu0 %5036
    %5038 = vrot.lane.b32.xlu0 %v4963, 56
    %v5039 = vpop.permute.xlu0 %5038
    %5040 = vrot.lane.b32.xlu0 %v4966, 56
    %v5041 = vpop.permute.xlu0 %5040
    %5042 = vrot.lane.b32.xlu0 %v4969, 56
    %v5043 = vpop.permute.xlu0 %5042
    %5044 = vrot.lane.b32.xlu0 %v4972, 56
    %v5045 = vpop.permute.xlu0 %5044
    %5046 = vrot.lane.b32.xlu0 %v4975, 56
    %v5047 = vpop.permute.xlu0 %5046
    %5048 = vrot.lane.b32.xlu0 %v4978, 56
    %v5049 = vpop.permute.xlu0 %5048
    %5050 = vrot.lane.b32.xlu0 %v4981, 56
    %v5051 = vpop.permute.xlu0 %5050
    %5052 = vrot.lane.b32.xlu0 %v4984, 56
    %v5053 = vpop.permute.xlu0 %5052
    %5054 = vrot.lane.b32.xlu0 %v4987, 56
    %v5055 = vpop.permute.xlu0 %5054
    %5056 = vrot.lane.b32.xlu0 %v4990, 56
    %v5057 = vpop.permute.xlu0 %5056
    %5058 = vrot.lane.b32.xlu0 %v4993, 56
    %v5059 = vpop.permute.xlu0 %5058
    %5060 = vrot.lane.b32.xlu0 %v4996, 56
    %v5061 = vpop.permute.xlu0 %5060
    %5062 = vrot.lane.b32.xlu0 %v4999, 56
    %v5063 = vpop.permute.xlu0 %5062
    %vm5096 = vcmask 519616
    %5097 = vst.msk [vmem:[#allocation3] sm:$0xf] %vm5096, %v5001
    %5098 = vst.msk [vmem:[#allocation3 + $0x8] sm:$0xf] %vm5096, %v5003
    %5099 = vst.msk [vmem:[#allocation3 + $0x10] sm:$0xf] %vm5096, %v5005
    %5100 = vst.msk [vmem:[#allocation3 + $0x18] sm:$0xf] %vm5096, %v5007
    %5101 = vst.msk [vmem:[#allocation3 + $0x20] sm:$0xf] %vm5096, %v5009
    %5102 = vst.msk [vmem:[#allocation3 + $0x28] sm:$0xf] %vm5096, %v5011
    %5103 = vst.msk [vmem:[#allocation3 + $0x30] sm:$0xf] %vm5096, %v5013
    %5104 = vst.msk [vmem:[#allocation3 + $0x38] sm:$0xf] %vm5096, %v5015
    %5105 = vst.msk [vmem:[#allocation3 + $0x40] sm:$0xf] %vm5096, %v5017
    %5106 = vst.msk [vmem:[#allocation3 + $0x48] sm:$0xf] %vm5096, %v5019
    %5107 = vst.msk [vmem:[#allocation3 + $0x50] sm:$0xf] %vm5096, %v5021
    %5108 = vst.msk [vmem:[#allocation3 + $0x58] sm:$0xf] %vm5096, %v5023
    %5109 = vst.msk [vmem:[#allocation3 + $0x60] sm:$0xf] %vm5096, %v5025
    %5110 = vst.msk [vmem:[#allocation3 + $0x68] sm:$0xf] %vm5096, %v5027
    %5111 = vst.msk [vmem:[#allocation3 + $0x70] sm:$0xf] %vm5096, %v5029
    %5112 = vst.msk [vmem:[#allocation3 + $0x78] sm:$0xf] %vm5096, %v5031
    %5113 = vst.msk [vmem:[#allocation3 + $0x80] sm:$0xf] %vm5096, %v5033
    %5114 = vst.msk [vmem:[#allocation3 + $0x88] sm:$0xf] %vm5096, %v5035
    %5115 = vst.msk [vmem:[#allocation3 + $0x90] sm:$0xf] %vm5096, %v5037
    %5116 = vst.msk [vmem:[#allocation3 + $0x98] sm:$0xf] %vm5096, %v5039
    %5117 = vst.msk [vmem:[#allocation3 + $0xa0] sm:$0xf] %vm5096, %v5041
    %5118 = vst.msk [vmem:[#allocation3 + $0xa8] sm:$0xf] %vm5096, %v5043
    %5119 = vst.msk [vmem:[#allocation3 + $0xb0] sm:$0xf] %vm5096, %v5045
    %5120 = vst.msk [vmem:[#allocation3 + $0xb8] sm:$0xf] %vm5096, %v5047
    %5121 = vst.msk [vmem:[#allocation3 + $0xc0] sm:$0xf] %vm5096, %v5049
    %5122 = vst.msk [vmem:[#allocation3 + $0xc8] sm:$0xf] %vm5096, %v5051
    %5123 = vst.msk [vmem:[#allocation3 + $0xd0] sm:$0xf] %vm5096, %v5053
    %5124 = vst.msk [vmem:[#allocation3 + $0xd8] sm:$0xf] %vm5096, %v5055
    %5125 = vst.msk [vmem:[#allocation3 + $0xe0] sm:$0xf] %vm5096, %v5057
    %5126 = vst.msk [vmem:[#allocation3 + $0xe8] sm:$0xf] %vm5096, %v5059
    %5127 = vst.msk [vmem:[#allocation3 + $0xf0] sm:$0xf] %vm5096, %v5061
    %5128 = vst.msk [vmem:[#allocation3 + $0xf8] sm:$0xf] %vm5096, %v5063
    %v5129 = vld [vmem:[#allocation2 + $0x10] sm:$0xe]
    %v5130 = vld [vmem:[#allocation2 + $0x14] sm:$0xf]
    %v5131 = vld [vmem:[#allocation2 + $0x18] sm:$0xf]
    %v5132 = vld [vmem:[#allocation2 + $0x1c] sm:$0xf]
    %v5133 = vld [vmem:[#allocation2 + $0x20] sm:$0xf]
    %v5134 = vld [vmem:[#allocation2 + $0x24] sm:$0xf]
    %v5135 = vld [vmem:[#allocation2 + $0x28] sm:$0xf]
    %v5136 = vld [vmem:[#allocation2 + $0x2c] sm:$0xf]
    %v5137 = vld [vmem:[#allocation2 + $0x30] sm:$0xf]
    %v5138 = vld [vmem:[#allocation2 + $0x34] sm:$0xf]
    %v5139 = vld [vmem:[#allocation2 + $0x38] sm:$0xf]
    %v5140 = vld [vmem:[#allocation2 + $0x3c] sm:$0xf]
    %v5141 = vld [vmem:[#allocation2 + $0x40] sm:$0xf]
    %v5142 = vld [vmem:[#allocation2 + $0x44] sm:$0xf]
    %v5143 = vld [vmem:[#allocation2 + $0x48] sm:$0xf]
    %v5144 = vld [vmem:[#allocation2 + $0x4c] sm:$0xf]
    %v5145 = vld [vmem:[#allocation2 + $0x50] sm:$0xf]
    %v5146 = vld [vmem:[#allocation2 + $0x54] sm:$0xf]
    %v5147 = vld [vmem:[#allocation2 + $0x58] sm:$0xf]
    %v5148 = vld [vmem:[#allocation2 + $0x5c] sm:$0xf]
    %v5149 = vld [vmem:[#allocation2 + $0x60] sm:$0xf]
    %v5150 = vld [vmem:[#allocation2 + $0x64] sm:$0xf]
    %v5151 = vld [vmem:[#allocation2 + $0x68] sm:$0xf]
    %v5152 = vld [vmem:[#allocation2 + $0x6c] sm:$0xf]
    %v5153 = vld [vmem:[#allocation2 + $0x70] sm:$0xf]
    %v5154 = vld [vmem:[#allocation2 + $0x74] sm:$0xf]
    %v5155 = vld [vmem:[#allocation2 + $0x78] sm:$0xf]
    %v5156 = vld [vmem:[#allocation2 + $0x7c] sm:$0xf]
    %v5157 = vld [vmem:[#allocation2 + $0x80] sm:$0xf]
    %v5158 = vld [vmem:[#allocation2 + $0x84] sm:$0xf]
    %v5159 = vld [vmem:[#allocation2 + $0x88] sm:$0xf]
    %v5160 = vld [vmem:[#allocation2 + $0x8c] sm:$0xf]
    %v5161 = vld [vmem:[#allocation2 + $0x90] sm:$0x3]
    %v5163 = vshrl.u32 %v5129, 16
    %v5165 = vrot.slane %v5163, 5
    %v5166 = vshll.u32 %v5129, 16
    %v5168 = vrot.slane %v5166, 6
    %v5169 = vor.u32 %v5165, %v5168
    %v5170 = vrot.slane %v5169, 4
    %v5172 = vshrl.u32 %v5130, 16
    %v5174 = vrot.slane %v5172, 5
    %v5175 = vshll.u32 %v5130, 16
    %v5177 = vrot.slane %v5175, 6
    %v5178 = vor.u32 %v5174, %v5177
    %v5179 = vsel %vm3405, %v5170, %v5178
    %v5180 = vrot.slane %v5178, 4
    %v5182 = vshrl.u32 %v5131, 16
    %v5184 = vrot.slane %v5182, 5
    %v5185 = vshll.u32 %v5131, 16
    %v5187 = vrot.slane %v5185, 6
    %v5188 = vor.u32 %v5184, %v5187
    %v5189 = vsel %vm3405, %v5180, %v5188
    %v5190 = vrot.slane %v5188, 4
    %v5192 = vshrl.u32 %v5132, 16
    %v5194 = vrot.slane %v5192, 5
    %v5195 = vshll.u32 %v5132, 16
    %v5197 = vrot.slane %v5195, 6
    %v5198 = vor.u32 %v5194, %v5197
    %v5199 = vsel %vm3405, %v5190, %v5198
    %v5200 = vrot.slane %v5198, 4
    %v5202 = vshrl.u32 %v5133, 16
    %v5204 = vrot.slane %v5202, 5
    %v5205 = vshll.u32 %v5133, 16
    %v5207 = vrot.slane %v5205, 6
    %v5208 = vor.u32 %v5204, %v5207
    %v5209 = vsel %vm3405, %v5200, %v5208
    %v5210 = vrot.slane %v5208, 4
    %v5212 = vshrl.u32 %v5134, 16
    %v5214 = vrot.slane %v5212, 5
    %v5215 = vshll.u32 %v5134, 16
    %v5217 = vrot.slane %v5215, 6
    %v5218 = vor.u32 %v5214, %v5217
    %v5219 = vsel %vm3405, %v5210, %v5218
    %v5220 = vrot.slane %v5218, 4
    %v5222 = vshrl.u32 %v5135, 16
    %v5224 = vrot.slane %v5222, 5
    %v5225 = vshll.u32 %v5135, 16
    %v5227 = vrot.slane %v5225, 6
    %v5228 = vor.u32 %v5224, %v5227
    %v5229 = vsel %vm3405, %v5220, %v5228
    %v5230 = vrot.slane %v5228, 4
    %v5232 = vshrl.u32 %v5136, 16
    %v5234 = vrot.slane %v5232, 5
    %v5235 = vshll.u32 %v5136, 16
    %v5237 = vrot.slane %v5235, 6
    %v5238 = vor.u32 %v5234, %v5237
    %v5239 = vsel %vm3405, %v5230, %v5238
    %v5240 = vrot.slane %v5238, 4
    %v5242 = vshrl.u32 %v5137, 16
    %v5244 = vrot.slane %v5242, 5
    %v5245 = vshll.u32 %v5137, 16
    %v5247 = vrot.slane %v5245, 6
    %v5248 = vor.u32 %v5244, %v5247
    %v5249 = vsel %vm3405, %v5240, %v5248
    %v5250 = vrot.slane %v5248, 4
    %v5252 = vshrl.u32 %v5138, 16
    %v5254 = vrot.slane %v5252, 5
    %v5255 = vshll.u32 %v5138, 16
    %v5257 = vrot.slane %v5255, 6
    %v5258 = vor.u32 %v5254, %v5257
    %v5259 = vsel %vm3405, %v5250, %v5258
    %v5260 = vrot.slane %v5258, 4
    %v5262 = vshrl.u32 %v5139, 16
    %v5264 = vrot.slane %v5262, 5
    %v5265 = vshll.u32 %v5139, 16
    %v5267 = vrot.slane %v5265, 6
    %v5268 = vor.u32 %v5264, %v5267
    %v5269 = vsel %vm3405, %v5260, %v5268
    %v5270 = vrot.slane %v5268, 4
    %v5272 = vshrl.u32 %v5140, 16
    %v5274 = vrot.slane %v5272, 5
    %v5275 = vshll.u32 %v5140, 16
    %v5277 = vrot.slane %v5275, 6
    %v5278 = vor.u32 %v5274, %v5277
    %v5279 = vsel %vm3405, %v5270, %v5278
    %v5280 = vrot.slane %v5278, 4
    %v5282 = vshrl.u32 %v5141, 16
    %v5284 = vrot.slane %v5282, 5
    %v5285 = vshll.u32 %v5141, 16
    %v5287 = vrot.slane %v5285, 6
    %v5288 = vor.u32 %v5284, %v5287
    %v5289 = vsel %vm3405, %v5280, %v5288
    %v5290 = vrot.slane %v5288, 4
    %v5292 = vshrl.u32 %v5142, 16
    %v5294 = vrot.slane %v5292, 5
    %v5295 = vshll.u32 %v5142, 16
    %v5297 = vrot.slane %v5295, 6
    %v5298 = vor.u32 %v5294, %v5297
    %v5299 = vsel %vm3405, %v5290, %v5298
    %v5300 = vrot.slane %v5298, 4
    %v5302 = vshrl.u32 %v5143, 16
    %v5304 = vrot.slane %v5302, 5
    %v5305 = vshll.u32 %v5143, 16
    %v5307 = vrot.slane %v5305, 6
    %v5308 = vor.u32 %v5304, %v5307
    %v5309 = vsel %vm3405, %v5300, %v5308
    %v5310 = vrot.slane %v5308, 4
    %v5312 = vshrl.u32 %v5144, 16
    %v5314 = vrot.slane %v5312, 5
    %v5315 = vshll.u32 %v5144, 16
    %v5317 = vrot.slane %v5315, 6
    %v5318 = vor.u32 %v5314, %v5317
    %v5319 = vsel %vm3405, %v5310, %v5318
    %v5320 = vrot.slane %v5318, 4
    %v5322 = vshrl.u32 %v5145, 16
    %v5324 = vrot.slane %v5322, 5
    %v5325 = vshll.u32 %v5145, 16
    %v5327 = vrot.slane %v5325, 6
    %v5328 = vor.u32 %v5324, %v5327
    %v5329 = vsel %vm3405, %v5320, %v5328
    %v5330 = vrot.slane %v5328, 4
    %v5332 = vshrl.u32 %v5146, 16
    %v5334 = vrot.slane %v5332, 5
    %v5335 = vshll.u32 %v5146, 16
    %v5337 = vrot.slane %v5335, 6
    %v5338 = vor.u32 %v5334, %v5337
    %v5339 = vsel %vm3405, %v5330, %v5338
    %v5340 = vrot.slane %v5338, 4
    %v5342 = vshrl.u32 %v5147, 16
    %v5344 = vrot.slane %v5342, 5
    %v5345 = vshll.u32 %v5147, 16
    %v5347 = vrot.slane %v5345, 6
    %v5348 = vor.u32 %v5344, %v5347
    %v5349 = vsel %vm3405, %v5340, %v5348
    %v5350 = vrot.slane %v5348, 4
    %v5352 = vshrl.u32 %v5148, 16
    %v5354 = vrot.slane %v5352, 5
    %v5355 = vshll.u32 %v5148, 16
    %v5357 = vrot.slane %v5355, 6
    %v5358 = vor.u32 %v5354, %v5357
    %v5359 = vsel %vm3405, %v5350, %v5358
    %v5360 = vrot.slane %v5358, 4
    %v5362 = vshrl.u32 %v5149, 16
    %v5364 = vrot.slane %v5362, 5
    %v5365 = vshll.u32 %v5149, 16
    %v5367 = vrot.slane %v5365, 6
    %v5368 = vor.u32 %v5364, %v5367
    %v5369 = vsel %vm3405, %v5360, %v5368
    %v5370 = vrot.slane %v5368, 4
    %v5372 = vshrl.u32 %v5150, 16
    %v5374 = vrot.slane %v5372, 5
    %v5375 = vshll.u32 %v5150, 16
    %v5377 = vrot.slane %v5375, 6
    %v5378 = vor.u32 %v5374, %v5377
    %v5379 = vsel %vm3405, %v5370, %v5378
    %v5380 = vrot.slane %v5378, 4
    %v5382 = vshrl.u32 %v5151, 16
    %v5384 = vrot.slane %v5382, 5
    %v5385 = vshll.u32 %v5151, 16
    %v5387 = vrot.slane %v5385, 6
    %v5388 = vor.u32 %v5384, %v5387
    %v5389 = vsel %vm3405, %v5380, %v5388
    %v5390 = vrot.slane %v5388, 4
    %v5392 = vshrl.u32 %v5152, 16
    %v5394 = vrot.slane %v5392, 5
    %v5395 = vshll.u32 %v5152, 16
    %v5397 = vrot.slane %v5395, 6
    %v5398 = vor.u32 %v5394, %v5397
    %v5399 = vsel %vm3405, %v5390, %v5398
    %v5400 = vrot.slane %v5398, 4
    %v5402 = vshrl.u32 %v5153, 16
    %v5404 = vrot.slane %v5402, 5
    %v5405 = vshll.u32 %v5153, 16
    %v5407 = vrot.slane %v5405, 6
    %v5408 = vor.u32 %v5404, %v5407
    %v5409 = vsel %vm3405, %v5400, %v5408
    %v5410 = vrot.slane %v5408, 4
    %v5412 = vshrl.u32 %v5154, 16
    %v5414 = vrot.slane %v5412, 5
    %v5415 = vshll.u32 %v5154, 16
    %v5417 = vrot.slane %v5415, 6
    %v5418 = vor.u32 %v5414, %v5417
    %v5419 = vsel %vm3405, %v5410, %v5418
    %v5420 = vrot.slane %v5418, 4
    %v5422 = vshrl.u32 %v5155, 16
    %v5424 = vrot.slane %v5422, 5
    %v5425 = vshll.u32 %v5155, 16
    %v5427 = vrot.slane %v5425, 6
    %v5428 = vor.u32 %v5424, %v5427
    %v5429 = vsel %vm3405, %v5420, %v5428
    %v5430 = vrot.slane %v5428, 4
    %v5432 = vshrl.u32 %v5156, 16
    %v5434 = vrot.slane %v5432, 5
    %v5435 = vshll.u32 %v5156, 16
    %v5437 = vrot.slane %v5435, 6
    %v5438 = vor.u32 %v5434, %v5437
    %v5439 = vsel %vm3405, %v5430, %v5438
    %v5440 = vrot.slane %v5438, 4
    %v5442 = vshrl.u32 %v5157, 16
    %v5444 = vrot.slane %v5442, 5
    %v5445 = vshll.u32 %v5157, 16
    %v5447 = vrot.slane %v5445, 6
    %v5448 = vor.u32 %v5444, %v5447
    %v5449 = vsel %vm3405, %v5440, %v5448
    %v5450 = vrot.slane %v5448, 4
    %v5452 = vshrl.u32 %v5158, 16
    %v5454 = vrot.slane %v5452, 5
    %v5455 = vshll.u32 %v5158, 16
    %v5457 = vrot.slane %v5455, 6
    %v5458 = vor.u32 %v5454, %v5457
    %v5459 = vsel %vm3405, %v5450, %v5458
    %v5460 = vrot.slane %v5458, 4
    %v5462 = vshrl.u32 %v5159, 16
    %v5464 = vrot.slane %v5462, 5
    %v5465 = vshll.u32 %v5159, 16
    %v5467 = vrot.slane %v5465, 6
    %v5468 = vor.u32 %v5464, %v5467
    %v5469 = vsel %vm3405, %v5460, %v5468
    %v5470 = vrot.slane %v5468, 4
    %v5472 = vshrl.u32 %v5160, 16
    %v5474 = vrot.slane %v5472, 5
    %v5475 = vshll.u32 %v5160, 16
    %v5477 = vrot.slane %v5475, 6
    %v5478 = vor.u32 %v5474, %v5477
    %v5479 = vsel %vm3405, %v5470, %v5478
    %v5480 = vrot.slane %v5478, 4
    %v5482 = vshrl.u32 %v5161, 16
    %v5484 = vrot.slane %v5482, 5
    %v5485 = vshll.u32 %v5161, 16
    %v5487 = vrot.slane %v5485, 6
    %v5488 = vor.u32 %v5484, %v5487
    %v5489 = vsel %vm3405, %v5480, %v5488
    %5490 = vrot.lane.b32.xlu0 %v5179, 64
    %v5491 = vpop.permute.xlu0 %5490
    %5492 = vrot.lane.b32.xlu0 %v5189, 64
    %v5493 = vpop.permute.xlu0 %5492
    %5494 = vrot.lane.b32.xlu0 %v5199, 64
    %v5495 = vpop.permute.xlu0 %5494
    %5496 = vrot.lane.b32.xlu0 %v5209, 64
    %v5497 = vpop.permute.xlu0 %5496
    %5498 = vrot.lane.b32.xlu0 %v5219, 64
    %v5499 = vpop.permute.xlu0 %5498
    %5500 = vrot.lane.b32.xlu0 %v5229, 64
    %v5501 = vpop.permute.xlu0 %5500
    %5502 = vrot.lane.b32.xlu0 %v5239, 64
    %v5503 = vpop.permute.xlu0 %5502
    %5504 = vrot.lane.b32.xlu0 %v5249, 64
    %v5505 = vpop.permute.xlu0 %5504
    %5506 = vrot.lane.b32.xlu0 %v5259, 64
    %v5507 = vpop.permute.xlu0 %5506
    %5508 = vrot.lane.b32.xlu0 %v5269, 64
    %v5509 = vpop.permute.xlu0 %5508
    %5510 = vrot.lane.b32.xlu0 %v5279, 64
    %v5511 = vpop.permute.xlu0 %5510
    %5512 = vrot.lane.b32.xlu0 %v5289, 64
    %v5513 = vpop.permute.xlu0 %5512
    %5514 = vrot.lane.b32.xlu0 %v5299, 64
    %v5515 = vpop.permute.xlu0 %5514
    %5516 = vrot.lane.b32.xlu0 %v5309, 64
    %v5517 = vpop.permute.xlu0 %5516
    %5518 = vrot.lane.b32.xlu0 %v5319, 64
    %v5519 = vpop.permute.xlu0 %5518
    %5520 = vrot.lane.b32.xlu0 %v5329, 64
    %v5521 = vpop.permute.xlu0 %5520
    %5522 = vrot.lane.b32.xlu0 %v5339, 64
    %v5523 = vpop.permute.xlu0 %5522
    %5524 = vrot.lane.b32.xlu0 %v5349, 64
    %v5525 = vpop.permute.xlu0 %5524
    %5526 = vrot.lane.b32.xlu0 %v5359, 64
    %v5527 = vpop.permute.xlu0 %5526
    %5528 = vrot.lane.b32.xlu0 %v5369, 64
    %v5529 = vpop.permute.xlu0 %5528
    %5530 = vrot.lane.b32.xlu0 %v5379, 64
    %v5531 = vpop.permute.xlu0 %5530
    %5532 = vrot.lane.b32.xlu0 %v5389, 64
    %v5533 = vpop.permute.xlu0 %5532
    %5534 = vrot.lane.b32.xlu0 %v5399, 64
    %v5535 = vpop.permute.xlu0 %5534
    %5536 = vrot.lane.b32.xlu0 %v5409, 64
    %v5537 = vpop.permute.xlu0 %5536
    %5538 = vrot.lane.b32.xlu0 %v5419, 64
    %v5539 = vpop.permute.xlu0 %5538
    %5540 = vrot.lane.b32.xlu0 %v5429, 64
    %v5541 = vpop.permute.xlu0 %5540
    %5542 = vrot.lane.b32.xlu0 %v5439, 64
    %v5543 = vpop.permute.xlu0 %5542
    %5544 = vrot.lane.b32.xlu0 %v5449, 64
    %v5545 = vpop.permute.xlu0 %5544
    %5546 = vrot.lane.b32.xlu0 %v5459, 64
    %v5547 = vpop.permute.xlu0 %5546
    %5548 = vrot.lane.b32.xlu0 %v5469, 64
    %v5549 = vpop.permute.xlu0 %5548
    %5550 = vrot.lane.b32.xlu0 %v5479, 64
    %v5551 = vpop.permute.xlu0 %5550
    %5552 = vrot.lane.b32.xlu0 %v5489, 64
    %v5553 = vpop.permute.xlu0 %5552
    %vm5586 = vcmask 585216
    %5587 = vst.msk [vmem:[#allocation3] sm:$0xf] %vm5586, %v5491
    %5588 = vst.msk [vmem:[#allocation3 + $0x8] sm:$0xf] %vm5586, %v5493
    %5589 = vst.msk [vmem:[#allocation3 + $0x10] sm:$0xf] %vm5586, %v5495
    %5590 = vst.msk [vmem:[#allocation3 + $0x18] sm:$0xf] %vm5586, %v5497
    %5591 = vst.msk [vmem:[#allocation3 + $0x20] sm:$0xf] %vm5586, %v5499
    %5592 = vst.msk [vmem:[#allocation3 + $0x28] sm:$0xf] %vm5586, %v5501
    %5593 = vst.msk [vmem:[#allocation3 + $0x30] sm:$0xf] %vm5586, %v5503
    %5594 = vst.msk [vmem:[#allocation3 + $0x38] sm:$0xf] %vm5586, %v5505
    %5595 = vst.msk [vmem:[#allocation3 + $0x40] sm:$0xf] %vm5586, %v5507
    %5596 = vst.msk [vmem:[#allocation3 + $0x48] sm:$0xf] %vm5586, %v5509
    %5597 = vst.msk [vmem:[#allocation3 + $0x50] sm:$0xf] %vm5586, %v5511
    %5598 = vst.msk [vmem:[#allocation3 + $0x58] sm:$0xf] %vm5586, %v5513
    %5599 = vst.msk [vmem:[#allocation3 + $0x60] sm:$0xf] %vm5586, %v5515
    %5600 = vst.msk [vmem:[#allocation3 + $0x68] sm:$0xf] %vm5586, %v5517
    %5601 = vst.msk [vmem:[#allocation3 + $0x70] sm:$0xf] %vm5586, %v5519
    %5602 = vst.msk [vmem:[#allocation3 + $0x78] sm:$0xf] %vm5586, %v5521
    %5603 = vst.msk [vmem:[#allocation3 + $0x80] sm:$0xf] %vm5586, %v5523
    %5604 = vst.msk [vmem:[#allocation3 + $0x88] sm:$0xf] %vm5586, %v5525
    %5605 = vst.msk [vmem:[#allocation3 + $0x90] sm:$0xf] %vm5586, %v5527
    %5606 = vst.msk [vmem:[#allocation3 + $0x98] sm:$0xf] %vm5586, %v5529
    %5607 = vst.msk [vmem:[#allocation3 + $0xa0] sm:$0xf] %vm5586, %v5531
    %5608 = vst.msk [vmem:[#allocation3 + $0xa8] sm:$0xf] %vm5586, %v5533
    %5609 = vst.msk [vmem:[#allocation3 + $0xb0] sm:$0xf] %vm5586, %v5535
    %5610 = vst.msk [vmem:[#allocation3 + $0xb8] sm:$0xf] %vm5586, %v5537
    %5611 = vst.msk [vmem:[#allocation3 + $0xc0] sm:$0xf] %vm5586, %v5539
    %5612 = vst.msk [vmem:[#allocation3 + $0xc8] sm:$0xf] %vm5586, %v5541
    %5613 = vst.msk [vmem:[#allocation3 + $0xd0] sm:$0xf] %vm5586, %v5543
    %5614 = vst.msk [vmem:[#allocation3 + $0xd8] sm:$0xf] %vm5586, %v5545
    %5615 = vst.msk [vmem:[#allocation3 + $0xe0] sm:$0xf] %vm5586, %v5547
    %5616 = vst.msk [vmem:[#allocation3 + $0xe8] sm:$0xf] %vm5586, %v5549
    %5617 = vst.msk [vmem:[#allocation3 + $0xf0] sm:$0xf] %vm5586, %v5551
    %5618 = vst.msk [vmem:[#allocation3 + $0xf8] sm:$0xf] %vm5586, %v5553
    %v5619 = vld [vmem:[#allocation2 + $0x10] sm:$0xc]
    %v5620 = vld [vmem:[#allocation2 + $0x14] sm:$0xf]
    %v5621 = vld [vmem:[#allocation2 + $0x18] sm:$0xf]
    %v5622 = vld [vmem:[#allocation2 + $0x1c] sm:$0xf]
    %v5623 = vld [vmem:[#allocation2 + $0x20] sm:$0xf]
    %v5624 = vld [vmem:[#allocation2 + $0x24] sm:$0xf]
    %v5625 = vld [vmem:[#allocation2 + $0x28] sm:$0xf]
    %v5626 = vld [vmem:[#allocation2 + $0x2c] sm:$0xf]
    %v5627 = vld [vmem:[#allocation2 + $0x30] sm:$0xf]
    %v5628 = vld [vmem:[#allocation2 + $0x34] sm:$0xf]
    %v5629 = vld [vmem:[#allocation2 + $0x38] sm:$0xf]
    %v5630 = vld [vmem:[#allocation2 + $0x3c] sm:$0xf]
    %v5631 = vld [vmem:[#allocation2 + $0x40] sm:$0xf]
    %v5632 = vld [vmem:[#allocation2 + $0x44] sm:$0xf]
    %v5633 = vld [vmem:[#allocation2 + $0x48] sm:$0xf]
    %v5634 = vld [vmem:[#allocation2 + $0x4c] sm:$0xf]
    %v5635 = vld [vmem:[#allocation2 + $0x50] sm:$0xf]
    %v5636 = vld [vmem:[#allocation2 + $0x54] sm:$0xf]
    %v5637 = vld [vmem:[#allocation2 + $0x58] sm:$0xf]
    %v5638 = vld [vmem:[#allocation2 + $0x5c] sm:$0xf]
    %v5639 = vld [vmem:[#allocation2 + $0x60] sm:$0xf]
    %v5640 = vld [vmem:[#allocation2 + $0x64] sm:$0xf]
    %v5641 = vld [vmem:[#allocation2 + $0x68] sm:$0xf]
    %v5642 = vld [vmem:[#allocation2 + $0x6c] sm:$0xf]
    %v5643 = vld [vmem:[#allocation2 + $0x70] sm:$0xf]
    %v5644 = vld [vmem:[#allocation2 + $0x74] sm:$0xf]
    %v5645 = vld [vmem:[#allocation2 + $0x78] sm:$0xf]
    %v5646 = vld [vmem:[#allocation2 + $0x7c] sm:$0xf]
    %v5647 = vld [vmem:[#allocation2 + $0x80] sm:$0xf]
    %v5648 = vld [vmem:[#allocation2 + $0x84] sm:$0xf]
    %v5649 = vld [vmem:[#allocation2 + $0x88] sm:$0xf]
    %v5650 = vld [vmem:[#allocation2 + $0x8c] sm:$0xf]
    %v5651 = vld [vmem:[#allocation2 + $0x90] sm:$0x3]
    %v5685 = vrot.slane %v5619, 6
    %v5686 = vrot.slane %v5685, 4
    %v5687 = vrot.slane %v5620, 6
    %v5688 = vsel %vm3931, %v5686, %v5687
    %v5689 = vrot.slane %v5687, 4
    %v5690 = vrot.slane %v5621, 6
    %v5691 = vsel %vm3931, %v5689, %v5690
    %v5692 = vrot.slane %v5690, 4
    %v5693 = vrot.slane %v5622, 6
    %v5694 = vsel %vm3931, %v5692, %v5693
    %v5695 = vrot.slane %v5693, 4
    %v5696 = vrot.slane %v5623, 6
    %v5697 = vsel %vm3931, %v5695, %v5696
    %v5698 = vrot.slane %v5696, 4
    %v5699 = vrot.slane %v5624, 6
    %v5700 = vsel %vm3931, %v5698, %v5699
    %v5701 = vrot.slane %v5699, 4
    %v5702 = vrot.slane %v5625, 6
    %v5703 = vsel %vm3931, %v5701, %v5702
    %v5704 = vrot.slane %v5702, 4
    %v5705 = vrot.slane %v5626, 6
    %v5706 = vsel %vm3931, %v5704, %v5705
    %v5707 = vrot.slane %v5705, 4
    %v5708 = vrot.slane %v5627, 6
    %v5709 = vsel %vm3931, %v5707, %v5708
    %v5710 = vrot.slane %v5708, 4
    %v5711 = vrot.slane %v5628, 6
    %v5712 = vsel %vm3931, %v5710, %v5711
    %v5713 = vrot.slane %v5711, 4
    %v5714 = vrot.slane %v5629, 6
    %v5715 = vsel %vm3931, %v5713, %v5714
    %v5716 = vrot.slane %v5714, 4
    %v5717 = vrot.slane %v5630, 6
    %v5718 = vsel %vm3931, %v5716, %v5717
    %v5719 = vrot.slane %v5717, 4
    %v5720 = vrot.slane %v5631, 6
    %v5721 = vsel %vm3931, %v5719, %v5720
    %v5722 = vrot.slane %v5720, 4
    %v5723 = vrot.slane %v5632, 6
    %v5724 = vsel %vm3931, %v5722, %v5723
    %v5725 = vrot.slane %v5723, 4
    %v5726 = vrot.slane %v5633, 6
    %v5727 = vsel %vm3931, %v5725, %v5726
    %v5728 = vrot.slane %v5726, 4
    %v5729 = vrot.slane %v5634, 6
    %v5730 = vsel %vm3931, %v5728, %v5729
    %v5731 = vrot.slane %v5729, 4
    %v5732 = vrot.slane %v5635, 6
    %v5733 = vsel %vm3931, %v5731, %v5732
    %v5734 = vrot.slane %v5732, 4
    %v5735 = vrot.slane %v5636, 6
    %v5736 = vsel %vm3931, %v5734, %v5735
    %v5737 = vrot.slane %v5735, 4
    %v5738 = vrot.slane %v5637, 6
    %v5739 = vsel %vm3931, %v5737, %v5738
    %v5740 = vrot.slane %v5738, 4
    %v5741 = vrot.slane %v5638, 6
    %v5742 = vsel %vm3931, %v5740, %v5741
    %v5743 = vrot.slane %v5741, 4
    %v5744 = vrot.slane %v5639, 6
    %v5745 = vsel %vm3931, %v5743, %v5744
    %v5746 = vrot.slane %v5744, 4
    %v5747 = vrot.slane %v5640, 6
    %v5748 = vsel %vm3931, %v5746, %v5747
    %v5749 = vrot.slane %v5747, 4
    %v5750 = vrot.slane %v5641, 6
    %v5751 = vsel %vm3931, %v5749, %v5750
    %v5752 = vrot.slane %v5750, 4
    %v5753 = vrot.slane %v5642, 6
    %v5754 = vsel %vm3931, %v5752, %v5753
    %v5755 = vrot.slane %v5753, 4
    %v5756 = vrot.slane %v5643, 6
    %v5757 = vsel %vm3931, %v5755, %v5756
    %v5758 = vrot.slane %v5756, 4
    %v5759 = vrot.slane %v5644, 6
    %v5760 = vsel %vm3931, %v5758, %v5759
    %v5761 = vrot.slane %v5759, 4
    %v5762 = vrot.slane %v5645, 6
    %v5763 = vsel %vm3931, %v5761, %v5762
    %v5764 = vrot.slane %v5762, 4
    %v5765 = vrot.slane %v5646, 6
    %v5766 = vsel %vm3931, %v5764, %v5765
    %v5767 = vrot.slane %v5765, 4
    %v5768 = vrot.slane %v5647, 6
    %v5769 = vsel %vm3931, %v5767, %v5768
    %v5770 = vrot.slane %v5768, 4
    %v5771 = vrot.slane %v5648, 6
    %v5772 = vsel %vm3931, %v5770, %v5771
    %v5773 = vrot.slane %v5771, 4
    %v5774 = vrot.slane %v5649, 6
    %v5775 = vsel %vm3931, %v5773, %v5774
    %v5776 = vrot.slane %v5774, 4
    %v5777 = vrot.slane %v5650, 6
    %v5778 = vsel %vm3931, %v5776, %v5777
    %v5779 = vrot.slane %v5777, 4
    %v5780 = vrot.slane %v5651, 6
    %v5781 = vsel %vm3931, %v5779, %v5780
    %5782 = vrot.lane.b32.xlu0 %v5688, 72
    %v5783 = vpop.permute.xlu0 %5782
    %5784 = vrot.lane.b32.xlu0 %v5691, 72
    %v5785 = vpop.permute.xlu0 %5784
    %5786 = vrot.lane.b32.xlu0 %v5694, 72
    %v5787 = vpop.permute.xlu0 %5786
    %5788 = vrot.lane.b32.xlu0 %v5697, 72
    %v5789 = vpop.permute.xlu0 %5788
    %5790 = vrot.lane.b32.xlu0 %v5700, 72
    %v5791 = vpop.permute.xlu0 %5790
    %5792 = vrot.lane.b32.xlu0 %v5703, 72
    %v5793 = vpop.permute.xlu0 %5792
    %5794 = vrot.lane.b32.xlu0 %v5706, 72
    %v5795 = vpop.permute.xlu0 %5794
    %5796 = vrot.lane.b32.xlu0 %v5709, 72
    %v5797 = vpop.permute.xlu0 %5796
    %5798 = vrot.lane.b32.xlu0 %v5712, 72
    %v5799 = vpop.permute.xlu0 %5798
    %5800 = vrot.lane.b32.xlu0 %v5715, 72
    %v5801 = vpop.permute.xlu0 %5800
    %5802 = vrot.lane.b32.xlu0 %v5718, 72
    %v5803 = vpop.permute.xlu0 %5802
    %5804 = vrot.lane.b32.xlu0 %v5721, 72
    %v5805 = vpop.permute.xlu0 %5804
    %5806 = vrot.lane.b32.xlu0 %v5724, 72
    %v5807 = vpop.permute.xlu0 %5806
    %5808 = vrot.lane.b32.xlu0 %v5727, 72
    %v5809 = vpop.permute.xlu0 %5808
    %5810 = vrot.lane.b32.xlu0 %v5730, 72
    %v5811 = vpop.permute.xlu0 %5810
    %5812 = vrot.lane.b32.xlu0 %v5733, 72
    %v5813 = vpop.permute.xlu0 %5812
    %5814 = vrot.lane.b32.xlu0 %v5736, 72
    %v5815 = vpop.permute.xlu0 %5814
    %5816 = vrot.lane.b32.xlu0 %v5739, 72
    %v5817 = vpop.permute.xlu0 %5816
    %5818 = vrot.lane.b32.xlu0 %v5742, 72
    %v5819 = vpop.permute.xlu0 %5818
    %5820 = vrot.lane.b32.xlu0 %v5745, 72
    %v5821 = vpop.permute.xlu0 %5820
    %5822 = vrot.lane.b32.xlu0 %v5748, 72
    %v5823 = vpop.permute.xlu0 %5822
    %5824 = vrot.lane.b32.xlu0 %v5751, 72
    %v5825 = vpop.permute.xlu0 %5824
    %5826 = vrot.lane.b32.xlu0 %v5754, 72
    %v5827 = vpop.permute.xlu0 %5826
    %5828 = vrot.lane.b32.xlu0 %v5757, 72
    %v5829 = vpop.permute.xlu0 %5828
    %5830 = vrot.lane.b32.xlu0 %v5760, 72
    %v5831 = vpop.permute.xlu0 %5830
    %5832 = vrot.lane.b32.xlu0 %v5763, 72
    %v5833 = vpop.permute.xlu0 %5832
    %5834 = vrot.lane.b32.xlu0 %v5766, 72
    %v5835 = vpop.permute.xlu0 %5834
    %5836 = vrot.lane.b32.xlu0 %v5769, 72
    %v5837 = vpop.permute.xlu0 %5836
    %5838 = vrot.lane.b32.xlu0 %v5772, 72
    %v5839 = vpop.permute.xlu0 %5838
    %5840 = vrot.lane.b32.xlu0 %v5775, 72
    %v5841 = vpop.permute.xlu0 %5840
    %5842 = vrot.lane.b32.xlu0 %v5778, 72
    %v5843 = vpop.permute.xlu0 %5842
    %5844 = vrot.lane.b32.xlu0 %v5781, 72
    %v5845 = vpop.permute.xlu0 %5844
    %vm5878 = vcmask 650816
    %5879 = vst.msk [vmem:[#allocation3] sm:$0xf] %vm5878, %v5783
    %5880 = vst.msk [vmem:[#allocation3 + $0x8] sm:$0xf] %vm5878, %v5785
    %5881 = vst.msk [vmem:[#allocation3 + $0x10] sm:$0xf] %vm5878, %v5787
    %5882 = vst.msk [vmem:[#allocation3 + $0x18] sm:$0xf] %vm5878, %v5789
    %5883 = vst.msk [vmem:[#allocation3 + $0x20] sm:$0xf] %vm5878, %v5791
    %5884 = vst.msk [vmem:[#allocation3 + $0x28] sm:$0xf] %vm5878, %v5793
    %5885 = vst.msk [vmem:[#allocation3 + $0x30] sm:$0xf] %vm5878, %v5795
    %5886 = vst.msk [vmem:[#allocation3 + $0x38] sm:$0xf] %vm5878, %v5797
    %5887 = vst.msk [vmem:[#allocation3 + $0x40] sm:$0xf] %vm5878, %v5799
    %5888 = vst.msk [vmem:[#allocation3 + $0x48] sm:$0xf] %vm5878, %v5801
    %5889 = vst.msk [vmem:[#allocation3 + $0x50] sm:$0xf] %vm5878, %v5803
    %5890 = vst.msk [vmem:[#allocation3 + $0x58] sm:$0xf] %vm5878, %v5805
    %5891 = vst.msk [vmem:[#allocation3 + $0x60] sm:$0xf] %vm5878, %v5807
    %5892 = vst.msk [vmem:[#allocation3 + $0x68] sm:$0xf] %vm5878, %v5809
    %5893 = vst.msk [vmem:[#allocation3 + $0x70] sm:$0xf] %vm5878, %v5811
    %5894 = vst.msk [vmem:[#allocation3 + $0x78] sm:$0xf] %vm5878, %v5813
    %5895 = vst.msk [vmem:[#allocation3 + $0x80] sm:$0xf] %vm5878, %v5815
    %5896 = vst.msk [vmem:[#allocation3 + $0x88] sm:$0xf] %vm5878, %v5817
    %5897 = vst.msk [vmem:[#allocation3 + $0x90] sm:$0xf] %vm5878, %v5819
    %5898 = vst.msk [vmem:[#allocation3 + $0x98] sm:$0xf] %vm5878, %v5821
    %5899 = vst.msk [vmem:[#allocation3 + $0xa0] sm:$0xf] %vm5878, %v5823
    %5900 = vst.msk [vmem:[#allocation3 + $0xa8] sm:$0xf] %vm5878, %v5825
    %5901 = vst.msk [vmem:[#allocation3 + $0xb0] sm:$0xf] %vm5878, %v5827
    %5902 = vst.msk [vmem:[#allocation3 + $0xb8] sm:$0xf] %vm5878, %v5829
    %5903 = vst.msk [vmem:[#allocation3 + $0xc0] sm:$0xf] %vm5878, %v5831
    %5904 = vst.msk [vmem:[#allocation3 + $0xc8] sm:$0xf] %vm5878, %v5833
    %5905 = vst.msk [vmem:[#allocation3 + $0xd0] sm:$0xf] %vm5878, %v5835
    %5906 = vst.msk [vmem:[#allocation3 + $0xd8] sm:$0xf] %vm5878, %v5837
    %5907 = vst.msk [vmem:[#allocation3 + $0xe0] sm:$0xf] %vm5878, %v5839
    %5908 = vst.msk [vmem:[#allocation3 + $0xe8] sm:$0xf] %vm5878, %v5841
    %5909 = vst.msk [vmem:[#allocation3 + $0xf0] sm:$0xf] %vm5878, %v5843
    %5910 = vst.msk [vmem:[#allocation3 + $0xf8] sm:$0xf] %vm5878, %v5845
    %v5911 = vld [vmem:[#allocation2 + $0x20] sm:$0xf]
    %v5912 = vld [vmem:[#allocation2 + $0x24] sm:$0xf]
    %v5913 = vld [vmem:[#allocation2 + $0x28] sm:$0xf]
    %v5914 = vld [vmem:[#allocation2 + $0x2c] sm:$0xf]
    %v5915 = vld [vmem:[#allocation2 + $0x30] sm:$0xf]
    %v5916 = vld [vmem:[#allocation2 + $0x34] sm:$0xf]
    %v5917 = vld [vmem:[#allocation2 + $0x38] sm:$0xf]
    %v5918 = vld [vmem:[#allocation2 + $0x3c] sm:$0xf]
    %v5919 = vld [vmem:[#allocation2 + $0x40] sm:$0xf]
    %v5920 = vld [vmem:[#allocation2 + $0x44] sm:$0xf]
    %v5921 = vld [vmem:[#allocation2 + $0x48] sm:$0xf]
    %v5922 = vld [vmem:[#allocation2 + $0x4c] sm:$0xf]
    %v5923 = vld [vmem:[#allocation2 + $0x50] sm:$0xf]
    %v5924 = vld [vmem:[#allocation2 + $0x54] sm:$0xf]
    %v5925 = vld [vmem:[#allocation2 + $0x58] sm:$0xf]
    %v5926 = vld [vmem:[#allocation2 + $0x5c] sm:$0xf]
    %v5927 = vld [vmem:[#allocation2 + $0x60] sm:$0xf]
    %v5928 = vld [vmem:[#allocation2 + $0x64] sm:$0xf]
    %v5929 = vld [vmem:[#allocation2 + $0x68] sm:$0xf]
    %v5930 = vld [vmem:[#allocation2 + $0x6c] sm:$0xf]
    %v5931 = vld [vmem:[#allocation2 + $0x70] sm:$0xf]
    %v5932 = vld [vmem:[#allocation2 + $0x74] sm:$0xf]
    %v5933 = vld [vmem:[#allocation2 + $0x78] sm:$0xf]
    %v5934 = vld [vmem:[#allocation2 + $0x7c] sm:$0xf]
    %v5935 = vld [vmem:[#allocation2 + $0x80] sm:$0xf]
    %v5936 = vld [vmem:[#allocation2 + $0x84] sm:$0xf]
    %v5937 = vld [vmem:[#allocation2 + $0x88] sm:$0xf]
    %v5938 = vld [vmem:[#allocation2 + $0x8c] sm:$0xf]
    %v5939 = vld [vmem:[#allocation2 + $0x90] sm:$0xf]
    %v5940 = vld [vmem:[#allocation2 + $0x94] sm:$0xf]
    %v5941 = vld [vmem:[#allocation2 + $0x98] sm:$0xf]
    %v5942 = vld [vmem:[#allocation2 + $0x9c] sm:$0xf]
    %5975 = vrot.lane.b32.xlu0 %v5911, 80
    %v5976 = vpop.permute.xlu0 %5975
    %5977 = vrot.lane.b32.xlu0 %v5912, 80
    %v5978 = vpop.permute.xlu0 %5977
    %5979 = vrot.lane.b32.xlu0 %v5913, 80
    %v5980 = vpop.permute.xlu0 %5979
    %5981 = vrot.lane.b32.xlu0 %v5914, 80
    %v5982 = vpop.permute.xlu0 %5981
    %5983 = vrot.lane.b32.xlu0 %v5915, 80
    %v5984 = vpop.permute.xlu0 %5983
    %5985 = vrot.lane.b32.xlu0 %v5916, 80
    %v5986 = vpop.permute.xlu0 %5985
    %5987 = vrot.lane.b32.xlu0 %v5917, 80
    %v5988 = vpop.permute.xlu0 %5987
    %5989 = vrot.lane.b32.xlu0 %v5918, 80
    %v5990 = vpop.permute.xlu0 %5989
    %5991 = vrot.lane.b32.xlu0 %v5919, 80
    %v5992 = vpop.permute.xlu0 %5991
    %5993 = vrot.lane.b32.xlu0 %v5920, 80
    %v5994 = vpop.permute.xlu0 %5993
    %5995 = vrot.lane.b32.xlu0 %v5921, 80
    %v5996 = vpop.permute.xlu0 %5995
    %5997 = vrot.lane.b32.xlu0 %v5922, 80
    %v5998 = vpop.permute.xlu0 %5997
    %5999 = vrot.lane.b32.xlu0 %v5923, 80
    %v6000 = vpop.permute.xlu0 %5999
    %6001 = vrot.lane.b32.xlu0 %v5924, 80
    %v6002 = vpop.permute.xlu0 %6001
    %6003 = vrot.lane.b32.xlu0 %v5925, 80
    %v6004 = vpop.permute.xlu0 %6003
    %6005 = vrot.lane.b32.xlu0 %v5926, 80
    %v6006 = vpop.permute.xlu0 %6005
    %6007 = vrot.lane.b32.xlu0 %v5927, 80
    %v6008 = vpop.permute.xlu0 %6007
    %6009 = vrot.lane.b32.xlu0 %v5928, 80
    %v6010 = vpop.permute.xlu0 %6009
    %6011 = vrot.lane.b32.xlu0 %v5929, 80
    %v6012 = vpop.permute.xlu0 %6011
    %6013 = vrot.lane.b32.xlu0 %v5930, 80
    %v6014 = vpop.permute.xlu0 %6013
    %6015 = vrot.lane.b32.xlu0 %v5931, 80
    %v6016 = vpop.permute.xlu0 %6015
    %6017 = vrot.lane.b32.xlu0 %v5932, 80
    %v6018 = vpop.permute.xlu0 %6017
    %6019 = vrot.lane.b32.xlu0 %v5933, 80
    %v6020 = vpop.permute.xlu0 %6019
    %6021 = vrot.lane.b32.xlu0 %v5934, 80
    %v6022 = vpop.permute.xlu0 %6021
    %6023 = vrot.lane.b32.xlu0 %v5935, 80
    %v6024 = vpop.permute.xlu0 %6023
    %6025 = vrot.lane.b32.xlu0 %v5936, 80
    %v6026 = vpop.permute.xlu0 %6025
    %6027 = vrot.lane.b32.xlu0 %v5937, 80
    %v6028 = vpop.permute.xlu0 %6027
    %6029 = vrot.lane.b32.xlu0 %v5938, 80
    %v6030 = vpop.permute.xlu0 %6029
    %6031 = vrot.lane.b32.xlu0 %v5939, 80
    %v6032 = vpop.permute.xlu0 %6031
    %6033 = vrot.lane.b32.xlu0 %v5940, 80
    %v6034 = vpop.permute.xlu0 %6033
    %6035 = vrot.lane.b32.xlu0 %v5941, 80
    %v6036 = vpop.permute.xlu0 %6035
    %6037 = vrot.lane.b32.xlu0 %v5942, 80
    %v6038 = vpop.permute.xlu0 %6037
    %vm6071 = vcmask 716416
    %6072 = vst.msk [vmem:[#allocation3] sm:$0xf] %vm6071, %v5976
    %6073 = vst.msk [vmem:[#allocation3 + $0x8] sm:$0xf] %vm6071, %v5978
    %6074 = vst.msk [vmem:[#allocation3 + $0x10] sm:$0xf] %vm6071, %v5980
    %6075 = vst.msk [vmem:[#allocation3 + $0x18] sm:$0xf] %vm6071, %v5982
    %6076 = vst.msk [vmem:[#allocation3 + $0x20] sm:$0xf] %vm6071, %v5984
    %6077 = vst.msk [vmem:[#allocation3 + $0x28] sm:$0xf] %vm6071, %v5986
    %6078 = vst.msk [vmem:[#allocation3 + $0x30] sm:$0xf] %vm6071, %v5988
    %6079 = vst.msk [vmem:[#allocation3 + $0x38] sm:$0xf] %vm6071, %v5990
    %6080 = vst.msk [vmem:[#allocation3 + $0x40] sm:$0xf] %vm6071, %v5992
    %6081 = vst.msk [vmem:[#allocation3 + $0x48] sm:$0xf] %vm6071, %v5994
    %6082 = vst.msk [vmem:[#allocation3 + $0x50] sm:$0xf] %vm6071, %v5996
    %6083 = vst.msk [vmem:[#allocation3 + $0x58] sm:$0xf] %vm6071, %v5998
    %6084 = vst.msk [vmem:[#allocation3 + $0x60] sm:$0xf] %vm6071, %v6000
    %6085 = vst.msk [vmem:[#allocation3 + $0x68] sm:$0xf] %vm6071, %v6002
    %6086 = vst.msk [vmem:[#allocation3 + $0x70] sm:$0xf] %vm6071, %v6004
    %6087 = vst.msk [vmem:[#allocation3 + $0x78] sm:$0xf] %vm6071, %v6006
    %6088 = vst.msk [vmem:[#allocation3 + $0x80] sm:$0xf] %vm6071, %v6008
    %6089 = vst.msk [vmem:[#allocation3 + $0x88] sm:$0xf] %vm6071, %v6010
    %6090 = vst.msk [vmem:[#allocation3 + $0x90] sm:$0xf] %vm6071, %v6012
    %6091 = vst.msk [vmem:[#allocation3 + $0x98] sm:$0xf] %vm6071, %v6014
    %6092 = vst.msk [vmem:[#allocation3 + $0xa0] sm:$0xf] %vm6071, %v6016
    %6093 = vst.msk [vmem:[#allocation3 + $0xa8] sm:$0xf] %vm6071, %v6018
    %6094 = vst.msk [vmem:[#allocation3 + $0xb0] sm:$0xf] %vm6071, %v6020
    %6095 = vst.msk [vmem:[#allocation3 + $0xb8] sm:$0xf] %vm6071, %v6022
    %6096 = vst.msk [vmem:[#allocation3 + $0xc0] sm:$0xf] %vm6071, %v6024
    %6097 = vst.msk [vmem:[#allocation3 + $0xc8] sm:$0xf] %vm6071, %v6026
    %6098 = vst.msk [vmem:[#allocation3 + $0xd0] sm:$0xf] %vm6071, %v6028
    %6099 = vst.msk [vmem:[#allocation3 + $0xd8] sm:$0xf] %vm6071, %v6030
    %6100 = vst.msk [vmem:[#allocation3 + $0xe0] sm:$0xf] %vm6071, %v6032
    %6101 = vst.msk [vmem:[#allocation3 + $0xe8] sm:$0xf] %vm6071, %v6034
    %6102 = vst.msk [vmem:[#allocation3 + $0xf0] sm:$0xf] %vm6071, %v6036
    %6103 = vst.msk [vmem:[#allocation3 + $0xf8] sm:$0xf] %vm6071, %v6038
    %v6104 = vld [vmem:[#allocation2 + $0x20] sm:$0xf]
    %v6105 = vld [vmem:[#allocation2 + $0x24] sm:$0xf]
    %v6106 = vld [vmem:[#allocation2 + $0x28] sm:$0xf]
    %v6107 = vld [vmem:[#allocation2 + $0x2c] sm:$0xf]
    %v6108 = vld [vmem:[#allocation2 + $0x30] sm:$0xf]
    %v6109 = vld [vmem:[#allocation2 + $0x34] sm:$0xf]
    %v6110 = vld [vmem:[#allocation2 + $0x38] sm:$0xf]
    %v6111 = vld [vmem:[#allocation2 + $0x3c] sm:$0xf]
    %v6112 = vld [vmem:[#allocation2 + $0x40] sm:$0xf]
    %v6113 = vld [vmem:[#allocation2 + $0x44] sm:$0xf]
    %v6114 = vld [vmem:[#allocation2 + $0x48] sm:$0xf]
    %v6115 = vld [vmem:[#allocation2 + $0x4c] sm:$0xf]
    %v6116 = vld [vmem:[#allocation2 + $0x50] sm:$0xf]
    %v6117 = vld [vmem:[#allocation2 + $0x54] sm:$0xf]
    %v6118 = vld [vmem:[#allocation2 + $0x58] sm:$0xf]
    %v6119 = vld [vmem:[#allocation2 + $0x5c] sm:$0xf]
    %v6120 = vld [vmem:[#allocation2 + $0x60] sm:$0xf]
    %v6121 = vld [vmem:[#allocation2 + $0x64] sm:$0xf]
    %v6122 = vld [vmem:[#allocation2 + $0x68] sm:$0xf]
    %v6123 = vld [vmem:[#allocation2 + $0x6c] sm:$0xf]
    %v6124 = vld [vmem:[#allocation2 + $0x70] sm:$0xf]
    %v6125 = vld [vmem:[#allocation2 + $0x74] sm:$0xf]
    %v6126 = vld [vmem:[#allocation2 + $0x78] sm:$0xf]
    %v6127 = vld [vmem:[#allocation2 + $0x7c] sm:$0xf]
    %v6128 = vld [vmem:[#allocation2 + $0x80] sm:$0xf]
    %v6129 = vld [vmem:[#allocation2 + $0x84] sm:$0xf]
    %v6130 = vld [vmem:[#allocation2 + $0x88] sm:$0xf]
    %v6131 = vld [vmem:[#allocation2 + $0x8c] sm:$0xf]
    %v6132 = vld [vmem:[#allocation2 + $0x90] sm:$0xf]
    %v6133 = vld [vmem:[#allocation2 + $0x94] sm:$0xf]
    %v6134 = vld [vmem:[#allocation2 + $0x98] sm:$0xf]
    %v6135 = vld [vmem:[#allocation2 + $0x9c] sm:$0xf]
    %v6136 = vld [vmem:[#allocation2 + $0xa0] sm:$0x1]
    %v6138 = vshrl.u32 %v6104, 16
    %v6140 = vrot.slane %v6138, 4
    %v6141 = vshll.u32 %v6104, 16
    %v6143 = vrot.slane %v6141, 5
    %v6144 = vor.u32 %v6140, %v6143
    %v6145 = vrot.slane %v6144, 4
    %v6147 = vshll.u32 %v6105, 16
    %v6149 = vrot.slane %v6147, 5
    %v6150 = vsel %vm2621, %v6145, %v6149
    %v6151 = vshrl.u32 %v6105, 16
    %v6153 = vrot.slane %v6151, 4
    %v6154 = vor.u32 %v6153, %v6149
    %v6155 = vrot.slane %v6154, 4
    %v6157 = vshll.u32 %v6106, 16
    %v6159 = vrot.slane %v6157, 5
    %v6160 = vsel %vm2621, %v6155, %v6159
    %v6161 = vshrl.u32 %v6106, 16
    %v6163 = vrot.slane %v6161, 4
    %v6164 = vor.u32 %v6163, %v6159
    %v6165 = vrot.slane %v6164, 4
    %v6167 = vshll.u32 %v6107, 16
    %v6169 = vrot.slane %v6167, 5
    %v6170 = vsel %vm2621, %v6165, %v6169
    %v6171 = vshrl.u32 %v6107, 16
    %v6173 = vrot.slane %v6171, 4
    %v6174 = vor.u32 %v6173, %v6169
    %v6175 = vrot.slane %v6174, 4
    %v6177 = vshll.u32 %v6108, 16
    %v6179 = vrot.slane %v6177, 5
    %v6180 = vsel %vm2621, %v6175, %v6179
    %v6181 = vshrl.u32 %v6108, 16
    %v6183 = vrot.slane %v6181, 4
    %v6184 = vor.u32 %v6183, %v6179
    %v6185 = vrot.slane %v6184, 4
    %v6187 = vshll.u32 %v6109, 16
    %v6189 = vrot.slane %v6187, 5
    %v6190 = vsel %vm2621, %v6185, %v6189
    %v6191 = vshrl.u32 %v6109, 16
    %v6193 = vrot.slane %v6191, 4
    %v6194 = vor.u32 %v6193, %v6189
    %v6195 = vrot.slane %v6194, 4
    %v6197 = vshll.u32 %v6110, 16
    %v6199 = vrot.slane %v6197, 5
    %v6200 = vsel %vm2621, %v6195, %v6199
    %v6201 = vshrl.u32 %v6110, 16
    %v6203 = vrot.slane %v6201, 4
    %v6204 = vor.u32 %v6203, %v6199
    %v6205 = vrot.slane %v6204, 4
    %v6207 = vshll.u32 %v6111, 16
    %v6209 = vrot.slane %v6207, 5
    %v6210 = vsel %vm2621, %v6205, %v6209
    %v6211 = vshrl.u32 %v6111, 16
    %v6213 = vrot.slane %v6211, 4
    %v6214 = vor.u32 %v6213, %v6209
    %v6215 = vrot.slane %v6214, 4
    %v6217 = vshll.u32 %v6112, 16
    %v6219 = vrot.slane %v6217, 5
    %v6220 = vsel %vm2621, %v6215, %v6219
    %v6221 = vshrl.u32 %v6112, 16
    %v6223 = vrot.slane %v6221, 4
    %v6224 = vor.u32 %v6223, %v6219
    %v6225 = vrot.slane %v6224, 4
    %v6227 = vshll.u32 %v6113, 16
    %v6229 = vrot.slane %v6227, 5
    %v6230 = vsel %vm2621, %v6225, %v6229
    %v6231 = vshrl.u32 %v6113, 16
    %v6233 = vrot.slane %v6231, 4
    %v6234 = vor.u32 %v6233, %v6229
    %v6235 = vrot.slane %v6234, 4
    %v6237 = vshll.u32 %v6114, 16
    %v6239 = vrot.slane %v6237, 5
    %v6240 = vsel %vm2621, %v6235, %v6239
    %v6241 = vshrl.u32 %v6114, 16
    %v6243 = vrot.slane %v6241, 4
    %v6244 = vor.u32 %v6243, %v6239
    %v6245 = vrot.slane %v6244, 4
    %v6247 = vshll.u32 %v6115, 16
    %v6249 = vrot.slane %v6247, 5
    %v6250 = vsel %vm2621, %v6245, %v6249
    %v6251 = vshrl.u32 %v6115, 16
    %v6253 = vrot.slane %v6251, 4
    %v6254 = vor.u32 %v6253, %v6249
    %v6255 = vrot.slane %v6254, 4
    %v6257 = vshll.u32 %v6116, 16
    %v6259 = vrot.slane %v6257, 5
    %v6260 = vsel %vm2621, %v6255, %v6259
    %v6261 = vshrl.u32 %v6116, 16
    %v6263 = vrot.slane %v6261, 4
    %v6264 = vor.u32 %v6263, %v6259
    %v6265 = vrot.slane %v6264, 4
    %v6267 = vshll.u32 %v6117, 16
    %v6269 = vrot.slane %v6267, 5
    %v6270 = vsel %vm2621, %v6265, %v6269
    %v6271 = vshrl.u32 %v6117, 16
    %v6273 = vrot.slane %v6271, 4
    %v6274 = vor.u32 %v6273, %v6269
    %v6275 = vrot.slane %v6274, 4
    %v6277 = vshll.u32 %v6118, 16
    %v6279 = vrot.slane %v6277, 5
    %v6280 = vsel %vm2621, %v6275, %v6279
    %v6281 = vshrl.u32 %v6118, 16
    %v6283 = vrot.slane %v6281, 4
    %v6284 = vor.u32 %v6283, %v6279
    %v6285 = vrot.slane %v6284, 4
    %v6287 = vshll.u32 %v6119, 16
    %v6289 = vrot.slane %v6287, 5
    %v6290 = vsel %vm2621, %v6285, %v6289
    %v6291 = vshrl.u32 %v6119, 16
    %v6293 = vrot.slane %v6291, 4
    %v6294 = vor.u32 %v6293, %v6289
    %v6295 = vrot.slane %v6294, 4
    %v6297 = vshll.u32 %v6120, 16
    %v6299 = vrot.slane %v6297, 5
    %v6300 = vsel %vm2621, %v6295, %v6299
    %v6301 = vshrl.u32 %v6120, 16
    %v6303 = vrot.slane %v6301, 4
    %v6304 = vor.u32 %v6303, %v6299
    %v6305 = vrot.slane %v6304, 4
    %v6307 = vshll.u32 %v6121, 16
    %v6309 = vrot.slane %v6307, 5
    %v6310 = vsel %vm2621, %v6305, %v6309
    %v6311 = vshrl.u32 %v6121, 16
    %v6313 = vrot.slane %v6311, 4
    %v6314 = vor.u32 %v6313, %v6309
    %v6315 = vrot.slane %v6314, 4
    %v6317 = vshll.u32 %v6122, 16
    %v6319 = vrot.slane %v6317, 5
    %v6320 = vsel %vm2621, %v6315, %v6319
    %v6321 = vshrl.u32 %v6122, 16
    %v6323 = vrot.slane %v6321, 4
    %v6324 = vor.u32 %v6323, %v6319
    %v6325 = vrot.slane %v6324, 4
    %v6327 = vshll.u32 %v6123, 16
    %v6329 = vrot.slane %v6327, 5
    %v6330 = vsel %vm2621, %v6325, %v6329
    %v6331 = vshrl.u32 %v6123, 16
    %v6333 = vrot.slane %v6331, 4
    %v6334 = vor.u32 %v6333, %v6329
    %v6335 = vrot.slane %v6334, 4
    %v6337 = vshll.u32 %v6124, 16
    %v6339 = vrot.slane %v6337, 5
    %v6340 = vsel %vm2621, %v6335, %v6339
    %v6341 = vshrl.u32 %v6124, 16
    %v6343 = vrot.slane %v6341, 4
    %v6344 = vor.u32 %v6343, %v6339
    %v6345 = vrot.slane %v6344, 4
    %v6347 = vshll.u32 %v6125, 16
    %v6349 = vrot.slane %v6347, 5
    %v6350 = vsel %vm2621, %v6345, %v6349
    %v6351 = vshrl.u32 %v6125, 16
    %v6353 = vrot.slane %v6351, 4
    %v6354 = vor.u32 %v6353, %v6349
    %v6355 = vrot.slane %v6354, 4
    %v6357 = vshll.u32 %v6126, 16
    %v6359 = vrot.slane %v6357, 5
    %v6360 = vsel %vm2621, %v6355, %v6359
    %v6361 = vshrl.u32 %v6126, 16
    %v6363 = vrot.slane %v6361, 4
    %v6364 = vor.u32 %v6363, %v6359
    %v6365 = vrot.slane %v6364, 4
    %v6367 = vshll.u32 %v6127, 16
    %v6369 = vrot.slane %v6367, 5
    %v6370 = vsel %vm2621, %v6365, %v6369
    %v6371 = vshrl.u32 %v6127, 16
    %v6373 = vrot.slane %v6371, 4
    %v6374 = vor.u32 %v6373, %v6369
    %v6375 = vrot.slane %v6374, 4
    %v6377 = vshll.u32 %v6128, 16
    %v6379 = vrot.slane %v6377, 5
    %v6380 = vsel %vm2621, %v6375, %v6379
    %v6381 = vshrl.u32 %v6128, 16
    %v6383 = vrot.slane %v6381, 4
    %v6384 = vor.u32 %v6383, %v6379
    %v6385 = vrot.slane %v6384, 4
    %v6387 = vshll.u32 %v6129, 16
    %v6389 = vrot.slane %v6387, 5
    %v6390 = vsel %vm2621, %v6385, %v6389
    %v6391 = vshrl.u32 %v6129, 16
    %v6393 = vrot.slane %v6391, 4
    %v6394 = vor.u32 %v6393, %v6389
    %v6395 = vrot.slane %v6394, 4
    %v6397 = vshll.u32 %v6130, 16
    %v6399 = vrot.slane %v6397, 5
    %v6400 = vsel %vm2621, %v6395, %v6399
    %v6401 = vshrl.u32 %v6130, 16
    %v6403 = vrot.slane %v6401, 4
    %v6404 = vor.u32 %v6403, %v6399
    %v6405 = vrot.slane %v6404, 4
    %v6407 = vshll.u32 %v6131, 16
    %v6409 = vrot.slane %v6407, 5
    %v6410 = vsel %vm2621, %v6405, %v6409
    %v6411 = vshrl.u32 %v6131, 16
    %v6413 = vrot.slane %v6411, 4
    %v6414 = vor.u32 %v6413, %v6409
    %v6415 = vrot.slane %v6414, 4
    %v6417 = vshll.u32 %v6132, 16
    %v6419 = vrot.slane %v6417, 5
    %v6420 = vsel %vm2621, %v6415, %v6419
    %v6421 = vshrl.u32 %v6132, 16
    %v6423 = vrot.slane %v6421, 4
    %v6424 = vor.u32 %v6423, %v6419
    %v6425 = vrot.slane %v6424, 4
    %v6427 = vshll.u32 %v6133, 16
    %v6429 = vrot.slane %v6427, 5
    %v6430 = vsel %vm2621, %v6425, %v6429
    %v6431 = vshrl.u32 %v6133, 16
    %v6433 = vrot.slane %v6431, 4
    %v6434 = vor.u32 %v6433, %v6429
    %v6435 = vrot.slane %v6434, 4
    %v6437 = vshll.u32 %v6134, 16
    %v6439 = vrot.slane %v6437, 5
    %v6440 = vsel %vm2621, %v6435, %v6439
    %v6441 = vshrl.u32 %v6134, 16
    %v6443 = vrot.slane %v6441, 4
    %v6444 = vor.u32 %v6443, %v6439
    %v6445 = vrot.slane %v6444, 4
    %v6447 = vshll.u32 %v6135, 16
    %v6449 = vrot.slane %v6447, 5
    %v6450 = vsel %vm2621, %v6445, %v6449
    %v6451 = vshrl.u32 %v6135, 16
    %v6453 = vrot.slane %v6451, 4
    %v6454 = vor.u32 %v6453, %v6449
    %v6455 = vrot.slane %v6454, 4
    %v6457 = vshll.u32 %v6136, 16
    %v6459 = vrot.slane %v6457, 5
    %v6460 = vsel %vm2621, %v6455, %v6459
    %6461 = vrot.lane.b32.xlu0 %v6150, 88
    %v6462 = vpop.permute.xlu0 %6461
    %6463 = vrot.lane.b32.xlu0 %v6160, 88
    %v6464 = vpop.permute.xlu0 %6463
    %6465 = vrot.lane.b32.xlu0 %v6170, 88
    %v6466 = vpop.permute.xlu0 %6465
    %6467 = vrot.lane.b32.xlu0 %v6180, 88
    %v6468 = vpop.permute.xlu0 %6467
    %6469 = vrot.lane.b32.xlu0 %v6190, 88
    %v6470 = vpop.permute.xlu0 %6469
    %6471 = vrot.lane.b32.xlu0 %v6200, 88
    %v6472 = vpop.permute.xlu0 %6471
    %6473 = vrot.lane.b32.xlu0 %v6210, 88
    %v6474 = vpop.permute.xlu0 %6473
    %6475 = vrot.lane.b32.xlu0 %v6220, 88
    %v6476 = vpop.permute.xlu0 %6475
    %6477 = vrot.lane.b32.xlu0 %v6230, 88
    %v6478 = vpop.permute.xlu0 %6477
    %6479 = vrot.lane.b32.xlu0 %v6240, 88
    %v6480 = vpop.permute.xlu0 %6479
    %6481 = vrot.lane.b32.xlu0 %v6250, 88
    %v6482 = vpop.permute.xlu0 %6481
    %6483 = vrot.lane.b32.xlu0 %v6260, 88
    %v6484 = vpop.permute.xlu0 %6483
    %6485 = vrot.lane.b32.xlu0 %v6270, 88
    %v6486 = vpop.permute.xlu0 %6485
    %6487 = vrot.lane.b32.xlu0 %v6280, 88
    %v6488 = vpop.permute.xlu0 %6487
    %6489 = vrot.lane.b32.xlu0 %v6290, 88
    %v6490 = vpop.permute.xlu0 %6489
    %6491 = vrot.lane.b32.xlu0 %v6300, 88
    %v6492 = vpop.permute.xlu0 %6491
    %6493 = vrot.lane.b32.xlu0 %v6310, 88
    %v6494 = vpop.permute.xlu0 %6493
    %6495 = vrot.lane.b32.xlu0 %v6320, 88
    %v6496 = vpop.permute.xlu0 %6495
    %6497 = vrot.lane.b32.xlu0 %v6330, 88
    %v6498 = vpop.permute.xlu0 %6497
    %6499 = vrot.lane.b32.xlu0 %v6340, 88
    %v6500 = vpop.permute.xlu0 %6499
    %6501 = vrot.lane.b32.xlu0 %v6350, 88
    %v6502 = vpop.permute.xlu0 %6501
    %6503 = vrot.lane.b32.xlu0 %v6360, 88
    %v6504 = vpop.permute.xlu0 %6503
    %6505 = vrot.lane.b32.xlu0 %v6370, 88
    %v6506 = vpop.permute.xlu0 %6505
    %6507 = vrot.lane.b32.xlu0 %v6380, 88
    %v6508 = vpop.permute.xlu0 %6507
    %6509 = vrot.lane.b32.xlu0 %v6390, 88
    %v6510 = vpop.permute.xlu0 %6509
    %6511 = vrot.lane.b32.xlu0 %v6400, 88
    %v6512 = vpop.permute.xlu0 %6511
    %6513 = vrot.lane.b32.xlu0 %v6410, 88
    %v6514 = vpop.permute.xlu0 %6513
    %6515 = vrot.lane.b32.xlu0 %v6420, 88
    %v6516 = vpop.permute.xlu0 %6515
    %6517 = vrot.lane.b32.xlu0 %v6430, 88
    %v6518 = vpop.permute.xlu0 %6517
    %6519 = vrot.lane.b32.xlu0 %v6440, 88
    %v6520 = vpop.permute.xlu0 %6519
    %6521 = vrot.lane.b32.xlu0 %v6450, 88
    %v6522 = vpop.permute.xlu0 %6521
    %6523 = vrot.lane.b32.xlu0 %v6460, 88
    %v6524 = vpop.permute.xlu0 %6523
    %vm6557 = vcmask 782016
    %6558 = vst.msk [vmem:[#allocation3] sm:$0xf] %vm6557, %v6462
    %6559 = vst.msk [vmem:[#allocation3 + $0x8] sm:$0xf] %vm6557, %v6464
    %6560 = vst.msk [vmem:[#allocation3 + $0x10] sm:$0xf] %vm6557, %v6466
    %6561 = vst.msk [vmem:[#allocation3 + $0x18] sm:$0xf] %vm6557, %v6468
    %6562 = vst.msk [vmem:[#allocation3 + $0x20] sm:$0xf] %vm6557, %v6470
    %6563 = vst.msk [vmem:[#allocation3 + $0x28] sm:$0xf] %vm6557, %v6472
    %6564 = vst.msk [vmem:[#allocation3 + $0x30] sm:$0xf] %vm6557, %v6474
    %6565 = vst.msk [vmem:[#allocation3 + $0x38] sm:$0xf] %vm6557, %v6476
    %6566 = vst.msk [vmem:[#allocation3 + $0x40] sm:$0xf] %vm6557, %v6478
    %6567 = vst.msk [vmem:[#allocation3 + $0x48] sm:$0xf] %vm6557, %v6480
    %6568 = vst.msk [vmem:[#allocation3 + $0x50] sm:$0xf] %vm6557, %v6482
    %6569 = vst.msk [vmem:[#allocation3 + $0x58] sm:$0xf] %vm6557, %v6484
    %6570 = vst.msk [vmem:[#allocation3 + $0x60] sm:$0xf] %vm6557, %v6486
    %6571 = vst.msk [vmem:[#allocation3 + $0x68] sm:$0xf] %vm6557, %v6488
    %6572 = vst.msk [vmem:[#allocation3 + $0x70] sm:$0xf] %vm6557, %v6490
    %6573 = vst.msk [vmem:[#allocation3 + $0x78] sm:$0xf] %vm6557, %v6492
    %6574 = vst.msk [vmem:[#allocation3 + $0x80] sm:$0xf] %vm6557, %v6494
    %6575 = vst.msk [vmem:[#allocation3 + $0x88] sm:$0xf] %vm6557, %v6496
    %6576 = vst.msk [vmem:[#allocation3 + $0x90] sm:$0xf] %vm6557, %v6498
    %6577 = vst.msk [vmem:[#allocation3 + $0x98] sm:$0xf] %vm6557, %v6500
    %6578 = vst.msk [vmem:[#allocation3 + $0xa0] sm:$0xf] %vm6557, %v6502
    %6579 = vst.msk [vmem:[#allocation3 + $0xa8] sm:$0xf] %vm6557, %v6504
    %6580 = vst.msk [vmem:[#allocation3 + $0xb0] sm:$0xf] %vm6557, %v6506
    %6581 = vst.msk [vmem:[#allocation3 + $0xb8] sm:$0xf] %vm6557, %v6508
    %6582 = vst.msk [vmem:[#allocation3 + $0xc0] sm:$0xf] %vm6557, %v6510
    %6583 = vst.msk [vmem:[#allocation3 + $0xc8] sm:$0xf] %vm6557, %v6512
    %6584 = vst.msk [vmem:[#allocation3 + $0xd0] sm:$0xf] %vm6557, %v6514
    %6585 = vst.msk [vmem:[#allocation3 + $0xd8] sm:$0xf] %vm6557, %v6516
    %6586 = vst.msk [vmem:[#allocation3 + $0xe0] sm:$0xf] %vm6557, %v6518
    %6587 = vst.msk [vmem:[#allocation3 + $0xe8] sm:$0xf] %vm6557, %v6520
    %6588 = vst.msk [vmem:[#allocation3 + $0xf0] sm:$0xf] %vm6557, %v6522
    %6589 = vst.msk [vmem:[#allocation3 + $0xf8] sm:$0xf] %vm6557, %v6524
    %v6590 = vld [vmem:[#allocation2 + $0x20] sm:$0xe]
    %v6591 = vld [vmem:[#allocation2 + $0x24] sm:$0xf]
    %v6592 = vld [vmem:[#allocation2 + $0x28] sm:$0xf]
    %v6593 = vld [vmem:[#allocation2 + $0x2c] sm:$0xf]
    %v6594 = vld [vmem:[#allocation2 + $0x30] sm:$0xf]
    %v6595 = vld [vmem:[#allocation2 + $0x34] sm:$0xf]
    %v6596 = vld [vmem:[#allocation2 + $0x38] sm:$0xf]
    %v6597 = vld [vmem:[#allocation2 + $0x3c] sm:$0xf]
    %v6598 = vld [vmem:[#allocation2 + $0x40] sm:$0xf]
    %v6599 = vld [vmem:[#allocation2 + $0x44] sm:$0xf]
    %v6600 = vld [vmem:[#allocation2 + $0x48] sm:$0xf]
    %v6601 = vld [vmem:[#allocation2 + $0x4c] sm:$0xf]
    %v6602 = vld [vmem:[#allocation2 + $0x50] sm:$0xf]
    %v6603 = vld [vmem:[#allocation2 + $0x54] sm:$0xf]
    %v6604 = vld [vmem:[#allocation2 + $0x58] sm:$0xf]
    %v6605 = vld [vmem:[#allocation2 + $0x5c] sm:$0xf]
    %v6606 = vld [vmem:[#allocation2 + $0x60] sm:$0xf]
    %v6607 = vld [vmem:[#allocation2 + $0x64] sm:$0xf]
    %v6608 = vld [vmem:[#allocation2 + $0x68] sm:$0xf]
    %v6609 = vld [vmem:[#allocation2 + $0x6c] sm:$0xf]
    %v6610 = vld [vmem:[#allocation2 + $0x70] sm:$0xf]
    %v6611 = vld [vmem:[#allocation2 + $0x74] sm:$0xf]
    %v6612 = vld [vmem:[#allocation2 + $0x78] sm:$0xf]
    %v6613 = vld [vmem:[#allocation2 + $0x7c] sm:$0xf]
    %v6614 = vld [vmem:[#allocation2 + $0x80] sm:$0xf]
    %v6615 = vld [vmem:[#allocation2 + $0x84] sm:$0xf]
    %v6616 = vld [vmem:[#allocation2 + $0x88] sm:$0xf]
    %v6617 = vld [vmem:[#allocation2 + $0x8c] sm:$0xf]
    %v6618 = vld [vmem:[#allocation2 + $0x90] sm:$0xf]
    %v6619 = vld [vmem:[#allocation2 + $0x94] sm:$0xf]
    %v6620 = vld [vmem:[#allocation2 + $0x98] sm:$0xf]
    %v6621 = vld [vmem:[#allocation2 + $0x9c] sm:$0xf]
    %v6622 = vld [vmem:[#allocation2 + $0xa0] sm:$0x1]
    %v6656 = vrot.slane %v6590, 5
    %v6657 = vrot.slane %v6656, 4
    %v6658 = vrot.slane %v6591, 5
    %v6659 = vsel %vm3143, %v6657, %v6658
    %v6660 = vrot.slane %v6658, 4
    %v6661 = vrot.slane %v6592, 5
    %v6662 = vsel %vm3143, %v6660, %v6661
    %v6663 = vrot.slane %v6661, 4
    %v6664 = vrot.slane %v6593, 5
    %v6665 = vsel %vm3143, %v6663, %v6664
    %v6666 = vrot.slane %v6664, 4
    %v6667 = vrot.slane %v6594, 5
    %v6668 = vsel %vm3143, %v6666, %v6667
    %v6669 = vrot.slane %v6667, 4
    %v6670 = vrot.slane %v6595, 5
    %v6671 = vsel %vm3143, %v6669, %v6670
    %v6672 = vrot.slane %v6670, 4
    %v6673 = vrot.slane %v6596, 5
    %v6674 = vsel %vm3143, %v6672, %v6673
    %v6675 = vrot.slane %v6673, 4
    %v6676 = vrot.slane %v6597, 5
    %v6677 = vsel %vm3143, %v6675, %v6676
    %v6678 = vrot.slane %v6676, 4
    %v6679 = vrot.slane %v6598, 5
    %v6680 = vsel %vm3143, %v6678, %v6679
    %v6681 = vrot.slane %v6679, 4
    %v6682 = vrot.slane %v6599, 5
    %v6683 = vsel %vm3143, %v6681, %v6682
    %v6684 = vrot.slane %v6682, 4
    %v6685 = vrot.slane %v6600, 5
    %v6686 = vsel %vm3143, %v6684, %v6685
    %v6687 = vrot.slane %v6685, 4
    %v6688 = vrot.slane %v6601, 5
    %v6689 = vsel %vm3143, %v6687, %v6688
    %v6690 = vrot.slane %v6688, 4
    %v6691 = vrot.slane %v6602, 5
    %v6692 = vsel %vm3143, %v6690, %v6691
    %v6693 = vrot.slane %v6691, 4
    %v6694 = vrot.slane %v6603, 5
    %v6695 = vsel %vm3143, %v6693, %v6694
    %v6696 = vrot.slane %v6694, 4
    %v6697 = vrot.slane %v6604, 5
    %v6698 = vsel %vm3143, %v6696, %v6697
    %v6699 = vrot.slane %v6697, 4
    %v6700 = vrot.slane %v6605, 5
    %v6701 = vsel %vm3143, %v6699, %v6700
    %v6702 = vrot.slane %v6700, 4
    %v6703 = vrot.slane %v6606, 5
    %v6704 = vsel %vm3143, %v6702, %v6703
    %v6705 = vrot.slane %v6703, 4
    %v6706 = vrot.slane %v6607, 5
    %v6707 = vsel %vm3143, %v6705, %v6706
    %v6708 = vrot.slane %v6706, 4
    %v6709 = vrot.slane %v6608, 5
    %v6710 = vsel %vm3143, %v6708, %v6709
    %v6711 = vrot.slane %v6709, 4
    %v6712 = vrot.slane %v6609, 5
    %v6713 = vsel %vm3143, %v6711, %v6712
    %v6714 = vrot.slane %v6712, 4
    %v6715 = vrot.slane %v6610, 5
    %v6716 = vsel %vm3143, %v6714, %v6715
    %v6717 = vrot.slane %v6715, 4
    %v6718 = vrot.slane %v6611, 5
    %v6719 = vsel %vm3143, %v6717, %v6718
    %v6720 = vrot.slane %v6718, 4
    %v6721 = vrot.slane %v6612, 5
    %v6722 = vsel %vm3143, %v6720, %v6721
    %v6723 = vrot.slane %v6721, 4
    %v6724 = vrot.slane %v6613, 5
    %v6725 = vsel %vm3143, %v6723, %v6724
    %v6726 = vrot.slane %v6724, 4
    %v6727 = vrot.slane %v6614, 5
    %v6728 = vsel %vm3143, %v6726, %v6727
    %v6729 = vrot.slane %v6727, 4
    %v6730 = vrot.slane %v6615, 5
    %v6731 = vsel %vm3143, %v6729, %v6730
    %v6732 = vrot.slane %v6730, 4
    %v6733 = vrot.slane %v6616, 5
    %v6734 = vsel %vm3143, %v6732, %v6733
    %v6735 = vrot.slane %v6733, 4
    %v6736 = vrot.slane %v6617, 5
    %v6737 = vsel %vm3143, %v6735, %v6736
    %v6738 = vrot.slane %v6736, 4
    %v6739 = vrot.slane %v6618, 5
    %v6740 = vsel %vm3143, %v6738, %v6739
    %v6741 = vrot.slane %v6739, 4
    %v6742 = vrot.slane %v6619, 5
    %v6743 = vsel %vm3143, %v6741, %v6742
    %v6744 = vrot.slane %v6742, 4
    %v6745 = vrot.slane %v6620, 5
    %v6746 = vsel %vm3143, %v6744, %v6745
    %v6747 = vrot.slane %v6745, 4
    %v6748 = vrot.slane %v6621, 5
    %v6749 = vsel %vm3143, %v6747, %v6748
    %v6750 = vrot.slane %v6748, 4
    %v6751 = vrot.slane %v6622, 5
    %v6752 = vsel %vm3143, %v6750, %v6751
    %6753 = vrot.lane.b32.xlu0 %v6659, 96
    %v6754 = vpop.permute.xlu0 %6753
    %6755 = vrot.lane.b32.xlu0 %v6662, 96
    %v6756 = vpop.permute.xlu0 %6755
    %6757 = vrot.lane.b32.xlu0 %v6665, 96
    %v6758 = vpop.permute.xlu0 %6757
    %6759 = vrot.lane.b32.xlu0 %v6668, 96
    %v6760 = vpop.permute.xlu0 %6759
    %6761 = vrot.lane.b32.xlu0 %v6671, 96
    %v6762 = vpop.permute.xlu0 %6761
    %6763 = vrot.lane.b32.xlu0 %v6674, 96
    %v6764 = vpop.permute.xlu0 %6763
    %6765 = vrot.lane.b32.xlu0 %v6677, 96
    %v6766 = vpop.permute.xlu0 %6765
    %6767 = vrot.lane.b32.xlu0 %v6680, 96
    %v6768 = vpop.permute.xlu0 %6767
    %6769 = vrot.lane.b32.xlu0 %v6683, 96
    %v6770 = vpop.permute.xlu0 %6769
    %6771 = vrot.lane.b32.xlu0 %v6686, 96
    %v6772 = vpop.permute.xlu0 %6771
    %6773 = vrot.lane.b32.xlu0 %v6689, 96
    %v6774 = vpop.permute.xlu0 %6773
    %6775 = vrot.lane.b32.xlu0 %v6692, 96
    %v6776 = vpop.permute.xlu0 %6775
    %6777 = vrot.lane.b32.xlu0 %v6695, 96
    %v6778 = vpop.permute.xlu0 %6777
    %6779 = vrot.lane.b32.xlu0 %v6698, 96
    %v6780 = vpop.permute.xlu0 %6779
    %6781 = vrot.lane.b32.xlu0 %v6701, 96
    %v6782 = vpop.permute.xlu0 %6781
    %6783 = vrot.lane.b32.xlu0 %v6704, 96
    %v6784 = vpop.permute.xlu0 %6783
    %6785 = vrot.lane.b32.xlu0 %v6707, 96
    %v6786 = vpop.permute.xlu0 %6785
    %6787 = vrot.lane.b32.xlu0 %v6710, 96
    %v6788 = vpop.permute.xlu0 %6787
    %6789 = vrot.lane.b32.xlu0 %v6713, 96
    %v6790 = vpop.permute.xlu0 %6789
    %6791 = vrot.lane.b32.xlu0 %v6716, 96
    %v6792 = vpop.permute.xlu0 %6791
    %6793 = vrot.lane.b32.xlu0 %v6719, 96
    %v6794 = vpop.permute.xlu0 %6793
    %6795 = vrot.lane.b32.xlu0 %v6722, 96
    %v6796 = vpop.permute.xlu0 %6795
    %6797 = vrot.lane.b32.xlu0 %v6725, 96
    %v6798 = vpop.permute.xlu0 %6797
    %6799 = vrot.lane.b32.xlu0 %v6728, 96
    %v6800 = vpop.permute.xlu0 %6799
    %6801 = vrot.lane.b32.xlu0 %v6731, 96
    %v6802 = vpop.permute.xlu0 %6801
    %6803 = vrot.lane.b32.xlu0 %v6734, 96
    %v6804 = vpop.permute.xlu0 %6803
    %6805 = vrot.lane.b32.xlu0 %v6737, 96
    %v6806 = vpop.permute.xlu0 %6805
    %6807 = vrot.lane.b32.xlu0 %v6740, 96
    %v6808 = vpop.permute.xlu0 %6807
    %6809 = vrot.lane.b32.xlu0 %v6743, 96
    %v6810 = vpop.permute.xlu0 %6809
    %6811 = vrot.lane.b32.xlu0 %v6746, 96
    %v6812 = vpop.permute.xlu0 %6811
    %6813 = vrot.lane.b32.xlu0 %v6749, 96
    %v6814 = vpop.permute.xlu0 %6813
    %6815 = vrot.lane.b32.xlu0 %v6752, 96
    %v6816 = vpop.permute.xlu0 %6815
    %vm6849 = vcmask 847616
    %6850 = vst.msk [vmem:[#allocation3] sm:$0xf] %vm6849, %v6754
    %6851 = vst.msk [vmem:[#allocation3 + $0x8] sm:$0xf] %vm6849, %v6756
    %6852 = vst.msk [vmem:[#allocation3 + $0x10] sm:$0xf] %vm6849, %v6758
    %6853 = vst.msk [vmem:[#allocation3 + $0x18] sm:$0xf] %vm6849, %v6760
    %6854 = vst.msk [vmem:[#allocation3 + $0x20] sm:$0xf] %vm6849, %v6762
    %6855 = vst.msk [vmem:[#allocation3 + $0x28] sm:$0xf] %vm6849, %v6764
    %6856 = vst.msk [vmem:[#allocation3 + $0x30] sm:$0xf] %vm6849, %v6766
    %6857 = vst.msk [vmem:[#allocation3 + $0x38] sm:$0xf] %vm6849, %v6768
    %6858 = vst.msk [vmem:[#allocation3 + $0x40] sm:$0xf] %vm6849, %v6770
    %6859 = vst.msk [vmem:[#allocation3 + $0x48] sm:$0xf] %vm6849, %v6772
    %6860 = vst.msk [vmem:[#allocation3 + $0x50] sm:$0xf] %vm6849, %v6774
    %6861 = vst.msk [vmem:[#allocation3 + $0x58] sm:$0xf] %vm6849, %v6776
    %6862 = vst.msk [vmem:[#allocation3 + $0x60] sm:$0xf] %vm6849, %v6778
    %6863 = vst.msk [vmem:[#allocation3 + $0x68] sm:$0xf] %vm6849, %v6780
    %6864 = vst.msk [vmem:[#allocation3 + $0x70] sm:$0xf] %vm6849, %v6782
    %6865 = vst.msk [vmem:[#allocation3 + $0x78] sm:$0xf] %vm6849, %v6784
    %6866 = vst.msk [vmem:[#allocation3 + $0x80] sm:$0xf] %vm6849, %v6786
    %6867 = vst.msk [vmem:[#allocation3 + $0x88] sm:$0xf] %vm6849, %v6788
    %6868 = vst.msk [vmem:[#allocation3 + $0x90] sm:$0xf] %vm6849, %v6790
    %6869 = vst.msk [vmem:[#allocation3 + $0x98] sm:$0xf] %vm6849, %v6792
    %6870 = vst.msk [vmem:[#allocation3 + $0xa0] sm:$0xf] %vm6849, %v6794
    %6871 = vst.msk [vmem:[#allocation3 + $0xa8] sm:$0xf] %vm6849, %v6796
    %6872 = vst.msk [vmem:[#allocation3 + $0xb0] sm:$0xf] %vm6849, %v6798
    %6873 = vst.msk [vmem:[#allocation3 + $0xb8] sm:$0xf] %vm6849, %v6800
    %6874 = vst.msk [vmem:[#allocation3 + $0xc0] sm:$0xf] %vm6849, %v6802
    %6875 = vst.msk [vmem:[#allocation3 + $0xc8] sm:$0xf] %vm6849, %v6804
    %6876 = vst.msk [vmem:[#allocation3 + $0xd0] sm:$0xf] %vm6849, %v6806
    %6877 = vst.msk [vmem:[#allocation3 + $0xd8] sm:$0xf] %vm6849, %v6808
    %6878 = vst.msk [vmem:[#allocation3 + $0xe0] sm:$0xf] %vm6849, %v6810
    %6879 = vst.msk [vmem:[#allocation3 + $0xe8] sm:$0xf] %vm6849, %v6812
    %6880 = vst.msk [vmem:[#allocation3 + $0xf0] sm:$0xf] %vm6849, %v6814
    %6881 = vst.msk [vmem:[#allocation3 + $0xf8] sm:$0xf] %vm6849, %v6816
    %v6882 = vld [vmem:[#allocation2 + $0x20] sm:$0xe]
    %v6883 = vld [vmem:[#allocation2 + $0x24] sm:$0xf]
    %v6884 = vld [vmem:[#allocation2 + $0x28] sm:$0xf]
    %v6885 = vld [vmem:[#allocation2 + $0x2c] sm:$0xf]
    %v6886 = vld [vmem:[#allocation2 + $0x30] sm:$0xf]
    %v6887 = vld [vmem:[#allocation2 + $0x34] sm:$0xf]
    %v6888 = vld [vmem:[#allocation2 + $0x38] sm:$0xf]
    %v6889 = vld [vmem:[#allocation2 + $0x3c] sm:$0xf]
    %v6890 = vld [vmem:[#allocation2 + $0x40] sm:$0xf]
    %v6891 = vld [vmem:[#allocation2 + $0x44] sm:$0xf]
    %v6892 = vld [vmem:[#allocation2 + $0x48] sm:$0xf]
    %v6893 = vld [vmem:[#allocation2 + $0x4c] sm:$0xf]
    %v6894 = vld [vmem:[#allocation2 + $0x50] sm:$0xf]
    %v6895 = vld [vmem:[#allocation2 + $0x54] sm:$0xf]
    %v6896 = vld [vmem:[#allocation2 + $0x58] sm:$0xf]
    %v6897 = vld [vmem:[#allocation2 + $0x5c] sm:$0xf]
    %v6898 = vld [vmem:[#allocation2 + $0x60] sm:$0xf]
    %v6899 = vld [vmem:[#allocation2 + $0x64] sm:$0xf]
    %v6900 = vld [vmem:[#allocation2 + $0x68] sm:$0xf]
    %v6901 = vld [vmem:[#allocation2 + $0x6c] sm:$0xf]
    %v6902 = vld [vmem:[#allocation2 + $0x70] sm:$0xf]
    %v6903 = vld [vmem:[#allocation2 + $0x74] sm:$0xf]
    %v6904 = vld [vmem:[#allocation2 + $0x78] sm:$0xf]
    %v6905 = vld [vmem:[#allocation2 + $0x7c] sm:$0xf]
    %v6906 = vld [vmem:[#allocation2 + $0x80] sm:$0xf]
    %v6907 = vld [vmem:[#allocation2 + $0x84] sm:$0xf]
    %v6908 = vld [vmem:[#allocation2 + $0x88] sm:$0xf]
    %v6909 = vld [vmem:[#allocation2 + $0x8c] sm:$0xf]
    %v6910 = vld [vmem:[#allocation2 + $0x90] sm:$0xf]
    %v6911 = vld [vmem:[#allocation2 + $0x94] sm:$0xf]
    %v6912 = vld [vmem:[#allocation2 + $0x98] sm:$0xf]
    %v6913 = vld [vmem:[#allocation2 + $0x9c] sm:$0xf]
    %v6914 = vld [vmem:[#allocation2 + $0xa0] sm:$0x3]
    %v6916 = vshrl.u32 %v6882, 16
    %v6918 = vrot.slane %v6916, 5
    %v6919 = vshll.u32 %v6882, 16
    %v6921 = vrot.slane %v6919, 6
    %v6922 = vor.u32 %v6918, %v6921
    %v6923 = vrot.slane %v6922, 4
    %v6925 = vshrl.u32 %v6883, 16
    %v6927 = vrot.slane %v6925, 5
    %v6928 = vshll.u32 %v6883, 16
    %v6930 = vrot.slane %v6928, 6
    %v6931 = vor.u32 %v6927, %v6930
    %v6932 = vsel %vm3405, %v6923, %v6931
    %v6933 = vrot.slane %v6931, 4
    %v6935 = vshrl.u32 %v6884, 16
    %v6937 = vrot.slane %v6935, 5
    %v6938 = vshll.u32 %v6884, 16
    %v6940 = vrot.slane %v6938, 6
    %v6941 = vor.u32 %v6937, %v6940
    %v6942 = vsel %vm3405, %v6933, %v6941
    %v6943 = vrot.slane %v6941, 4
    %v6945 = vshrl.u32 %v6885, 16
    %v6947 = vrot.slane %v6945, 5
    %v6948 = vshll.u32 %v6885, 16
    %v6950 = vrot.slane %v6948, 6
    %v6951 = vor.u32 %v6947, %v6950
    %v6952 = vsel %vm3405, %v6943, %v6951
    %v6953 = vrot.slane %v6951, 4
    %v6955 = vshrl.u32 %v6886, 16
    %v6957 = vrot.slane %v6955, 5
    %v6958 = vshll.u32 %v6886, 16
    %v6960 = vrot.slane %v6958, 6
    %v6961 = vor.u32 %v6957, %v6960
    %v6962 = vsel %vm3405, %v6953, %v6961
    %v6963 = vrot.slane %v6961, 4
    %v6965 = vshrl.u32 %v6887, 16
    %v6967 = vrot.slane %v6965, 5
    %v6968 = vshll.u32 %v6887, 16
    %v6970 = vrot.slane %v6968, 6
    %v6971 = vor.u32 %v6967, %v6970
    %v6972 = vsel %vm3405, %v6963, %v6971
    %v6973 = vrot.slane %v6971, 4
    %v6975 = vshrl.u32 %v6888, 16
    %v6977 = vrot.slane %v6975, 5
    %v6978 = vshll.u32 %v6888, 16
    %v6980 = vrot.slane %v6978, 6
    %v6981 = vor.u32 %v6977, %v6980
    %v6982 = vsel %vm3405, %v6973, %v6981
    %v6983 = vrot.slane %v6981, 4
    %v6985 = vshrl.u32 %v6889, 16
    %v6987 = vrot.slane %v6985, 5
    %v6988 = vshll.u32 %v6889, 16
    %v6990 = vrot.slane %v6988, 6
    %v6991 = vor.u32 %v6987, %v6990
    %v6992 = vsel %vm3405, %v6983, %v6991
    %v6993 = vrot.slane %v6991, 4
    %v6995 = vshrl.u32 %v6890, 16
    %v6997 = vrot.slane %v6995, 5
    %v6998 = vshll.u32 %v6890, 16
    %v7000 = vrot.slane %v6998, 6
    %v7001 = vor.u32 %v6997, %v7000
    %v7002 = vsel %vm3405, %v6993, %v7001
    %v7003 = vrot.slane %v7001, 4
    %v7005 = vshrl.u32 %v6891, 16
    %v7007 = vrot.slane %v7005, 5
    %v7008 = vshll.u32 %v6891, 16
    %v7010 = vrot.slane %v7008, 6
    %v7011 = vor.u32 %v7007, %v7010
    %v7012 = vsel %vm3405, %v7003, %v7011
    %v7013 = vrot.slane %v7011, 4
    %v7015 = vshrl.u32 %v6892, 16
    %v7017 = vrot.slane %v7015, 5
    %v7018 = vshll.u32 %v6892, 16
    %v7020 = vrot.slane %v7018, 6
    %v7021 = vor.u32 %v7017, %v7020
    %v7022 = vsel %vm3405, %v7013, %v7021
    %v7023 = vrot.slane %v7021, 4
    %v7025 = vshrl.u32 %v6893, 16
    %v7027 = vrot.slane %v7025, 5
    %v7028 = vshll.u32 %v6893, 16
    %v7030 = vrot.slane %v7028, 6
    %v7031 = vor.u32 %v7027, %v7030
    %v7032 = vsel %vm3405, %v7023, %v7031
    %v7033 = vrot.slane %v7031, 4
    %v7035 = vshrl.u32 %v6894, 16
    %v7037 = vrot.slane %v7035, 5
    %v7038 = vshll.u32 %v6894, 16
    %v7040 = vrot.slane %v7038, 6
    %v7041 = vor.u32 %v7037, %v7040
    %v7042 = vsel %vm3405, %v7033, %v7041
    %v7043 = vrot.slane %v7041, 4
    %v7045 = vshrl.u32 %v6895, 16
    %v7047 = vrot.slane %v7045, 5
    %v7048 = vshll.u32 %v6895, 16
    %v7050 = vrot.slane %v7048, 6
    %v7051 = vor.u32 %v7047, %v7050
    %v7052 = vsel %vm3405, %v7043, %v7051
    %v7053 = vrot.slane %v7051, 4
    %v7055 = vshrl.u32 %v6896, 16
    %v7057 = vrot.slane %v7055, 5
    %v7058 = vshll.u32 %v6896, 16
    %v7060 = vrot.slane %v7058, 6
    %v7061 = vor.u32 %v7057, %v7060
    %v7062 = vsel %vm3405, %v7053, %v7061
    %v7063 = vrot.slane %v7061, 4
    %v7065 = vshrl.u32 %v6897, 16
    %v7067 = vrot.slane %v7065, 5
    %v7068 = vshll.u32 %v6897, 16
    %v7070 = vrot.slane %v7068, 6
    %v7071 = vor.u32 %v7067, %v7070
    %v7072 = vsel %vm3405, %v7063, %v7071
    %v7073 = vrot.slane %v7071, 4
    %v7075 = vshrl.u32 %v6898, 16
    %v7077 = vrot.slane %v7075, 5
    %v7078 = vshll.u32 %v6898, 16
    %v7080 = vrot.slane %v7078, 6
    %v7081 = vor.u32 %v7077, %v7080
    %v7082 = vsel %vm3405, %v7073, %v7081
    %v7083 = vrot.slane %v7081, 4
    %v7085 = vshrl.u32 %v6899, 16
    %v7087 = vrot.slane %v7085, 5
    %v7088 = vshll.u32 %v6899, 16
    %v7090 = vrot.slane %v7088, 6
    %v7091 = vor.u32 %v7087, %v7090
    %v7092 = vsel %vm3405, %v7083, %v7091
    %v7093 = vrot.slane %v7091, 4
    %v7095 = vshrl.u32 %v6900, 16
    %v7097 = vrot.slane %v7095, 5
    %v7098 = vshll.u32 %v6900, 16
    %v7100 = vrot.slane %v7098, 6
    %v7101 = vor.u32 %v7097, %v7100
    %v7102 = vsel %vm3405, %v7093, %v7101
    %v7103 = vrot.slane %v7101, 4
    %v7105 = vshrl.u32 %v6901, 16
    %v7107 = vrot.slane %v7105, 5
    %v7108 = vshll.u32 %v6901, 16
    %v7110 = vrot.slane %v7108, 6
    %v7111 = vor.u32 %v7107, %v7110
    %v7112 = vsel %vm3405, %v7103, %v7111
    %v7113 = vrot.slane %v7111, 4
    %v7115 = vshrl.u32 %v6902, 16
    %v7117 = vrot.slane %v7115, 5
    %v7118 = vshll.u32 %v6902, 16
    %v7120 = vrot.slane %v7118, 6
    %v7121 = vor.u32 %v7117, %v7120
    %v7122 = vsel %vm3405, %v7113, %v7121
    %v7123 = vrot.slane %v7121, 4
    %v7125 = vshrl.u32 %v6903, 16
    %v7127 = vrot.slane %v7125, 5
    %v7128 = vshll.u32 %v6903, 16
    %v7130 = vrot.slane %v7128, 6
    %v7131 = vor.u32 %v7127, %v7130
    %v7132 = vsel %vm3405, %v7123, %v7131
    %v7133 = vrot.slane %v7131, 4
    %v7135 = vshrl.u32 %v6904, 16
    %v7137 = vrot.slane %v7135, 5
    %v7138 = vshll.u32 %v6904, 16
    %v7140 = vrot.slane %v7138, 6
    %v7141 = vor.u32 %v7137, %v7140
    %v7142 = vsel %vm3405, %v7133, %v7141
    %v7143 = vrot.slane %v7141, 4
    %v7145 = vshrl.u32 %v6905, 16
    %v7147 = vrot.slane %v7145, 5
    %v7148 = vshll.u32 %v6905, 16
    %v7150 = vrot.slane %v7148, 6
    %v7151 = vor.u32 %v7147, %v7150
    %v7152 = vsel %vm3405, %v7143, %v7151
    %v7153 = vrot.slane %v7151, 4
    %v7155 = vshrl.u32 %v6906, 16
    %v7157 = vrot.slane %v7155, 5
    %v7158 = vshll.u32 %v6906, 16
    %v7160 = vrot.slane %v7158, 6
    %v7161 = vor.u32 %v7157, %v7160
    %v7162 = vsel %vm3405, %v7153, %v7161
    %v7163 = vrot.slane %v7161, 4
    %v7165 = vshrl.u32 %v6907, 16
    %v7167 = vrot.slane %v7165, 5
    %v7168 = vshll.u32 %v6907, 16
    %v7170 = vrot.slane %v7168, 6
    %v7171 = vor.u32 %v7167, %v7170
    %v7172 = vsel %vm3405, %v7163, %v7171
    %v7173 = vrot.slane %v7171, 4
    %v7175 = vshrl.u32 %v6908, 16
    %v7177 = vrot.slane %v7175, 5
    %v7178 = vshll.u32 %v6908, 16
    %v7180 = vrot.slane %v7178, 6
    %v7181 = vor.u32 %v7177, %v7180
    %v7182 = vsel %vm3405, %v7173, %v7181
    %v7183 = vrot.slane %v7181, 4
    %v7185 = vshrl.u32 %v6909, 16
    %v7187 = vrot.slane %v7185, 5
    %v7188 = vshll.u32 %v6909, 16
    %v7190 = vrot.slane %v7188, 6
    %v7191 = vor.u32 %v7187, %v7190
    %v7192 = vsel %vm3405, %v7183, %v7191
    %v7193 = vrot.slane %v7191, 4
    %v7195 = vshrl.u32 %v6910, 16
    %v7197 = vrot.slane %v7195, 5
    %v7198 = vshll.u32 %v6910, 16
    %v7200 = vrot.slane %v7198, 6
    %v7201 = vor.u32 %v7197, %v7200
    %v7202 = vsel %vm3405, %v7193, %v7201
    %v7203 = vrot.slane %v7201, 4
    %v7205 = vshrl.u32 %v6911, 16
    %v7207 = vrot.slane %v7205, 5
    %v7208 = vshll.u32 %v6911, 16
    %v7210 = vrot.slane %v7208, 6
    %v7211 = vor.u32 %v7207, %v7210
    %v7212 = vsel %vm3405, %v7203, %v7211
    %v7213 = vrot.slane %v7211, 4
    %v7215 = vshrl.u32 %v6912, 16
    %v7217 = vrot.slane %v7215, 5
    %v7218 = vshll.u32 %v6912, 16
    %v7220 = vrot.slane %v7218, 6
    %v7221 = vor.u32 %v7217, %v7220
    %v7222 = vsel %vm3405, %v7213, %v7221
    %v7223 = vrot.slane %v7221, 4
    %v7225 = vshrl.u32 %v6913, 16
    %v7227 = vrot.slane %v7225, 5
    %v7228 = vshll.u32 %v6913, 16
    %v7230 = vrot.slane %v7228, 6
    %v7231 = vor.u32 %v7227, %v7230
    %v7232 = vsel %vm3405, %v7223, %v7231
    %v7233 = vrot.slane %v7231, 4
    %v7235 = vshrl.u32 %v6914, 16
    %v7237 = vrot.slane %v7235, 5
    %v7238 = vshll.u32 %v6914, 16
    %v7240 = vrot.slane %v7238, 6
    %v7241 = vor.u32 %v7237, %v7240
    %v7242 = vsel %vm3405, %v7233, %v7241
    %7243 = vrot.lane.b32.xlu0 %v6932, 104
    %v7244 = vpop.permute.xlu0 %7243
    %7245 = vrot.lane.b32.xlu0 %v6942, 104
    %v7246 = vpop.permute.xlu0 %7245
    %7247 = vrot.lane.b32.xlu0 %v6952, 104
    %v7248 = vpop.permute.xlu0 %7247
    %7249 = vrot.lane.b32.xlu0 %v6962, 104
    %v7250 = vpop.permute.xlu0 %7249
    %7251 = vrot.lane.b32.xlu0 %v6972, 104
    %v7252 = vpop.permute.xlu0 %7251
    %7253 = vrot.lane.b32.xlu0 %v6982, 104
    %v7254 = vpop.permute.xlu0 %7253
    %7255 = vrot.lane.b32.xlu0 %v6992, 104
    %v7256 = vpop.permute.xlu0 %7255
    %7257 = vrot.lane.b32.xlu0 %v7002, 104
    %v7258 = vpop.permute.xlu0 %7257
    %7259 = vrot.lane.b32.xlu0 %v7012, 104
    %v7260 = vpop.permute.xlu0 %7259
    %7261 = vrot.lane.b32.xlu0 %v7022, 104
    %v7262 = vpop.permute.xlu0 %7261
    %7263 = vrot.lane.b32.xlu0 %v7032, 104
    %v7264 = vpop.permute.xlu0 %7263
    %7265 = vrot.lane.b32.xlu0 %v7042, 104
    %v7266 = vpop.permute.xlu0 %7265
    %7267 = vrot.lane.b32.xlu0 %v7052, 104
    %v7268 = vpop.permute.xlu0 %7267
    %7269 = vrot.lane.b32.xlu0 %v7062, 104
    %v7270 = vpop.permute.xlu0 %7269
    %7271 = vrot.lane.b32.xlu0 %v7072, 104
    %v7272 = vpop.permute.xlu0 %7271
    %7273 = vrot.lane.b32.xlu0 %v7082, 104
    %v7274 = vpop.permute.xlu0 %7273
    %7275 = vrot.lane.b32.xlu0 %v7092, 104
    %v7276 = vpop.permute.xlu0 %7275
    %7277 = vrot.lane.b32.xlu0 %v7102, 104
    %v7278 = vpop.permute.xlu0 %7277
    %7279 = vrot.lane.b32.xlu0 %v7112, 104
    %v7280 = vpop.permute.xlu0 %7279
    %7281 = vrot.lane.b32.xlu0 %v7122, 104
    %v7282 = vpop.permute.xlu0 %7281
    %7283 = vrot.lane.b32.xlu0 %v7132, 104
    %v7284 = vpop.permute.xlu0 %7283
    %7285 = vrot.lane.b32.xlu0 %v7142, 104
    %v7286 = vpop.permute.xlu0 %7285
    %7287 = vrot.lane.b32.xlu0 %v7152, 104
    %v7288 = vpop.permute.xlu0 %7287
    %7289 = vrot.lane.b32.xlu0 %v7162, 104
    %v7290 = vpop.permute.xlu0 %7289
    %7291 = vrot.lane.b32.xlu0 %v7172, 104
    %v7292 = vpop.permute.xlu0 %7291
    %7293 = vrot.lane.b32.xlu0 %v7182, 104
    %v7294 = vpop.permute.xlu0 %7293
    %7295 = vrot.lane.b32.xlu0 %v7192, 104
    %v7296 = vpop.permute.xlu0 %7295
    %7297 = vrot.lane.b32.xlu0 %v7202, 104
    %v7298 = vpop.permute.xlu0 %7297
    %7299 = vrot.lane.b32.xlu0 %v7212, 104
    %v7300 = vpop.permute.xlu0 %7299
    %7301 = vrot.lane.b32.xlu0 %v7222, 104
    %v7302 = vpop.permute.xlu0 %7301
    %7303 = vrot.lane.b32.xlu0 %v7232, 104
    %v7304 = vpop.permute.xlu0 %7303
    %7305 = vrot.lane.b32.xlu0 %v7242, 104
    %v7306 = vpop.permute.xlu0 %7305
    %vm7339 = vcmask 913216
    %7340 = vst.msk [vmem:[#allocation3] sm:$0xf] %vm7339, %v7244
    %7341 = vst.msk [vmem:[#allocation3 + $0x8] sm:$0xf] %vm7339, %v7246
    %7342 = vst.msk [vmem:[#allocation3 + $0x10] sm:$0xf] %vm7339, %v7248
    %7343 = vst.msk [vmem:[#allocation3 + $0x18] sm:$0xf] %vm7339, %v7250
    %7344 = vst.msk [vmem:[#allocation3 + $0x20] sm:$0xf] %vm7339, %v7252
    %7345 = vst.msk [vmem:[#allocation3 + $0x28] sm:$0xf] %vm7339, %v7254
    %7346 = vst.msk [vmem:[#allocation3 + $0x30] sm:$0xf] %vm7339, %v7256
    %7347 = vst.msk [vmem:[#allocation3 + $0x38] sm:$0xf] %vm7339, %v7258
    %7348 = vst.msk [vmem:[#allocation3 + $0x40] sm:$0xf] %vm7339, %v7260
    %7349 = vst.msk [vmem:[#allocation3 + $0x48] sm:$0xf] %vm7339, %v7262
    %7350 = vst.msk [vmem:[#allocation3 + $0x50] sm:$0xf] %vm7339, %v7264
    %7351 = vst.msk [vmem:[#allocation3 + $0x58] sm:$0xf] %vm7339, %v7266
    %7352 = vst.msk [vmem:[#allocation3 + $0x60] sm:$0xf] %vm7339, %v7268
    %7353 = vst.msk [vmem:[#allocation3 + $0x68] sm:$0xf] %vm7339, %v7270
    %7354 = vst.msk [vmem:[#allocation3 + $0x70] sm:$0xf] %vm7339, %v7272
    %7355 = vst.msk [vmem:[#allocation3 + $0x78] sm:$0xf] %vm7339, %v7274
    %7356 = vst.msk [vmem:[#allocation3 + $0x80] sm:$0xf] %vm7339, %v7276
    %7357 = vst.msk [vmem:[#allocation3 + $0x88] sm:$0xf] %vm7339, %v7278
    %7358 = vst.msk [vmem:[#allocation3 + $0x90] sm:$0xf] %vm7339, %v7280
    %7359 = vst.msk [vmem:[#allocation3 + $0x98] sm:$0xf] %vm7339, %v7282
    %7360 = vst.msk [vmem:[#allocation3 + $0xa0] sm:$0xf] %vm7339, %v7284
    %7361 = vst.msk [vmem:[#allocation3 + $0xa8] sm:$0xf] %vm7339, %v7286
    %7362 = vst.msk [vmem:[#allocation3 + $0xb0] sm:$0xf] %vm7339, %v7288
    %7363 = vst.msk [vmem:[#allocation3 + $0xb8] sm:$0xf] %vm7339, %v7290
    %7364 = vst.msk [vmem:[#allocation3 + $0xc0] sm:$0xf] %vm7339, %v7292
    %7365 = vst.msk [vmem:[#allocation3 + $0xc8] sm:$0xf] %vm7339, %v7294
    %7366 = vst.msk [vmem:[#allocation3 + $0xd0] sm:$0xf] %vm7339, %v7296
    %7367 = vst.msk [vmem:[#allocation3 + $0xd8] sm:$0xf] %vm7339, %v7298
    %7368 = vst.msk [vmem:[#allocation3 + $0xe0] sm:$0xf] %vm7339, %v7300
    %7369 = vst.msk [vmem:[#allocation3 + $0xe8] sm:$0xf] %vm7339, %v7302
    %7370 = vst.msk [vmem:[#allocation3 + $0xf0] sm:$0xf] %vm7339, %v7304
    %7371 = vst.msk [vmem:[#allocation3 + $0xf8] sm:$0xf] %vm7339, %v7306
    %v7372 = vld [vmem:[#allocation2 + $0x20] sm:$0xc]
    %v7373 = vld [vmem:[#allocation2 + $0x24] sm:$0xf]
    %v7374 = vld [vmem:[#allocation2 + $0x28] sm:$0xf]
    %v7375 = vld [vmem:[#allocation2 + $0x2c] sm:$0xf]
    %v7376 = vld [vmem:[#allocation2 + $0x30] sm:$0xf]
    %v7377 = vld [vmem:[#allocation2 + $0x34] sm:$0xf]
    %v7378 = vld [vmem:[#allocation2 + $0x38] sm:$0xf]
    %v7379 = vld [vmem:[#allocation2 + $0x3c] sm:$0xf]
    %v7380 = vld [vmem:[#allocation2 + $0x40] sm:$0xf]
    %v7381 = vld [vmem:[#allocation2 + $0x44] sm:$0xf]
    %v7382 = vld [vmem:[#allocation2 + $0x48] sm:$0xf]
    %v7383 = vld [vmem:[#allocation2 + $0x4c] sm:$0xf]
    %v7384 = vld [vmem:[#allocation2 + $0x50] sm:$0xf]
    %v7385 = vld [vmem:[#allocation2 + $0x54] sm:$0xf]
    %v7386 = vld [vmem:[#allocation2 + $0x58] sm:$0xf]
    %v7387 = vld [vmem:[#allocation2 + $0x5c] sm:$0xf]
    %v7388 = vld [vmem:[#allocation2 + $0x60] sm:$0xf]
    %v7389 = vld [vmem:[#allocation2 + $0x64] sm:$0xf]
    %v7390 = vld [vmem:[#allocation2 + $0x68] sm:$0xf]
    %v7391 = vld [vmem:[#allocation2 + $0x6c] sm:$0xf]
    %v7392 = vld [vmem:[#allocation2 + $0x70] sm:$0xf]
    %v7393 = vld [vmem:[#allocation2 + $0x74] sm:$0xf]
    %v7394 = vld [vmem:[#allocation2 + $0x78] sm:$0xf]
    %v7395 = vld [vmem:[#allocation2 + $0x7c] sm:$0xf]
    %v7396 = vld [vmem:[#allocation2 + $0x80] sm:$0xf]
    %v7397 = vld [vmem:[#allocation2 + $0x84] sm:$0xf]
    %v7398 = vld [vmem:[#allocation2 + $0x88] sm:$0xf]
    %v7399 = vld [vmem:[#allocation2 + $0x8c] sm:$0xf]
    %v7400 = vld [vmem:[#allocation2 + $0x90] sm:$0xf]
    %v7401 = vld [vmem:[#allocation2 + $0x94] sm:$0xf]
    %v7402 = vld [vmem:[#allocation2 + $0x98] sm:$0xf]
    %v7403 = vld [vmem:[#allocation2 + $0x9c] sm:$0xf]
    %v7404 = vld [vmem:[#allocation2 + $0xa0] sm:$0x3]
    %v7438 = vrot.slane %v7372, 6
    %v7439 = vrot.slane %v7438, 4
    %v7440 = vrot.slane %v7373, 6
    %v7441 = vsel %vm3931, %v7439, %v7440
    %v7442 = vrot.slane %v7440, 4
    %v7443 = vrot.slane %v7374, 6
    %v7444 = vsel %vm3931, %v7442, %v7443
    %v7445 = vrot.slane %v7443, 4
    %v7446 = vrot.slane %v7375, 6
    %v7447 = vsel %vm3931, %v7445, %v7446
    %v7448 = vrot.slane %v7446, 4
    %v7449 = vrot.slane %v7376, 6
    %v7450 = vsel %vm3931, %v7448, %v7449
    %v7451 = vrot.slane %v7449, 4
    %v7452 = vrot.slane %v7377, 6
    %v7453 = vsel %vm3931, %v7451, %v7452
    %v7454 = vrot.slane %v7452, 4
    %v7455 = vrot.slane %v7378, 6
    %v7456 = vsel %vm3931, %v7454, %v7455
    %v7457 = vrot.slane %v7455, 4
    %v7458 = vrot.slane %v7379, 6
    %v7459 = vsel %vm3931, %v7457, %v7458
    %v7460 = vrot.slane %v7458, 4
    %v7461 = vrot.slane %v7380, 6
    %v7462 = vsel %vm3931, %v7460, %v7461
    %v7463 = vrot.slane %v7461, 4
    %v7464 = vrot.slane %v7381, 6
    %v7465 = vsel %vm3931, %v7463, %v7464
    %v7466 = vrot.slane %v7464, 4
    %v7467 = vrot.slane %v7382, 6
    %v7468 = vsel %vm3931, %v7466, %v7467
    %v7469 = vrot.slane %v7467, 4
    %v7470 = vrot.slane %v7383, 6
    %v7471 = vsel %vm3931, %v7469, %v7470
    %v7472 = vrot.slane %v7470, 4
    %v7473 = vrot.slane %v7384, 6
    %v7474 = vsel %vm3931, %v7472, %v7473
    %v7475 = vrot.slane %v7473, 4
    %v7476 = vrot.slane %v7385, 6
    %v7477 = vsel %vm3931, %v7475, %v7476
    %v7478 = vrot.slane %v7476, 4
    %v7479 = vrot.slane %v7386, 6
    %v7480 = vsel %vm3931, %v7478, %v7479
    %v7481 = vrot.slane %v7479, 4
    %v7482 = vrot.slane %v7387, 6
    %v7483 = vsel %vm3931, %v7481, %v7482
    %v7484 = vrot.slane %v7482, 4
    %v7485 = vrot.slane %v7388, 6
    %v7486 = vsel %vm3931, %v7484, %v7485
    %v7487 = vrot.slane %v7485, 4
    %v7488 = vrot.slane %v7389, 6
    %v7489 = vsel %vm3931, %v7487, %v7488
    %v7490 = vrot.slane %v7488, 4
    %v7491 = vrot.slane %v7390, 6
    %v7492 = vsel %vm3931, %v7490, %v7491
    %v7493 = vrot.slane %v7491, 4
    %v7494 = vrot.slane %v7391, 6
    %v7495 = vsel %vm3931, %v7493, %v7494
    %v7496 = vrot.slane %v7494, 4
    %v7497 = vrot.slane %v7392, 6
    %v7498 = vsel %vm3931, %v7496, %v7497
    %v7499 = vrot.slane %v7497, 4
    %v7500 = vrot.slane %v7393, 6
    %v7501 = vsel %vm3931, %v7499, %v7500
    %v7502 = vrot.slane %v7500, 4
    %v7503 = vrot.slane %v7394, 6
    %v7504 = vsel %vm3931, %v7502, %v7503
    %v7505 = vrot.slane %v7503, 4
    %v7506 = vrot.slane %v7395, 6
    %v7507 = vsel %vm3931, %v7505, %v7506
    %v7508 = vrot.slane %v7506, 4
    %v7509 = vrot.slane %v7396, 6
    %v7510 = vsel %vm3931, %v7508, %v7509
    %v7511 = vrot.slane %v7509, 4
    %v7512 = vrot.slane %v7397, 6
    %v7513 = vsel %vm3931, %v7511, %v7512
    %v7514 = vrot.slane %v7512, 4
    %v7515 = vrot.slane %v7398, 6
    %v7516 = vsel %vm3931, %v7514, %v7515
    %v7517 = vrot.slane %v7515, 4
    %v7518 = vrot.slane %v7399, 6
    %v7519 = vsel %vm3931, %v7517, %v7518
    %v7520 = vrot.slane %v7518, 4
    %v7521 = vrot.slane %v7400, 6
    %v7522 = vsel %vm3931, %v7520, %v7521
    %v7523 = vrot.slane %v7521, 4
    %v7524 = vrot.slane %v7401, 6
    %v7525 = vsel %vm3931, %v7523, %v7524
    %v7526 = vrot.slane %v7524, 4
    %v7527 = vrot.slane %v7402, 6
    %v7528 = vsel %vm3931, %v7526, %v7527
    %v7529 = vrot.slane %v7527, 4
    %v7530 = vrot.slane %v7403, 6
    %v7531 = vsel %vm3931, %v7529, %v7530
    %v7532 = vrot.slane %v7530, 4
    %v7533 = vrot.slane %v7404, 6
    %v7534 = vsel %vm3931, %v7532, %v7533
    %7535 = vrot.lane.b32.xlu0 %v7441, 112
    %v7536 = vpop.permute.xlu0 %7535
    %7537 = vrot.lane.b32.xlu0 %v7444, 112
    %v7538 = vpop.permute.xlu0 %7537
    %7539 = vrot.lane.b32.xlu0 %v7447, 112
    %v7540 = vpop.permute.xlu0 %7539
    %7541 = vrot.lane.b32.xlu0 %v7450, 112
    %v7542 = vpop.permute.xlu0 %7541
    %7543 = vrot.lane.b32.xlu0 %v7453, 112
    %v7544 = vpop.permute.xlu0 %7543
    %7545 = vrot.lane.b32.xlu0 %v7456, 112
    %v7546 = vpop.permute.xlu0 %7545
    %7547 = vrot.lane.b32.xlu0 %v7459, 112
    %v7548 = vpop.permute.xlu0 %7547
    %7549 = vrot.lane.b32.xlu0 %v7462, 112
    %v7550 = vpop.permute.xlu0 %7549
    %7551 = vrot.lane.b32.xlu0 %v7465, 112
    %v7552 = vpop.permute.xlu0 %7551
    %7553 = vrot.lane.b32.xlu0 %v7468, 112
    %v7554 = vpop.permute.xlu0 %7553
    %7555 = vrot.lane.b32.xlu0 %v7471, 112
    %v7556 = vpop.permute.xlu0 %7555
    %7557 = vrot.lane.b32.xlu0 %v7474, 112
    %v7558 = vpop.permute.xlu0 %7557
    %7559 = vrot.lane.b32.xlu0 %v7477, 112
    %v7560 = vpop.permute.xlu0 %7559
    %7561 = vrot.lane.b32.xlu0 %v7480, 112
    %v7562 = vpop.permute.xlu0 %7561
    %7563 = vrot.lane.b32.xlu0 %v7483, 112
    %v7564 = vpop.permute.xlu0 %7563
    %7565 = vrot.lane.b32.xlu0 %v7486, 112
    %v7566 = vpop.permute.xlu0 %7565
    %7567 = vrot.lane.b32.xlu0 %v7489, 112
    %v7568 = vpop.permute.xlu0 %7567
    %7569 = vrot.lane.b32.xlu0 %v7492, 112
    %v7570 = vpop.permute.xlu0 %7569
    %7571 = vrot.lane.b32.xlu0 %v7495, 112
    %v7572 = vpop.permute.xlu0 %7571
    %7573 = vrot.lane.b32.xlu0 %v7498, 112
    %v7574 = vpop.permute.xlu0 %7573
    %7575 = vrot.lane.b32.xlu0 %v7501, 112
    %v7576 = vpop.permute.xlu0 %7575
    %7577 = vrot.lane.b32.xlu0 %v7504, 112
    %v7578 = vpop.permute.xlu0 %7577
    %7579 = vrot.lane.b32.xlu0 %v7507, 112
    %v7580 = vpop.permute.xlu0 %7579
    %7581 = vrot.lane.b32.xlu0 %v7510, 112
    %v7582 = vpop.permute.xlu0 %7581
    %7583 = vrot.lane.b32.xlu0 %v7513, 112
    %v7584 = vpop.permute.xlu0 %7583
    %7585 = vrot.lane.b32.xlu0 %v7516, 112
    %v7586 = vpop.permute.xlu0 %7585
    %7587 = vrot.lane.b32.xlu0 %v7519, 112
    %v7588 = vpop.permute.xlu0 %7587
    %7589 = vrot.lane.b32.xlu0 %v7522, 112
    %v7590 = vpop.permute.xlu0 %7589
    %7591 = vrot.lane.b32.xlu0 %v7525, 112
    %v7592 = vpop.permute.xlu0 %7591
    %7593 = vrot.lane.b32.xlu0 %v7528, 112
    %v7594 = vpop.permute.xlu0 %7593
    %7595 = vrot.lane.b32.xlu0 %v7531, 112
    %v7596 = vpop.permute.xlu0 %7595
    %7597 = vrot.lane.b32.xlu0 %v7534, 112
    %v7598 = vpop.permute.xlu0 %7597
    %vm7631 = vcmask 978816
    %7632 = vst.msk [vmem:[#allocation3] sm:$0xf] %vm7631, %v7536
    %7633 = vst.msk [vmem:[#allocation3 + $0x8] sm:$0xf] %vm7631, %v7538
    %7634 = vst.msk [vmem:[#allocation3 + $0x10] sm:$0xf] %vm7631, %v7540
    %7635 = vst.msk [vmem:[#allocation3 + $0x18] sm:$0xf] %vm7631, %v7542
    %7636 = vst.msk [vmem:[#allocation3 + $0x20] sm:$0xf] %vm7631, %v7544
    %7637 = vst.msk [vmem:[#allocation3 + $0x28] sm:$0xf] %vm7631, %v7546
    %7638 = vst.msk [vmem:[#allocation3 + $0x30] sm:$0xf] %vm7631, %v7548
    %7639 = vst.msk [vmem:[#allocation3 + $0x38] sm:$0xf] %vm7631, %v7550
    %7640 = vst.msk [vmem:[#allocation3 + $0x40] sm:$0xf] %vm7631, %v7552
    %7641 = vst.msk [vmem:[#allocation3 + $0x48] sm:$0xf] %vm7631, %v7554
    %7642 = vst.msk [vmem:[#allocation3 + $0x50] sm:$0xf] %vm7631, %v7556
    %7643 = vst.msk [vmem:[#allocation3 + $0x58] sm:$0xf] %vm7631, %v7558
    %7644 = vst.msk [vmem:[#allocation3 + $0x60] sm:$0xf] %vm7631, %v7560
    %7645 = vst.msk [vmem:[#allocation3 + $0x68] sm:$0xf] %vm7631, %v7562
    %7646 = vst.msk [vmem:[#allocation3 + $0x70] sm:$0xf] %vm7631, %v7564
    %7647 = vst.msk [vmem:[#allocation3 + $0x78] sm:$0xf] %vm7631, %v7566
    %7648 = vst.msk [vmem:[#allocation3 + $0x80] sm:$0xf] %vm7631, %v7568
    %7649 = vst.msk [vmem:[#allocation3 + $0x88] sm:$0xf] %vm7631, %v7570
    %7650 = vst.msk [vmem:[#allocation3 + $0x90] sm:$0xf] %vm7631, %v7572
    %7651 = vst.msk [vmem:[#allocation3 + $0x98] sm:$0xf] %vm7631, %v7574
    %7652 = vst.msk [vmem:[#allocation3 + $0xa0] sm:$0xf] %vm7631, %v7576
    %7653 = vst.msk [vmem:[#allocation3 + $0xa8] sm:$0xf] %vm7631, %v7578
    %7654 = vst.msk [vmem:[#allocation3 + $0xb0] sm:$0xf] %vm7631, %v7580
    %7655 = vst.msk [vmem:[#allocation3 + $0xb8] sm:$0xf] %vm7631, %v7582
    %7656 = vst.msk [vmem:[#allocation3 + $0xc0] sm:$0xf] %vm7631, %v7584
    %7657 = vst.msk [vmem:[#allocation3 + $0xc8] sm:$0xf] %vm7631, %v7586
    %7658 = vst.msk [vmem:[#allocation3 + $0xd0] sm:$0xf] %vm7631, %v7588
    %7659 = vst.msk [vmem:[#allocation3 + $0xd8] sm:$0xf] %vm7631, %v7590
    %7660 = vst.msk [vmem:[#allocation3 + $0xe0] sm:$0xf] %vm7631, %v7592
    %7661 = vst.msk [vmem:[#allocation3 + $0xe8] sm:$0xf] %vm7631, %v7594
    %7662 = vst.msk [vmem:[#allocation3 + $0xf0] sm:$0xf] %vm7631, %v7596
    %7663 = vst.msk [vmem:[#allocation3 + $0xf8] sm:$0xf] %vm7631, %v7598
    %v7664 = vld [vmem:[#allocation2 + $0x30] sm:$0xf]
    %v7665 = vld [vmem:[#allocation2 + $0x34] sm:$0xf]
    %v7666 = vld [vmem:[#allocation2 + $0x38] sm:$0xf]
    %v7667 = vld [vmem:[#allocation2 + $0x3c] sm:$0xf]
    %v7668 = vld [vmem:[#allocation2 + $0x40] sm:$0xf]
    %v7669 = vld [vmem:[#allocation2 + $0x44] sm:$0xf]
    %v7670 = vld [vmem:[#allocation2 + $0x48] sm:$0xf]
    %v7671 = vld [vmem:[#allocation2 + $0x4c] sm:$0xf]
    %v7672 = vld [vmem:[#allocation2 + $0x50] sm:$0xf]
    %v7673 = vld [vmem:[#allocation2 + $0x54] sm:$0xf]
    %v7674 = vld [vmem:[#allocation2 + $0x58] sm:$0xf]
    %v7675 = vld [vmem:[#allocation2 + $0x5c] sm:$0xf]
    %v7676 = vld [vmem:[#allocation2 + $0x60] sm:$0xf]
    %v7677 = vld [vmem:[#allocation2 + $0x64] sm:$0xf]
    %v7678 = vld [vmem:[#allocation2 + $0x68] sm:$0xf]
    %v7679 = vld [vmem:[#allocation2 + $0x6c] sm:$0xf]
    %v7680 = vld [vmem:[#allocation2 + $0x70] sm:$0xf]
    %v7681 = vld [vmem:[#allocation2 + $0x74] sm:$0xf]
    %v7682 = vld [vmem:[#allocation2 + $0x78] sm:$0xf]
    %v7683 = vld [vmem:[#allocation2 + $0x7c] sm:$0xf]
    %v7684 = vld [vmem:[#allocation2 + $0x80] sm:$0xf]
    %v7685 = vld [vmem:[#allocation2 + $0x84] sm:$0xf]
    %v7686 = vld [vmem:[#allocation2 + $0x88] sm:$0xf]
    %v7687 = vld [vmem:[#allocation2 + $0x8c] sm:$0xf]
    %v7688 = vld [vmem:[#allocation2 + $0x90] sm:$0xf]
    %v7689 = vld [vmem:[#allocation2 + $0x94] sm:$0xf]
    %v7690 = vld [vmem:[#allocation2 + $0x98] sm:$0xf]
    %v7691 = vld [vmem:[#allocation2 + $0x9c] sm:$0xf]
    %v7692 = vld [vmem:[#allocation2 + $0xa0] sm:$0xf]
    %v7693 = vld [vmem:[#allocation2 + $0xa4] sm:$0xf]
    %v7694 = vld [vmem:[#allocation2 + $0xa8] sm:$0xf]
    %v7695 = vld [vmem:[#allocation2 + $0xac] sm:$0xf]
    %7728 = vrot.lane.b32.xlu0 %v7664, 120
    %v7729 = vpop.permute.xlu0 %7728
    %7730 = vrot.lane.b32.xlu0 %v7665, 120
    %v7731 = vpop.permute.xlu0 %7730
    %7732 = vrot.lane.b32.xlu0 %v7666, 120
    %v7733 = vpop.permute.xlu0 %7732
    %7734 = vrot.lane.b32.xlu0 %v7667, 120
    %v7735 = vpop.permute.xlu0 %7734
    %7736 = vrot.lane.b32.xlu0 %v7668, 120
    %v7737 = vpop.permute.xlu0 %7736
    %7738 = vrot.lane.b32.xlu0 %v7669, 120
    %v7739 = vpop.permute.xlu0 %7738
    %7740 = vrot.lane.b32.xlu0 %v7670, 120
    %v7741 = vpop.permute.xlu0 %7740
    %7742 = vrot.lane.b32.xlu0 %v7671, 120
    %v7743 = vpop.permute.xlu0 %7742
    %7744 = vrot.lane.b32.xlu0 %v7672, 120
    %v7745 = vpop.permute.xlu0 %7744
    %7746 = vrot.lane.b32.xlu0 %v7673, 120
    %v7747 = vpop.permute.xlu0 %7746
    %7748 = vrot.lane.b32.xlu0 %v7674, 120
    %v7749 = vpop.permute.xlu0 %7748
    %7750 = vrot.lane.b32.xlu0 %v7675, 120
    %v7751 = vpop.permute.xlu0 %7750
    %7752 = vrot.lane.b32.xlu0 %v7676, 120
    %v7753 = vpop.permute.xlu0 %7752
    %7754 = vrot.lane.b32.xlu0 %v7677, 120
    %v7755 = vpop.permute.xlu0 %7754
    %7756 = vrot.lane.b32.xlu0 %v7678, 120
    %v7757 = vpop.permute.xlu0 %7756
    %7758 = vrot.lane.b32.xlu0 %v7679, 120
    %v7759 = vpop.permute.xlu0 %7758
    %7760 = vrot.lane.b32.xlu0 %v7680, 120
    %v7761 = vpop.permute.xlu0 %7760
    %7762 = vrot.lane.b32.xlu0 %v7681, 120
    %v7763 = vpop.permute.xlu0 %7762
    %7764 = vrot.lane.b32.xlu0 %v7682, 120
    %v7765 = vpop.permute.xlu0 %7764
    %7766 = vrot.lane.b32.xlu0 %v7683, 120
    %v7767 = vpop.permute.xlu0 %7766
    %7768 = vrot.lane.b32.xlu0 %v7684, 120
    %v7769 = vpop.permute.xlu0 %7768
    %7770 = vrot.lane.b32.xlu0 %v7685, 120
    %v7771 = vpop.permute.xlu0 %7770
    %7772 = vrot.lane.b32.xlu0 %v7686, 120
    %v7773 = vpop.permute.xlu0 %7772
    %7774 = vrot.lane.b32.xlu0 %v7687, 120
    %v7775 = vpop.permute.xlu0 %7774
    %7776 = vrot.lane.b32.xlu0 %v7688, 120
    %v7777 = vpop.permute.xlu0 %7776
    %7778 = vrot.lane.b32.xlu0 %v7689, 120
    %v7779 = vpop.permute.xlu0 %7778
    %7780 = vrot.lane.b32.xlu0 %v7690, 120
    %v7781 = vpop.permute.xlu0 %7780
    %7782 = vrot.lane.b32.xlu0 %v7691, 120
    %v7783 = vpop.permute.xlu0 %7782
    %7784 = vrot.lane.b32.xlu0 %v7692, 120
    %v7785 = vpop.permute.xlu0 %7784
    %7786 = vrot.lane.b32.xlu0 %v7693, 120
    %v7787 = vpop.permute.xlu0 %7786
    %7788 = vrot.lane.b32.xlu0 %v7694, 120
    %v7789 = vpop.permute.xlu0 %7788
    %7790 = vrot.lane.b32.xlu0 %v7695, 120
    %v7791 = vpop.permute.xlu0 %7790
    %vm7824 = vcmask 1044416
    %7825 = vst.msk [vmem:[#allocation3] sm:$0xf] %vm7824, %v7729
    %7826 = vst.msk [vmem:[#allocation3 + $0x8] sm:$0xf] %vm7824, %v7731
    %7827 = vst.msk [vmem:[#allocation3 + $0x10] sm:$0xf] %vm7824, %v7733
    %7828 = vst.msk [vmem:[#allocation3 + $0x18] sm:$0xf] %vm7824, %v7735
    %7829 = vst.msk [vmem:[#allocation3 + $0x20] sm:$0xf] %vm7824, %v7737
    %7830 = vst.msk [vmem:[#allocation3 + $0x28] sm:$0xf] %vm7824, %v7739
    %7831 = vst.msk [vmem:[#allocation3 + $0x30] sm:$0xf] %vm7824, %v7741
    %7832 = vst.msk [vmem:[#allocation3 + $0x38] sm:$0xf] %vm7824, %v7743
    %7833 = vst.msk [vmem:[#allocation3 + $0x40] sm:$0xf] %vm7824, %v7745
    %7834 = vst.msk [vmem:[#allocation3 + $0x48] sm:$0xf] %vm7824, %v7747
    %7835 = vst.msk [vmem:[#allocation3 + $0x50] sm:$0xf] %vm7824, %v7749
    %7836 = vst.msk [vmem:[#allocation3 + $0x58] sm:$0xf] %vm7824, %v7751
    %7837 = vst.msk [vmem:[#allocation3 + $0x60] sm:$0xf] %vm7824, %v7753
    %7838 = vst.msk [vmem:[#allocation3 + $0x68] sm:$0xf] %vm7824, %v7755
    %7839 = vst.msk [vmem:[#allocation3 + $0x70] sm:$0xf] %vm7824, %v7757
    %7840 = vst.msk [vmem:[#allocation3 + $0x78] sm:$0xf] %vm7824, %v7759
    %7841 = vst.msk [vmem:[#allocation3 + $0x80] sm:$0xf] %vm7824, %v7761
    %7842 = vst.msk [vmem:[#allocation3 + $0x88] sm:$0xf] %vm7824, %v7763
    %7843 = vst.msk [vmem:[#allocation3 + $0x90] sm:$0xf] %vm7824, %v7765
    %7844 = vst.msk [vmem:[#allocation3 + $0x98] sm:$0xf] %vm7824, %v7767
    %7845 = vst.msk [vmem:[#allocation3 + $0xa0] sm:$0xf] %vm7824, %v7769
    %7846 = vst.msk [vmem:[#allocation3 + $0xa8] sm:$0xf] %vm7824, %v7771
    %7847 = vst.msk [vmem:[#allocation3 + $0xb0] sm:$0xf] %vm7824, %v7773
    %7848 = vst.msk [vmem:[#allocation3 + $0xb8] sm:$0xf] %vm7824, %v7775
    %7849 = vst.msk [vmem:[#allocation3 + $0xc0] sm:$0xf] %vm7824, %v7777
    %7850 = vst.msk [vmem:[#allocation3 + $0xc8] sm:$0xf] %vm7824, %v7779
    %7851 = vst.msk [vmem:[#allocation3 + $0xd0] sm:$0xf] %vm7824, %v7781
    %7852 = vst.msk [vmem:[#allocation3 + $0xd8] sm:$0xf] %vm7824, %v7783
    %7853 = vst.msk [vmem:[#allocation3 + $0xe0] sm:$0xf] %vm7824, %v7785
    %7854 = vst.msk [vmem:[#allocation3 + $0xe8] sm:$0xf] %vm7824, %v7787
    %7855 = vst.msk [vmem:[#allocation3 + $0xf0] sm:$0xf] %vm7824, %v7789
    %7856 = vst.msk [vmem:[#allocation3 + $0xf8] sm:$0xf] %vm7824, %v7791
    %v7857 = vld [vmem:[#allocation2 + $0x30] sm:$0xf]
    %v7858 = vld [vmem:[#allocation2 + $0x34] sm:$0xf]
    %v7859 = vld [vmem:[#allocation2 + $0x38] sm:$0xf]
    %v7860 = vld [vmem:[#allocation2 + $0x3c] sm:$0xf]
    %v7861 = vld [vmem:[#allocation2 + $0x40] sm:$0xf]
    %v7862 = vld [vmem:[#allocation2 + $0x44] sm:$0xf]
    %v7863 = vld [vmem:[#allocation2 + $0x48] sm:$0xf]
    %v7864 = vld [vmem:[#allocation2 + $0x4c] sm:$0xf]
    %v7865 = vld [vmem:[#allocation2 + $0x50] sm:$0xf]
    %v7866 = vld [vmem:[#allocation2 + $0x54] sm:$0xf]
    %v7867 = vld [vmem:[#allocation2 + $0x58] sm:$0xf]
    %v7868 = vld [vmem:[#allocation2 + $0x5c] sm:$0xf]
    %v7869 = vld [vmem:[#allocation2 + $0x60] sm:$0xf]
    %v7870 = vld [vmem:[#allocation2 + $0x64] sm:$0xf]
    %v7871 = vld [vmem:[#allocation2 + $0x68] sm:$0xf]
    %v7872 = vld [vmem:[#allocation2 + $0x6c] sm:$0xf]
    %v7873 = vld [vmem:[#allocation2 + $0x70] sm:$0xf]
    %v7874 = vld [vmem:[#allocation2 + $0x74] sm:$0xf]
    %v7875 = vld [vmem:[#allocation2 + $0x78] sm:$0xf]
    %v7876 = vld [vmem:[#allocation2 + $0x7c] sm:$0xf]
    %v7877 = vld [vmem:[#allocation2 + $0x80] sm:$0xf]
    %v7878 = vld [vmem:[#allocation2 + $0x84] sm:$0xf]
    %v7879 = vld [vmem:[#allocation2 + $0x88] sm:$0xf]
    %v7880 = vld [vmem:[#allocation2 + $0x8c] sm:$0xf]
    %v7881 = vld [vmem:[#allocation2 + $0x90] sm:$0xf]
    %v7882 = vld [vmem:[#allocation2 + $0x94] sm:$0xf]
    %v7883 = vld [vmem:[#allocation2 + $0x98] sm:$0xf]
    %v7884 = vld [vmem:[#allocation2 + $0x9c] sm:$0xf]
    %v7885 = vld [vmem:[#allocation2 + $0xa0] sm:$0xf]
    %v7886 = vld [vmem:[#allocation2 + $0xa4] sm:$0xf]
    %v7887 = vld [vmem:[#allocation2 + $0xa8] sm:$0xf]
    %v7888 = vld [vmem:[#allocation2 + $0xac] sm:$0xf]
    %v7889 = vld [vmem:[#allocation2 + $0xb0] sm:$0x1]
    %v7891 = vshrl.u32 %v7857, 16
    %v7893 = vrot.slane %v7891, 4
    %v7894 = vshll.u32 %v7857, 16
    %v7896 = vrot.slane %v7894, 5
    %v7897 = vor.u32 %v7893, %v7896
    %v7898 = vrot.slane %v7897, 4
    %v7900 = vshll.u32 %v7858, 16
    %v7902 = vrot.slane %v7900, 5
    %v7903 = vsel %vm2621, %v7898, %v7902
    %v7904 = vshrl.u32 %v7858, 16
    %v7906 = vrot.slane %v7904, 4
    %v7907 = vor.u32 %v7906, %v7902
    %v7908 = vrot.slane %v7907, 4
    %v7910 = vshll.u32 %v7859, 16
    %v7912 = vrot.slane %v7910, 5
    %v7913 = vsel %vm2621, %v7908, %v7912
    %v7914 = vshrl.u32 %v7859, 16
    %v7916 = vrot.slane %v7914, 4
    %v7917 = vor.u32 %v7916, %v7912
    %v7918 = vrot.slane %v7917, 4
    %v7920 = vshll.u32 %v7860, 16
    %v7922 = vrot.slane %v7920, 5
    %v7923 = vsel %vm2621, %v7918, %v7922
    %v7924 = vshrl.u32 %v7860, 16
    %v7926 = vrot.slane %v7924, 4
    %v7927 = vor.u32 %v7926, %v7922
    %v7928 = vrot.slane %v7927, 4
    %v7930 = vshll.u32 %v7861, 16
    %v7932 = vrot.slane %v7930, 5
    %v7933 = vsel %vm2621, %v7928, %v7932
    %v7934 = vshrl.u32 %v7861, 16
    %v7936 = vrot.slane %v7934, 4
    %v7937 = vor.u32 %v7936, %v7932
    %v7938 = vrot.slane %v7937, 4
    %v7940 = vshll.u32 %v7862, 16
    %v7942 = vrot.slane %v7940, 5
    %v7943 = vsel %vm2621, %v7938, %v7942
    %v7944 = vshrl.u32 %v7862, 16
    %v7946 = vrot.slane %v7944, 4
    %v7947 = vor.u32 %v7946, %v7942
    %v7948 = vrot.slane %v7947, 4
    %v7950 = vshll.u32 %v7863, 16
    %v7952 = vrot.slane %v7950, 5
    %v7953 = vsel %vm2621, %v7948, %v7952
    %v7954 = vshrl.u32 %v7863, 16
    %v7956 = vrot.slane %v7954, 4
    %v7957 = vor.u32 %v7956, %v7952
    %v7958 = vrot.slane %v7957, 4
    %v7960 = vshll.u32 %v7864, 16
    %v7962 = vrot.slane %v7960, 5
    %v7963 = vsel %vm2621, %v7958, %v7962
    %v7964 = vshrl.u32 %v7864, 16
    %v7966 = vrot.slane %v7964, 4
    %v7967 = vor.u32 %v7966, %v7962
    %v7968 = vrot.slane %v7967, 4
    %v7970 = vshll.u32 %v7865, 16
    %v7972 = vrot.slane %v7970, 5
    %v7973 = vsel %vm2621, %v7968, %v7972
    %v7974 = vshrl.u32 %v7865, 16
    %v7976 = vrot.slane %v7974, 4
    %v7977 = vor.u32 %v7976, %v7972
    %v7978 = vrot.slane %v7977, 4
    %v7980 = vshll.u32 %v7866, 16
    %v7982 = vrot.slane %v7980, 5
    %v7983 = vsel %vm2621, %v7978, %v7982
    %v7984 = vshrl.u32 %v7866, 16
    %v7986 = vrot.slane %v7984, 4
    %v7987 = vor.u32 %v7986, %v7982
    %v7988 = vrot.slane %v7987, 4
    %v7990 = vshll.u32 %v7867, 16
    %v7992 = vrot.slane %v7990, 5
    %v7993 = vsel %vm2621, %v7988, %v7992
    %v7994 = vshrl.u32 %v7867, 16
    %v7996 = vrot.slane %v7994, 4
    %v7997 = vor.u32 %v7996, %v7992
    %v7998 = vrot.slane %v7997, 4
    %v8000 = vshll.u32 %v7868, 16
    %v8002 = vrot.slane %v8000, 5
    %v8003 = vsel %vm2621, %v7998, %v8002
    %v8004 = vshrl.u32 %v7868, 16
    %v8006 = vrot.slane %v8004, 4
    %v8007 = vor.u32 %v8006, %v8002
    %v8008 = vrot.slane %v8007, 4
    %v8010 = vshll.u32 %v7869, 16
    %v8012 = vrot.slane %v8010, 5
    %v8013 = vsel %vm2621, %v8008, %v8012
    %v8014 = vshrl.u32 %v7869, 16
    %v8016 = vrot.slane %v8014, 4
    %v8017 = vor.u32 %v8016, %v8012
    %v8018 = vrot.slane %v8017, 4
    %v8020 = vshll.u32 %v7870, 16
    %v8022 = vrot.slane %v8020, 5
    %v8023 = vsel %vm2621, %v8018, %v8022
    %v8024 = vshrl.u32 %v7870, 16
    %v8026 = vrot.slane %v8024, 4
    %v8027 = vor.u32 %v8026, %v8022
    %v8028 = vrot.slane %v8027, 4
    %v8030 = vshll.u32 %v7871, 16
    %v8032 = vrot.slane %v8030, 5
    %v8033 = vsel %vm2621, %v8028, %v8032
    %v8034 = vshrl.u32 %v7871, 16
    %v8036 = vrot.slane %v8034, 4
    %v8037 = vor.u32 %v8036, %v8032
    %v8038 = vrot.slane %v8037, 4
    %v8040 = vshll.u32 %v7872, 16
    %v8042 = vrot.slane %v8040, 5
    %v8043 = vsel %vm2621, %v8038, %v8042
    %v8044 = vshrl.u32 %v7872, 16
    %v8046 = vrot.slane %v8044, 4
    %v8047 = vor.u32 %v8046, %v8042
    %v8048 = vrot.slane %v8047, 4
    %v8050 = vshll.u32 %v7873, 16
    %v8052 = vrot.slane %v8050, 5
    %v8053 = vsel %vm2621, %v8048, %v8052
    %v8054 = vshrl.u32 %v7873, 16
    %v8056 = vrot.slane %v8054, 4
    %v8057 = vor.u32 %v8056, %v8052
    %v8058 = vrot.slane %v8057, 4
    %v8060 = vshll.u32 %v7874, 16
    %v8062 = vrot.slane %v8060, 5
    %v8063 = vsel %vm2621, %v8058, %v8062
    %v8064 = vshrl.u32 %v7874, 16
    %v8066 = vrot.slane %v8064, 4
    %v8067 = vor.u32 %v8066, %v8062
    %v8068 = vrot.slane %v8067, 4
    %v8070 = vshll.u32 %v7875, 16
    %v8072 = vrot.slane %v8070, 5
    %v8073 = vsel %vm2621, %v8068, %v8072
    %v8074 = vshrl.u32 %v7875, 16
    %v8076 = vrot.slane %v8074, 4
    %v8077 = vor.u32 %v8076, %v8072
    %v8078 = vrot.slane %v8077, 4
    %v8080 = vshll.u32 %v7876, 16
    %v8082 = vrot.slane %v8080, 5
    %v8083 = vsel %vm2621, %v8078, %v8082
    %v8084 = vshrl.u32 %v7876, 16
    %v8086 = vrot.slane %v8084, 4
    %v8087 = vor.u32 %v8086, %v8082
    %v8088 = vrot.slane %v8087, 4
    %v8090 = vshll.u32 %v7877, 16
    %v8092 = vrot.slane %v8090, 5
    %v8093 = vsel %vm2621, %v8088, %v8092
    %v8094 = vshrl.u32 %v7877, 16
    %v8096 = vrot.slane %v8094, 4
    %v8097 = vor.u32 %v8096, %v8092
    %v8098 = vrot.slane %v8097, 4
    %v8100 = vshll.u32 %v7878, 16
    %v8102 = vrot.slane %v8100, 5
    %v8103 = vsel %vm2621, %v8098, %v8102
    %v8104 = vshrl.u32 %v7878, 16
    %v8106 = vrot.slane %v8104, 4
    %v8107 = vor.u32 %v8106, %v8102
    %v8108 = vrot.slane %v8107, 4
    %v8110 = vshll.u32 %v7879, 16
    %v8112 = vrot.slane %v8110, 5
    %v8113 = vsel %vm2621, %v8108, %v8112
    %v8114 = vshrl.u32 %v7879, 16
    %v8116 = vrot.slane %v8114, 4
    %v8117 = vor.u32 %v8116, %v8112
    %v8118 = vrot.slane %v8117, 4
    %v8120 = vshll.u32 %v7880, 16
    %v8122 = vrot.slane %v8120, 5
    %v8123 = vsel %vm2621, %v8118, %v8122
    %v8124 = vshrl.u32 %v7880, 16
    %v8126 = vrot.slane %v8124, 4
    %v8127 = vor.u32 %v8126, %v8122
    %v8128 = vrot.slane %v8127, 4
    %v8130 = vshll.u32 %v7881, 16
    %v8132 = vrot.slane %v8130, 5
    %v8133 = vsel %vm2621, %v8128, %v8132
    %v8134 = vshrl.u32 %v7881, 16
    %v8136 = vrot.slane %v8134, 4
    %v8137 = vor.u32 %v8136, %v8132
    %v8138 = vrot.slane %v8137, 4
    %v8140 = vshll.u32 %v7882, 16
    %v8142 = vrot.slane %v8140, 5
    %v8143 = vsel %vm2621, %v8138, %v8142
    %v8144 = vshrl.u32 %v7882, 16
    %v8146 = vrot.slane %v8144, 4
    %v8147 = vor.u32 %v8146, %v8142
    %v8148 = vrot.slane %v8147, 4
    %v8150 = vshll.u32 %v7883, 16
    %v8152 = vrot.slane %v8150, 5
    %v8153 = vsel %vm2621, %v8148, %v8152
    %v8154 = vshrl.u32 %v7883, 16
    %v8156 = vrot.slane %v8154, 4
    %v8157 = vor.u32 %v8156, %v8152
    %v8158 = vrot.slane %v8157, 4
    %v8160 = vshll.u32 %v7884, 16
    %v8162 = vrot.slane %v8160, 5
    %v8163 = vsel %vm2621, %v8158, %v8162
    %v8164 = vshrl.u32 %v7884, 16
    %v8166 = vrot.slane %v8164, 4
    %v8167 = vor.u32 %v8166, %v8162
    %v8168 = vrot.slane %v8167, 4
    %v8170 = vshll.u32 %v7885, 16
    %v8172 = vrot.slane %v8170, 5
    %v8173 = vsel %vm2621, %v8168, %v8172
    %v8174 = vshrl.u32 %v7885, 16
    %v8176 = vrot.slane %v8174, 4
    %v8177 = vor.u32 %v8176, %v8172
    %v8178 = vrot.slane %v8177, 4
    %v8180 = vshll.u32 %v7886, 16
    %v8182 = vrot.slane %v8180, 5
    %v8183 = vsel %vm2621, %v8178, %v8182
    %v8184 = vshrl.u32 %v7886, 16
    %v8186 = vrot.slane %v8184, 4
    %v8187 = vor.u32 %v8186, %v8182
    %v8188 = vrot.slane %v8187, 4
    %v8190 = vshll.u32 %v7887, 16
    %v8192 = vrot.slane %v8190, 5
    %v8193 = vsel %vm2621, %v8188, %v8192
    %v8194 = vshrl.u32 %v7887, 16
    %v8196 = vrot.slane %v8194, 4
    %v8197 = vor.u32 %v8196, %v8192
    %v8198 = vrot.slane %v8197, 4
    %v8200 = vshll.u32 %v7888, 16
    %v8202 = vrot.slane %v8200, 5
    %v8203 = vsel %vm2621, %v8198, %v8202
    %v8204 = vshrl.u32 %v7888, 16
    %v8206 = vrot.slane %v8204, 4
    %v8207 = vor.u32 %v8206, %v8202
    %v8208 = vrot.slane %v8207, 4
    %v8210 = vshll.u32 %v7889, 16
    %v8212 = vrot.slane %v8210, 5
    %v8213 = vsel %vm2621, %v8208, %v8212
    %8246 = vst.msk [vmem:[#allocation3 + $0x4] sm:$0xf] %vm2553, %v7903
    %8247 = vst.msk [vmem:[#allocation3 + $0xc] sm:$0xf] %vm2553, %v7913
    %8248 = vst.msk [vmem:[#allocation3 + $0x14] sm:$0xf] %vm2553, %v7923
    %8249 = vst.msk [vmem:[#allocation3 + $0x1c] sm:$0xf] %vm2553, %v7933
    %8250 = vst.msk [vmem:[#allocation3 + $0x24] sm:$0xf] %vm2553, %v7943
    %8251 = vst.msk [vmem:[#allocation3 + $0x2c] sm:$0xf] %vm2553, %v7953
    %8252 = vst.msk [vmem:[#allocation3 + $0x34] sm:$0xf] %vm2553, %v7963
    %8253 = vst.msk [vmem:[#allocation3 + $0x3c] sm:$0xf] %vm2553, %v7973
    %8254 = vst.msk [vmem:[#allocation3 + $0x44] sm:$0xf] %vm2553, %v7983
    %8255 = vst.msk [vmem:[#allocation3 + $0x4c] sm:$0xf] %vm2553, %v7993
    %8256 = vst.msk [vmem:[#allocation3 + $0x54] sm:$0xf] %vm2553, %v8003
    %8257 = vst.msk [vmem:[#allocation3 + $0x5c] sm:$0xf] %vm2553, %v8013
    %8258 = vst.msk [vmem:[#allocation3 + $0x64] sm:$0xf] %vm2553, %v8023
    %8259 = vst.msk [vmem:[#allocation3 + $0x6c] sm:$0xf] %vm2553, %v8033
    %8260 = vst.msk [vmem:[#allocation3 + $0x74] sm:$0xf] %vm2553, %v8043
    %8261 = vst.msk [vmem:[#allocation3 + $0x7c] sm:$0xf] %vm2553, %v8053
    %8262 = vst.msk [vmem:[#allocation3 + $0x84] sm:$0xf] %vm2553, %v8063
    %8263 = vst.msk [vmem:[#allocation3 + $0x8c] sm:$0xf] %vm2553, %v8073
    %8264 = vst.msk [vmem:[#allocation3 + $0x94] sm:$0xf] %vm2553, %v8083
    %8265 = vst.msk [vmem:[#allocation3 + $0x9c] sm:$0xf] %vm2553, %v8093
    %8266 = vst.msk [vmem:[#allocation3 + $0xa4] sm:$0xf] %vm2553, %v8103
    %8267 = vst.msk [vmem:[#allocation3 + $0xac] sm:$0xf] %vm2553, %v8113
    %8268 = vst.msk [vmem:[#allocation3 + $0xb4] sm:$0xf] %vm2553, %v8123
    %8269 = vst.msk [vmem:[#allocation3 + $0xbc] sm:$0xf] %vm2553, %v8133
    %8270 = vst.msk [vmem:[#allocation3 + $0xc4] sm:$0xf] %vm2553, %v8143
    %8271 = vst.msk [vmem:[#allocation3 + $0xcc] sm:$0xf] %vm2553, %v8153
    %8272 = vst.msk [vmem:[#allocation3 + $0xd4] sm:$0xf] %vm2553, %v8163
    %8273 = vst.msk [vmem:[#allocation3 + $0xdc] sm:$0xf] %vm2553, %v8173
    %8274 = vst.msk [vmem:[#allocation3 + $0xe4] sm:$0xf] %vm2553, %v8183
    %8275 = vst.msk [vmem:[#allocation3 + $0xec] sm:$0xf] %vm2553, %v8193
    %8276 = vst.msk [vmem:[#allocation3 + $0xf4] sm:$0xf] %vm2553, %v8203
    %8277 = vst.msk [vmem:[#allocation3 + $0xfc] sm:$0xf] %vm2553, %v8213
    %v8278 = vld [vmem:[#allocation2 + $0x30] sm:$0xe]
    %v8279 = vld [vmem:[#allocation2 + $0x34] sm:$0xf]
    %v8280 = vld [vmem:[#allocation2 + $0x38] sm:$0xf]
    %v8281 = vld [vmem:[#allocation2 + $0x3c] sm:$0xf]
    %v8282 = vld [vmem:[#allocation2 + $0x40] sm:$0xf]
    %v8283 = vld [vmem:[#allocation2 + $0x44] sm:$0xf]
    %v8284 = vld [vmem:[#allocation2 + $0x48] sm:$0xf]
    %v8285 = vld [vmem:[#allocation2 + $0x4c] sm:$0xf]
    %v8286 = vld [vmem:[#allocation2 + $0x50] sm:$0xf]
    %v8287 = vld [vmem:[#allocation2 + $0x54] sm:$0xf]
    %v8288 = vld [vmem:[#allocation2 + $0x58] sm:$0xf]
    %v8289 = vld [vmem:[#allocation2 + $0x5c] sm:$0xf]
    %v8290 = vld [vmem:[#allocation2 + $0x60] sm:$0xf]
    %v8291 = vld [vmem:[#allocation2 + $0x64] sm:$0xf]
    %v8292 = vld [vmem:[#allocation2 + $0x68] sm:$0xf]
    %v8293 = vld [vmem:[#allocation2 + $0x6c] sm:$0xf]
    %v8294 = vld [vmem:[#allocation2 + $0x70] sm:$0xf]
    %v8295 = vld [vmem:[#allocation2 + $0x74] sm:$0xf]
    %v8296 = vld [vmem:[#allocation2 + $0x78] sm:$0xf]
    %v8297 = vld [vmem:[#allocation2 + $0x7c] sm:$0xf]
    %v8298 = vld [vmem:[#allocation2 + $0x80] sm:$0xf]
    %v8299 = vld [vmem:[#allocation2 + $0x84] sm:$0xf]
    %v8300 = vld [vmem:[#allocation2 + $0x88] sm:$0xf]
    %v8301 = vld [vmem:[#allocation2 + $0x8c] sm:$0xf]
    %v8302 = vld [vmem:[#allocation2 + $0x90] sm:$0xf]
    %v8303 = vld [vmem:[#allocation2 + $0x94] sm:$0xf]
    %v8304 = vld [vmem:[#allocation2 + $0x98] sm:$0xf]
    %v8305 = vld [vmem:[#allocation2 + $0x9c] sm:$0xf]
    %v8306 = vld [vmem:[#allocation2 + $0xa0] sm:$0xf]
    %v8307 = vld [vmem:[#allocation2 + $0xa4] sm:$0xf]
    %v8308 = vld [vmem:[#allocation2 + $0xa8] sm:$0xf]
    %v8309 = vld [vmem:[#allocation2 + $0xac] sm:$0xf]
    %v8310 = vld [vmem:[#allocation2 + $0xb0] sm:$0x1]
    %v8344 = vrot.slane %v8278, 5
    %v8345 = vrot.slane %v8344, 4
    %v8346 = vrot.slane %v8279, 5
    %v8347 = vsel %vm3143, %v8345, %v8346
    %v8348 = vrot.slane %v8346, 4
    %v8349 = vrot.slane %v8280, 5
    %v8350 = vsel %vm3143, %v8348, %v8349
    %v8351 = vrot.slane %v8349, 4
    %v8352 = vrot.slane %v8281, 5
    %v8353 = vsel %vm3143, %v8351, %v8352
    %v8354 = vrot.slane %v8352, 4
    %v8355 = vrot.slane %v8282, 5
    %v8356 = vsel %vm3143, %v8354, %v8355
    %v8357 = vrot.slane %v8355, 4
    %v8358 = vrot.slane %v8283, 5
    %v8359 = vsel %vm3143, %v8357, %v8358
    %v8360 = vrot.slane %v8358, 4
    %v8361 = vrot.slane %v8284, 5
    %v8362 = vsel %vm3143, %v8360, %v8361
    %v8363 = vrot.slane %v8361, 4
    %v8364 = vrot.slane %v8285, 5
    %v8365 = vsel %vm3143, %v8363, %v8364
    %v8366 = vrot.slane %v8364, 4
    %v8367 = vrot.slane %v8286, 5
    %v8368 = vsel %vm3143, %v8366, %v8367
    %v8369 = vrot.slane %v8367, 4
    %v8370 = vrot.slane %v8287, 5
    %v8371 = vsel %vm3143, %v8369, %v8370
    %v8372 = vrot.slane %v8370, 4
    %v8373 = vrot.slane %v8288, 5
    %v8374 = vsel %vm3143, %v8372, %v8373
    %v8375 = vrot.slane %v8373, 4
    %v8376 = vrot.slane %v8289, 5
    %v8377 = vsel %vm3143, %v8375, %v8376
    %v8378 = vrot.slane %v8376, 4
    %v8379 = vrot.slane %v8290, 5
    %v8380 = vsel %vm3143, %v8378, %v8379
    %v8381 = vrot.slane %v8379, 4
    %v8382 = vrot.slane %v8291, 5
    %v8383 = vsel %vm3143, %v8381, %v8382
    %v8384 = vrot.slane %v8382, 4
    %v8385 = vrot.slane %v8292, 5
    %v8386 = vsel %vm3143, %v8384, %v8385
    %v8387 = vrot.slane %v8385, 4
    %v8388 = vrot.slane %v8293, 5
    %v8389 = vsel %vm3143, %v8387, %v8388
    %v8390 = vrot.slane %v8388, 4
    %v8391 = vrot.slane %v8294, 5
    %v8392 = vsel %vm3143, %v8390, %v8391
    %v8393 = vrot.slane %v8391, 4
    %v8394 = vrot.slane %v8295, 5
    %v8395 = vsel %vm3143, %v8393, %v8394
    %v8396 = vrot.slane %v8394, 4
    %v8397 = vrot.slane %v8296, 5
    %v8398 = vsel %vm3143, %v8396, %v8397
    %v8399 = vrot.slane %v8397, 4
    %v8400 = vrot.slane %v8297, 5
    %v8401 = vsel %vm3143, %v8399, %v8400
    %v8402 = vrot.slane %v8400, 4
    %v8403 = vrot.slane %v8298, 5
    %v8404 = vsel %vm3143, %v8402, %v8403
    %v8405 = vrot.slane %v8403, 4
    %v8406 = vrot.slane %v8299, 5
    %v8407 = vsel %vm3143, %v8405, %v8406
    %v8408 = vrot.slane %v8406, 4
    %v8409 = vrot.slane %v8300, 5
    %v8410 = vsel %vm3143, %v8408, %v8409
    %v8411 = vrot.slane %v8409, 4
    %v8412 = vrot.slane %v8301, 5
    %v8413 = vsel %vm3143, %v8411, %v8412
    %v8414 = vrot.slane %v8412, 4
    %v8415 = vrot.slane %v8302, 5
    %v8416 = vsel %vm3143, %v8414, %v8415
    %v8417 = vrot.slane %v8415, 4
    %v8418 = vrot.slane %v8303, 5
    %v8419 = vsel %vm3143, %v8417, %v8418
    %v8420 = vrot.slane %v8418, 4
    %v8421 = vrot.slane %v8304, 5
    %v8422 = vsel %vm3143, %v8420, %v8421
    %v8423 = vrot.slane %v8421, 4
    %v8424 = vrot.slane %v8305, 5
    %v8425 = vsel %vm3143, %v8423, %v8424
    %v8426 = vrot.slane %v8424, 4
    %v8427 = vrot.slane %v8306, 5
    %v8428 = vsel %vm3143, %v8426, %v8427
    %v8429 = vrot.slane %v8427, 4
    %v8430 = vrot.slane %v8307, 5
    %v8431 = vsel %vm3143, %v8429, %v8430
    %v8432 = vrot.slane %v8430, 4
    %v8433 = vrot.slane %v8308, 5
    %v8434 = vsel %vm3143, %v8432, %v8433
    %v8435 = vrot.slane %v8433, 4
    %v8436 = vrot.slane %v8309, 5
    %v8437 = vsel %vm3143, %v8435, %v8436
    %v8438 = vrot.slane %v8436, 4
    %v8439 = vrot.slane %v8310, 5
    %v8440 = vsel %vm3143, %v8438, %v8439
    %8441 = vrot.lane.b32.xlu0 %v8347, 8
    %v8442 = vpop.permute.xlu0 %8441
    %8443 = vrot.lane.b32.xlu0 %v8350, 8
    %v8444 = vpop.permute.xlu0 %8443
    %8445 = vrot.lane.b32.xlu0 %v8353, 8
    %v8446 = vpop.permute.xlu0 %8445
    %8447 = vrot.lane.b32.xlu0 %v8356, 8
    %v8448 = vpop.permute.xlu0 %8447
    %8449 = vrot.lane.b32.xlu0 %v8359, 8
    %v8450 = vpop.permute.xlu0 %8449
    %8451 = vrot.lane.b32.xlu0 %v8362, 8
    %v8452 = vpop.permute.xlu0 %8451
    %8453 = vrot.lane.b32.xlu0 %v8365, 8
    %v8454 = vpop.permute.xlu0 %8453
    %8455 = vrot.lane.b32.xlu0 %v8368, 8
    %v8456 = vpop.permute.xlu0 %8455
    %8457 = vrot.lane.b32.xlu0 %v8371, 8
    %v8458 = vpop.permute.xlu0 %8457
    %8459 = vrot.lane.b32.xlu0 %v8374, 8
    %v8460 = vpop.permute.xlu0 %8459
    %8461 = vrot.lane.b32.xlu0 %v8377, 8
    %v8462 = vpop.permute.xlu0 %8461
    %8463 = vrot.lane.b32.xlu0 %v8380, 8
    %v8464 = vpop.permute.xlu0 %8463
    %8465 = vrot.lane.b32.xlu0 %v8383, 8
    %v8466 = vpop.permute.xlu0 %8465
    %8467 = vrot.lane.b32.xlu0 %v8386, 8
    %v8468 = vpop.permute.xlu0 %8467
    %8469 = vrot.lane.b32.xlu0 %v8389, 8
    %v8470 = vpop.permute.xlu0 %8469
    %8471 = vrot.lane.b32.xlu0 %v8392, 8
    %v8472 = vpop.permute.xlu0 %8471
    %8473 = vrot.lane.b32.xlu0 %v8395, 8
    %v8474 = vpop.permute.xlu0 %8473
    %8475 = vrot.lane.b32.xlu0 %v8398, 8
    %v8476 = vpop.permute.xlu0 %8475
    %8477 = vrot.lane.b32.xlu0 %v8401, 8
    %v8478 = vpop.permute.xlu0 %8477
    %8479 = vrot.lane.b32.xlu0 %v8404, 8
    %v8480 = vpop.permute.xlu0 %8479
    %8481 = vrot.lane.b32.xlu0 %v8407, 8
    %v8482 = vpop.permute.xlu0 %8481
    %8483 = vrot.lane.b32.xlu0 %v8410, 8
    %v8484 = vpop.permute.xlu0 %8483
    %8485 = vrot.lane.b32.xlu0 %v8413, 8
    %v8486 = vpop.permute.xlu0 %8485
    %8487 = vrot.lane.b32.xlu0 %v8416, 8
    %v8488 = vpop.permute.xlu0 %8487
    %8489 = vrot.lane.b32.xlu0 %v8419, 8
    %v8490 = vpop.permute.xlu0 %8489
    %8491 = vrot.lane.b32.xlu0 %v8422, 8
    %v8492 = vpop.permute.xlu0 %8491
    %8493 = vrot.lane.b32.xlu0 %v8425, 8
    %v8494 = vpop.permute.xlu0 %8493
    %8495 = vrot.lane.b32.xlu0 %v8428, 8
    %v8496 = vpop.permute.xlu0 %8495
    %8497 = vrot.lane.b32.xlu0 %v8431, 8
    %v8498 = vpop.permute.xlu0 %8497
    %8499 = vrot.lane.b32.xlu0 %v8434, 8
    %v8500 = vpop.permute.xlu0 %8499
    %8501 = vrot.lane.b32.xlu0 %v8437, 8
    %v8502 = vpop.permute.xlu0 %8501
    %8503 = vrot.lane.b32.xlu0 %v8440, 8
    %v8504 = vpop.permute.xlu0 %8503
    %8537 = vst.msk [vmem:[#allocation3 + $0x4] sm:$0xf] %vm3042, %v8442
    %8538 = vst.msk [vmem:[#allocation3 + $0xc] sm:$0xf] %vm3042, %v8444
    %8539 = vst.msk [vmem:[#allocation3 + $0x14] sm:$0xf] %vm3042, %v8446
    %8540 = vst.msk [vmem:[#allocation3 + $0x1c] sm:$0xf] %vm3042, %v8448
    %8541 = vst.msk [vmem:[#allocation3 + $0x24] sm:$0xf] %vm3042, %v8450
    %8542 = vst.msk [vmem:[#allocation3 + $0x2c] sm:$0xf] %vm3042, %v8452
    %8543 = vst.msk [vmem:[#allocation3 + $0x34] sm:$0xf] %vm3042, %v8454
    %8544 = vst.msk [vmem:[#allocation3 + $0x3c] sm:$0xf] %vm3042, %v8456
    %8545 = vst.msk [vmem:[#allocation3 + $0x44] sm:$0xf] %vm3042, %v8458
    %8546 = vst.msk [vmem:[#allocation3 + $0x4c] sm:$0xf] %vm3042, %v8460
    %8547 = vst.msk [vmem:[#allocation3 + $0x54] sm:$0xf] %vm3042, %v8462
    %8548 = vst.msk [vmem:[#allocation3 + $0x5c] sm:$0xf] %vm3042, %v8464
    %8549 = vst.msk [vmem:[#allocation3 + $0x64] sm:$0xf] %vm3042, %v8466
    %8550 = vst.msk [vmem:[#allocation3 + $0x6c] sm:$0xf] %vm3042, %v8468
    %8551 = vst.msk [vmem:[#allocation3 + $0x74] sm:$0xf] %vm3042, %v8470
    %8552 = vst.msk [vmem:[#allocation3 + $0x7c] sm:$0xf] %vm3042, %v8472
    %8553 = vst.msk [vmem:[#allocation3 + $0x84] sm:$0xf] %vm3042, %v8474
    %8554 = vst.msk [vmem:[#allocation3 + $0x8c] sm:$0xf] %vm3042, %v8476
    %8555 = vst.msk [vmem:[#allocation3 + $0x94] sm:$0xf] %vm3042, %v8478
    %8556 = vst.msk [vmem:[#allocation3 + $0x9c] sm:$0xf] %vm3042, %v8480
    %8557 = vst.msk [vmem:[#allocation3 + $0xa4] sm:$0xf] %vm3042, %v8482
    %8558 = vst.msk [vmem:[#allocation3 + $0xac] sm:$0xf] %vm3042, %v8484
    %8559 = vst.msk [vmem:[#allocation3 + $0xb4] sm:$0xf] %vm3042, %v8486
    %8560 = vst.msk [vmem:[#allocation3 + $0xbc] sm:$0xf] %vm3042, %v8488
    %8561 = vst.msk [vmem:[#allocation3 + $0xc4] sm:$0xf] %vm3042, %v8490
    %8562 = vst.msk [vmem:[#allocation3 + $0xcc] sm:$0xf] %vm3042, %v8492
    %8563 = vst.msk [vmem:[#allocation3 + $0xd4] sm:$0xf] %vm3042, %v8494
    %8564 = vst.msk [vmem:[#allocation3 + $0xdc] sm:$0xf] %vm3042, %v8496
    %8565 = vst.msk [vmem:[#allocation3 + $0xe4] sm:$0xf] %vm3042, %v8498
    %8566 = vst.msk [vmem:[#allocation3 + $0xec] sm:$0xf] %vm3042, %v8500
    %8567 = vst.msk [vmem:[#allocation3 + $0xf4] sm:$0xf] %vm3042, %v8502
    %8568 = vst.msk [vmem:[#allocation3 + $0xfc] sm:$0xf] %vm3042, %v8504
    %v8569 = vld [vmem:[#allocation2 + $0x30] sm:$0xe]
    %v8570 = vld [vmem:[#allocation2 + $0x34] sm:$0xf]
    %v8571 = vld [vmem:[#allocation2 + $0x38] sm:$0xf]
    %v8572 = vld [vmem:[#allocation2 + $0x3c] sm:$0xf]
    %v8573 = vld [vmem:[#allocation2 + $0x40] sm:$0xf]
    %v8574 = vld [vmem:[#allocation2 + $0x44] sm:$0xf]
    %v8575 = vld [vmem:[#allocation2 + $0x48] sm:$0xf]
    %v8576 = vld [vmem:[#allocation2 + $0x4c] sm:$0xf]
    %v8577 = vld [vmem:[#allocation2 + $0x50] sm:$0xf]
    %v8578 = vld [vmem:[#allocation2 + $0x54] sm:$0xf]
    %v8579 = vld [vmem:[#allocation2 + $0x58] sm:$0xf]
    %v8580 = vld [vmem:[#allocation2 + $0x5c] sm:$0xf]
    %v8581 = vld [vmem:[#allocation2 + $0x60] sm:$0xf]
    %v8582 = vld [vmem:[#allocation2 + $0x64] sm:$0xf]
    %v8583 = vld [vmem:[#allocation2 + $0x68] sm:$0xf]
    %v8584 = vld [vmem:[#allocation2 + $0x6c] sm:$0xf]
    %v8585 = vld [vmem:[#allocation2 + $0x70] sm:$0xf]
    %v8586 = vld [vmem:[#allocation2 + $0x74] sm:$0xf]
    %v8587 = vld [vmem:[#allocation2 + $0x78] sm:$0xf]
    %v8588 = vld [vmem:[#allocation2 + $0x7c] sm:$0xf]
    %v8589 = vld [vmem:[#allocation2 + $0x80] sm:$0xf]
    %v8590 = vld [vmem:[#allocation2 + $0x84] sm:$0xf]
    %v8591 = vld [vmem:[#allocation2 + $0x88] sm:$0xf]
    %v8592 = vld [vmem:[#allocation2 + $0x8c] sm:$0xf]
    %v8593 = vld [vmem:[#allocation2 + $0x90] sm:$0xf]
    %v8594 = vld [vmem:[#allocation2 + $0x94] sm:$0xf]
    %v8595 = vld [vmem:[#allocation2 + $0x98] sm:$0xf]
    %v8596 = vld [vmem:[#allocation2 + $0x9c] sm:$0xf]
    %v8597 = vld [vmem:[#allocation2 + $0xa0] sm:$0xf]
    %v8598 = vld [vmem:[#allocation2 + $0xa4] sm:$0xf]
    %v8599 = vld [vmem:[#allocation2 + $0xa8] sm:$0xf]
    %v8600 = vld [vmem:[#allocation2 + $0xac] sm:$0xf]
    %v8601 = vld [vmem:[#allocation2 + $0xb0] sm:$0x3]
    %v8603 = vshrl.u32 %v8569, 16
    %v8605 = vrot.slane %v8603, 5
    %v8606 = vshll.u32 %v8569, 16
    %v8608 = vrot.slane %v8606, 6
    %v8609 = vor.u32 %v8605, %v8608
    %v8610 = vrot.slane %v8609, 4
    %v8612 = vshrl.u32 %v8570, 16
    %v8614 = vrot.slane %v8612, 5
    %v8615 = vshll.u32 %v8570, 16
    %v8617 = vrot.slane %v8615, 6
    %v8618 = vor.u32 %v8614, %v8617
    %v8619 = vsel %vm3405, %v8610, %v8618
    %v8620 = vrot.slane %v8618, 4
    %v8622 = vshrl.u32 %v8571, 16
    %v8624 = vrot.slane %v8622, 5
    %v8625 = vshll.u32 %v8571, 16
    %v8627 = vrot.slane %v8625, 6
    %v8628 = vor.u32 %v8624, %v8627
    %v8629 = vsel %vm3405, %v8620, %v8628
    %v8630 = vrot.slane %v8628, 4
    %v8632 = vshrl.u32 %v8572, 16
    %v8634 = vrot.slane %v8632, 5
    %v8635 = vshll.u32 %v8572, 16
    %v8637 = vrot.slane %v8635, 6
    %v8638 = vor.u32 %v8634, %v8637
    %v8639 = vsel %vm3405, %v8630, %v8638
    %v8640 = vrot.slane %v8638, 4
    %v8642 = vshrl.u32 %v8573, 16
    %v8644 = vrot.slane %v8642, 5
    %v8645 = vshll.u32 %v8573, 16
    %v8647 = vrot.slane %v8645, 6
    %v8648 = vor.u32 %v8644, %v8647
    %v8649 = vsel %vm3405, %v8640, %v8648
    %v8650 = vrot.slane %v8648, 4
    %v8652 = vshrl.u32 %v8574, 16
    %v8654 = vrot.slane %v8652, 5
    %v8655 = vshll.u32 %v8574, 16
    %v8657 = vrot.slane %v8655, 6
    %v8658 = vor.u32 %v8654, %v8657
    %v8659 = vsel %vm3405, %v8650, %v8658
    %v8660 = vrot.slane %v8658, 4
    %v8662 = vshrl.u32 %v8575, 16
    %v8664 = vrot.slane %v8662, 5
    %v8665 = vshll.u32 %v8575, 16
    %v8667 = vrot.slane %v8665, 6
    %v8668 = vor.u32 %v8664, %v8667
    %v8669 = vsel %vm3405, %v8660, %v8668
    %v8670 = vrot.slane %v8668, 4
    %v8672 = vshrl.u32 %v8576, 16
    %v8674 = vrot.slane %v8672, 5
    %v8675 = vshll.u32 %v8576, 16
    %v8677 = vrot.slane %v8675, 6
    %v8678 = vor.u32 %v8674, %v8677
    %v8679 = vsel %vm3405, %v8670, %v8678
    %v8680 = vrot.slane %v8678, 4
    %v8682 = vshrl.u32 %v8577, 16
    %v8684 = vrot.slane %v8682, 5
    %v8685 = vshll.u32 %v8577, 16
    %v8687 = vrot.slane %v8685, 6
    %v8688 = vor.u32 %v8684, %v8687
    %v8689 = vsel %vm3405, %v8680, %v8688
    %v8690 = vrot.slane %v8688, 4
    %v8692 = vshrl.u32 %v8578, 16
    %v8694 = vrot.slane %v8692, 5
    %v8695 = vshll.u32 %v8578, 16
    %v8697 = vrot.slane %v8695, 6
    %v8698 = vor.u32 %v8694, %v8697
    %v8699 = vsel %vm3405, %v8690, %v8698
    %v8700 = vrot.slane %v8698, 4
    %v8702 = vshrl.u32 %v8579, 16
    %v8704 = vrot.slane %v8702, 5
    %v8705 = vshll.u32 %v8579, 16
    %v8707 = vrot.slane %v8705, 6
    %v8708 = vor.u32 %v8704, %v8707
    %v8709 = vsel %vm3405, %v8700, %v8708
    %v8710 = vrot.slane %v8708, 4
    %v8712 = vshrl.u32 %v8580, 16
    %v8714 = vrot.slane %v8712, 5
    %v8715 = vshll.u32 %v8580, 16
    %v8717 = vrot.slane %v8715, 6
    %v8718 = vor.u32 %v8714, %v8717
    %v8719 = vsel %vm3405, %v8710, %v8718
    %v8720 = vrot.slane %v8718, 4
    %v8722 = vshrl.u32 %v8581, 16
    %v8724 = vrot.slane %v8722, 5
    %v8725 = vshll.u32 %v8581, 16
    %v8727 = vrot.slane %v8725, 6
    %v8728 = vor.u32 %v8724, %v8727
    %v8729 = vsel %vm3405, %v8720, %v8728
    %v8730 = vrot.slane %v8728, 4
    %v8732 = vshrl.u32 %v8582, 16
    %v8734 = vrot.slane %v8732, 5
    %v8735 = vshll.u32 %v8582, 16
    %v8737 = vrot.slane %v8735, 6
    %v8738 = vor.u32 %v8734, %v8737
    %v8739 = vsel %vm3405, %v8730, %v8738
    %v8740 = vrot.slane %v8738, 4
    %v8742 = vshrl.u32 %v8583, 16
    %v8744 = vrot.slane %v8742, 5
    %v8745 = vshll.u32 %v8583, 16
    %v8747 = vrot.slane %v8745, 6
    %v8748 = vor.u32 %v8744, %v8747
    %v8749 = vsel %vm3405, %v8740, %v8748
    %v8750 = vrot.slane %v8748, 4
    %v8752 = vshrl.u32 %v8584, 16
    %v8754 = vrot.slane %v8752, 5
    %v8755 = vshll.u32 %v8584, 16
    %v8757 = vrot.slane %v8755, 6
    %v8758 = vor.u32 %v8754, %v8757
    %v8759 = vsel %vm3405, %v8750, %v8758
    %v8760 = vrot.slane %v8758, 4
    %v8762 = vshrl.u32 %v8585, 16
    %v8764 = vrot.slane %v8762, 5
    %v8765 = vshll.u32 %v8585, 16
    %v8767 = vrot.slane %v8765, 6
    %v8768 = vor.u32 %v8764, %v8767
    %v8769 = vsel %vm3405, %v8760, %v8768
    %v8770 = vrot.slane %v8768, 4
    %v8772 = vshrl.u32 %v8586, 16
    %v8774 = vrot.slane %v8772, 5
    %v8775 = vshll.u32 %v8586, 16
    %v8777 = vrot.slane %v8775, 6
    %v8778 = vor.u32 %v8774, %v8777
    %v8779 = vsel %vm3405, %v8770, %v8778
    %v8780 = vrot.slane %v8778, 4
    %v8782 = vshrl.u32 %v8587, 16
    %v8784 = vrot.slane %v8782, 5
    %v8785 = vshll.u32 %v8587, 16
    %v8787 = vrot.slane %v8785, 6
    %v8788 = vor.u32 %v8784, %v8787
    %v8789 = vsel %vm3405, %v8780, %v8788
    %v8790 = vrot.slane %v8788, 4
    %v8792 = vshrl.u32 %v8588, 16
    %v8794 = vrot.slane %v8792, 5
    %v8795 = vshll.u32 %v8588, 16
    %v8797 = vrot.slane %v8795, 6
    %v8798 = vor.u32 %v8794, %v8797
    %v8799 = vsel %vm3405, %v8790, %v8798
    %v8800 = vrot.slane %v8798, 4
    %v8802 = vshrl.u32 %v8589, 16
    %v8804 = vrot.slane %v8802, 5
    %v8805 = vshll.u32 %v8589, 16
    %v8807 = vrot.slane %v8805, 6
    %v8808 = vor.u32 %v8804, %v8807
    %v8809 = vsel %vm3405, %v8800, %v8808
    %v8810 = vrot.slane %v8808, 4
    %v8812 = vshrl.u32 %v8590, 16
    %v8814 = vrot.slane %v8812, 5
    %v8815 = vshll.u32 %v8590, 16
    %v8817 = vrot.slane %v8815, 6
    %v8818 = vor.u32 %v8814, %v8817
    %v8819 = vsel %vm3405, %v8810, %v8818
    %v8820 = vrot.slane %v8818, 4
    %v8822 = vshrl.u32 %v8591, 16
    %v8824 = vrot.slane %v8822, 5
    %v8825 = vshll.u32 %v8591, 16
    %v8827 = vrot.slane %v8825, 6
    %v8828 = vor.u32 %v8824, %v8827
    %v8829 = vsel %vm3405, %v8820, %v8828
    %v8830 = vrot.slane %v8828, 4
    %v8832 = vshrl.u32 %v8592, 16
    %v8834 = vrot.slane %v8832, 5
    %v8835 = vshll.u32 %v8592, 16
    %v8837 = vrot.slane %v8835, 6
    %v8838 = vor.u32 %v8834, %v8837
    %v8839 = vsel %vm3405, %v8830, %v8838
    %v8840 = vrot.slane %v8838, 4
    %v8842 = vshrl.u32 %v8593, 16
    %v8844 = vrot.slane %v8842, 5
    %v8845 = vshll.u32 %v8593, 16
    %v8847 = vrot.slane %v8845, 6
    %v8848 = vor.u32 %v8844, %v8847
    %v8849 = vsel %vm3405, %v8840, %v8848
    %v8850 = vrot.slane %v8848, 4
    %v8852 = vshrl.u32 %v8594, 16
    %v8854 = vrot.slane %v8852, 5
    %v8855 = vshll.u32 %v8594, 16
    %v8857 = vrot.slane %v8855, 6
    %v8858 = vor.u32 %v8854, %v8857
    %v8859 = vsel %vm3405, %v8850, %v8858
    %v8860 = vrot.slane %v8858, 4
    %v8862 = vshrl.u32 %v8595, 16
    %v8864 = vrot.slane %v8862, 5
    %v8865 = vshll.u32 %v8595, 16
    %v8867 = vrot.slane %v8865, 6
    %v8868 = vor.u32 %v8864, %v8867
    %v8869 = vsel %vm3405, %v8860, %v8868
    %v8870 = vrot.slane %v8868, 4
    %v8872 = vshrl.u32 %v8596, 16
    %v8874 = vrot.slane %v8872, 5
    %v8875 = vshll.u32 %v8596, 16
    %v8877 = vrot.slane %v8875, 6
    %v8878 = vor.u32 %v8874, %v8877
    %v8879 = vsel %vm3405, %v8870, %v8878
    %v8880 = vrot.slane %v8878, 4
    %v8882 = vshrl.u32 %v8597, 16
    %v8884 = vrot.slane %v8882, 5
    %v8885 = vshll.u32 %v8597, 16
    %v8887 = vrot.slane %v8885, 6
    %v8888 = vor.u32 %v8884, %v8887
    %v8889 = vsel %vm3405, %v8880, %v8888
    %v8890 = vrot.slane %v8888, 4
    %v8892 = vshrl.u32 %v8598, 16
    %v8894 = vrot.slane %v8892, 5
    %v8895 = vshll.u32 %v8598, 16
    %v8897 = vrot.slane %v8895, 6
    %v8898 = vor.u32 %v8894, %v8897
    %v8899 = vsel %vm3405, %v8890, %v8898
    %v8900 = vrot.slane %v8898, 4
    %v8902 = vshrl.u32 %v8599, 16
    %v8904 = vrot.slane %v8902, 5
    %v8905 = vshll.u32 %v8599, 16
    %v8907 = vrot.slane %v8905, 6
    %v8908 = vor.u32 %v8904, %v8907
    %v8909 = vsel %vm3405, %v8900, %v8908
    %v8910 = vrot.slane %v8908, 4
    %v8912 = vshrl.u32 %v8600, 16
    %v8914 = vrot.slane %v8912, 5
    %v8915 = vshll.u32 %v8600, 16
    %v8917 = vrot.slane %v8915, 6
    %v8918 = vor.u32 %v8914, %v8917
    %v8919 = vsel %vm3405, %v8910, %v8918
    %v8920 = vrot.slane %v8918, 4
    %v8922 = vshrl.u32 %v8601, 16
    %v8924 = vrot.slane %v8922, 5
    %v8925 = vshll.u32 %v8601, 16
    %v8927 = vrot.slane %v8925, 6
    %v8928 = vor.u32 %v8924, %v8927
    %v8929 = vsel %vm3405, %v8920, %v8928
    %8930 = vrot.lane.b32.xlu0 %v8619, 16
    %v8931 = vpop.permute.xlu0 %8930
    %8932 = vrot.lane.b32.xlu0 %v8629, 16
    %v8933 = vpop.permute.xlu0 %8932
    %8934 = vrot.lane.b32.xlu0 %v8639, 16
    %v8935 = vpop.permute.xlu0 %8934
    %8936 = vrot.lane.b32.xlu0 %v8649, 16
    %v8937 = vpop.permute.xlu0 %8936
    %8938 = vrot.lane.b32.xlu0 %v8659, 16
    %v8939 = vpop.permute.xlu0 %8938
    %8940 = vrot.lane.b32.xlu0 %v8669, 16
    %v8941 = vpop.permute.xlu0 %8940
    %8942 = vrot.lane.b32.xlu0 %v8679, 16
    %v8943 = vpop.permute.xlu0 %8942
    %8944 = vrot.lane.b32.xlu0 %v8689, 16
    %v8945 = vpop.permute.xlu0 %8944
    %8946 = vrot.lane.b32.xlu0 %v8699, 16
    %v8947 = vpop.permute.xlu0 %8946
    %8948 = vrot.lane.b32.xlu0 %v8709, 16
    %v8949 = vpop.permute.xlu0 %8948
    %8950 = vrot.lane.b32.xlu0 %v8719, 16
    %v8951 = vpop.permute.xlu0 %8950
    %8952 = vrot.lane.b32.xlu0 %v8729, 16
    %v8953 = vpop.permute.xlu0 %8952
    %8954 = vrot.lane.b32.xlu0 %v8739, 16
    %v8955 = vpop.permute.xlu0 %8954
    %8956 = vrot.lane.b32.xlu0 %v8749, 16
    %v8957 = vpop.permute.xlu0 %8956
    %8958 = vrot.lane.b32.xlu0 %v8759, 16
    %v8959 = vpop.permute.xlu0 %8958
    %8960 = vrot.lane.b32.xlu0 %v8769, 16
    %v8961 = vpop.permute.xlu0 %8960
    %8962 = vrot.lane.b32.xlu0 %v8779, 16
    %v8963 = vpop.permute.xlu0 %8962
    %8964 = vrot.lane.b32.xlu0 %v8789, 16
    %v8965 = vpop.permute.xlu0 %8964
    %8966 = vrot.lane.b32.xlu0 %v8799, 16
    %v8967 = vpop.permute.xlu0 %8966
    %8968 = vrot.lane.b32.xlu0 %v8809, 16
    %v8969 = vpop.permute.xlu0 %8968
    %8970 = vrot.lane.b32.xlu0 %v8819, 16
    %v8971 = vpop.permute.xlu0 %8970
    %8972 = vrot.lane.b32.xlu0 %v8829, 16
    %v8973 = vpop.permute.xlu0 %8972
    %8974 = vrot.lane.b32.xlu0 %v8839, 16
    %v8975 = vpop.permute.xlu0 %8974
    %8976 = vrot.lane.b32.xlu0 %v8849, 16
    %v8977 = vpop.permute.xlu0 %8976
    %8978 = vrot.lane.b32.xlu0 %v8859, 16
    %v8979 = vpop.permute.xlu0 %8978
    %8980 = vrot.lane.b32.xlu0 %v8869, 16
    %v8981 = vpop.permute.xlu0 %8980
    %8982 = vrot.lane.b32.xlu0 %v8879, 16
    %v8983 = vpop.permute.xlu0 %8982
    %8984 = vrot.lane.b32.xlu0 %v8889, 16
    %v8985 = vpop.permute.xlu0 %8984
    %8986 = vrot.lane.b32.xlu0 %v8899, 16
    %v8987 = vpop.permute.xlu0 %8986
    %8988 = vrot.lane.b32.xlu0 %v8909, 16
    %v8989 = vpop.permute.xlu0 %8988
    %8990 = vrot.lane.b32.xlu0 %v8919, 16
    %v8991 = vpop.permute.xlu0 %8990
    %8992 = vrot.lane.b32.xlu0 %v8929, 16
    %v8993 = vpop.permute.xlu0 %8992
    %9026 = vst.msk [vmem:[#allocation3 + $0x4] sm:$0xf] %vm3337, %v8931
    %9027 = vst.msk [vmem:[#allocation3 + $0xc] sm:$0xf] %vm3337, %v8933
    %9028 = vst.msk [vmem:[#allocation3 + $0x14] sm:$0xf] %vm3337, %v8935
    %9029 = vst.msk [vmem:[#allocation3 + $0x1c] sm:$0xf] %vm3337, %v8937
    %9030 = vst.msk [vmem:[#allocation3 + $0x24] sm:$0xf] %vm3337, %v8939
    %9031 = vst.msk [vmem:[#allocation3 + $0x2c] sm:$0xf] %vm3337, %v8941
    %9032 = vst.msk [vmem:[#allocation3 + $0x34] sm:$0xf] %vm3337, %v8943
    %9033 = vst.msk [vmem:[#allocation3 + $0x3c] sm:$0xf] %vm3337, %v8945
    %9034 = vst.msk [vmem:[#allocation3 + $0x44] sm:$0xf] %vm3337, %v8947
    %9035 = vst.msk [vmem:[#allocation3 + $0x4c] sm:$0xf] %vm3337, %v8949
    %9036 = vst.msk [vmem:[#allocation3 + $0x54] sm:$0xf] %vm3337, %v8951
    %9037 = vst.msk [vmem:[#allocation3 + $0x5c] sm:$0xf] %vm3337, %v8953
    %9038 = vst.msk [vmem:[#allocation3 + $0x64] sm:$0xf] %vm3337, %v8955
    %9039 = vst.msk [vmem:[#allocation3 + $0x6c] sm:$0xf] %vm3337, %v8957
    %9040 = vst.msk [vmem:[#allocation3 + $0x74] sm:$0xf] %vm3337, %v8959
    %9041 = vst.msk [vmem:[#allocation3 + $0x7c] sm:$0xf] %vm3337, %v8961
    %9042 = vst.msk [vmem:[#allocation3 + $0x84] sm:$0xf] %vm3337, %v8963
    %9043 = vst.msk [vmem:[#allocation3 + $0x8c] sm:$0xf] %vm3337, %v8965
    %9044 = vst.msk [vmem:[#allocation3 + $0x94] sm:$0xf] %vm3337, %v8967
    %9045 = vst.msk [vmem:[#allocation3 + $0x9c] sm:$0xf] %vm3337, %v8969
    %9046 = vst.msk [vmem:[#allocation3 + $0xa4] sm:$0xf] %vm3337, %v8971
    %9047 = vst.msk [vmem:[#allocation3 + $0xac] sm:$0xf] %vm3337, %v8973
    %9048 = vst.msk [vmem:[#allocation3 + $0xb4] sm:$0xf] %vm3337, %v8975
    %9049 = vst.msk [vmem:[#allocation3 + $0xbc] sm:$0xf] %vm3337, %v8977
    %9050 = vst.msk [vmem:[#allocation3 + $0xc4] sm:$0xf] %vm3337, %v8979
    %9051 = vst.msk [vmem:[#allocation3 + $0xcc] sm:$0xf] %vm3337, %v8981
    %9052 = vst.msk [vmem:[#allocation3 + $0xd4] sm:$0xf] %vm3337, %v8983
    %9053 = vst.msk [vmem:[#allocation3 + $0xdc] sm:$0xf] %vm3337, %v8985
    %9054 = vst.msk [vmem:[#allocation3 + $0xe4] sm:$0xf] %vm3337, %v8987
    %9055 = vst.msk [vmem:[#allocation3 + $0xec] sm:$0xf] %vm3337, %v8989
    %9056 = vst.msk [vmem:[#allocation3 + $0xf4] sm:$0xf] %vm3337, %v8991
    %9057 = vst.msk [vmem:[#allocation3 + $0xfc] sm:$0xf] %vm3337, %v8993
    %v9058 = vld [vmem:[#allocation2 + $0x30] sm:$0xc]
    %v9059 = vld [vmem:[#allocation2 + $0x34] sm:$0xf]
    %v9060 = vld [vmem:[#allocation2 + $0x38] sm:$0xf]
    %v9061 = vld [vmem:[#allocation2 + $0x3c] sm:$0xf]
    %v9062 = vld [vmem:[#allocation2 + $0x40] sm:$0xf]
    %v9063 = vld [vmem:[#allocation2 + $0x44] sm:$0xf]
    %v9064 = vld [vmem:[#allocation2 + $0x48] sm:$0xf]
    %v9065 = vld [vmem:[#allocation2 + $0x4c] sm:$0xf]
    %v9066 = vld [vmem:[#allocation2 + $0x50] sm:$0xf]
    %v9067 = vld [vmem:[#allocation2 + $0x54] sm:$0xf]
    %v9068 = vld [vmem:[#allocation2 + $0x58] sm:$0xf]
    %v9069 = vld [vmem:[#allocation2 + $0x5c] sm:$0xf]
    %v9070 = vld [vmem:[#allocation2 + $0x60] sm:$0xf]
    %v9071 = vld [vmem:[#allocation2 + $0x64] sm:$0xf]
    %v9072 = vld [vmem:[#allocation2 + $0x68] sm:$0xf]
    %v9073 = vld [vmem:[#allocation2 + $0x6c] sm:$0xf]
    %v9074 = vld [vmem:[#allocation2 + $0x70] sm:$0xf]
    %v9075 = vld [vmem:[#allocation2 + $0x74] sm:$0xf]
    %v9076 = vld [vmem:[#allocation2 + $0x78] sm:$0xf]
    %v9077 = vld [vmem:[#allocation2 + $0x7c] sm:$0xf]
    %v9078 = vld [vmem:[#allocation2 + $0x80] sm:$0xf]
    %v9079 = vld [vmem:[#allocation2 + $0x84] sm:$0xf]
    %v9080 = vld [vmem:[#allocation2 + $0x88] sm:$0xf]
    %v9081 = vld [vmem:[#allocation2 + $0x8c] sm:$0xf]
    %v9082 = vld [vmem:[#allocation2 + $0x90] sm:$0xf]
    %v9083 = vld [vmem:[#allocation2 + $0x94] sm:$0xf]
    %v9084 = vld [vmem:[#allocation2 + $0x98] sm:$0xf]
    %v9085 = vld [vmem:[#allocation2 + $0x9c] sm:$0xf]
    %v9086 = vld [vmem:[#allocation2 + $0xa0] sm:$0xf]
    %v9087 = vld [vmem:[#allocation2 + $0xa4] sm:$0xf]
    %v9088 = vld [vmem:[#allocation2 + $0xa8] sm:$0xf]
    %v9089 = vld [vmem:[#allocation2 + $0xac] sm:$0xf]
    %v9090 = vld [vmem:[#allocation2 + $0xb0] sm:$0x3]
    %v9124 = vrot.slane %v9058, 6
    %v9125 = vrot.slane %v9124, 4
    %v9126 = vrot.slane %v9059, 6
    %v9127 = vsel %vm3931, %v9125, %v9126
    %v9128 = vrot.slane %v9126, 4
    %v9129 = vrot.slane %v9060, 6
    %v9130 = vsel %vm3931, %v9128, %v9129
    %v9131 = vrot.slane %v9129, 4
    %v9132 = vrot.slane %v9061, 6
    %v9133 = vsel %vm3931, %v9131, %v9132
    %v9134 = vrot.slane %v9132, 4
    %v9135 = vrot.slane %v9062, 6
    %v9136 = vsel %vm3931, %v9134, %v9135
    %v9137 = vrot.slane %v9135, 4
    %v9138 = vrot.slane %v9063, 6
    %v9139 = vsel %vm3931, %v9137, %v9138
    %v9140 = vrot.slane %v9138, 4
    %v9141 = vrot.slane %v9064, 6
    %v9142 = vsel %vm3931, %v9140, %v9141
    %v9143 = vrot.slane %v9141, 4
    %v9144 = vrot.slane %v9065, 6
    %v9145 = vsel %vm3931, %v9143, %v9144
    %v9146 = vrot.slane %v9144, 4
    %v9147 = vrot.slane %v9066, 6
    %v9148 = vsel %vm3931, %v9146, %v9147
    %v9149 = vrot.slane %v9147, 4
    %v9150 = vrot.slane %v9067, 6
    %v9151 = vsel %vm3931, %v9149, %v9150
    %v9152 = vrot.slane %v9150, 4
    %v9153 = vrot.slane %v9068, 6
    %v9154 = vsel %vm3931, %v9152, %v9153
    %v9155 = vrot.slane %v9153, 4
    %v9156 = vrot.slane %v9069, 6
    %v9157 = vsel %vm3931, %v9155, %v9156
    %v9158 = vrot.slane %v9156, 4
    %v9159 = vrot.slane %v9070, 6
    %v9160 = vsel %vm3931, %v9158, %v9159
    %v9161 = vrot.slane %v9159, 4
    %v9162 = vrot.slane %v9071, 6
    %v9163 = vsel %vm3931, %v9161, %v9162
    %v9164 = vrot.slane %v9162, 4
    %v9165 = vrot.slane %v9072, 6
    %v9166 = vsel %vm3931, %v9164, %v9165
    %v9167 = vrot.slane %v9165, 4
    %v9168 = vrot.slane %v9073, 6
    %v9169 = vsel %vm3931, %v9167, %v9168
    %v9170 = vrot.slane %v9168, 4
    %v9171 = vrot.slane %v9074, 6
    %v9172 = vsel %vm3931, %v9170, %v9171
    %v9173 = vrot.slane %v9171, 4
    %v9174 = vrot.slane %v9075, 6
    %v9175 = vsel %vm3931, %v9173, %v9174
    %v9176 = vrot.slane %v9174, 4
    %v9177 = vrot.slane %v9076, 6
    %v9178 = vsel %vm3931, %v9176, %v9177
    %v9179 = vrot.slane %v9177, 4
    %v9180 = vrot.slane %v9077, 6
    %v9181 = vsel %vm3931, %v9179, %v9180
    %v9182 = vrot.slane %v9180, 4
    %v9183 = vrot.slane %v9078, 6
    %v9184 = vsel %vm3931, %v9182, %v9183
    %v9185 = vrot.slane %v9183, 4
    %v9186 = vrot.slane %v9079, 6
    %v9187 = vsel %vm3931, %v9185, %v9186
    %v9188 = vrot.slane %v9186, 4
    %v9189 = vrot.slane %v9080, 6
    %v9190 = vsel %vm3931, %v9188, %v9189
    %v9191 = vrot.slane %v9189, 4
    %v9192 = vrot.slane %v9081, 6
    %v9193 = vsel %vm3931, %v9191, %v9192
    %v9194 = vrot.slane %v9192, 4
    %v9195 = vrot.slane %v9082, 6
    %v9196 = vsel %vm3931, %v9194, %v9195
    %v9197 = vrot.slane %v9195, 4
    %v9198 = vrot.slane %v9083, 6
    %v9199 = vsel %vm3931, %v9197, %v9198
    %v9200 = vrot.slane %v9198, 4
    %v9201 = vrot.slane %v9084, 6
    %v9202 = vsel %vm3931, %v9200, %v9201
    %v9203 = vrot.slane %v9201, 4
    %v9204 = vrot.slane %v9085, 6
    %v9205 = vsel %vm3931, %v9203, %v9204
    %v9206 = vrot.slane %v9204, 4
    %v9207 = vrot.slane %v9086, 6
    %v9208 = vsel %vm3931, %v9206, %v9207
    %v9209 = vrot.slane %v9207, 4
    %v9210 = vrot.slane %v9087, 6
    %v9211 = vsel %vm3931, %v9209, %v9210
    %v9212 = vrot.slane %v9210, 4
    %v9213 = vrot.slane %v9088, 6
    %v9214 = vsel %vm3931, %v9212, %v9213
    %v9215 = vrot.slane %v9213, 4
    %v9216 = vrot.slane %v9089, 6
    %v9217 = vsel %vm3931, %v9215, %v9216
    %v9218 = vrot.slane %v9216, 4
    %v9219 = vrot.slane %v9090, 6
    %v9220 = vsel %vm3931, %v9218, %v9219
    %9221 = vrot.lane.b32.xlu0 %v9127, 24
    %v9222 = vpop.permute.xlu0 %9221
    %9223 = vrot.lane.b32.xlu0 %v9130, 24
    %v9224 = vpop.permute.xlu0 %9223
    %9225 = vrot.lane.b32.xlu0 %v9133, 24
    %v9226 = vpop.permute.xlu0 %9225
    %9227 = vrot.lane.b32.xlu0 %v9136, 24
    %v9228 = vpop.permute.xlu0 %9227
    %9229 = vrot.lane.b32.xlu0 %v9139, 24
    %v9230 = vpop.permute.xlu0 %9229
    %9231 = vrot.lane.b32.xlu0 %v9142, 24
    %v9232 = vpop.permute.xlu0 %9231
    %9233 = vrot.lane.b32.xlu0 %v9145, 24
    %v9234 = vpop.permute.xlu0 %9233
    %9235 = vrot.lane.b32.xlu0 %v9148, 24
    %v9236 = vpop.permute.xlu0 %9235
    %9237 = vrot.lane.b32.xlu0 %v9151, 24
    %v9238 = vpop.permute.xlu0 %9237
    %9239 = vrot.lane.b32.xlu0 %v9154, 24
    %v9240 = vpop.permute.xlu0 %9239
    %9241 = vrot.lane.b32.xlu0 %v9157, 24
    %v9242 = vpop.permute.xlu0 %9241
    %9243 = vrot.lane.b32.xlu0 %v9160, 24
    %v9244 = vpop.permute.xlu0 %9243
    %9245 = vrot.lane.b32.xlu0 %v9163, 24
    %v9246 = vpop.permute.xlu0 %9245
    %9247 = vrot.lane.b32.xlu0 %v9166, 24
    %v9248 = vpop.permute.xlu0 %9247
    %9249 = vrot.lane.b32.xlu0 %v9169, 24
    %v9250 = vpop.permute.xlu0 %9249
    %9251 = vrot.lane.b32.xlu0 %v9172, 24
    %v9252 = vpop.permute.xlu0 %9251
    %9253 = vrot.lane.b32.xlu0 %v9175, 24
    %v9254 = vpop.permute.xlu0 %9253
    %9255 = vrot.lane.b32.xlu0 %v9178, 24
    %v9256 = vpop.permute.xlu0 %9255
    %9257 = vrot.lane.b32.xlu0 %v9181, 24
    %v9258 = vpop.permute.xlu0 %9257
    %9259 = vrot.lane.b32.xlu0 %v9184, 24
    %v9260 = vpop.permute.xlu0 %9259
    %9261 = vrot.lane.b32.xlu0 %v9187, 24
    %v9262 = vpop.permute.xlu0 %9261
    %9263 = vrot.lane.b32.xlu0 %v9190, 24
    %v9264 = vpop.permute.xlu0 %9263
    %9265 = vrot.lane.b32.xlu0 %v9193, 24
    %v9266 = vpop.permute.xlu0 %9265
    %9267 = vrot.lane.b32.xlu0 %v9196, 24
    %v9268 = vpop.permute.xlu0 %9267
    %9269 = vrot.lane.b32.xlu0 %v9199, 24
    %v9270 = vpop.permute.xlu0 %9269
    %9271 = vrot.lane.b32.xlu0 %v9202, 24
    %v9272 = vpop.permute.xlu0 %9271
    %9273 = vrot.lane.b32.xlu0 %v9205, 24
    %v9274 = vpop.permute.xlu0 %9273
    %9275 = vrot.lane.b32.xlu0 %v9208, 24
    %v9276 = vpop.permute.xlu0 %9275
    %9277 = vrot.lane.b32.xlu0 %v9211, 24
    %v9278 = vpop.permute.xlu0 %9277
    %9279 = vrot.lane.b32.xlu0 %v9214, 24
    %v9280 = vpop.permute.xlu0 %9279
    %9281 = vrot.lane.b32.xlu0 %v9217, 24
    %v9282 = vpop.permute.xlu0 %9281
    %9283 = vrot.lane.b32.xlu0 %v9220, 24
    %v9284 = vpop.permute.xlu0 %9283
    %9317 = vst.msk [vmem:[#allocation3 + $0x4] sm:$0xf] %vm3830, %v9222
    %9318 = vst.msk [vmem:[#allocation3 + $0xc] sm:$0xf] %vm3830, %v9224
    %9319 = vst.msk [vmem:[#allocation3 + $0x14] sm:$0xf] %vm3830, %v9226
    %9320 = vst.msk [vmem:[#allocation3 + $0x1c] sm:$0xf] %vm3830, %v9228
    %9321 = vst.msk [vmem:[#allocation3 + $0x24] sm:$0xf] %vm3830, %v9230
    %9322 = vst.msk [vmem:[#allocation3 + $0x2c] sm:$0xf] %vm3830, %v9232
    %9323 = vst.msk [vmem:[#allocation3 + $0x34] sm:$0xf] %vm3830, %v9234
    %9324 = vst.msk [vmem:[#allocation3 + $0x3c] sm:$0xf] %vm3830, %v9236
    %9325 = vst.msk [vmem:[#allocation3 + $0x44] sm:$0xf] %vm3830, %v9238
    %9326 = vst.msk [vmem:[#allocation3 + $0x4c] sm:$0xf] %vm3830, %v9240
    %9327 = vst.msk [vmem:[#allocation3 + $0x54] sm:$0xf] %vm3830, %v9242
    %9328 = vst.msk [vmem:[#allocation3 + $0x5c] sm:$0xf] %vm3830, %v9244
    %9329 = vst.msk [vmem:[#allocation3 + $0x64] sm:$0xf] %vm3830, %v9246
    %9330 = vst.msk [vmem:[#allocation3 + $0x6c] sm:$0xf] %vm3830, %v9248
    %9331 = vst.msk [vmem:[#allocation3 + $0x74] sm:$0xf] %vm3830, %v9250
    %9332 = vst.msk [vmem:[#allocation3 + $0x7c] sm:$0xf] %vm3830, %v9252
    %9333 = vst.msk [vmem:[#allocation3 + $0x84] sm:$0xf] %vm3830, %v9254
    %9334 = vst.msk [vmem:[#allocation3 + $0x8c] sm:$0xf] %vm3830, %v9256
    %9335 = vst.msk [vmem:[#allocation3 + $0x94] sm:$0xf] %vm3830, %v9258
    %9336 = vst.msk [vmem:[#allocation3 + $0x9c] sm:$0xf] %vm3830, %v9260
    %9337 = vst.msk [vmem:[#allocation3 + $0xa4] sm:$0xf] %vm3830, %v9262
    %9338 = vst.msk [vmem:[#allocation3 + $0xac] sm:$0xf] %vm3830, %v9264
    %9339 = vst.msk [vmem:[#allocation3 + $0xb4] sm:$0xf] %vm3830, %v9266
    %9340 = vst.msk [vmem:[#allocation3 + $0xbc] sm:$0xf] %vm3830, %v9268
    %9341 = vst.msk [vmem:[#allocation3 + $0xc4] sm:$0xf] %vm3830, %v9270
    %9342 = vst.msk [vmem:[#allocation3 + $0xcc] sm:$0xf] %vm3830, %v9272
    %9343 = vst.msk [vmem:[#allocation3 + $0xd4] sm:$0xf] %vm3830, %v9274
    %9344 = vst.msk [vmem:[#allocation3 + $0xdc] sm:$0xf] %vm3830, %v9276
    %9345 = vst.msk [vmem:[#allocation3 + $0xe4] sm:$0xf] %vm3830, %v9278
    %9346 = vst.msk [vmem:[#allocation3 + $0xec] sm:$0xf] %vm3830, %v9280
    %9347 = vst.msk [vmem:[#allocation3 + $0xf4] sm:$0xf] %vm3830, %v9282
    %9348 = vst.msk [vmem:[#allocation3 + $0xfc] sm:$0xf] %vm3830, %v9284
    %v9349 = vld [vmem:[#allocation2 + $0x40] sm:$0xf]
    %v9350 = vld [vmem:[#allocation2 + $0x44] sm:$0xf]
    %v9351 = vld [vmem:[#allocation2 + $0x48] sm:$0xf]
    %v9352 = vld [vmem:[#allocation2 + $0x4c] sm:$0xf]
    %v9353 = vld [vmem:[#allocation2 + $0x50] sm:$0xf]
    %v9354 = vld [vmem:[#allocation2 + $0x54] sm:$0xf]
    %v9355 = vld [vmem:[#allocation2 + $0x58] sm:$0xf]
    %v9356 = vld [vmem:[#allocation2 + $0x5c] sm:$0xf]
    %v9357 = vld [vmem:[#allocation2 + $0x60] sm:$0xf]
    %v9358 = vld [vmem:[#allocation2 + $0x64] sm:$0xf]
    %v9359 = vld [vmem:[#allocation2 + $0x68] sm:$0xf]
    %v9360 = vld [vmem:[#allocation2 + $0x6c] sm:$0xf]
    %v9361 = vld [vmem:[#allocation2 + $0x70] sm:$0xf]
    %v9362 = vld [vmem:[#allocation2 + $0x74] sm:$0xf]
    %v9363 = vld [vmem:[#allocation2 + $0x78] sm:$0xf]
    %v9364 = vld [vmem:[#allocation2 + $0x7c] sm:$0xf]
    %v9365 = vld [vmem:[#allocation2 + $0x80] sm:$0xf]
    %v9366 = vld [vmem:[#allocation2 + $0x84] sm:$0xf]
    %v9367 = vld [vmem:[#allocation2 + $0x88] sm:$0xf]
    %v9368 = vld [vmem:[#allocation2 + $0x8c] sm:$0xf]
    %v9369 = vld [vmem:[#allocation2 + $0x90] sm:$0xf]
    %v9370 = vld [vmem:[#allocation2 + $0x94] sm:$0xf]
    %v9371 = vld [vmem:[#allocation2 + $0x98] sm:$0xf]
    %v9372 = vld [vmem:[#allocation2 + $0x9c] sm:$0xf]
    %v9373 = vld [vmem:[#allocation2 + $0xa0] sm:$0xf]
    %v9374 = vld [vmem:[#allocation2 + $0xa4] sm:$0xf]
    %v9375 = vld [vmem:[#allocation2 + $0xa8] sm:$0xf]
    %v9376 = vld [vmem:[#allocation2 + $0xac] sm:$0xf]
    %v9377 = vld [vmem:[#allocation2 + $0xb0] sm:$0xf]
    %v9378 = vld [vmem:[#allocation2 + $0xb4] sm:$0xf]
    %v9379 = vld [vmem:[#allocation2 + $0xb8] sm:$0xf]
    %v9380 = vld [vmem:[#allocation2 + $0xbc] sm:$0xf]
    %9413 = vrot.lane.b32.xlu0 %v9349, 32
    %v9414 = vpop.permute.xlu0 %9413
    %9415 = vrot.lane.b32.xlu0 %v9350, 32
    %v9416 = vpop.permute.xlu0 %9415
    %9417 = vrot.lane.b32.xlu0 %v9351, 32
    %v9418 = vpop.permute.xlu0 %9417
    %9419 = vrot.lane.b32.xlu0 %v9352, 32
    %v9420 = vpop.permute.xlu0 %9419
    %9421 = vrot.lane.b32.xlu0 %v9353, 32
    %v9422 = vpop.permute.xlu0 %9421
    %9423 = vrot.lane.b32.xlu0 %v9354, 32
    %v9424 = vpop.permute.xlu0 %9423
    %9425 = vrot.lane.b32.xlu0 %v9355, 32
    %v9426 = vpop.permute.xlu0 %9425
    %9427 = vrot.lane.b32.xlu0 %v9356, 32
    %v9428 = vpop.permute.xlu0 %9427
    %9429 = vrot.lane.b32.xlu0 %v9357, 32
    %v9430 = vpop.permute.xlu0 %9429
    %9431 = vrot.lane.b32.xlu0 %v9358, 32
    %v9432 = vpop.permute.xlu0 %9431
    %9433 = vrot.lane.b32.xlu0 %v9359, 32
    %v9434 = vpop.permute.xlu0 %9433
    %9435 = vrot.lane.b32.xlu0 %v9360, 32
    %v9436 = vpop.permute.xlu0 %9435
    %9437 = vrot.lane.b32.xlu0 %v9361, 32
    %v9438 = vpop.permute.xlu0 %9437
    %9439 = vrot.lane.b32.xlu0 %v9362, 32
    %v9440 = vpop.permute.xlu0 %9439
    %9441 = vrot.lane.b32.xlu0 %v9363, 32
    %v9442 = vpop.permute.xlu0 %9441
    %9443 = vrot.lane.b32.xlu0 %v9364, 32
    %v9444 = vpop.permute.xlu0 %9443
    %9445 = vrot.lane.b32.xlu0 %v9365, 32
    %v9446 = vpop.permute.xlu0 %9445
    %9447 = vrot.lane.b32.xlu0 %v9366, 32
    %v9448 = vpop.permute.xlu0 %9447
    %9449 = vrot.lane.b32.xlu0 %v9367, 32
    %v9450 = vpop.permute.xlu0 %9449
    %9451 = vrot.lane.b32.xlu0 %v9368, 32
    %v9452 = vpop.permute.xlu0 %9451
    %9453 = vrot.lane.b32.xlu0 %v9369, 32
    %v9454 = vpop.permute.xlu0 %9453
    %9455 = vrot.lane.b32.xlu0 %v9370, 32
    %v9456 = vpop.permute.xlu0 %9455
    %9457 = vrot.lane.b32.xlu0 %v9371, 32
    %v9458 = vpop.permute.xlu0 %9457
    %9459 = vrot.lane.b32.xlu0 %v9372, 32
    %v9460 = vpop.permute.xlu0 %9459
    %9461 = vrot.lane.b32.xlu0 %v9373, 32
    %v9462 = vpop.permute.xlu0 %9461
    %9463 = vrot.lane.b32.xlu0 %v9374, 32
    %v9464 = vpop.permute.xlu0 %9463
    %9465 = vrot.lane.b32.xlu0 %v9375, 32
    %v9466 = vpop.permute.xlu0 %9465
    %9467 = vrot.lane.b32.xlu0 %v9376, 32
    %v9468 = vpop.permute.xlu0 %9467
    %9469 = vrot.lane.b32.xlu0 %v9377, 32
    %v9470 = vpop.permute.xlu0 %9469
    %9471 = vrot.lane.b32.xlu0 %v9378, 32
    %v9472 = vpop.permute.xlu0 %9471
    %9473 = vrot.lane.b32.xlu0 %v9379, 32
    %v9474 = vpop.permute.xlu0 %9473
    %9475 = vrot.lane.b32.xlu0 %v9380, 32
    %v9476 = vpop.permute.xlu0 %9475
    %9509 = vst.msk [vmem:[#allocation3 + $0x4] sm:$0xf] %vm4125, %v9414
    %9510 = vst.msk [vmem:[#allocation3 + $0xc] sm:$0xf] %vm4125, %v9416
    %9511 = vst.msk [vmem:[#allocation3 + $0x14] sm:$0xf] %vm4125, %v9418
    %9512 = vst.msk [vmem:[#allocation3 + $0x1c] sm:$0xf] %vm4125, %v9420
    %9513 = vst.msk [vmem:[#allocation3 + $0x24] sm:$0xf] %vm4125, %v9422
    %9514 = vst.msk [vmem:[#allocation3 + $0x2c] sm:$0xf] %vm4125, %v9424
    %9515 = vst.msk [vmem:[#allocation3 + $0x34] sm:$0xf] %vm4125, %v9426
    %9516 = vst.msk [vmem:[#allocation3 + $0x3c] sm:$0xf] %vm4125, %v9428
    %9517 = vst.msk [vmem:[#allocation3 + $0x44] sm:$0xf] %vm4125, %v9430
    %9518 = vst.msk [vmem:[#allocation3 + $0x4c] sm:$0xf] %vm4125, %v9432
    %9519 = vst.msk [vmem:[#allocation3 + $0x54] sm:$0xf] %vm4125, %v9434
    %9520 = vst.msk [vmem:[#allocation3 + $0x5c] sm:$0xf] %vm4125, %v9436
    %9521 = vst.msk [vmem:[#allocation3 + $0x64] sm:$0xf] %vm4125, %v9438
    %9522 = vst.msk [vmem:[#allocation3 + $0x6c] sm:$0xf] %vm4125, %v9440
    %9523 = vst.msk [vmem:[#allocation3 + $0x74] sm:$0xf] %vm4125, %v9442
    %9524 = vst.msk [vmem:[#allocation3 + $0x7c] sm:$0xf] %vm4125, %v9444
    %9525 = vst.msk [vmem:[#allocation3 + $0x84] sm:$0xf] %vm4125, %v9446
    %9526 = vst.msk [vmem:[#allocation3 + $0x8c] sm:$0xf] %vm4125, %v9448
    %9527 = vst.msk [vmem:[#allocation3 + $0x94] sm:$0xf] %vm4125, %v9450
    %9528 = vst.msk [vmem:[#allocation3 + $0x9c] sm:$0xf] %vm4125, %v9452
    %9529 = vst.msk [vmem:[#allocation3 + $0xa4] sm:$0xf] %vm4125, %v9454
    %9530 = vst.msk [vmem:[#allocation3 + $0xac] sm:$0xf] %vm4125, %v9456
    %9531 = vst.msk [vmem:[#allocation3 + $0xb4] sm:$0xf] %vm4125, %v9458
    %9532 = vst.msk [vmem:[#allocation3 + $0xbc] sm:$0xf] %vm4125, %v9460
    %9533 = vst.msk [vmem:[#allocation3 + $0xc4] sm:$0xf] %vm4125, %v9462
    %9534 = vst.msk [vmem:[#allocation3 + $0xcc] sm:$0xf] %vm4125, %v9464
    %9535 = vst.msk [vmem:[#allocation3 + $0xd4] sm:$0xf] %vm4125, %v9466
    %9536 = vst.msk [vmem:[#allocation3 + $0xdc] sm:$0xf] %vm4125, %v9468
    %9537 = vst.msk [vmem:[#allocation3 + $0xe4] sm:$0xf] %vm4125, %v9470
    %9538 = vst.msk [vmem:[#allocation3 + $0xec] sm:$0xf] %vm4125, %v9472
    %9539 = vst.msk [vmem:[#allocation3 + $0xf4] sm:$0xf] %vm4125, %v9474
    %9540 = vst.msk [vmem:[#allocation3 + $0xfc] sm:$0xf] %vm4125, %v9476
    %v9541 = vld [vmem:[#allocation2 + $0x40] sm:$0xf]
    %v9542 = vld [vmem:[#allocation2 + $0x44] sm:$0xf]
    %v9543 = vld [vmem:[#allocation2 + $0x48] sm:$0xf]
    %v9544 = vld [vmem:[#allocation2 + $0x4c] sm:$0xf]
    %v9545 = vld [vmem:[#allocation2 + $0x50] sm:$0xf]
    %v9546 = vld [vmem:[#allocation2 + $0x54] sm:$0xf]
    %v9547 = vld [vmem:[#allocation2 + $0x58] sm:$0xf]
    %v9548 = vld [vmem:[#allocation2 + $0x5c] sm:$0xf]
    %v9549 = vld [vmem:[#allocation2 + $0x60] sm:$0xf]
    %v9550 = vld [vmem:[#allocation2 + $0x64] sm:$0xf]
    %v9551 = vld [vmem:[#allocation2 + $0x68] sm:$0xf]
    %v9552 = vld [vmem:[#allocation2 + $0x6c] sm:$0xf]
    %v9553 = vld [vmem:[#allocation2 + $0x70] sm:$0xf]
    %v9554 = vld [vmem:[#allocation2 + $0x74] sm:$0xf]
    %v9555 = vld [vmem:[#allocation2 + $0x78] sm:$0xf]
    %v9556 = vld [vmem:[#allocation2 + $0x7c] sm:$0xf]
    %v9557 = vld [vmem:[#allocation2 + $0x80] sm:$0xf]
    %v9558 = vld [vmem:[#allocation2 + $0x84] sm:$0xf]
    %v9559 = vld [vmem:[#allocation2 + $0x88] sm:$0xf]
    %v9560 = vld [vmem:[#allocation2 + $0x8c] sm:$0xf]
    %v9561 = vld [vmem:[#allocation2 + $0x90] sm:$0xf]
    %v9562 = vld [vmem:[#allocation2 + $0x94] sm:$0xf]
    %v9563 = vld [vmem:[#allocation2 + $0x98] sm:$0xf]
    %v9564 = vld [vmem:[#allocation2 + $0x9c] sm:$0xf]
    %v9565 = vld [vmem:[#allocation2 + $0xa0] sm:$0xf]
    %v9566 = vld [vmem:[#allocation2 + $0xa4] sm:$0xf]
    %v9567 = vld [vmem:[#allocation2 + $0xa8] sm:$0xf]
    %v9568 = vld [vmem:[#allocation2 + $0xac] sm:$0xf]
    %v9569 = vld [vmem:[#allocation2 + $0xb0] sm:$0xf]
    %v9570 = vld [vmem:[#allocation2 + $0xb4] sm:$0xf]
    %v9571 = vld [vmem:[#allocation2 + $0xb8] sm:$0xf]
    %v9572 = vld [vmem:[#allocation2 + $0xbc] sm:$0xf]
    %v9573 = vld [vmem:[#allocation2 + $0xc0] sm:$0x1]
    %v9575 = vshrl.u32 %v9541, 16
    %v9577 = vrot.slane %v9575, 4
    %v9578 = vshll.u32 %v9541, 16
    %v9580 = vrot.slane %v9578, 5
    %v9581 = vor.u32 %v9577, %v9580
    %v9582 = vrot.slane %v9581, 4
    %v9584 = vshll.u32 %v9542, 16
    %v9586 = vrot.slane %v9584, 5
    %v9587 = vsel %vm2621, %v9582, %v9586
    %v9588 = vshrl.u32 %v9542, 16
    %v9590 = vrot.slane %v9588, 4
    %v9591 = vor.u32 %v9590, %v9586
    %v9592 = vrot.slane %v9591, 4
    %v9594 = vshll.u32 %v9543, 16
    %v9596 = vrot.slane %v9594, 5
    %v9597 = vsel %vm2621, %v9592, %v9596
    %v9598 = vshrl.u32 %v9543, 16
    %v9600 = vrot.slane %v9598, 4
    %v9601 = vor.u32 %v9600, %v9596
    %v9602 = vrot.slane %v9601, 4
    %v9604 = vshll.u32 %v9544, 16
    %v9606 = vrot.slane %v9604, 5
    %v9607 = vsel %vm2621, %v9602, %v9606
    %v9608 = vshrl.u32 %v9544, 16
    %v9610 = vrot.slane %v9608, 4
    %v9611 = vor.u32 %v9610, %v9606
    %v9612 = vrot.slane %v9611, 4
    %v9614 = vshll.u32 %v9545, 16
    %v9616 = vrot.slane %v9614, 5
    %v9617 = vsel %vm2621, %v9612, %v9616
    %v9618 = vshrl.u32 %v9545, 16
    %v9620 = vrot.slane %v9618, 4
    %v9621 = vor.u32 %v9620, %v9616
    %v9622 = vrot.slane %v9621, 4
    %v9624 = vshll.u32 %v9546, 16
    %v9626 = vrot.slane %v9624, 5
    %v9627 = vsel %vm2621, %v9622, %v9626
    %v9628 = vshrl.u32 %v9546, 16
    %v9630 = vrot.slane %v9628, 4
    %v9631 = vor.u32 %v9630, %v9626
    %v9632 = vrot.slane %v9631, 4
    %v9634 = vshll.u32 %v9547, 16
    %v9636 = vrot.slane %v9634, 5
    %v9637 = vsel %vm2621, %v9632, %v9636
    %v9638 = vshrl.u32 %v9547, 16
    %v9640 = vrot.slane %v9638, 4
    %v9641 = vor.u32 %v9640, %v9636
    %v9642 = vrot.slane %v9641, 4
    %v9644 = vshll.u32 %v9548, 16
    %v9646 = vrot.slane %v9644, 5
    %v9647 = vsel %vm2621, %v9642, %v9646
    %v9648 = vshrl.u32 %v9548, 16
    %v9650 = vrot.slane %v9648, 4
    %v9651 = vor.u32 %v9650, %v9646
    %v9652 = vrot.slane %v9651, 4
    %v9654 = vshll.u32 %v9549, 16
    %v9656 = vrot.slane %v9654, 5
    %v9657 = vsel %vm2621, %v9652, %v9656
    %v9658 = vshrl.u32 %v9549, 16
    %v9660 = vrot.slane %v9658, 4
    %v9661 = vor.u32 %v9660, %v9656
    %v9662 = vrot.slane %v9661, 4
    %v9664 = vshll.u32 %v9550, 16
    %v9666 = vrot.slane %v9664, 5
    %v9667 = vsel %vm2621, %v9662, %v9666
    %v9668 = vshrl.u32 %v9550, 16
    %v9670 = vrot.slane %v9668, 4
    %v9671 = vor.u32 %v9670, %v9666
    %v9672 = vrot.slane %v9671, 4
    %v9674 = vshll.u32 %v9551, 16
    %v9676 = vrot.slane %v9674, 5
    %v9677 = vsel %vm2621, %v9672, %v9676
    %v9678 = vshrl.u32 %v9551, 16
    %v9680 = vrot.slane %v9678, 4
    %v9681 = vor.u32 %v9680, %v9676
    %v9682 = vrot.slane %v9681, 4
    %v9684 = vshll.u32 %v9552, 16
    %v9686 = vrot.slane %v9684, 5
    %v9687 = vsel %vm2621, %v9682, %v9686
    %v9688 = vshrl.u32 %v9552, 16
    %v9690 = vrot.slane %v9688, 4
    %v9691 = vor.u32 %v9690, %v9686
    %v9692 = vrot.slane %v9691, 4
    %v9694 = vshll.u32 %v9553, 16
    %v9696 = vrot.slane %v9694, 5
    %v9697 = vsel %vm2621, %v9692, %v9696
    %v9698 = vshrl.u32 %v9553, 16
    %v9700 = vrot.slane %v9698, 4
    %v9701 = vor.u32 %v9700, %v9696
    %v9702 = vrot.slane %v9701, 4
    %v9704 = vshll.u32 %v9554, 16
    %v9706 = vrot.slane %v9704, 5
    %v9707 = vsel %vm2621, %v9702, %v9706
    %v9708 = vshrl.u32 %v9554, 16
    %v9710 = vrot.slane %v9708, 4
    %v9711 = vor.u32 %v9710, %v9706
    %v9712 = vrot.slane %v9711, 4
    %v9714 = vshll.u32 %v9555, 16
    %v9716 = vrot.slane %v9714, 5
    %v9717 = vsel %vm2621, %v9712, %v9716
    %v9718 = vshrl.u32 %v9555, 16
    %v9720 = vrot.slane %v9718, 4
    %v9721 = vor.u32 %v9720, %v9716
    %v9722 = vrot.slane %v9721, 4
    %v9724 = vshll.u32 %v9556, 16
    %v9726 = vrot.slane %v9724, 5
    %v9727 = vsel %vm2621, %v9722, %v9726
    %v9728 = vshrl.u32 %v9556, 16
    %v9730 = vrot.slane %v9728, 4
    %v9731 = vor.u32 %v9730, %v9726
    %v9732 = vrot.slane %v9731, 4
    %v9734 = vshll.u32 %v9557, 16
    %v9736 = vrot.slane %v9734, 5
    %v9737 = vsel %vm2621, %v9732, %v9736
    %v9738 = vshrl.u32 %v9557, 16
    %v9740 = vrot.slane %v9738, 4
    %v9741 = vor.u32 %v9740, %v9736
    %v9742 = vrot.slane %v9741, 4
    %v9744 = vshll.u32 %v9558, 16
    %v9746 = vrot.slane %v9744, 5
    %v9747 = vsel %vm2621, %v9742, %v9746
    %v9748 = vshrl.u32 %v9558, 16
    %v9750 = vrot.slane %v9748, 4
    %v9751 = vor.u32 %v9750, %v9746
    %v9752 = vrot.slane %v9751, 4
    %v9754 = vshll.u32 %v9559, 16
    %v9756 = vrot.slane %v9754, 5
    %v9757 = vsel %vm2621, %v9752, %v9756
    %v9758 = vshrl.u32 %v9559, 16
    %v9760 = vrot.slane %v9758, 4
    %v9761 = vor.u32 %v9760, %v9756
    %v9762 = vrot.slane %v9761, 4
    %v9764 = vshll.u32 %v9560, 16
    %v9766 = vrot.slane %v9764, 5
    %v9767 = vsel %vm2621, %v9762, %v9766
    %v9768 = vshrl.u32 %v9560, 16
    %v9770 = vrot.slane %v9768, 4
    %v9771 = vor.u32 %v9770, %v9766
    %v9772 = vrot.slane %v9771, 4
    %v9774 = vshll.u32 %v9561, 16
    %v9776 = vrot.slane %v9774, 5
    %v9777 = vsel %vm2621, %v9772, %v9776
    %v9778 = vshrl.u32 %v9561, 16
    %v9780 = vrot.slane %v9778, 4
    %v9781 = vor.u32 %v9780, %v9776
    %v9782 = vrot.slane %v9781, 4
    %v9784 = vshll.u32 %v9562, 16
    %v9786 = vrot.slane %v9784, 5
    %v9787 = vsel %vm2621, %v9782, %v9786
    %v9788 = vshrl.u32 %v9562, 16
    %v9790 = vrot.slane %v9788, 4
    %v9791 = vor.u32 %v9790, %v9786
    %v9792 = vrot.slane %v9791, 4
    %v9794 = vshll.u32 %v9563, 16
    %v9796 = vrot.slane %v9794, 5
    %v9797 = vsel %vm2621, %v9792, %v9796
    %v9798 = vshrl.u32 %v9563, 16
    %v9800 = vrot.slane %v9798, 4
    %v9801 = vor.u32 %v9800, %v9796
    %v9802 = vrot.slane %v9801, 4
    %v9804 = vshll.u32 %v9564, 16
    %v9806 = vrot.slane %v9804, 5
    %v9807 = vsel %vm2621, %v9802, %v9806
    %v9808 = vshrl.u32 %v9564, 16
    %v9810 = vrot.slane %v9808, 4
    %v9811 = vor.u32 %v9810, %v9806
    %v9812 = vrot.slane %v9811, 4
    %v9814 = vshll.u32 %v9565, 16
    %v9816 = vrot.slane %v9814, 5
    %v9817 = vsel %vm2621, %v9812, %v9816
    %v9818 = vshrl.u32 %v9565, 16
    %v9820 = vrot.slane %v9818, 4
    %v9821 = vor.u32 %v9820, %v9816
    %v9822 = vrot.slane %v9821, 4
    %v9824 = vshll.u32 %v9566, 16
    %v9826 = vrot.slane %v9824, 5
    %v9827 = vsel %vm2621, %v9822, %v9826
    %v9828 = vshrl.u32 %v9566, 16
    %v9830 = vrot.slane %v9828, 4
    %v9831 = vor.u32 %v9830, %v9826
    %v9832 = vrot.slane %v9831, 4
    %v9834 = vshll.u32 %v9567, 16
    %v9836 = vrot.slane %v9834, 5
    %v9837 = vsel %vm2621, %v9832, %v9836
    %v9838 = vshrl.u32 %v9567, 16
    %v9840 = vrot.slane %v9838, 4
    %v9841 = vor.u32 %v9840, %v9836
    %v9842 = vrot.slane %v9841, 4
    %v9844 = vshll.u32 %v9568, 16
    %v9846 = vrot.slane %v9844, 5
    %v9847 = vsel %vm2621, %v9842, %v9846
    %v9848 = vshrl.u32 %v9568, 16
    %v9850 = vrot.slane %v9848, 4
    %v9851 = vor.u32 %v9850, %v9846
    %v9852 = vrot.slane %v9851, 4
    %v9854 = vshll.u32 %v9569, 16
    %v9856 = vrot.slane %v9854, 5
    %v9857 = vsel %vm2621, %v9852, %v9856
    %v9858 = vshrl.u32 %v9569, 16
    %v9860 = vrot.slane %v9858, 4
    %v9861 = vor.u32 %v9860, %v9856
    %v9862 = vrot.slane %v9861, 4
    %v9864 = vshll.u32 %v9570, 16
    %v9866 = vrot.slane %v9864, 5
    %v9867 = vsel %vm2621, %v9862, %v9866
    %v9868 = vshrl.u32 %v9570, 16
    %v9870 = vrot.slane %v9868, 4
    %v9871 = vor.u32 %v9870, %v9866
    %v9872 = vrot.slane %v9871, 4
    %v9874 = vshll.u32 %v9571, 16
    %v9876 = vrot.slane %v9874, 5
    %v9877 = vsel %vm2621, %v9872, %v9876
    %v9878 = vshrl.u32 %v9571, 16
    %v9880 = vrot.slane %v9878, 4
    %v9881 = vor.u32 %v9880, %v9876
    %v9882 = vrot.slane %v9881, 4
    %v9884 = vshll.u32 %v9572, 16
    %v9886 = vrot.slane %v9884, 5
    %v9887 = vsel %vm2621, %v9882, %v9886
    %v9888 = vshrl.u32 %v9572, 16
    %v9890 = vrot.slane %v9888, 4
    %v9891 = vor.u32 %v9890, %v9886
    %v9892 = vrot.slane %v9891, 4
    %v9894 = vshll.u32 %v9573, 16
    %v9896 = vrot.slane %v9894, 5
    %v9897 = vsel %vm2621, %v9892, %v9896
    %9898 = vrot.lane.b32.xlu0 %v9587, 40
    %v9899 = vpop.permute.xlu0 %9898
    %9900 = vrot.lane.b32.xlu0 %v9597, 40
    %v9901 = vpop.permute.xlu0 %9900
    %9902 = vrot.lane.b32.xlu0 %v9607, 40
    %v9903 = vpop.permute.xlu0 %9902
    %9904 = vrot.lane.b32.xlu0 %v9617, 40
    %v9905 = vpop.permute.xlu0 %9904
    %9906 = vrot.lane.b32.xlu0 %v9627, 40
    %v9907 = vpop.permute.xlu0 %9906
    %9908 = vrot.lane.b32.xlu0 %v9637, 40
    %v9909 = vpop.permute.xlu0 %9908
    %9910 = vrot.lane.b32.xlu0 %v9647, 40
    %v9911 = vpop.permute.xlu0 %9910
    %9912 = vrot.lane.b32.xlu0 %v9657, 40
    %v9913 = vpop.permute.xlu0 %9912
    %9914 = vrot.lane.b32.xlu0 %v9667, 40
    %v9915 = vpop.permute.xlu0 %9914
    %9916 = vrot.lane.b32.xlu0 %v9677, 40
    %v9917 = vpop.permute.xlu0 %9916
    %9918 = vrot.lane.b32.xlu0 %v9687, 40
    %v9919 = vpop.permute.xlu0 %9918
    %9920 = vrot.lane.b32.xlu0 %v9697, 40
    %v9921 = vpop.permute.xlu0 %9920
    %9922 = vrot.lane.b32.xlu0 %v9707, 40
    %v9923 = vpop.permute.xlu0 %9922
    %9924 = vrot.lane.b32.xlu0 %v9717, 40
    %v9925 = vpop.permute.xlu0 %9924
    %9926 = vrot.lane.b32.xlu0 %v9727, 40
    %v9927 = vpop.permute.xlu0 %9926
    %9928 = vrot.lane.b32.xlu0 %v9737, 40
    %v9929 = vpop.permute.xlu0 %9928
    %9930 = vrot.lane.b32.xlu0 %v9747, 40
    %v9931 = vpop.permute.xlu0 %9930
    %9932 = vrot.lane.b32.xlu0 %v9757, 40
    %v9933 = vpop.permute.xlu0 %9932
    %9934 = vrot.lane.b32.xlu0 %v9767, 40
    %v9935 = vpop.permute.xlu0 %9934
    %9936 = vrot.lane.b32.xlu0 %v9777, 40
    %v9937 = vpop.permute.xlu0 %9936
    %9938 = vrot.lane.b32.xlu0 %v9787, 40
    %v9939 = vpop.permute.xlu0 %9938
    %9940 = vrot.lane.b32.xlu0 %v9797, 40
    %v9941 = vpop.permute.xlu0 %9940
    %9942 = vrot.lane.b32.xlu0 %v9807, 40
    %v9943 = vpop.permute.xlu0 %9942
    %9944 = vrot.lane.b32.xlu0 %v9817, 40
    %v9945 = vpop.permute.xlu0 %9944
    %9946 = vrot.lane.b32.xlu0 %v9827, 40
    %v9947 = vpop.permute.xlu0 %9946
    %9948 = vrot.lane.b32.xlu0 %v9837, 40
    %v9949 = vpop.permute.xlu0 %9948
    %9950 = vrot.lane.b32.xlu0 %v9847, 40
    %v9951 = vpop.permute.xlu0 %9950
    %9952 = vrot.lane.b32.xlu0 %v9857, 40
    %v9953 = vpop.permute.xlu0 %9952
    %9954 = vrot.lane.b32.xlu0 %v9867, 40
    %v9955 = vpop.permute.xlu0 %9954
    %9956 = vrot.lane.b32.xlu0 %v9877, 40
    %v9957 = vpop.permute.xlu0 %9956
    %9958 = vrot.lane.b32.xlu0 %v9887, 40
    %v9959 = vpop.permute.xlu0 %9958
    %9960 = vrot.lane.b32.xlu0 %v9897, 40
    %v9961 = vpop.permute.xlu0 %9960
    %9994 = vst.msk [vmem:[#allocation3 + $0x4] sm:$0xf] %vm4318, %v9899
    %9995 = vst.msk [vmem:[#allocation3 + $0xc] sm:$0xf] %vm4318, %v9901
    %9996 = vst.msk [vmem:[#allocation3 + $0x14] sm:$0xf] %vm4318, %v9903
    %9997 = vst.msk [vmem:[#allocation3 + $0x1c] sm:$0xf] %vm4318, %v9905
    %9998 = vst.msk [vmem:[#allocation3 + $0x24] sm:$0xf] %vm4318, %v9907
    %9999 = vst.msk [vmem:[#allocation3 + $0x2c] sm:$0xf] %vm4318, %v9909
    %10000 = vst.msk [vmem:[#allocation3 + $0x34] sm:$0xf] %vm4318, %v9911
    %10001 = vst.msk [vmem:[#allocation3 + $0x3c] sm:$0xf] %vm4318, %v9913
    %10002 = vst.msk [vmem:[#allocation3 + $0x44] sm:$0xf] %vm4318, %v9915
    %10003 = vst.msk [vmem:[#allocation3 + $0x4c] sm:$0xf] %vm4318, %v9917
    %10004 = vst.msk [vmem:[#allocation3 + $0x54] sm:$0xf] %vm4318, %v9919
    %10005 = vst.msk [vmem:[#allocation3 + $0x5c] sm:$0xf] %vm4318, %v9921
    %10006 = vst.msk [vmem:[#allocation3 + $0x64] sm:$0xf] %vm4318, %v9923
    %10007 = vst.msk [vmem:[#allocation3 + $0x6c] sm:$0xf] %vm4318, %v9925
    %10008 = vst.msk [vmem:[#allocation3 + $0x74] sm:$0xf] %vm4318, %v9927
    %10009 = vst.msk [vmem:[#allocation3 + $0x7c] sm:$0xf] %vm4318, %v9929
    %10010 = vst.msk [vmem:[#allocation3 + $0x84] sm:$0xf] %vm4318, %v9931
    %10011 = vst.msk [vmem:[#allocation3 + $0x8c] sm:$0xf] %vm4318, %v9933
    %10012 = vst.msk [vmem:[#allocation3 + $0x94] sm:$0xf] %vm4318, %v9935
    %10013 = vst.msk [vmem:[#allocation3 + $0x9c] sm:$0xf] %vm4318, %v9937
    %10014 = vst.msk [vmem:[#allocation3 + $0xa4] sm:$0xf] %vm4318, %v9939
    %10015 = vst.msk [vmem:[#allocation3 + $0xac] sm:$0xf] %vm4318, %v9941
    %10016 = vst.msk [vmem:[#allocation3 + $0xb4] sm:$0xf] %vm4318, %v9943
    %10017 = vst.msk [vmem:[#allocation3 + $0xbc] sm:$0xf] %vm4318, %v9945
    %10018 = vst.msk [vmem:[#allocation3 + $0xc4] sm:$0xf] %vm4318, %v9947
    %10019 = vst.msk [vmem:[#allocation3 + $0xcc] sm:$0xf] %vm4318, %v9949
    %10020 = vst.msk [vmem:[#allocation3 + $0xd4] sm:$0xf] %vm4318, %v9951
    %10021 = vst.msk [vmem:[#allocation3 + $0xdc] sm:$0xf] %vm4318, %v9953
    %10022 = vst.msk [vmem:[#allocation3 + $0xe4] sm:$0xf] %vm4318, %v9955
    %10023 = vst.msk [vmem:[#allocation3 + $0xec] sm:$0xf] %vm4318, %v9957
    %10024 = vst.msk [vmem:[#allocation3 + $0xf4] sm:$0xf] %vm4318, %v9959
    %10025 = vst.msk [vmem:[#allocation3 + $0xfc] sm:$0xf] %vm4318, %v9961
    %v10026 = vld [vmem:[#allocation2 + $0x40] sm:$0xe]
    %v10027 = vld [vmem:[#allocation2 + $0x44] sm:$0xf]
    %v10028 = vld [vmem:[#allocation2 + $0x48] sm:$0xf]
    %v10029 = vld [vmem:[#allocation2 + $0x4c] sm:$0xf]
    %v10030 = vld [vmem:[#allocation2 + $0x50] sm:$0xf]
    %v10031 = vld [vmem:[#allocation2 + $0x54] sm:$0xf]
    %v10032 = vld [vmem:[#allocation2 + $0x58] sm:$0xf]
    %v10033 = vld [vmem:[#allocation2 + $0x5c] sm:$0xf]
    %v10034 = vld [vmem:[#allocation2 + $0x60] sm:$0xf]
    %v10035 = vld [vmem:[#allocation2 + $0x64] sm:$0xf]
    %v10036 = vld [vmem:[#allocation2 + $0x68] sm:$0xf]
    %v10037 = vld [vmem:[#allocation2 + $0x6c] sm:$0xf]
    %v10038 = vld [vmem:[#allocation2 + $0x70] sm:$0xf]
    %v10039 = vld [vmem:[#allocation2 + $0x74] sm:$0xf]
    %v10040 = vld [vmem:[#allocation2 + $0x78] sm:$0xf]
    %v10041 = vld [vmem:[#allocation2 + $0x7c] sm:$0xf]
    %v10042 = vld [vmem:[#allocation2 + $0x80] sm:$0xf]
    %v10043 = vld [vmem:[#allocation2 + $0x84] sm:$0xf]
    %v10044 = vld [vmem:[#allocation2 + $0x88] sm:$0xf]
    %v10045 = vld [vmem:[#allocation2 + $0x8c] sm:$0xf]
    %v10046 = vld [vmem:[#allocation2 + $0x90] sm:$0xf]
    %v10047 = vld [vmem:[#allocation2 + $0x94] sm:$0xf]
    %v10048 = vld [vmem:[#allocation2 + $0x98] sm:$0xf]
    %v10049 = vld [vmem:[#allocation2 + $0x9c] sm:$0xf]
    %v10050 = vld [vmem:[#allocation2 + $0xa0] sm:$0xf]
    %v10051 = vld [vmem:[#allocation2 + $0xa4] sm:$0xf]
    %v10052 = vld [vmem:[#allocation2 + $0xa8] sm:$0xf]
    %v10053 = vld [vmem:[#allocation2 + $0xac] sm:$0xf]
    %v10054 = vld [vmem:[#allocation2 + $0xb0] sm:$0xf]
    %v10055 = vld [vmem:[#allocation2 + $0xb4] sm:$0xf]
    %v10056 = vld [vmem:[#allocation2 + $0xb8] sm:$0xf]
    %v10057 = vld [vmem:[#allocation2 + $0xbc] sm:$0xf]
    %v10058 = vld [vmem:[#allocation2 + $0xc0] sm:$0x1]
    %v10092 = vrot.slane %v10026, 5
    %v10093 = vrot.slane %v10092, 4
    %v10094 = vrot.slane %v10027, 5
    %v10095 = vsel %vm3143, %v10093, %v10094
    %v10096 = vrot.slane %v10094, 4
    %v10097 = vrot.slane %v10028, 5
    %v10098 = vsel %vm3143, %v10096, %v10097
    %v10099 = vrot.slane %v10097, 4
    %v10100 = vrot.slane %v10029, 5
    %v10101 = vsel %vm3143, %v10099, %v10100
    %v10102 = vrot.slane %v10100, 4
    %v10103 = vrot.slane %v10030, 5
    %v10104 = vsel %vm3143, %v10102, %v10103
    %v10105 = vrot.slane %v10103, 4
    %v10106 = vrot.slane %v10031, 5
    %v10107 = vsel %vm3143, %v10105, %v10106
    %v10108 = vrot.slane %v10106, 4
    %v10109 = vrot.slane %v10032, 5
    %v10110 = vsel %vm3143, %v10108, %v10109
    %v10111 = vrot.slane %v10109, 4
    %v10112 = vrot.slane %v10033, 5
    %v10113 = vsel %vm3143, %v10111, %v10112
    %v10114 = vrot.slane %v10112, 4
    %v10115 = vrot.slane %v10034, 5
    %v10116 = vsel %vm3143, %v10114, %v10115
    %v10117 = vrot.slane %v10115, 4
    %v10118 = vrot.slane %v10035, 5
    %v10119 = vsel %vm3143, %v10117, %v10118
    %v10120 = vrot.slane %v10118, 4
    %v10121 = vrot.slane %v10036, 5
    %v10122 = vsel %vm3143, %v10120, %v10121
    %v10123 = vrot.slane %v10121, 4
    %v10124 = vrot.slane %v10037, 5
    %v10125 = vsel %vm3143, %v10123, %v10124
    %v10126 = vrot.slane %v10124, 4
    %v10127 = vrot.slane %v10038, 5
    %v10128 = vsel %vm3143, %v10126, %v10127
    %v10129 = vrot.slane %v10127, 4
    %v10130 = vrot.slane %v10039, 5
    %v10131 = vsel %vm3143, %v10129, %v10130
    %v10132 = vrot.slane %v10130, 4
    %v10133 = vrot.slane %v10040, 5
    %v10134 = vsel %vm3143, %v10132, %v10133
    %v10135 = vrot.slane %v10133, 4
    %v10136 = vrot.slane %v10041, 5
    %v10137 = vsel %vm3143, %v10135, %v10136
    %v10138 = vrot.slane %v10136, 4
    %v10139 = vrot.slane %v10042, 5
    %v10140 = vsel %vm3143, %v10138, %v10139
    %v10141 = vrot.slane %v10139, 4
    %v10142 = vrot.slane %v10043, 5
    %v10143 = vsel %vm3143, %v10141, %v10142
    %v10144 = vrot.slane %v10142, 4
    %v10145 = vrot.slane %v10044, 5
    %v10146 = vsel %vm3143, %v10144, %v10145
    %v10147 = vrot.slane %v10145, 4
    %v10148 = vrot.slane %v10045, 5
    %v10149 = vsel %vm3143, %v10147, %v10148
    %v10150 = vrot.slane %v10148, 4
    %v10151 = vrot.slane %v10046, 5
    %v10152 = vsel %vm3143, %v10150, %v10151
    %v10153 = vrot.slane %v10151, 4
    %v10154 = vrot.slane %v10047, 5
    %v10155 = vsel %vm3143, %v10153, %v10154
    %v10156 = vrot.slane %v10154, 4
    %v10157 = vrot.slane %v10048, 5
    %v10158 = vsel %vm3143, %v10156, %v10157
    %v10159 = vrot.slane %v10157, 4
    %v10160 = vrot.slane %v10049, 5
    %v10161 = vsel %vm3143, %v10159, %v10160
    %v10162 = vrot.slane %v10160, 4
    %v10163 = vrot.slane %v10050, 5
    %v10164 = vsel %vm3143, %v10162, %v10163
    %v10165 = vrot.slane %v10163, 4
    %v10166 = vrot.slane %v10051, 5
    %v10167 = vsel %vm3143, %v10165, %v10166
    %v10168 = vrot.slane %v10166, 4
    %v10169 = vrot.slane %v10052, 5
    %v10170 = vsel %vm3143, %v10168, %v10169
    %v10171 = vrot.slane %v10169, 4
    %v10172 = vrot.slane %v10053, 5
    %v10173 = vsel %vm3143, %v10171, %v10172
    %v10174 = vrot.slane %v10172, 4
    %v10175 = vrot.slane %v10054, 5
    %v10176 = vsel %vm3143, %v10174, %v10175
    %v10177 = vrot.slane %v10175, 4
    %v10178 = vrot.slane %v10055, 5
    %v10179 = vsel %vm3143, %v10177, %v10178
    %v10180 = vrot.slane %v10178, 4
    %v10181 = vrot.slane %v10056, 5
    %v10182 = vsel %vm3143, %v10180, %v10181
    %v10183 = vrot.slane %v10181, 4
    %v10184 = vrot.slane %v10057, 5
    %v10185 = vsel %vm3143, %v10183, %v10184
    %v10186 = vrot.slane %v10184, 4
    %v10187 = vrot.slane %v10058, 5
    %v10188 = vsel %vm3143, %v10186, %v10187
    %10189 = vrot.lane.b32.xlu0 %v10095, 48
    %v10190 = vpop.permute.xlu0 %10189
    %10191 = vrot.lane.b32.xlu0 %v10098, 48
    %v10192 = vpop.permute.xlu0 %10191
    %10193 = vrot.lane.b32.xlu0 %v10101, 48
    %v10194 = vpop.permute.xlu0 %10193
    %10195 = vrot.lane.b32.xlu0 %v10104, 48
    %v10196 = vpop.permute.xlu0 %10195
    %10197 = vrot.lane.b32.xlu0 %v10107, 48
    %v10198 = vpop.permute.xlu0 %10197
    %10199 = vrot.lane.b32.xlu0 %v10110, 48
    %v10200 = vpop.permute.xlu0 %10199
    %10201 = vrot.lane.b32.xlu0 %v10113, 48
    %v10202 = vpop.permute.xlu0 %10201
    %10203 = vrot.lane.b32.xlu0 %v10116, 48
    %v10204 = vpop.permute.xlu0 %10203
    %10205 = vrot.lane.b32.xlu0 %v10119, 48
    %v10206 = vpop.permute.xlu0 %10205
    %10207 = vrot.lane.b32.xlu0 %v10122, 48
    %v10208 = vpop.permute.xlu0 %10207
    %10209 = vrot.lane.b32.xlu0 %v10125, 48
    %v10210 = vpop.permute.xlu0 %10209
    %10211 = vrot.lane.b32.xlu0 %v10128, 48
    %v10212 = vpop.permute.xlu0 %10211
    %10213 = vrot.lane.b32.xlu0 %v10131, 48
    %v10214 = vpop.permute.xlu0 %10213
    %10215 = vrot.lane.b32.xlu0 %v10134, 48
    %v10216 = vpop.permute.xlu0 %10215
    %10217 = vrot.lane.b32.xlu0 %v10137, 48
    %v10218 = vpop.permute.xlu0 %10217
    %10219 = vrot.lane.b32.xlu0 %v10140, 48
    %v10220 = vpop.permute.xlu0 %10219
    %10221 = vrot.lane.b32.xlu0 %v10143, 48
    %v10222 = vpop.permute.xlu0 %10221
    %10223 = vrot.lane.b32.xlu0 %v10146, 48
    %v10224 = vpop.permute.xlu0 %10223
    %10225 = vrot.lane.b32.xlu0 %v10149, 48
    %v10226 = vpop.permute.xlu0 %10225
    %10227 = vrot.lane.b32.xlu0 %v10152, 48
    %v10228 = vpop.permute.xlu0 %10227
    %10229 = vrot.lane.b32.xlu0 %v10155, 48
    %v10230 = vpop.permute.xlu0 %10229
    %10231 = vrot.lane.b32.xlu0 %v10158, 48
    %v10232 = vpop.permute.xlu0 %10231
    %10233 = vrot.lane.b32.xlu0 %v10161, 48
    %v10234 = vpop.permute.xlu0 %10233
    %10235 = vrot.lane.b32.xlu0 %v10164, 48
    %v10236 = vpop.permute.xlu0 %10235
    %10237 = vrot.lane.b32.xlu0 %v10167, 48
    %v10238 = vpop.permute.xlu0 %10237
    %10239 = vrot.lane.b32.xlu0 %v10170, 48
    %v10240 = vpop.permute.xlu0 %10239
    %10241 = vrot.lane.b32.xlu0 %v10173, 48
    %v10242 = vpop.permute.xlu0 %10241
    %10243 = vrot.lane.b32.xlu0 %v10176, 48
    %v10244 = vpop.permute.xlu0 %10243
    %10245 = vrot.lane.b32.xlu0 %v10179, 48
    %v10246 = vpop.permute.xlu0 %10245
    %10247 = vrot.lane.b32.xlu0 %v10182, 48
    %v10248 = vpop.permute.xlu0 %10247
    %10249 = vrot.lane.b32.xlu0 %v10185, 48
    %v10250 = vpop.permute.xlu0 %10249
    %10251 = vrot.lane.b32.xlu0 %v10188, 48
    %v10252 = vpop.permute.xlu0 %10251
    %10285 = vst.msk [vmem:[#allocation3 + $0x4] sm:$0xf] %vm4804, %v10190
    %10286 = vst.msk [vmem:[#allocation3 + $0xc] sm:$0xf] %vm4804, %v10192
    %10287 = vst.msk [vmem:[#allocation3 + $0x14] sm:$0xf] %vm4804, %v10194
    %10288 = vst.msk [vmem:[#allocation3 + $0x1c] sm:$0xf] %vm4804, %v10196
    %10289 = vst.msk [vmem:[#allocation3 + $0x24] sm:$0xf] %vm4804, %v10198
    %10290 = vst.msk [vmem:[#allocation3 + $0x2c] sm:$0xf] %vm4804, %v10200
    %10291 = vst.msk [vmem:[#allocation3 + $0x34] sm:$0xf] %vm4804, %v10202
    %10292 = vst.msk [vmem:[#allocation3 + $0x3c] sm:$0xf] %vm4804, %v10204
    %10293 = vst.msk [vmem:[#allocation3 + $0x44] sm:$0xf] %vm4804, %v10206
    %10294 = vst.msk [vmem:[#allocation3 + $0x4c] sm:$0xf] %vm4804, %v10208
    %10295 = vst.msk [vmem:[#allocation3 + $0x54] sm:$0xf] %vm4804, %v10210
    %10296 = vst.msk [vmem:[#allocation3 + $0x5c] sm:$0xf] %vm4804, %v10212
    %10297 = vst.msk [vmem:[#allocation3 + $0x64] sm:$0xf] %vm4804, %v10214
    %10298 = vst.msk [vmem:[#allocation3 + $0x6c] sm:$0xf] %vm4804, %v10216
    %10299 = vst.msk [vmem:[#allocation3 + $0x74] sm:$0xf] %vm4804, %v10218
    %10300 = vst.msk [vmem:[#allocation3 + $0x7c] sm:$0xf] %vm4804, %v10220
    %10301 = vst.msk [vmem:[#allocation3 + $0x84] sm:$0xf] %vm4804, %v10222
    %10302 = vst.msk [vmem:[#allocation3 + $0x8c] sm:$0xf] %vm4804, %v10224
    %10303 = vst.msk [vmem:[#allocation3 + $0x94] sm:$0xf] %vm4804, %v10226
    %10304 = vst.msk [vmem:[#allocation3 + $0x9c] sm:$0xf] %vm4804, %v10228
    %10305 = vst.msk [vmem:[#allocation3 + $0xa4] sm:$0xf] %vm4804, %v10230
    %10306 = vst.msk [vmem:[#allocation3 + $0xac] sm:$0xf] %vm4804, %v10232
    %10307 = vst.msk [vmem:[#allocation3 + $0xb4] sm:$0xf] %vm4804, %v10234
    %10308 = vst.msk [vmem:[#allocation3 + $0xbc] sm:$0xf] %vm4804, %v10236
    %10309 = vst.msk [vmem:[#allocation3 + $0xc4] sm:$0xf] %vm4804, %v10238
    %10310 = vst.msk [vmem:[#allocation3 + $0xcc] sm:$0xf] %vm4804, %v10240
    %10311 = vst.msk [vmem:[#allocation3 + $0xd4] sm:$0xf] %vm4804, %v10242
    %10312 = vst.msk [vmem:[#allocation3 + $0xdc] sm:$0xf] %vm4804, %v10244
    %10313 = vst.msk [vmem:[#allocation3 + $0xe4] sm:$0xf] %vm4804, %v10246
    %10314 = vst.msk [vmem:[#allocation3 + $0xec] sm:$0xf] %vm4804, %v10248
    %10315 = vst.msk [vmem:[#allocation3 + $0xf4] sm:$0xf] %vm4804, %v10250
    %10316 = vst.msk [vmem:[#allocation3 + $0xfc] sm:$0xf] %vm4804, %v10252
    %v10317 = vld [vmem:[#allocation2 + $0x40] sm:$0xe]
    %v10318 = vld [vmem:[#allocation2 + $0x44] sm:$0xf]
    %v10319 = vld [vmem:[#allocation2 + $0x48] sm:$0xf]
    %v10320 = vld [vmem:[#allocation2 + $0x4c] sm:$0xf]
    %v10321 = vld [vmem:[#allocation2 + $0x50] sm:$0xf]
    %v10322 = vld [vmem:[#allocation2 + $0x54] sm:$0xf]
    %v10323 = vld [vmem:[#allocation2 + $0x58] sm:$0xf]
    %v10324 = vld [vmem:[#allocation2 + $0x5c] sm:$0xf]
    %v10325 = vld [vmem:[#allocation2 + $0x60] sm:$0xf]
    %v10326 = vld [vmem:[#allocation2 + $0x64] sm:$0xf]
    %v10327 = vld [vmem:[#allocation2 + $0x68] sm:$0xf]
    %v10328 = vld [vmem:[#allocation2 + $0x6c] sm:$0xf]
    %v10329 = vld [vmem:[#allocation2 + $0x70] sm:$0xf]
    %v10330 = vld [vmem:[#allocation2 + $0x74] sm:$0xf]
    %v10331 = vld [vmem:[#allocation2 + $0x78] sm:$0xf]
    %v10332 = vld [vmem:[#allocation2 + $0x7c] sm:$0xf]
    %v10333 = vld [vmem:[#allocation2 + $0x80] sm:$0xf]
    %v10334 = vld [vmem:[#allocation2 + $0x84] sm:$0xf]
    %v10335 = vld [vmem:[#allocation2 + $0x88] sm:$0xf]
    %v10336 = vld [vmem:[#allocation2 + $0x8c] sm:$0xf]
    %v10337 = vld [vmem:[#allocation2 + $0x90] sm:$0xf]
    %v10338 = vld [vmem:[#allocation2 + $0x94] sm:$0xf]
    %v10339 = vld [vmem:[#allocation2 + $0x98] sm:$0xf]
    %v10340 = vld [vmem:[#allocation2 + $0x9c] sm:$0xf]
    %v10341 = vld [vmem:[#allocation2 + $0xa0] sm:$0xf]
    %v10342 = vld [vmem:[#allocation2 + $0xa4] sm:$0xf]
    %v10343 = vld [vmem:[#allocation2 + $0xa8] sm:$0xf]
    %v10344 = vld [vmem:[#allocation2 + $0xac] sm:$0xf]
    %v10345 = vld [vmem:[#allocation2 + $0xb0] sm:$0xf]
    %v10346 = vld [vmem:[#allocation2 + $0xb4] sm:$0xf]
    %v10347 = vld [vmem:[#allocation2 + $0xb8] sm:$0xf]
    %v10348 = vld [vmem:[#allocation2 + $0xbc] sm:$0xf]
    %v10349 = vld [vmem:[#allocation2 + $0xc0] sm:$0x3]
    %v10351 = vshrl.u32 %v10317, 16
    %v10353 = vrot.slane %v10351, 5
    %v10354 = vshll.u32 %v10317, 16
    %v10356 = vrot.slane %v10354, 6
    %v10357 = vor.u32 %v10353, %v10356
    %v10358 = vrot.slane %v10357, 4
    %v10360 = vshrl.u32 %v10318, 16
    %v10362 = vrot.slane %v10360, 5
    %v10363 = vshll.u32 %v10318, 16
    %v10365 = vrot.slane %v10363, 6
    %v10366 = vor.u32 %v10362, %v10365
    %v10367 = vsel %vm3405, %v10358, %v10366
    %v10368 = vrot.slane %v10366, 4
    %v10370 = vshrl.u32 %v10319, 16
    %v10372 = vrot.slane %v10370, 5
    %v10373 = vshll.u32 %v10319, 16
    %v10375 = vrot.slane %v10373, 6
    %v10376 = vor.u32 %v10372, %v10375
    %v10377 = vsel %vm3405, %v10368, %v10376
    %v10378 = vrot.slane %v10376, 4
    %v10380 = vshrl.u32 %v10320, 16
    %v10382 = vrot.slane %v10380, 5
    %v10383 = vshll.u32 %v10320, 16
    %v10385 = vrot.slane %v10383, 6
    %v10386 = vor.u32 %v10382, %v10385
    %v10387 = vsel %vm3405, %v10378, %v10386
    %v10388 = vrot.slane %v10386, 4
    %v10390 = vshrl.u32 %v10321, 16
    %v10392 = vrot.slane %v10390, 5
    %v10393 = vshll.u32 %v10321, 16
    %v10395 = vrot.slane %v10393, 6
    %v10396 = vor.u32 %v10392, %v10395
    %v10397 = vsel %vm3405, %v10388, %v10396
    %v10398 = vrot.slane %v10396, 4
    %v10400 = vshrl.u32 %v10322, 16
    %v10402 = vrot.slane %v10400, 5
    %v10403 = vshll.u32 %v10322, 16
    %v10405 = vrot.slane %v10403, 6
    %v10406 = vor.u32 %v10402, %v10405
    %v10407 = vsel %vm3405, %v10398, %v10406
    %v10408 = vrot.slane %v10406, 4
    %v10410 = vshrl.u32 %v10323, 16
    %v10412 = vrot.slane %v10410, 5
    %v10413 = vshll.u32 %v10323, 16
    %v10415 = vrot.slane %v10413, 6
    %v10416 = vor.u32 %v10412, %v10415
    %v10417 = vsel %vm3405, %v10408, %v10416
    %v10418 = vrot.slane %v10416, 4
    %v10420 = vshrl.u32 %v10324, 16
    %v10422 = vrot.slane %v10420, 5
    %v10423 = vshll.u32 %v10324, 16
    %v10425 = vrot.slane %v10423, 6
    %v10426 = vor.u32 %v10422, %v10425
    %v10427 = vsel %vm3405, %v10418, %v10426
    %v10428 = vrot.slane %v10426, 4
    %v10430 = vshrl.u32 %v10325, 16
    %v10432 = vrot.slane %v10430, 5
    %v10433 = vshll.u32 %v10325, 16
    %v10435 = vrot.slane %v10433, 6
    %v10436 = vor.u32 %v10432, %v10435
    %v10437 = vsel %vm3405, %v10428, %v10436
    %v10438 = vrot.slane %v10436, 4
    %v10440 = vshrl.u32 %v10326, 16
    %v10442 = vrot.slane %v10440, 5
    %v10443 = vshll.u32 %v10326, 16
    %v10445 = vrot.slane %v10443, 6
    %v10446 = vor.u32 %v10442, %v10445
    %v10447 = vsel %vm3405, %v10438, %v10446
    %v10448 = vrot.slane %v10446, 4
    %v10450 = vshrl.u32 %v10327, 16
    %v10452 = vrot.slane %v10450, 5
    %v10453 = vshll.u32 %v10327, 16
    %v10455 = vrot.slane %v10453, 6
    %v10456 = vor.u32 %v10452, %v10455
    %v10457 = vsel %vm3405, %v10448, %v10456
    %v10458 = vrot.slane %v10456, 4
    %v10460 = vshrl.u32 %v10328, 16
    %v10462 = vrot.slane %v10460, 5
    %v10463 = vshll.u32 %v10328, 16
    %v10465 = vrot.slane %v10463, 6
    %v10466 = vor.u32 %v10462, %v10465
    %v10467 = vsel %vm3405, %v10458, %v10466
    %v10468 = vrot.slane %v10466, 4
    %v10470 = vshrl.u32 %v10329, 16
    %v10472 = vrot.slane %v10470, 5
    %v10473 = vshll.u32 %v10329, 16
    %v10475 = vrot.slane %v10473, 6
    %v10476 = vor.u32 %v10472, %v10475
    %v10477 = vsel %vm3405, %v10468, %v10476
    %v10478 = vrot.slane %v10476, 4
    %v10480 = vshrl.u32 %v10330, 16
    %v10482 = vrot.slane %v10480, 5
    %v10483 = vshll.u32 %v10330, 16
    %v10485 = vrot.slane %v10483, 6
    %v10486 = vor.u32 %v10482, %v10485
    %v10487 = vsel %vm3405, %v10478, %v10486
    %v10488 = vrot.slane %v10486, 4
    %v10490 = vshrl.u32 %v10331, 16
    %v10492 = vrot.slane %v10490, 5
    %v10493 = vshll.u32 %v10331, 16
    %v10495 = vrot.slane %v10493, 6
    %v10496 = vor.u32 %v10492, %v10495
    %v10497 = vsel %vm3405, %v10488, %v10496
    %v10498 = vrot.slane %v10496, 4
    %v10500 = vshrl.u32 %v10332, 16
    %v10502 = vrot.slane %v10500, 5
    %v10503 = vshll.u32 %v10332, 16
    %v10505 = vrot.slane %v10503, 6
    %v10506 = vor.u32 %v10502, %v10505
    %v10507 = vsel %vm3405, %v10498, %v10506
    %v10508 = vrot.slane %v10506, 4
    %v10510 = vshrl.u32 %v10333, 16
    %v10512 = vrot.slane %v10510, 5
    %v10513 = vshll.u32 %v10333, 16
    %v10515 = vrot.slane %v10513, 6
    %v10516 = vor.u32 %v10512, %v10515
    %v10517 = vsel %vm3405, %v10508, %v10516
    %v10518 = vrot.slane %v10516, 4
    %v10520 = vshrl.u32 %v10334, 16
    %v10522 = vrot.slane %v10520, 5
    %v10523 = vshll.u32 %v10334, 16
    %v10525 = vrot.slane %v10523, 6
    %v10526 = vor.u32 %v10522, %v10525
    %v10527 = vsel %vm3405, %v10518, %v10526
    %v10528 = vrot.slane %v10526, 4
    %v10530 = vshrl.u32 %v10335, 16
    %v10532 = vrot.slane %v10530, 5
    %v10533 = vshll.u32 %v10335, 16
    %v10535 = vrot.slane %v10533, 6
    %v10536 = vor.u32 %v10532, %v10535
    %v10537 = vsel %vm3405, %v10528, %v10536
    %v10538 = vrot.slane %v10536, 4
    %v10540 = vshrl.u32 %v10336, 16
    %v10542 = vrot.slane %v10540, 5
    %v10543 = vshll.u32 %v10336, 16
    %v10545 = vrot.slane %v10543, 6
    %v10546 = vor.u32 %v10542, %v10545
    %v10547 = vsel %vm3405, %v10538, %v10546
    %v10548 = vrot.slane %v10546, 4
    %v10550 = vshrl.u32 %v10337, 16
    %v10552 = vrot.slane %v10550, 5
    %v10553 = vshll.u32 %v10337, 16
    %v10555 = vrot.slane %v10553, 6
    %v10556 = vor.u32 %v10552, %v10555
    %v10557 = vsel %vm3405, %v10548, %v10556
    %v10558 = vrot.slane %v10556, 4
    %v10560 = vshrl.u32 %v10338, 16
    %v10562 = vrot.slane %v10560, 5
    %v10563 = vshll.u32 %v10338, 16
    %v10565 = vrot.slane %v10563, 6
    %v10566 = vor.u32 %v10562, %v10565
    %v10567 = vsel %vm3405, %v10558, %v10566
    %v10568 = vrot.slane %v10566, 4
    %v10570 = vshrl.u32 %v10339, 16
    %v10572 = vrot.slane %v10570, 5
    %v10573 = vshll.u32 %v10339, 16
    %v10575 = vrot.slane %v10573, 6
    %v10576 = vor.u32 %v10572, %v10575
    %v10577 = vsel %vm3405, %v10568, %v10576
    %v10578 = vrot.slane %v10576, 4
    %v10580 = vshrl.u32 %v10340, 16
    %v10582 = vrot.slane %v10580, 5
    %v10583 = vshll.u32 %v10340, 16
    %v10585 = vrot.slane %v10583, 6
    %v10586 = vor.u32 %v10582, %v10585
    %v10587 = vsel %vm3405, %v10578, %v10586
    %v10588 = vrot.slane %v10586, 4
    %v10590 = vshrl.u32 %v10341, 16
    %v10592 = vrot.slane %v10590, 5
    %v10593 = vshll.u32 %v10341, 16
    %v10595 = vrot.slane %v10593, 6
    %v10596 = vor.u32 %v10592, %v10595
    %v10597 = vsel %vm3405, %v10588, %v10596
    %v10598 = vrot.slane %v10596, 4
    %v10600 = vshrl.u32 %v10342, 16
    %v10602 = vrot.slane %v10600, 5
    %v10603 = vshll.u32 %v10342, 16
    %v10605 = vrot.slane %v10603, 6
    %v10606 = vor.u32 %v10602, %v10605
    %v10607 = vsel %vm3405, %v10598, %v10606
    %v10608 = vrot.slane %v10606, 4
    %v10610 = vshrl.u32 %v10343, 16
    %v10612 = vrot.slane %v10610, 5
    %v10613 = vshll.u32 %v10343, 16
    %v10615 = vrot.slane %v10613, 6
    %v10616 = vor.u32 %v10612, %v10615
    %v10617 = vsel %vm3405, %v10608, %v10616
    %v10618 = vrot.slane %v10616, 4
    %v10620 = vshrl.u32 %v10344, 16
    %v10622 = vrot.slane %v10620, 5
    %v10623 = vshll.u32 %v10344, 16
    %v10625 = vrot.slane %v10623, 6
    %v10626 = vor.u32 %v10622, %v10625
    %v10627 = vsel %vm3405, %v10618, %v10626
    %v10628 = vrot.slane %v10626, 4
    %v10630 = vshrl.u32 %v10345, 16
    %v10632 = vrot.slane %v10630, 5
    %v10633 = vshll.u32 %v10345, 16
    %v10635 = vrot.slane %v10633, 6
    %v10636 = vor.u32 %v10632, %v10635
    %v10637 = vsel %vm3405, %v10628, %v10636
    %v10638 = vrot.slane %v10636, 4
    %v10640 = vshrl.u32 %v10346, 16
    %v10642 = vrot.slane %v10640, 5
    %v10643 = vshll.u32 %v10346, 16
    %v10645 = vrot.slane %v10643, 6
    %v10646 = vor.u32 %v10642, %v10645
    %v10647 = vsel %vm3405, %v10638, %v10646
    %v10648 = vrot.slane %v10646, 4
    %v10650 = vshrl.u32 %v10347, 16
    %v10652 = vrot.slane %v10650, 5
    %v10653 = vshll.u32 %v10347, 16
    %v10655 = vrot.slane %v10653, 6
    %v10656 = vor.u32 %v10652, %v10655
    %v10657 = vsel %vm3405, %v10648, %v10656
    %v10658 = vrot.slane %v10656, 4
    %v10660 = vshrl.u32 %v10348, 16
    %v10662 = vrot.slane %v10660, 5
    %v10663 = vshll.u32 %v10348, 16
    %v10665 = vrot.slane %v10663, 6
    %v10666 = vor.u32 %v10662, %v10665
    %v10667 = vsel %vm3405, %v10658, %v10666
    %v10668 = vrot.slane %v10666, 4
    %v10670 = vshrl.u32 %v10349, 16
    %v10672 = vrot.slane %v10670, 5
    %v10673 = vshll.u32 %v10349, 16
    %v10675 = vrot.slane %v10673, 6
    %v10676 = vor.u32 %v10672, %v10675
    %v10677 = vsel %vm3405, %v10668, %v10676
    %10678 = vrot.lane.b32.xlu0 %v10367, 56
    %v10679 = vpop.permute.xlu0 %10678
    %10680 = vrot.lane.b32.xlu0 %v10377, 56
    %v10681 = vpop.permute.xlu0 %10680
    %10682 = vrot.lane.b32.xlu0 %v10387, 56
    %v10683 = vpop.permute.xlu0 %10682
    %10684 = vrot.lane.b32.xlu0 %v10397, 56
    %v10685 = vpop.permute.xlu0 %10684
    %10686 = vrot.lane.b32.xlu0 %v10407, 56
    %v10687 = vpop.permute.xlu0 %10686
    %10688 = vrot.lane.b32.xlu0 %v10417, 56
    %v10689 = vpop.permute.xlu0 %10688
    %10690 = vrot.lane.b32.xlu0 %v10427, 56
    %v10691 = vpop.permute.xlu0 %10690
    %10692 = vrot.lane.b32.xlu0 %v10437, 56
    %v10693 = vpop.permute.xlu0 %10692
    %10694 = vrot.lane.b32.xlu0 %v10447, 56
    %v10695 = vpop.permute.xlu0 %10694
    %10696 = vrot.lane.b32.xlu0 %v10457, 56
    %v10697 = vpop.permute.xlu0 %10696
    %10698 = vrot.lane.b32.xlu0 %v10467, 56
    %v10699 = vpop.permute.xlu0 %10698
    %10700 = vrot.lane.b32.xlu0 %v10477, 56
    %v10701 = vpop.permute.xlu0 %10700
    %10702 = vrot.lane.b32.xlu0 %v10487, 56
    %v10703 = vpop.permute.xlu0 %10702
    %10704 = vrot.lane.b32.xlu0 %v10497, 56
    %v10705 = vpop.permute.xlu0 %10704
    %10706 = vrot.lane.b32.xlu0 %v10507, 56
    %v10707 = vpop.permute.xlu0 %10706
    %10708 = vrot.lane.b32.xlu0 %v10517, 56
    %v10709 = vpop.permute.xlu0 %10708
    %10710 = vrot.lane.b32.xlu0 %v10527, 56
    %v10711 = vpop.permute.xlu0 %10710
    %10712 = vrot.lane.b32.xlu0 %v10537, 56
    %v10713 = vpop.permute.xlu0 %10712
    %10714 = vrot.lane.b32.xlu0 %v10547, 56
    %v10715 = vpop.permute.xlu0 %10714
    %10716 = vrot.lane.b32.xlu0 %v10557, 56
    %v10717 = vpop.permute.xlu0 %10716
    %10718 = vrot.lane.b32.xlu0 %v10567, 56
    %v10719 = vpop.permute.xlu0 %10718
    %10720 = vrot.lane.b32.xlu0 %v10577, 56
    %v10721 = vpop.permute.xlu0 %10720
    %10722 = vrot.lane.b32.xlu0 %v10587, 56
    %v10723 = vpop.permute.xlu0 %10722
    %10724 = vrot.lane.b32.xlu0 %v10597, 56
    %v10725 = vpop.permute.xlu0 %10724
    %10726 = vrot.lane.b32.xlu0 %v10607, 56
    %v10727 = vpop.permute.xlu0 %10726
    %10728 = vrot.lane.b32.xlu0 %v10617, 56
    %v10729 = vpop.permute.xlu0 %10728
    %10730 = vrot.lane.b32.xlu0 %v10627, 56
    %v10731 = vpop.permute.xlu0 %10730
    %10732 = vrot.lane.b32.xlu0 %v10637, 56
    %v10733 = vpop.permute.xlu0 %10732
    %10734 = vrot.lane.b32.xlu0 %v10647, 56
    %v10735 = vpop.permute.xlu0 %10734
    %10736 = vrot.lane.b32.xlu0 %v10657, 56
    %v10737 = vpop.permute.xlu0 %10736
    %10738 = vrot.lane.b32.xlu0 %v10667, 56
    %v10739 = vpop.permute.xlu0 %10738
    %10740 = vrot.lane.b32.xlu0 %v10677, 56
    %v10741 = vpop.permute.xlu0 %10740
    %10774 = vst.msk [vmem:[#allocation3 + $0x4] sm:$0xf] %vm5096, %v10679
    %10775 = vst.msk [vmem:[#allocation3 + $0xc] sm:$0xf] %vm5096, %v10681
    %10776 = vst.msk [vmem:[#allocation3 + $0x14] sm:$0xf] %vm5096, %v10683
    %10777 = vst.msk [vmem:[#allocation3 + $0x1c] sm:$0xf] %vm5096, %v10685
    %10778 = vst.msk [vmem:[#allocation3 + $0x24] sm:$0xf] %vm5096, %v10687
    %10779 = vst.msk [vmem:[#allocation3 + $0x2c] sm:$0xf] %vm5096, %v10689
    %10780 = vst.msk [vmem:[#allocation3 + $0x34] sm:$0xf] %vm5096, %v10691
    %10781 = vst.msk [vmem:[#allocation3 + $0x3c] sm:$0xf] %vm5096, %v10693
    %10782 = vst.msk [vmem:[#allocation3 + $0x44] sm:$0xf] %vm5096, %v10695
    %10783 = vst.msk [vmem:[#allocation3 + $0x4c] sm:$0xf] %vm5096, %v10697
    %10784 = vst.msk [vmem:[#allocation3 + $0x54] sm:$0xf] %vm5096, %v10699
    %10785 = vst.msk [vmem:[#allocation3 + $0x5c] sm:$0xf] %vm5096, %v10701
    %10786 = vst.msk [vmem:[#allocation3 + $0x64] sm:$0xf] %vm5096, %v10703
    %10787 = vst.msk [vmem:[#allocation3 + $0x6c] sm:$0xf] %vm5096, %v10705
    %10788 = vst.msk [vmem:[#allocation3 + $0x74] sm:$0xf] %vm5096, %v10707
    %10789 = vst.msk [vmem:[#allocation3 + $0x7c] sm:$0xf] %vm5096, %v10709
    %10790 = vst.msk [vmem:[#allocation3 + $0x84] sm:$0xf] %vm5096, %v10711
    %10791 = vst.msk [vmem:[#allocation3 + $0x8c] sm:$0xf] %vm5096, %v10713
    %10792 = vst.msk [vmem:[#allocation3 + $0x94] sm:$0xf] %vm5096, %v10715
    %10793 = vst.msk [vmem:[#allocation3 + $0x9c] sm:$0xf] %vm5096, %v10717
    %10794 = vst.msk [vmem:[#allocation3 + $0xa4] sm:$0xf] %vm5096, %v10719
    %10795 = vst.msk [vmem:[#allocation3 + $0xac] sm:$0xf] %vm5096, %v10721
    %10796 = vst.msk [vmem:[#allocation3 + $0xb4] sm:$0xf] %vm5096, %v10723
    %10797 = vst.msk [vmem:[#allocation3 + $0xbc] sm:$0xf] %vm5096, %v10725
    %10798 = vst.msk [vmem:[#allocation3 + $0xc4] sm:$0xf] %vm5096, %v10727
    %10799 = vst.msk [vmem:[#allocation3 + $0xcc] sm:$0xf] %vm5096, %v10729
    %10800 = vst.msk [vmem:[#allocation3 + $0xd4] sm:$0xf] %vm5096, %v10731
    %10801 = vst.msk [vmem:[#allocation3 + $0xdc] sm:$0xf] %vm5096, %v10733
    %10802 = vst.msk [vmem:[#allocation3 + $0xe4] sm:$0xf] %vm5096, %v10735
    %10803 = vst.msk [vmem:[#allocation3 + $0xec] sm:$0xf] %vm5096, %v10737
    %10804 = vst.msk [vmem:[#allocation3 + $0xf4] sm:$0xf] %vm5096, %v10739
    %10805 = vst.msk [vmem:[#allocation3 + $0xfc] sm:$0xf] %vm5096, %v10741
    %v10806 = vld [vmem:[#allocation2 + $0x40] sm:$0xc]
    %v10807 = vld [vmem:[#allocation2 + $0x44] sm:$0xf]
    %v10808 = vld [vmem:[#allocation2 + $0x48] sm:$0xf]
    %v10809 = vld [vmem:[#allocation2 + $0x4c] sm:$0xf]
    %v10810 = vld [vmem:[#allocation2 + $0x50] sm:$0xf]
    %v10811 = vld [vmem:[#allocation2 + $0x54] sm:$0xf]
    %v10812 = vld [vmem:[#allocation2 + $0x58] sm:$0xf]
    %v10813 = vld [vmem:[#allocation2 + $0x5c] sm:$0xf]
    %v10814 = vld [vmem:[#allocation2 + $0x60] sm:$0xf]
    %v10815 = vld [vmem:[#allocation2 + $0x64] sm:$0xf]
    %v10816 = vld [vmem:[#allocation2 + $0x68] sm:$0xf]
    %v10817 = vld [vmem:[#allocation2 + $0x6c] sm:$0xf]
    %v10818 = vld [vmem:[#allocation2 + $0x70] sm:$0xf]
    %v10819 = vld [vmem:[#allocation2 + $0x74] sm:$0xf]
    %v10820 = vld [vmem:[#allocation2 + $0x78] sm:$0xf]
    %v10821 = vld [vmem:[#allocation2 + $0x7c] sm:$0xf]
    %v10822 = vld [vmem:[#allocation2 + $0x80] sm:$0xf]
    %v10823 = vld [vmem:[#allocation2 + $0x84] sm:$0xf]
    %v10824 = vld [vmem:[#allocation2 + $0x88] sm:$0xf]
    %v10825 = vld [vmem:[#allocation2 + $0x8c] sm:$0xf]
    %v10826 = vld [vmem:[#allocation2 + $0x90] sm:$0xf]
    %v10827 = vld [vmem:[#allocation2 + $0x94] sm:$0xf]
    %v10828 = vld [vmem:[#allocation2 + $0x98] sm:$0xf]
    %v10829 = vld [vmem:[#allocation2 + $0x9c] sm:$0xf]
    %v10830 = vld [vmem:[#allocation2 + $0xa0] sm:$0xf]
    %v10831 = vld [vmem:[#allocation2 + $0xa4] sm:$0xf]
    %v10832 = vld [vmem:[#allocation2 + $0xa8] sm:$0xf]
    %v10833 = vld [vmem:[#allocation2 + $0xac] sm:$0xf]
    %v10834 = vld [vmem:[#allocation2 + $0xb0] sm:$0xf]
    %v10835 = vld [vmem:[#allocation2 + $0xb4] sm:$0xf]
    %v10836 = vld [vmem:[#allocation2 + $0xb8] sm:$0xf]
    %v10837 = vld [vmem:[#allocation2 + $0xbc] sm:$0xf]
    %v10838 = vld [vmem:[#allocation2 + $0xc0] sm:$0x3]
    %v10872 = vrot.slane %v10806, 6
    %v10873 = vrot.slane %v10872, 4
    %v10874 = vrot.slane %v10807, 6
    %v10875 = vsel %vm3931, %v10873, %v10874
    %v10876 = vrot.slane %v10874, 4
    %v10877 = vrot.slane %v10808, 6
    %v10878 = vsel %vm3931, %v10876, %v10877
    %v10879 = vrot.slane %v10877, 4
    %v10880 = vrot.slane %v10809, 6
    %v10881 = vsel %vm3931, %v10879, %v10880
    %v10882 = vrot.slane %v10880, 4
    %v10883 = vrot.slane %v10810, 6
    %v10884 = vsel %vm3931, %v10882, %v10883
    %v10885 = vrot.slane %v10883, 4
    %v10886 = vrot.slane %v10811, 6
    %v10887 = vsel %vm3931, %v10885, %v10886
    %v10888 = vrot.slane %v10886, 4
    %v10889 = vrot.slane %v10812, 6
    %v10890 = vsel %vm3931, %v10888, %v10889
    %v10891 = vrot.slane %v10889, 4
    %v10892 = vrot.slane %v10813, 6
    %v10893 = vsel %vm3931, %v10891, %v10892
    %v10894 = vrot.slane %v10892, 4
    %v10895 = vrot.slane %v10814, 6
    %v10896 = vsel %vm3931, %v10894, %v10895
    %v10897 = vrot.slane %v10895, 4
    %v10898 = vrot.slane %v10815, 6
    %v10899 = vsel %vm3931, %v10897, %v10898
    %v10900 = vrot.slane %v10898, 4
    %v10901 = vrot.slane %v10816, 6
    %v10902 = vsel %vm3931, %v10900, %v10901
    %v10903 = vrot.slane %v10901, 4
    %v10904 = vrot.slane %v10817, 6
    %v10905 = vsel %vm3931, %v10903, %v10904
    %v10906 = vrot.slane %v10904, 4
    %v10907 = vrot.slane %v10818, 6
    %v10908 = vsel %vm3931, %v10906, %v10907
    %v10909 = vrot.slane %v10907, 4
    %v10910 = vrot.slane %v10819, 6
    %v10911 = vsel %vm3931, %v10909, %v10910
    %v10912 = vrot.slane %v10910, 4
    %v10913 = vrot.slane %v10820, 6
    %v10914 = vsel %vm3931, %v10912, %v10913
    %v10915 = vrot.slane %v10913, 4
    %v10916 = vrot.slane %v10821, 6
    %v10917 = vsel %vm3931, %v10915, %v10916
    %v10918 = vrot.slane %v10916, 4
    %v10919 = vrot.slane %v10822, 6
    %v10920 = vsel %vm3931, %v10918, %v10919
    %v10921 = vrot.slane %v10919, 4
    %v10922 = vrot.slane %v10823, 6
    %v10923 = vsel %vm3931, %v10921, %v10922
    %v10924 = vrot.slane %v10922, 4
    %v10925 = vrot.slane %v10824, 6
    %v10926 = vsel %vm3931, %v10924, %v10925
    %v10927 = vrot.slane %v10925, 4
    %v10928 = vrot.slane %v10825, 6
    %v10929 = vsel %vm3931, %v10927, %v10928
    %v10930 = vrot.slane %v10928, 4
    %v10931 = vrot.slane %v10826, 6
    %v10932 = vsel %vm3931, %v10930, %v10931
    %v10933 = vrot.slane %v10931, 4
    %v10934 = vrot.slane %v10827, 6
    %v10935 = vsel %vm3931, %v10933, %v10934
    %v10936 = vrot.slane %v10934, 4
    %v10937 = vrot.slane %v10828, 6
    %v10938 = vsel %vm3931, %v10936, %v10937
    %v10939 = vrot.slane %v10937, 4
    %v10940 = vrot.slane %v10829, 6
    %v10941 = vsel %vm3931, %v10939, %v10940
    %v10942 = vrot.slane %v10940, 4
    %v10943 = vrot.slane %v10830, 6
    %v10944 = vsel %vm3931, %v10942, %v10943
    %v10945 = vrot.slane %v10943, 4
    %v10946 = vrot.slane %v10831, 6
    %v10947 = vsel %vm3931, %v10945, %v10946
    %v10948 = vrot.slane %v10946, 4
    %v10949 = vrot.slane %v10832, 6
    %v10950 = vsel %vm3931, %v10948, %v10949
    %v10951 = vrot.slane %v10949, 4
    %v10952 = vrot.slane %v10833, 6
    %v10953 = vsel %vm3931, %v10951, %v10952
    %v10954 = vrot.slane %v10952, 4
    %v10955 = vrot.slane %v10834, 6
    %v10956 = vsel %vm3931, %v10954, %v10955
    %v10957 = vrot.slane %v10955, 4
    %v10958 = vrot.slane %v10835, 6
    %v10959 = vsel %vm3931, %v10957, %v10958
    %v10960 = vrot.slane %v10958, 4
    %v10961 = vrot.slane %v10836, 6
    %v10962 = vsel %vm3931, %v10960, %v10961
    %v10963 = vrot.slane %v10961, 4
    %v10964 = vrot.slane %v10837, 6
    %v10965 = vsel %vm3931, %v10963, %v10964
    %v10966 = vrot.slane %v10964, 4
    %v10967 = vrot.slane %v10838, 6
    %v10968 = vsel %vm3931, %v10966, %v10967
    %10969 = vrot.lane.b32.xlu0 %v10875, 64
    %v10970 = vpop.permute.xlu0 %10969
    %10971 = vrot.lane.b32.xlu0 %v10878, 64
    %v10972 = vpop.permute.xlu0 %10971
    %10973 = vrot.lane.b32.xlu0 %v10881, 64
    %v10974 = vpop.permute.xlu0 %10973
    %10975 = vrot.lane.b32.xlu0 %v10884, 64
    %v10976 = vpop.permute.xlu0 %10975
    %10977 = vrot.lane.b32.xlu0 %v10887, 64
    %v10978 = vpop.permute.xlu0 %10977
    %10979 = vrot.lane.b32.xlu0 %v10890, 64
    %v10980 = vpop.permute.xlu0 %10979
    %10981 = vrot.lane.b32.xlu0 %v10893, 64
    %v10982 = vpop.permute.xlu0 %10981
    %10983 = vrot.lane.b32.xlu0 %v10896, 64
    %v10984 = vpop.permute.xlu0 %10983
    %10985 = vrot.lane.b32.xlu0 %v10899, 64
    %v10986 = vpop.permute.xlu0 %10985
    %10987 = vrot.lane.b32.xlu0 %v10902, 64
    %v10988 = vpop.permute.xlu0 %10987
    %10989 = vrot.lane.b32.xlu0 %v10905, 64
    %v10990 = vpop.permute.xlu0 %10989
    %10991 = vrot.lane.b32.xlu0 %v10908, 64
    %v10992 = vpop.permute.xlu0 %10991
    %10993 = vrot.lane.b32.xlu0 %v10911, 64
    %v10994 = vpop.permute.xlu0 %10993
    %10995 = vrot.lane.b32.xlu0 %v10914, 64
    %v10996 = vpop.permute.xlu0 %10995
    %10997 = vrot.lane.b32.xlu0 %v10917, 64
    %v10998 = vpop.permute.xlu0 %10997
    %10999 = vrot.lane.b32.xlu0 %v10920, 64
    %v11000 = vpop.permute.xlu0 %10999
    %11001 = vrot.lane.b32.xlu0 %v10923, 64
    %v11002 = vpop.permute.xlu0 %11001
    %11003 = vrot.lane.b32.xlu0 %v10926, 64
    %v11004 = vpop.permute.xlu0 %11003
    %11005 = vrot.lane.b32.xlu0 %v10929, 64
    %v11006 = vpop.permute.xlu0 %11005
    %11007 = vrot.lane.b32.xlu0 %v10932, 64
    %v11008 = vpop.permute.xlu0 %11007
    %11009 = vrot.lane.b32.xlu0 %v10935, 64
    %v11010 = vpop.permute.xlu0 %11009
    %11011 = vrot.lane.b32.xlu0 %v10938, 64
    %v11012 = vpop.permute.xlu0 %11011
    %11013 = vrot.lane.b32.xlu0 %v10941, 64
    %v11014 = vpop.permute.xlu0 %11013
    %11015 = vrot.lane.b32.xlu0 %v10944, 64
    %v11016 = vpop.permute.xlu0 %11015
    %11017 = vrot.lane.b32.xlu0 %v10947, 64
    %v11018 = vpop.permute.xlu0 %11017
    %11019 = vrot.lane.b32.xlu0 %v10950, 64
    %v11020 = vpop.permute.xlu0 %11019
    %11021 = vrot.lane.b32.xlu0 %v10953, 64
    %v11022 = vpop.permute.xlu0 %11021
    %11023 = vrot.lane.b32.xlu0 %v10956, 64
    %v11024 = vpop.permute.xlu0 %11023
    %11025 = vrot.lane.b32.xlu0 %v10959, 64
    %v11026 = vpop.permute.xlu0 %11025
    %11027 = vrot.lane.b32.xlu0 %v10962, 64
    %v11028 = vpop.permute.xlu0 %11027
    %11029 = vrot.lane.b32.xlu0 %v10965, 64
    %v11030 = vpop.permute.xlu0 %11029
    %11031 = vrot.lane.b32.xlu0 %v10968, 64
    %v11032 = vpop.permute.xlu0 %11031
    %11065 = vst.msk [vmem:[#allocation3 + $0x4] sm:$0xf] %vm5586, %v10970
    %11066 = vst.msk [vmem:[#allocation3 + $0xc] sm:$0xf] %vm5586, %v10972
    %11067 = vst.msk [vmem:[#allocation3 + $0x14] sm:$0xf] %vm5586, %v10974
    %11068 = vst.msk [vmem:[#allocation3 + $0x1c] sm:$0xf] %vm5586, %v10976
    %11069 = vst.msk [vmem:[#allocation3 + $0x24] sm:$0xf] %vm5586, %v10978
    %11070 = vst.msk [vmem:[#allocation3 + $0x2c] sm:$0xf] %vm5586, %v10980
    %11071 = vst.msk [vmem:[#allocation3 + $0x34] sm:$0xf] %vm5586, %v10982
    %11072 = vst.msk [vmem:[#allocation3 + $0x3c] sm:$0xf] %vm5586, %v10984
    %11073 = vst.msk [vmem:[#allocation3 + $0x44] sm:$0xf] %vm5586, %v10986
    %11074 = vst.msk [vmem:[#allocation3 + $0x4c] sm:$0xf] %vm5586, %v10988
    %11075 = vst.msk [vmem:[#allocation3 + $0x54] sm:$0xf] %vm5586, %v10990
    %11076 = vst.msk [vmem:[#allocation3 + $0x5c] sm:$0xf] %vm5586, %v10992
    %11077 = vst.msk [vmem:[#allocation3 + $0x64] sm:$0xf] %vm5586, %v10994
    %11078 = vst.msk [vmem:[#allocation3 + $0x6c] sm:$0xf] %vm5586, %v10996
    %11079 = vst.msk [vmem:[#allocation3 + $0x74] sm:$0xf] %vm5586, %v10998
    %11080 = vst.msk [vmem:[#allocation3 + $0x7c] sm:$0xf] %vm5586, %v11000
    %11081 = vst.msk [vmem:[#allocation3 + $0x84] sm:$0xf] %vm5586, %v11002
    %11082 = vst.msk [vmem:[#allocation3 + $0x8c] sm:$0xf] %vm5586, %v11004
    %11083 = vst.msk [vmem:[#allocation3 + $0x94] sm:$0xf] %vm5586, %v11006
    %11084 = vst.msk [vmem:[#allocation3 + $0x9c] sm:$0xf] %vm5586, %v11008
    %11085 = vst.msk [vmem:[#allocation3 + $0xa4] sm:$0xf] %vm5586, %v11010
    %11086 = vst.msk [vmem:[#allocation3 + $0xac] sm:$0xf] %vm5586, %v11012
    %11087 = vst.msk [vmem:[#allocation3 + $0xb4] sm:$0xf] %vm5586, %v11014
    %11088 = vst.msk [vmem:[#allocation3 + $0xbc] sm:$0xf] %vm5586, %v11016
    %11089 = vst.msk [vmem:[#allocation3 + $0xc4] sm:$0xf] %vm5586, %v11018
    %11090 = vst.msk [vmem:[#allocation3 + $0xcc] sm:$0xf] %vm5586, %v11020
    %11091 = vst.msk [vmem:[#allocation3 + $0xd4] sm:$0xf] %vm5586, %v11022
    %11092 = vst.msk [vmem:[#allocation3 + $0xdc] sm:$0xf] %vm5586, %v11024
    %11093 = vst.msk [vmem:[#allocation3 + $0xe4] sm:$0xf] %vm5586, %v11026
    %11094 = vst.msk [vmem:[#allocation3 + $0xec] sm:$0xf] %vm5586, %v11028
    %11095 = vst.msk [vmem:[#allocation3 + $0xf4] sm:$0xf] %vm5586, %v11030
    %11096 = vst.msk [vmem:[#allocation3 + $0xfc] sm:$0xf] %vm5586, %v11032
    %v11097 = vld [vmem:[#allocation3] sm:$0xff]
    %v11098 = vld [vmem:[#allocation3 + $0x8] sm:$0xff]
    %v11099 = vld [vmem:[#allocation3 + $0x10] sm:$0xff]
    %v11100 = vld [vmem:[#allocation3 + $0x18] sm:$0xff]
    %v11101 = vld [vmem:[#allocation3 + $0x20] sm:$0xff]
    %v11102 = vld [vmem:[#allocation3 + $0x28] sm:$0xff]
    %v11103 = vld [vmem:[#allocation3 + $0x30] sm:$0xff]
    %v11104 = vld [vmem:[#allocation3 + $0x38] sm:$0xff]
    %v11105 = vld [vmem:[#allocation3 + $0x40] sm:$0xff]
    %v11106 = vld [vmem:[#allocation3 + $0x48] sm:$0xff]
    %v11107 = vld [vmem:[#allocation3 + $0x50] sm:$0xff]
    %v11108 = vld [vmem:[#allocation3 + $0x58] sm:$0xff]
    %v11109 = vld [vmem:[#allocation3 + $0x60] sm:$0xff]
    %v11110 = vld [vmem:[#allocation3 + $0x68] sm:$0xff]
    %v11111 = vld [vmem:[#allocation3 + $0x70] sm:$0xff]
    %v11112 = vld [vmem:[#allocation3 + $0x78] sm:$0xff]
    %v11113 = vld [vmem:[#allocation3 + $0x80] sm:$0xff]
    %v11114 = vld [vmem:[#allocation3 + $0x88] sm:$0xff]
    %v11115 = vld [vmem:[#allocation3 + $0x90] sm:$0xff]
    %v11116 = vld [vmem:[#allocation3 + $0x98] sm:$0xff]
    %v11117 = vld [vmem:[#allocation3 + $0xa0] sm:$0xff]
    %v11118 = vld [vmem:[#allocation3 + $0xa8] sm:$0xff]
    %v11119 = vld [vmem:[#allocation3 + $0xb0] sm:$0xff]
    %v11120 = vld [vmem:[#allocation3 + $0xb8] sm:$0xff]
    %v11121 = vld [vmem:[#allocation3 + $0xc0] sm:$0xff]
    %v11122 = vld [vmem:[#allocation3 + $0xc8] sm:$0xff]
    %v11123 = vld [vmem:[#allocation3 + $0xd0] sm:$0xff]
    %v11124 = vld [vmem:[#allocation3 + $0xd8] sm:$0xff]
    %v11125 = vld [vmem:[#allocation3 + $0xe0] sm:$0xff]
    %v11126 = vld [vmem:[#allocation3 + $0xe8] sm:$0xff]
    %v11127 = vld [vmem:[#allocation3 + $0xf0] sm:$0xff]
    %v11128 = vld [vmem:[#allocation3 + $0xf8] sm:$0xff]
    %v11129 = vld [vmem:[%s3] sm:$0xf]
    %v11130 = vld [vmem:[%s3 + $0x4] sm:$0xf]
    %v11131 = vld [vmem:[%s3 + $0x8] sm:$0xf]
    %v11132 = vld [vmem:[%s3 + $0xc] sm:$0xf]
    %v11133 = vld [vmem:[%s3 + $0x10] sm:$0xf]
    %v11134 = vld [vmem:[%s3 + $0x14] sm:$0xf]
    %v11135 = vld [vmem:[%s3 + $0x18] sm:$0xf]
    %v11136 = vld [vmem:[%s3 + $0x1c] sm:$0xf]
    %v11137 = vld [vmem:[%s3 + $0x20] sm:$0xf]
    %v11138 = vld [vmem:[%s3 + $0x24] sm:$0xf]
    %v11139 = vld [vmem:[%s3 + $0x28] sm:$0xf]
    %v11140 = vld [vmem:[%s3 + $0x2c] sm:$0xf]
    %v11141 = vld [vmem:[%s3 + $0x30] sm:$0xf]
    %v11142 = vld [vmem:[%s3 + $0x34] sm:$0xf]
    %v11143 = vld [vmem:[%s3 + $0x38] sm:$0xf]
    %v11144 = vld [vmem:[%s3 + $0x3c] sm:$0xf]
    %v11145 = vld [vmem:[%s3 + $0x40] sm:$0xf]
    %v11146 = vld [vmem:[%s3 + $0x44] sm:$0xf]
    %v11147 = vld [vmem:[%s3 + $0x48] sm:$0xf]
    %v11148 = vld [vmem:[%s3 + $0x4c] sm:$0xf]
    %v11149 = vld [vmem:[%s3 + $0x50] sm:$0xf]
    %v11150 = vld [vmem:[%s3 + $0x54] sm:$0xf]
    %v11151 = vld [vmem:[%s3 + $0x58] sm:$0xf]
    %v11152 = vld [vmem:[%s3 + $0x5c] sm:$0xf]
    %v11153 = vld [vmem:[%s3 + $0x60] sm:$0xf]
    %v11154 = vld [vmem:[%s3 + $0x64] sm:$0xf]
    %v11155 = vld [vmem:[%s3 + $0x68] sm:$0xf]
    %v11156 = vld [vmem:[%s3 + $0x6c] sm:$0xf]
    %v11157 = vld [vmem:[%s3 + $0x70] sm:$0xf]
    %v11158 = vld [vmem:[%s3 + $0x74] sm:$0xf]
    %v11159 = vld [vmem:[%s3 + $0x78] sm:$0xf]
    %v11160 = vld [vmem:[%s3 + $0x7c] sm:$0xf]
    %v11161 = vld [vmem:[%s4] sm:$0x1]
    %v11163 = vlaneseq
    %v11164 = vshrl.u32 %v11163, 7
    %v11165 = vsub.s32 0, %v11164
    %v11166 = vrot.slane %v11161, %v11165
    %v11200 = vunpack.c.l.b16 %v11097
    %v11201 = vunpack.c.h.b16 %v11097
    %v11202 = vunpack.c.l.b16 %v11098
    %v11203 = vunpack.c.h.b16 %v11098
    %v11204 = vunpack.c.l.b16 %v11099
    %v11205 = vunpack.c.h.b16 %v11099
    %v11206 = vunpack.c.l.b16 %v11100
    %v11207 = vunpack.c.h.b16 %v11100
    %v11208 = vunpack.c.l.b16 %v11101
    %v11209 = vunpack.c.h.b16 %v11101
    %v11210 = vunpack.c.l.b16 %v11102
    %v11211 = vunpack.c.h.b16 %v11102
    %v11212 = vunpack.c.l.b16 %v11103
    %v11213 = vunpack.c.h.b16 %v11103
    %v11214 = vunpack.c.l.b16 %v11104
    %v11215 = vunpack.c.h.b16 %v11104
    %v11216 = vunpack.c.l.b16 %v11105
    %v11217 = vunpack.c.h.b16 %v11105
    %v11218 = vunpack.c.l.b16 %v11106
    %v11219 = vunpack.c.h.b16 %v11106
    %v11220 = vunpack.c.l.b16 %v11107
    %v11221 = vunpack.c.h.b16 %v11107
    %v11222 = vunpack.c.l.b16 %v11108
    %v11223 = vunpack.c.h.b16 %v11108
    %v11224 = vunpack.c.l.b16 %v11109
    %v11225 = vunpack.c.h.b16 %v11109
    %v11226 = vunpack.c.l.b16 %v11110
    %v11227 = vunpack.c.h.b16 %v11110
    %v11228 = vunpack.c.l.b16 %v11111
    %v11229 = vunpack.c.h.b16 %v11111
    %v11230 = vunpack.c.l.b16 %v11112
    %v11231 = vunpack.c.h.b16 %v11112
    %v11232 = vunpack.c.l.b16 %v11113
    %v11233 = vunpack.c.h.b16 %v11113
    %v11234 = vunpack.c.l.b16 %v11114
    %v11235 = vunpack.c.h.b16 %v11114
    %v11236 = vunpack.c.l.b16 %v11115
    %v11237 = vunpack.c.h.b16 %v11115
    %v11238 = vunpack.c.l.b16 %v11116
    %v11239 = vunpack.c.h.b16 %v11116
    %v11240 = vunpack.c.l.b16 %v11117
    %v11241 = vunpack.c.h.b16 %v11117
    %v11242 = vunpack.c.l.b16 %v11118
    %v11243 = vunpack.c.h.b16 %v11118
    %v11244 = vunpack.c.l.b16 %v11119
    %v11245 = vunpack.c.h.b16 %v11119
    %v11246 = vunpack.c.l.b16 %v11120
    %v11247 = vunpack.c.h.b16 %v11120
    %v11248 = vunpack.c.l.b16 %v11121
    %v11249 = vunpack.c.h.b16 %v11121
    %v11250 = vunpack.c.l.b16 %v11122
    %v11251 = vunpack.c.h.b16 %v11122
    %v11252 = vunpack.c.l.b16 %v11123
    %v11253 = vunpack.c.h.b16 %v11123
    %v11254 = vunpack.c.l.b16 %v11124
    %v11255 = vunpack.c.h.b16 %v11124
    %v11256 = vunpack.c.l.b16 %v11125
    %v11257 = vunpack.c.h.b16 %v11125
    %v11258 = vunpack.c.l.b16 %v11126
    %v11259 = vunpack.c.h.b16 %v11126
    %v11260 = vunpack.c.l.b16 %v11127
    %v11261 = vunpack.c.h.b16 %v11127
    %v11262 = vunpack.c.l.b16 %v11128
    %v11263 = vunpack.c.h.b16 %v11128
    %v11264 = vpack.c.b16 %v11202, %v11200
    %v11265 = vpack.c.b16 %v11203, %v11201
    %v11266 = vpack.c.b16 %v11206, %v11204
    %v11267 = vpack.c.b16 %v11207, %v11205
    %v11268 = vpack.c.b16 %v11210, %v11208
    %v11269 = vpack.c.b16 %v11211, %v11209
    %v11270 = vpack.c.b16 %v11214, %v11212
    %v11271 = vpack.c.b16 %v11215, %v11213
    %v11272 = vpack.c.b16 %v11218, %v11216
    %v11273 = vpack.c.b16 %v11219, %v11217
    %v11274 = vpack.c.b16 %v11222, %v11220
    %v11275 = vpack.c.b16 %v11223, %v11221
    %v11276 = vpack.c.b16 %v11226, %v11224
    %v11277 = vpack.c.b16 %v11227, %v11225
    %v11278 = vpack.c.b16 %v11230, %v11228
    %v11279 = vpack.c.b16 %v11231, %v11229
    %v11280 = vpack.c.b16 %v11234, %v11232
    %v11281 = vpack.c.b16 %v11235, %v11233
    %v11282 = vpack.c.b16 %v11238, %v11236
    %v11283 = vpack.c.b16 %v11239, %v11237
    %v11284 = vpack.c.b16 %v11242, %v11240
    %v11285 = vpack.c.b16 %v11243, %v11241
    %v11286 = vpack.c.b16 %v11246, %v11244
    %v11287 = vpack.c.b16 %v11247, %v11245
    %v11288 = vpack.c.b16 %v11250, %v11248
    %v11289 = vpack.c.b16 %v11251, %v11249
    %v11290 = vpack.c.b16 %v11254, %v11252
    %v11291 = vpack.c.b16 %v11255, %v11253
    %v11292 = vpack.c.b16 %v11258, %v11256
    %v11293 = vpack.c.b16 %v11259, %v11257
    %v11294 = vpack.c.b16 %v11262, %v11260
    %v11295 = vpack.c.b16 %v11263, %v11261
    %v11360 = vunpack.c.l.b16 %v11129
    %v11361 = vunpack.c.l.b16 %v11130
    %v11362 = vunpack.c.l.b16 %v11131
    %v11363 = vunpack.c.l.b16 %v11132
    %v11364 = vunpack.c.l.b16 %v11133
    %v11365 = vunpack.c.l.b16 %v11134
    %v11366 = vunpack.c.l.b16 %v11135
    %v11367 = vunpack.c.l.b16 %v11136
    %v11368 = vunpack.c.l.b16 %v11137
    %v11369 = vunpack.c.l.b16 %v11138
    %v11370 = vunpack.c.l.b16 %v11139
    %v11371 = vunpack.c.l.b16 %v11140
    %v11372 = vunpack.c.l.b16 %v11141
    %v11373 = vunpack.c.l.b16 %v11142
    %v11374 = vunpack.c.l.b16 %v11143
    %v11375 = vunpack.c.l.b16 %v11144
    %v11376 = vunpack.c.l.b16 %v11145
    %v11377 = vunpack.c.l.b16 %v11146
    %v11378 = vunpack.c.l.b16 %v11147
    %v11379 = vunpack.c.l.b16 %v11148
    %v11380 = vunpack.c.l.b16 %v11149
    %v11381 = vunpack.c.l.b16 %v11150
    %v11382 = vunpack.c.l.b16 %v11151
    %v11383 = vunpack.c.l.b16 %v11152
    %v11384 = vunpack.c.l.b16 %v11153
    %v11385 = vunpack.c.l.b16 %v11154
    %v11386 = vunpack.c.l.b16 %v11155
    %v11387 = vunpack.c.l.b16 %v11156
    %v11388 = vunpack.c.l.b16 %v11157
    %v11389 = vunpack.c.l.b16 %v11158
    %v11390 = vunpack.c.l.b16 %v11159
    %v11391 = vunpack.c.l.b16 %v11160
    %v11392 = vpack.c.b16 %v11361, %v11360
    %v11393 = vpack.c.b16 %v11363, %v11362
    %v11394 = vpack.c.b16 %v11365, %v11364
    %v11395 = vpack.c.b16 %v11367, %v11366
    %v11396 = vpack.c.b16 %v11369, %v11368
    %v11397 = vpack.c.b16 %v11371, %v11370
    %v11398 = vpack.c.b16 %v11373, %v11372
    %v11399 = vpack.c.b16 %v11375, %v11374
    %v11400 = vpack.c.b16 %v11377, %v11376
    %v11401 = vpack.c.b16 %v11379, %v11378
    %v11402 = vpack.c.b16 %v11381, %v11380
    %v11403 = vpack.c.b16 %v11383, %v11382
    %v11404 = vpack.c.b16 %v11385, %v11384
    %v11405 = vpack.c.b16 %v11387, %v11386
    %v11406 = vpack.c.b16 %v11389, %v11388
    %v11407 = vpack.c.b16 %v11391, %v11390
    %11424 = vmatprep.subr.bf16.mxu0 0
    %11425 = vmatpush1.bf16.msra.mxu0 %v11399
    %11426 = vmatprep.subr.bf16.mxu0 0
    %11427 = vmatpush1.bf16.msra.mxu0 %v11398
    %11428 = vmatprep.subr.bf16.mxu0 0
    %11429 = vmatpush1.bf16.msra.mxu0 %v11397
    %11430 = vmatprep.subr.bf16.mxu0 0
    %11431 = vmatpush1.bf16.msra.mxu0 %v11396
    %11432 = vmatprep.subr.bf16.mxu0 0
    %11433 = vmatpush1.bf16.msra.mxu0 %v11395
    %11434 = vmatprep.subr.bf16.mxu0 0
    %11435 = vmatpush1.bf16.msra.mxu0 %v11394
    %11436 = vmatprep.subr.bf16.mxu0 0
    %11437 = vmatpush1.bf16.msra.mxu0 %v11393
    %11438 = vmatprep.subr.bf16.mxu0 0
    %11439 = vmatpush1.bf16.msra.mxu0 %v11392
    %11440 = vmatprep.subr.bf16.mxu0 0
    %11441 = vmatpush2.bf16.msra.mxu0 %v11407
    %11442 = vmatprep.subr.bf16.mxu0 0
    %11443 = vmatpush2.bf16.msra.mxu0 %v11406
    %11444 = vmatprep.subr.bf16.mxu0 0
    %11445 = vmatpush2.bf16.msra.mxu0 %v11405
    %11446 = vmatprep.subr.bf16.mxu0 0
    %11447 = vmatpush2.bf16.msra.mxu0 %v11404
    %11448 = vmatprep.subr.bf16.mxu0 0
    %11449 = vmatpush2.bf16.msra.mxu0 %v11403
    %11450 = vmatprep.subr.bf16.mxu0 0
    %11451 = vmatpush2.bf16.msra.mxu0 %v11402
    %11452 = vmatprep.subr.bf16.mxu0 0
    %11453 = vmatpush2.bf16.msra.mxu0 %v11401
    %11454 = vmatprep.subr.bf16.mxu0 0
    %11455 = vmatpush2.bf16.msra.mxu0 %v11400
    %11456 = vmatprep.mubr.bf16.mxu0 %v11265
    %11457 = vmatmul.mubr.bf16.gmra.mxu0 %v11264
    %v11458 = vpop.f32.mrf.mxu0
    %v11459 = vadd.f32 %v11166, %v11458
    %v11460 = vpop.f32.mrf.mxu0
    %v11461 = vpop.f32.mrf.mxu0
    %v11462 = vpop.f32.mrf.mxu0
    %11463 = vmatprep.mubr.bf16.mxu0 %v11267
    %11464 = vmatmul.mubr.bf16.gmra.mxu0 %v11266
    %v11465 = vpop.f32.mrf.mxu0
    %v11466 = vadd.f32 %v11166, %v11465
    %v11467 = vpop.f32.mrf.mxu0
    %v11468 = vpop.f32.mrf.mxu0
    %v11469 = vpop.f32.mrf.mxu0
    %11470 = vmatprep.mubr.bf16.mxu0 %v11269
    %11471 = vmatmul.mubr.bf16.gmra.mxu0 %v11268
    %v11472 = vpop.f32.mrf.mxu0
    %v11473 = vadd.f32 %v11166, %v11472
    %v11474 = vpop.f32.mrf.mxu0
    %v11475 = vpop.f32.mrf.mxu0
    %v11476 = vpop.f32.mrf.mxu0
    %11477 = vmatprep.mubr.bf16.mxu0 %v11271
    %11478 = vmatmul.mubr.bf16.gmra.mxu0 %v11270
    %v11479 = vpop.f32.mrf.mxu0
    %v11480 = vadd.f32 %v11166, %v11479
    %v11481 = vpop.f32.mrf.mxu0
    %v11482 = vpop.f32.mrf.mxu0
    %v11483 = vpop.f32.mrf.mxu0
    %11484 = vmatprep.mubr.bf16.mxu0 %v11273
    %11485 = vmatmul.mubr.bf16.gmra.mxu0 %v11272
    %v11486 = vpop.f32.mrf.mxu0
    %v11487 = vadd.f32 %v11166, %v11486
    %v11488 = vpop.f32.mrf.mxu0
    %v11489 = vpop.f32.mrf.mxu0
    %v11490 = vpop.f32.mrf.mxu0
    %11491 = vmatprep.mubr.bf16.mxu0 %v11275
    %11492 = vmatmul.mubr.bf16.gmra.mxu0 %v11274
    %v11493 = vpop.f32.mrf.mxu0
    %v11494 = vadd.f32 %v11166, %v11493
    %v11495 = vpop.f32.mrf.mxu0
    %v11496 = vpop.f32.mrf.mxu0
    %v11497 = vpop.f32.mrf.mxu0
    %11498 = vmatprep.mubr.bf16.mxu0 %v11277
    %11499 = vmatmul.mubr.bf16.gmra.mxu0 %v11276
    %v11500 = vpop.f32.mrf.mxu0
    %v11501 = vadd.f32 %v11166, %v11500
    %v11502 = vpop.f32.mrf.mxu0
    %v11503 = vpop.f32.mrf.mxu0
    %v11504 = vpop.f32.mrf.mxu0
    %11505 = vmatprep.mubr.bf16.mxu0 %v11279
    %11506 = vmatmul.mubr.bf16.gmra.mxu0 %v11278
    %v11507 = vpop.f32.mrf.mxu0
    %v11508 = vadd.f32 %v11166, %v11507
    %v11509 = vpop.f32.mrf.mxu0
    %v11510 = vpop.f32.mrf.mxu0
    %v11511 = vpop.f32.mrf.mxu0
    %11512 = vmatprep.mubr.bf16.mxu0 %v11281
    %11513 = vmatmul.mubr.bf16.gmra.mxu0 %v11280
    %v11514 = vpop.f32.mrf.mxu0
    %v11515 = vadd.f32 %v11166, %v11514
    %v11516 = vpop.f32.mrf.mxu0
    %v11517 = vpop.f32.mrf.mxu0
    %v11518 = vpop.f32.mrf.mxu0
    %11519 = vmatprep.mubr.bf16.mxu0 %v11283
    %11520 = vmatmul.mubr.bf16.gmra.mxu0 %v11282
    %v11521 = vpop.f32.mrf.mxu0
    %v11522 = vadd.f32 %v11166, %v11521
    %v11523 = vpop.f32.mrf.mxu0
    %v11524 = vpop.f32.mrf.mxu0
    %v11525 = vpop.f32.mrf.mxu0
    %11526 = vmatprep.mubr.bf16.mxu0 %v11285
    %11527 = vmatmul.mubr.bf16.gmra.mxu0 %v11284
    %v11528 = vpop.f32.mrf.mxu0
    %v11529 = vadd.f32 %v11166, %v11528
    %v11530 = vpop.f32.mrf.mxu0
    %v11531 = vpop.f32.mrf.mxu0
    %v11532 = vpop.f32.mrf.mxu0
    %11533 = vmatprep.mubr.bf16.mxu0 %v11287
    %11534 = vmatmul.mubr.bf16.gmra.mxu0 %v11286
    %v11535 = vpop.f32.mrf.mxu0
    %v11536 = vadd.f32 %v11166, %v11535
    %v11537 = vpop.f32.mrf.mxu0
    %v11538 = vpop.f32.mrf.mxu0
    %v11539 = vpop.f32.mrf.mxu0
    %11540 = vmatprep.mubr.bf16.mxu0 %v11289
    %11541 = vmatmul.mubr.bf16.gmra.mxu0 %v11288
    %v11542 = vpop.f32.mrf.mxu0
    %v11543 = vadd.f32 %v11166, %v11542
    %v11544 = vpop.f32.mrf.mxu0
    %v11545 = vpop.f32.mrf.mxu0
    %v11546 = vpop.f32.mrf.mxu0
    %11547 = vmatprep.mubr.bf16.mxu0 %v11291
    %11548 = vmatmul.mubr.bf16.gmra.mxu0 %v11290
    %v11549 = vpop.f32.mrf.mxu0
    %v11550 = vadd.f32 %v11166, %v11549
    %v11551 = vpop.f32.mrf.mxu0
    %v11552 = vpop.f32.mrf.mxu0
    %v11553 = vpop.f32.mrf.mxu0
    %11554 = vmatprep.mubr.bf16.mxu0 %v11293
    %11555 = vmatmul.mubr.bf16.gmra.mxu0 %v11292
    %v11556 = vpop.f32.mrf.mxu0
    %v11557 = vadd.f32 %v11166, %v11556
    %v11558 = vpop.f32.mrf.mxu0
    %v11559 = vpop.f32.mrf.mxu0
    %v11560 = vpop.f32.mrf.mxu0
    %11561 = vmatprep.mubr.bf16.mxu0 %v11295
    %11562 = vmatmul.mubr.bf16.gmra.mxu0 %v11294
    %v11563 = vpop.f32.mrf.mxu0
    %v11564 = vadd.f32 %v11166, %v11563
    %v11565 = vpop.f32.mrf.mxu0
    %v11566 = vpop.f32.mrf.mxu0
    %v11567 = vpop.f32.mrf.mxu0
    %11568 = vdwg.mxu0
    %v11569 = vmax.f32 %v11459, 0.0
    %v11570 = vmax.f32 %v11466, 0.0
    %v11571 = vmax.f32 %v11473, 0.0
    %v11572 = vmax.f32 %v11480, 0.0
    %v11573 = vmax.f32 %v11487, 0.0
    %v11574 = vmax.f32 %v11494, 0.0
    %v11575 = vmax.f32 %v11501, 0.0
    %v11576 = vmax.f32 %v11508, 0.0
    %v11577 = vmax.f32 %v11515, 0.0
    %v11578 = vmax.f32 %v11522, 0.0
    %v11579 = vmax.f32 %v11529, 0.0
    %v11580 = vmax.f32 %v11536, 0.0
    %v11581 = vmax.f32 %v11543, 0.0
    %v11582 = vmax.f32 %v11550, 0.0
    %v11583 = vmax.f32 %v11557, 0.0
    %v11584 = vmax.f32 %v11564, 0.0
    %v11585 = vmax.f32 %v11569, %v11571
    %v11586 = vmax.f32 %v11570, %v11572
    %v11587 = vmax.f32 %v11573, %v11575
    %v11588 = vmax.f32 %v11574, %v11576
    %v11589 = vmax.f32 %v11577, %v11579
    %v11590 = vmax.f32 %v11578, %v11580
    %v11591 = vmax.f32 %v11581, %v11583
    %v11592 = vmax.f32 %v11582, %v11584
    %v11595 = vrot.slane %v11585, 1
    %v11596 = vrot.slane %v11586, 1
    %v11599 = vmax.f32 %v11585, %v11595
    %v11600 = vmax.f32 %v11586, %v11596
    %v11601 = vpack.c.bf16 %v11599, %v11599
    %v11602 = vpack.c.bf16 %v11600, %v11600
    %v11606 = vunpack.c.l.s4 1966171168
    %v11607 = vunpack.c.0.s8 %v11606
    %v11608 = vlaneseq
    %v11609 = vshrl.u32 %v11608, 7
    %v11610 = vsub.s32 %v11607, %v11609
    %v11611 = vrot.slane %v11601, %v11610
    %v11613 = vunpack.c.l.s4 1966171168
    %v11614 = vunpack.c.0.s8 %v11613
    %v11615 = vlaneseq
    %v11616 = vshrl.u32 %v11615, 7
    %v11617 = vsub.s32 %v11614, %v11616
    %v11618 = vrot.slane %v11611, %v11617
    %v11620 = vunpack.c.l.s4 1966171168
    %v11621 = vunpack.c.0.s8 %v11620
    %v11622 = vlaneseq
    %v11623 = vshrl.u32 %v11622, 7
    %v11624 = vsub.s32 %v11621, %v11623
    %v11625 = vrot.slane %v11602, %v11624
    %v11627 = vunpack.c.l.s4 1966171168
    %v11628 = vunpack.c.0.s8 %v11627
    %v11629 = vlaneseq
    %v11630 = vshrl.u32 %v11629, 7
    %v11631 = vsub.s32 %v11628, %v11630
    %v11632 = vrot.slane %v11625, %v11631
    %v11634 = vunpack.c.l.s4 1935823168
    %v11635 = vunpack.c.0.s8 %v11634
    %v11636 = vlaneseq
    %v11637 = vshrl.u32 %v11636, 7
    %v11638 = vsub.s32 %v11635, %v11637
    %v11639 = vrot.slane %v11618, %v11638
    %v11641 = vunpack.c.l.s4 1935823168
    %v11642 = vunpack.c.0.s8 %v11641
    %v11643 = vlaneseq
    %v11644 = vshrl.u32 %v11643, 7
    %v11645 = vsub.s32 %v11642, %v11644
    %v11646 = vrot.slane %v11639, %v11645
    %v11648 = vunpack.c.l.s4 1935823168
    %v11649 = vunpack.c.0.s8 %v11648
    %v11650 = vlaneseq
    %v11651 = vshrl.u32 %v11650, 7
    %v11652 = vsub.s32 %v11649, %v11651
    %v11653 = vrot.slane %v11632, %v11652
    %v11655 = vunpack.c.l.s4 1935823168
    %v11656 = vunpack.c.0.s8 %v11655
    %v11657 = vlaneseq
    %v11658 = vshrl.u32 %v11657, 7
    %v11659 = vsub.s32 %v11656, %v11658
    %v11660 = vrot.slane %v11653, %v11659
    %v11661 = vunpack.c.l.b16 %v11646
    %v11662 = vunpack.c.l.b16 %v11660
    %v11663 = vrot.slane %v11662, 7
    %vm11664 = vcmask 1041409
    %v11665 = vsel %vm11664, %v11663, %v11661
    %v11666 = vpack.c.b16 %v11665, %v11665
    %v11668 = vunpack.c.l.s4 1966171168
    %v11669 = vunpack.c.0.s8 %v11668
    %v11670 = vlaneseq
    %v11671 = vshrl.u32 %v11670, 7
    %v11672 = vsub.s32 %v11669, %v11671
    %v11673 = vrot.slane %v11666, %v11672
    %v11675 = vunpack.c.l.s4 1966171168
    %v11676 = vunpack.c.0.s8 %v11675
    %v11677 = vlaneseq
    %v11678 = vshrl.u32 %v11677, 7
    %v11679 = vsub.s32 %v11676, %v11678
    %v11680 = vrot.slane %v11673, %v11679
    %vm11682 = vcmask 122880
    %11683 = vst.msk [vmem:[#allocation4] sm:$0x1] %vm11682, %v11680
    %v11684 = vcombine.high %v11611, %v11611
    %v11686 = vunpack.c.l.s4 1966171168
    %v11687 = vunpack.c.0.s8 %v11686
    %v11688 = vlaneseq
    %v11689 = vshrl.u32 %v11688, 7
    %v11690 = vsub.s32 %v11687, %v11689
    %v11691 = vrot.slane %v11684, %v11690
    %v11692 = vcombine.high %v11625, %v11625
    %v11694 = vunpack.c.l.s4 1966171168
    %v11695 = vunpack.c.0.s8 %v11694
    %v11696 = vlaneseq
    %v11697 = vshrl.u32 %v11696, 7
    %v11698 = vsub.s32 %v11695, %v11697
    %v11699 = vrot.slane %v11692, %v11698
    %v11701 = vunpack.c.l.s4 1935823168
    %v11702 = vunpack.c.0.s8 %v11701
    %v11703 = vlaneseq
    %v11704 = vshrl.u32 %v11703, 7
    %v11705 = vsub.s32 %v11702, %v11704
    %v11706 = vrot.slane %v11691, %v11705
    %v11708 = vunpack.c.l.s4 1935823168
    %v11709 = vunpack.c.0.s8 %v11708
    %v11710 = vlaneseq
    %v11711 = vshrl.u32 %v11710, 7
    %v11712 = vsub.s32 %v11709, %v11711
    %v11713 = vrot.slane %v11706, %v11712
    %v11715 = vunpack.c.l.s4 1935823168
    %v11716 = vunpack.c.0.s8 %v11715
    %v11717 = vlaneseq
    %v11718 = vshrl.u32 %v11717, 7
    %v11719 = vsub.s32 %v11716, %v11718
    %v11720 = vrot.slane %v11699, %v11719
    %v11722 = vunpack.c.l.s4 1935823168
    %v11723 = vunpack.c.0.s8 %v11722
    %v11724 = vlaneseq
    %v11725 = vshrl.u32 %v11724, 7
    %v11726 = vsub.s32 %v11723, %v11725
    %v11727 = vrot.slane %v11720, %v11726
    %v11728 = vunpack.c.l.b16 %v11713
    %v11729 = vunpack.c.l.b16 %v11727
    %v11730 = vrot.slane %v11729, 7
    %v11731 = vsel %vm11664, %v11730, %v11728
    %v11732 = vpack.c.b16 %v11731, %v11731
    %v11734 = vunpack.c.l.s4 1966171168
    %v11735 = vunpack.c.0.s8 %v11734
    %v11736 = vlaneseq
    %v11737 = vshrl.u32 %v11736, 7
    %v11738 = vsub.s32 %v11735, %v11737
    %v11739 = vrot.slane %v11732, %v11738
    %v11741 = vunpack.c.l.s4 1966171168
    %v11742 = vunpack.c.0.s8 %v11741
    %v11743 = vlaneseq
    %v11744 = vshrl.u32 %v11743, 7
    %v11745 = vsub.s32 %v11742, %v11744
    %v11746 = vrot.slane %v11739, %v11745
    %11747 = vrot.lane.b32.xlu0 %v11746, 16
    %v11748 = vpop.permute.xlu0 %11747
    %vm11750 = vcmask 254080
    %11751 = vst.msk [vmem:[#allocation4] sm:$0x1] %vm11750, %v11748
    %v11752 = vcombine.high %v11618, %v11618
    %v11753 = vcombine.high %v11632, %v11632
    %v11755 = vunpack.c.l.s4 1935823168
    %v11756 = vunpack.c.0.s8 %v11755
    %v11757 = vlaneseq
    %v11758 = vshrl.u32 %v11757, 7
    %v11759 = vsub.s32 %v11756, %v11758
    %v11760 = vrot.slane %v11752, %v11759
    %v11762 = vunpack.c.l.s4 1935823168
    %v11763 = vunpack.c.0.s8 %v11762
    %v11764 = vlaneseq
    %v11765 = vshrl.u32 %v11764, 7
    %v11766 = vsub.s32 %v11763, %v11765
    %v11767 = vrot.slane %v11760, %v11766
    %v11769 = vunpack.c.l.s4 1935823168
    %v11770 = vunpack.c.0.s8 %v11769
    %v11771 = vlaneseq
    %v11772 = vshrl.u32 %v11771, 7
    %v11773 = vsub.s32 %v11770, %v11772
    %v11774 = vrot.slane %v11753, %v11773
    %v11776 = vunpack.c.l.s4 1935823168
    %v11777 = vunpack.c.0.s8 %v11776
    %v11778 = vlaneseq
    %v11779 = vshrl.u32 %v11778, 7
    %v11780 = vsub.s32 %v11777, %v11779
    %v11781 = vrot.slane %v11774, %v11780
    %v11782 = vunpack.c.l.b16 %v11767
    %v11783 = vunpack.c.l.b16 %v11781
    %v11784 = vrot.slane %v11783, 7
    %v11785 = vsel %vm11664, %v11784, %v11782
    %v11786 = vpack.c.b16 %v11785, %v11785
    %v11788 = vunpack.c.l.s4 1966171168
    %v11789 = vunpack.c.0.s8 %v11788
    %v11790 = vlaneseq
    %v11791 = vshrl.u32 %v11790, 7
    %v11792 = vsub.s32 %v11789, %v11791
    %v11793 = vrot.slane %v11786, %v11792
    %v11795 = vunpack.c.l.s4 1966171168
    %v11796 = vunpack.c.0.s8 %v11795
    %v11797 = vlaneseq
    %v11798 = vshrl.u32 %v11797, 7
    %v11799 = vsub.s32 %v11796, %v11798
    %v11800 = vrot.slane %v11793, %v11799
    %11801 = vrot.lane.b32.xlu0 %v11800, 32
    %v11802 = vpop.permute.xlu0 %11801
    %vm11804 = vcmask 385280
    %11805 = vst.msk [vmem:[#allocation4] sm:$0x1] %vm11804, %v11802
    %v11806 = vcombine.high %v11691, %v11691
    %v11807 = vcombine.high %v11699, %v11699
    %v11809 = vunpack.c.l.s4 1935823168
    %v11810 = vunpack.c.0.s8 %v11809
    %v11811 = vlaneseq
    %v11812 = vshrl.u32 %v11811, 7
    %v11813 = vsub.s32 %v11810, %v11812
    %v11814 = vrot.slane %v11806, %v11813
    %v11816 = vunpack.c.l.s4 1935823168
    %v11817 = vunpack.c.0.s8 %v11816
    %v11818 = vlaneseq
    %v11819 = vshrl.u32 %v11818, 7
    %v11820 = vsub.s32 %v11817, %v11819
    %v11821 = vrot.slane %v11814, %v11820
    %v11823 = vunpack.c.l.s4 1935823168
    %v11824 = vunpack.c.0.s8 %v11823
    %v11825 = vlaneseq
    %v11826 = vshrl.u32 %v11825, 7
    %v11827 = vsub.s32 %v11824, %v11826
    %v11828 = vrot.slane %v11807, %v11827
    %v11830 = vunpack.c.l.s4 1935823168
    %v11831 = vunpack.c.0.s8 %v11830
    %v11832 = vlaneseq
    %v11833 = vshrl.u32 %v11832, 7
    %v11834 = vsub.s32 %v11831, %v11833
    %v11835 = vrot.slane %v11828, %v11834
    %v11836 = vunpack.c.l.b16 %v11821
    %v11837 = vunpack.c.l.b16 %v11835
    %v11838 = vrot.slane %v11837, 7
    %v11839 = vsel %vm11664, %v11838, %v11836
    %v11840 = vpack.c.b16 %v11839, %v11839
    %v11842 = vunpack.c.l.s4 1966171168
    %v11843 = vunpack.c.0.s8 %v11842
    %v11844 = vlaneseq
    %v11845 = vshrl.u32 %v11844, 7
    %v11846 = vsub.s32 %v11843, %v11845
    %v11847 = vrot.slane %v11840, %v11846
    %v11849 = vunpack.c.l.s4 1966171168
    %v11850 = vunpack.c.0.s8 %v11849
    %v11851 = vlaneseq
    %v11852 = vshrl.u32 %v11851, 7
    %v11853 = vsub.s32 %v11850, %v11852
    %v11854 = vrot.slane %v11847, %v11853
    %11855 = vrot.lane.b32.xlu0 %v11854, 48
    %v11856 = vpop.permute.xlu0 %11855
    %vm11858 = vcmask 516480
    %11859 = vst.msk [vmem:[#allocation4] sm:$0x1] %vm11858, %v11856
    %v11862 = vrot.slane %v11587, 1
    %v11863 = vrot.slane %v11588, 1
    %v11866 = vmax.f32 %v11587, %v11862
    %v11867 = vmax.f32 %v11588, %v11863
    %v11868 = vpack.c.bf16 %v11866, %v11866
    %v11869 = vpack.c.bf16 %v11867, %v11867
    %v11873 = vunpack.c.l.s4 1966171168
    %v11874 = vunpack.c.0.s8 %v11873
    %v11875 = vlaneseq
    %v11876 = vshrl.u32 %v11875, 7
    %v11877 = vsub.s32 %v11874, %v11876
    %v11878 = vrot.slane %v11868, %v11877
    %v11880 = vunpack.c.l.s4 1966171168
    %v11881 = vunpack.c.0.s8 %v11880
    %v11882 = vlaneseq
    %v11883 = vshrl.u32 %v11882, 7
    %v11884 = vsub.s32 %v11881, %v11883
    %v11885 = vrot.slane %v11878, %v11884
    %v11887 = vunpack.c.l.s4 1966171168
    %v11888 = vunpack.c.0.s8 %v11887
    %v11889 = vlaneseq
    %v11890 = vshrl.u32 %v11889, 7
    %v11891 = vsub.s32 %v11888, %v11890
    %v11892 = vrot.slane %v11869, %v11891
    %v11894 = vunpack.c.l.s4 1966171168
    %v11895 = vunpack.c.0.s8 %v11894
    %v11896 = vlaneseq
    %v11897 = vshrl.u32 %v11896, 7
    %v11898 = vsub.s32 %v11895, %v11897
    %v11899 = vrot.slane %v11892, %v11898
    %v11901 = vunpack.c.l.s4 1935823168
    %v11902 = vunpack.c.0.s8 %v11901
    %v11903 = vlaneseq
    %v11904 = vshrl.u32 %v11903, 7
    %v11905 = vsub.s32 %v11902, %v11904
    %v11906 = vrot.slane %v11885, %v11905
    %v11908 = vunpack.c.l.s4 1935823168
    %v11909 = vunpack.c.0.s8 %v11908
    %v11910 = vlaneseq
    %v11911 = vshrl.u32 %v11910, 7
    %v11912 = vsub.s32 %v11909, %v11911
    %v11913 = vrot.slane %v11906, %v11912
    %v11915 = vunpack.c.l.s4 1935823168
    %v11916 = vunpack.c.0.s8 %v11915
    %v11917 = vlaneseq
    %v11918 = vshrl.u32 %v11917, 7
    %v11919 = vsub.s32 %v11916, %v11918
    %v11920 = vrot.slane %v11899, %v11919
    %v11922 = vunpack.c.l.s4 1935823168
    %v11923 = vunpack.c.0.s8 %v11922
    %v11924 = vlaneseq
    %v11925 = vshrl.u32 %v11924, 7
    %v11926 = vsub.s32 %v11923, %v11925
    %v11927 = vrot.slane %v11920, %v11926
    %v11928 = vunpack.c.l.b16 %v11913
    %v11929 = vunpack.c.l.b16 %v11927
    %v11930 = vrot.slane %v11929, 7
    %v11931 = vsel %vm11664, %v11930, %v11928
    %v11932 = vpack.c.b16 %v11931, %v11931
    %v11934 = vunpack.c.l.s4 1966171168
    %v11935 = vunpack.c.0.s8 %v11934
    %v11936 = vlaneseq
    %v11937 = vshrl.u32 %v11936, 7
    %v11938 = vsub.s32 %v11935, %v11937
    %v11939 = vrot.slane %v11932, %v11938
    %v11941 = vunpack.c.l.s4 1966171168
    %v11942 = vunpack.c.0.s8 %v11941
    %v11943 = vlaneseq
    %v11944 = vshrl.u32 %v11943, 7
    %v11945 = vsub.s32 %v11942, %v11944
    %v11946 = vrot.slane %v11939, %v11945
    %11947 = vrot.lane.b32.xlu0 %v11946, 64
    %v11948 = vpop.permute.xlu0 %11947
    %vm11950 = vcmask 647680
    %11951 = vst.msk [vmem:[#allocation4] sm:$0x1] %vm11950, %v11948
    %v11952 = vcombine.high %v11878, %v11878
    %v11954 = vunpack.c.l.s4 1966171168
    %v11955 = vunpack.c.0.s8 %v11954
    %v11956 = vlaneseq
    %v11957 = vshrl.u32 %v11956, 7
    %v11958 = vsub.s32 %v11955, %v11957
    %v11959 = vrot.slane %v11952, %v11958
    %v11960 = vcombine.high %v11892, %v11892
    %v11962 = vunpack.c.l.s4 1966171168
    %v11963 = vunpack.c.0.s8 %v11962
    %v11964 = vlaneseq
    %v11965 = vshrl.u32 %v11964, 7
    %v11966 = vsub.s32 %v11963, %v11965
    %v11967 = vrot.slane %v11960, %v11966
    %v11969 = vunpack.c.l.s4 1935823168
    %v11970 = vunpack.c.0.s8 %v11969
    %v11971 = vlaneseq
    %v11972 = vshrl.u32 %v11971, 7
    %v11973 = vsub.s32 %v11970, %v11972
    %v11974 = vrot.slane %v11959, %v11973
    %v11976 = vunpack.c.l.s4 1935823168
    %v11977 = vunpack.c.0.s8 %v11976
    %v11978 = vlaneseq
    %v11979 = vshrl.u32 %v11978, 7
    %v11980 = vsub.s32 %v11977, %v11979
    %v11981 = vrot.slane %v11974, %v11980
    %v11983 = vunpack.c.l.s4 1935823168
    %v11984 = vunpack.c.0.s8 %v11983
    %v11985 = vlaneseq
    %v11986 = vshrl.u32 %v11985, 7
    %v11987 = vsub.s32 %v11984, %v11986
    %v11988 = vrot.slane %v11967, %v11987
    %v11990 = vunpack.c.l.s4 1935823168
    %v11991 = vunpack.c.0.s8 %v11990
    %v11992 = vlaneseq
    %v11993 = vshrl.u32 %v11992, 7
    %v11994 = vsub.s32 %v11991, %v11993
    %v11995 = vrot.slane %v11988, %v11994
    %v11996 = vunpack.c.l.b16 %v11981
    %v11997 = vunpack.c.l.b16 %v11995
    %v11998 = vrot.slane %v11997, 7
    %v11999 = vsel %vm11664, %v11998, %v11996
    %v12000 = vpack.c.b16 %v11999, %v11999
    %v12002 = vunpack.c.l.s4 1966171168
    %v12003 = vunpack.c.0.s8 %v12002
    %v12004 = vlaneseq
    %v12005 = vshrl.u32 %v12004, 7
    %v12006 = vsub.s32 %v12003, %v12005
    %v12007 = vrot.slane %v12000, %v12006
    %v12009 = vunpack.c.l.s4 1966171168
    %v12010 = vunpack.c.0.s8 %v12009
    %v12011 = vlaneseq
    %v12012 = vshrl.u32 %v12011, 7
    %v12013 = vsub.s32 %v12010, %v12012
    %v12014 = vrot.slane %v12007, %v12013
    %12015 = vrot.lane.b32.xlu0 %v12014, 80
    %v12016 = vpop.permute.xlu0 %12015
    %vm12018 = vcmask 778880
    %12019 = vst.msk [vmem:[#allocation4] sm:$0x1] %vm12018, %v12016
    %v12020 = vcombine.high %v11885, %v11885
    %v12021 = vcombine.high %v11899, %v11899
    %v12023 = vunpack.c.l.s4 1935823168
    %v12024 = vunpack.c.0.s8 %v12023
    %v12025 = vlaneseq
    %v12026 = vshrl.u32 %v12025, 7
    %v12027 = vsub.s32 %v12024, %v12026
    %v12028 = vrot.slane %v12020, %v12027
    %v12030 = vunpack.c.l.s4 1935823168
    %v12031 = vunpack.c.0.s8 %v12030
    %v12032 = vlaneseq
    %v12033 = vshrl.u32 %v12032, 7
    %v12034 = vsub.s32 %v12031, %v12033
    %v12035 = vrot.slane %v12028, %v12034
    %v12037 = vunpack.c.l.s4 1935823168
    %v12038 = vunpack.c.0.s8 %v12037
    %v12039 = vlaneseq
    %v12040 = vshrl.u32 %v12039, 7
    %v12041 = vsub.s32 %v12038, %v12040
    %v12042 = vrot.slane %v12021, %v12041
    %v12044 = vunpack.c.l.s4 1935823168
    %v12045 = vunpack.c.0.s8 %v12044
    %v12046 = vlaneseq
    %v12047 = vshrl.u32 %v12046, 7
    %v12048 = vsub.s32 %v12045, %v12047
    %v12049 = vrot.slane %v12042, %v12048
    %v12050 = vunpack.c.l.b16 %v12035
    %v12051 = vunpack.c.l.b16 %v12049
    %v12052 = vrot.slane %v12051, 7
    %v12053 = vsel %vm11664, %v12052, %v12050
    %v12054 = vpack.c.b16 %v12053, %v12053
    %v12056 = vunpack.c.l.s4 1966171168
    %v12057 = vunpack.c.0.s8 %v12056
    %v12058 = vlaneseq
    %v12059 = vshrl.u32 %v12058, 7
    %v12060 = vsub.s32 %v12057, %v12059
    %v12061 = vrot.slane %v12054, %v12060
    %v12063 = vunpack.c.l.s4 1966171168
    %v12064 = vunpack.c.0.s8 %v12063
    %v12065 = vlaneseq
    %v12066 = vshrl.u32 %v12065, 7
    %v12067 = vsub.s32 %v12064, %v12066
    %v12068 = vrot.slane %v12061, %v12067
    %12069 = vrot.lane.b32.xlu0 %v12068, 96
    %v12070 = vpop.permute.xlu0 %12069
    %vm12072 = vcmask 910080
    %12073 = vst.msk [vmem:[#allocation4] sm:$0x1] %vm12072, %v12070
    %v12074 = vcombine.high %v11959, %v11959
    %v12075 = vcombine.high %v11967, %v11967
    %v12077 = vunpack.c.l.s4 1935823168
    %v12078 = vunpack.c.0.s8 %v12077
    %v12079 = vlaneseq
    %v12080 = vshrl.u32 %v12079, 7
    %v12081 = vsub.s32 %v12078, %v12080
    %v12082 = vrot.slane %v12074, %v12081
    %v12084 = vunpack.c.l.s4 1935823168
    %v12085 = vunpack.c.0.s8 %v12084
    %v12086 = vlaneseq
    %v12087 = vshrl.u32 %v12086, 7
    %v12088 = vsub.s32 %v12085, %v12087
    %v12089 = vrot.slane %v12082, %v12088
    %v12091 = vunpack.c.l.s4 1935823168
    %v12092 = vunpack.c.0.s8 %v12091
    %v12093 = vlaneseq
    %v12094 = vshrl.u32 %v12093, 7
    %v12095 = vsub.s32 %v12092, %v12094
    %v12096 = vrot.slane %v12075, %v12095
    %v12098 = vunpack.c.l.s4 1935823168
    %v12099 = vunpack.c.0.s8 %v12098
    %v12100 = vlaneseq
    %v12101 = vshrl.u32 %v12100, 7
    %v12102 = vsub.s32 %v12099, %v12101
    %v12103 = vrot.slane %v12096, %v12102
    %v12104 = vunpack.c.l.b16 %v12089
    %v12105 = vunpack.c.l.b16 %v12103
    %v12106 = vrot.slane %v12105, 7
    %v12107 = vsel %vm11664, %v12106, %v12104
    %v12108 = vpack.c.b16 %v12107, %v12107
    %v12110 = vunpack.c.l.s4 1966171168
    %v12111 = vunpack.c.0.s8 %v12110
    %v12112 = vlaneseq
    %v12113 = vshrl.u32 %v12112, 7
    %v12114 = vsub.s32 %v12111, %v12113
    %v12115 = vrot.slane %v12108, %v12114
    %v12117 = vunpack.c.l.s4 1966171168
    %v12118 = vunpack.c.0.s8 %v12117
    %v12119 = vlaneseq
    %v12120 = vshrl.u32 %v12119, 7
    %v12121 = vsub.s32 %v12118, %v12120
    %v12122 = vrot.slane %v12115, %v12121
    %12123 = vrot.lane.b32.xlu0 %v12122, 112
    %v12124 = vpop.permute.xlu0 %12123
    %vm12126 = vcmask 1041280
    %12127 = vst.msk [vmem:[#allocation4] sm:$0x1] %vm12126, %v12124
    %v12130 = vrot.slane %v11589, 1
    %v12131 = vrot.slane %v11590, 1
    %v12134 = vmax.f32 %v11589, %v12130
    %v12135 = vmax.f32 %v11590, %v12131
    %v12136 = vpack.c.bf16 %v12134, %v12134
    %v12137 = vpack.c.bf16 %v12135, %v12135
    %v12141 = vunpack.c.l.s4 1966171168
    %v12142 = vunpack.c.0.s8 %v12141
    %v12143 = vlaneseq
    %v12144 = vshrl.u32 %v12143, 7
    %v12145 = vsub.s32 %v12142, %v12144
    %v12146 = vrot.slane %v12136, %v12145
    %v12148 = vunpack.c.l.s4 1966171168
    %v12149 = vunpack.c.0.s8 %v12148
    %v12150 = vlaneseq
    %v12151 = vshrl.u32 %v12150, 7
    %v12152 = vsub.s32 %v12149, %v12151
    %v12153 = vrot.slane %v12146, %v12152
    %v12155 = vunpack.c.l.s4 1966171168
    %v12156 = vunpack.c.0.s8 %v12155
    %v12157 = vlaneseq
    %v12158 = vshrl.u32 %v12157, 7
    %v12159 = vsub.s32 %v12156, %v12158
    %v12160 = vrot.slane %v12137, %v12159
    %v12162 = vunpack.c.l.s4 1966171168
    %v12163 = vunpack.c.0.s8 %v12162
    %v12164 = vlaneseq
    %v12165 = vshrl.u32 %v12164, 7
    %v12166 = vsub.s32 %v12163, %v12165
    %v12167 = vrot.slane %v12160, %v12166
    %v12169 = vunpack.c.l.s4 1935823168
    %v12170 = vunpack.c.0.s8 %v12169
    %v12171 = vlaneseq
    %v12172 = vshrl.u32 %v12171, 7
    %v12173 = vsub.s32 %v12170, %v12172
    %v12174 = vrot.slane %v12153, %v12173
    %v12176 = vunpack.c.l.s4 1935823168
    %v12177 = vunpack.c.0.s8 %v12176
    %v12178 = vlaneseq
    %v12179 = vshrl.u32 %v12178, 7
    %v12180 = vsub.s32 %v12177, %v12179
    %v12181 = vrot.slane %v12174, %v12180
    %v12183 = vunpack.c.l.s4 1935823168
    %v12184 = vunpack.c.0.s8 %v12183
    %v12185 = vlaneseq
    %v12186 = vshrl.u32 %v12185, 7
    %v12187 = vsub.s32 %v12184, %v12186
    %v12188 = vrot.slane %v12167, %v12187
    %v12190 = vunpack.c.l.s4 1935823168
    %v12191 = vunpack.c.0.s8 %v12190
    %v12192 = vlaneseq
    %v12193 = vshrl.u32 %v12192, 7
    %v12194 = vsub.s32 %v12191, %v12193
    %v12195 = vrot.slane %v12188, %v12194
    %v12196 = vunpack.c.l.b16 %v12181
    %v12197 = vunpack.c.l.b16 %v12195
    %v12198 = vrot.slane %v12197, 7
    %v12199 = vsel %vm11664, %v12198, %v12196
    %v12200 = vpack.c.b16 %v12199, %v12199
    %v12202 = vunpack.c.l.s4 1966171168
    %v12203 = vunpack.c.0.s8 %v12202
    %v12204 = vlaneseq
    %v12205 = vshrl.u32 %v12204, 7
    %v12206 = vsub.s32 %v12203, %v12205
    %v12207 = vrot.slane %v12200, %v12206
    %v12209 = vunpack.c.l.s4 1966171168
    %v12210 = vunpack.c.0.s8 %v12209
    %v12211 = vlaneseq
    %v12212 = vshrl.u32 %v12211, 7
    %v12213 = vsub.s32 %v12210, %v12212
    %v12214 = vrot.slane %v12207, %v12213
    %12216 = vst.msk [vmem:[#allocation4 + $0x1] sm:$0x1] %vm11682, %v12214
    %v12217 = vcombine.high %v12146, %v12146
    %v12219 = vunpack.c.l.s4 1966171168
    %v12220 = vunpack.c.0.s8 %v12219
    %v12221 = vlaneseq
    %v12222 = vshrl.u32 %v12221, 7
    %v12223 = vsub.s32 %v12220, %v12222
    %v12224 = vrot.slane %v12217, %v12223
    %v12225 = vcombine.high %v12160, %v12160
    %v12227 = vunpack.c.l.s4 1966171168
    %v12228 = vunpack.c.0.s8 %v12227
    %v12229 = vlaneseq
    %v12230 = vshrl.u32 %v12229, 7
    %v12231 = vsub.s32 %v12228, %v12230
    %v12232 = vrot.slane %v12225, %v12231
    %v12234 = vunpack.c.l.s4 1935823168
    %v12235 = vunpack.c.0.s8 %v12234
    %v12236 = vlaneseq
    %v12237 = vshrl.u32 %v12236, 7
    %v12238 = vsub.s32 %v12235, %v12237
    %v12239 = vrot.slane %v12224, %v12238
    %v12241 = vunpack.c.l.s4 1935823168
    %v12242 = vunpack.c.0.s8 %v12241
    %v12243 = vlaneseq
    %v12244 = vshrl.u32 %v12243, 7
    %v12245 = vsub.s32 %v12242, %v12244
    %v12246 = vrot.slane %v12239, %v12245
    %v12248 = vunpack.c.l.s4 1935823168
    %v12249 = vunpack.c.0.s8 %v12248
    %v12250 = vlaneseq
    %v12251 = vshrl.u32 %v12250, 7
    %v12252 = vsub.s32 %v12249, %v12251
    %v12253 = vrot.slane %v12232, %v12252
    %v12255 = vunpack.c.l.s4 1935823168
    %v12256 = vunpack.c.0.s8 %v12255
    %v12257 = vlaneseq
    %v12258 = vshrl.u32 %v12257, 7
    %v12259 = vsub.s32 %v12256, %v12258
    %v12260 = vrot.slane %v12253, %v12259
    %v12261 = vunpack.c.l.b16 %v12246
    %v12262 = vunpack.c.l.b16 %v12260
    %v12263 = vrot.slane %v12262, 7
    %v12264 = vsel %vm11664, %v12263, %v12261
    %v12265 = vpack.c.b16 %v12264, %v12264
    %v12267 = vunpack.c.l.s4 1966171168
    %v12268 = vunpack.c.0.s8 %v12267
    %v12269 = vlaneseq
    %v12270 = vshrl.u32 %v12269, 7
    %v12271 = vsub.s32 %v12268, %v12270
    %v12272 = vrot.slane %v12265, %v12271
    %v12274 = vunpack.c.l.s4 1966171168
    %v12275 = vunpack.c.0.s8 %v12274
    %v12276 = vlaneseq
    %v12277 = vshrl.u32 %v12276, 7
    %v12278 = vsub.s32 %v12275, %v12277
    %v12279 = vrot.slane %v12272, %v12278
    %12280 = vrot.lane.b32.xlu0 %v12279, 16
    %v12281 = vpop.permute.xlu0 %12280
    %12283 = vst.msk [vmem:[#allocation4 + $0x1] sm:$0x1] %vm11750, %v12281
    %v12284 = vcombine.high %v12153, %v12153
    %v12285 = vcombine.high %v12167, %v12167
    %v12287 = vunpack.c.l.s4 1935823168
    %v12288 = vunpack.c.0.s8 %v12287
    %v12289 = vlaneseq
    %v12290 = vshrl.u32 %v12289, 7
    %v12291 = vsub.s32 %v12288, %v12290
    %v12292 = vrot.slane %v12284, %v12291
    %v12294 = vunpack.c.l.s4 1935823168
    %v12295 = vunpack.c.0.s8 %v12294
    %v12296 = vlaneseq
    %v12297 = vshrl.u32 %v12296, 7
    %v12298 = vsub.s32 %v12295, %v12297
    %v12299 = vrot.slane %v12292, %v12298
    %v12301 = vunpack.c.l.s4 1935823168
    %v12302 = vunpack.c.0.s8 %v12301
    %v12303 = vlaneseq
    %v12304 = vshrl.u32 %v12303, 7
    %v12305 = vsub.s32 %v12302, %v12304
    %v12306 = vrot.slane %v12285, %v12305
    %v12308 = vunpack.c.l.s4 1935823168
    %v12309 = vunpack.c.0.s8 %v12308
    %v12310 = vlaneseq
    %v12311 = vshrl.u32 %v12310, 7
    %v12312 = vsub.s32 %v12309, %v12311
    %v12313 = vrot.slane %v12306, %v12312
    %v12314 = vunpack.c.l.b16 %v12299
    %v12315 = vunpack.c.l.b16 %v12313
    %v12316 = vrot.slane %v12315, 7
    %v12317 = vsel %vm11664, %v12316, %v12314
    %v12318 = vpack.c.b16 %v12317, %v12317
    %v12320 = vunpack.c.l.s4 1966171168
    %v12321 = vunpack.c.0.s8 %v12320
    %v12322 = vlaneseq
    %v12323 = vshrl.u32 %v12322, 7
    %v12324 = vsub.s32 %v12321, %v12323
    %v12325 = vrot.slane %v12318, %v12324
    %v12327 = vunpack.c.l.s4 1966171168
    %v12328 = vunpack.c.0.s8 %v12327
    %v12329 = vlaneseq
    %v12330 = vshrl.u32 %v12329, 7
    %v12331 = vsub.s32 %v12328, %v12330
    %v12332 = vrot.slane %v12325, %v12331
    %12333 = vrot.lane.b32.xlu0 %v12332, 32
    %v12334 = vpop.permute.xlu0 %12333
    %12336 = vst.msk [vmem:[#allocation4 + $0x1] sm:$0x1] %vm11804, %v12334
    %v12337 = vcombine.high %v12224, %v12224
    %v12338 = vcombine.high %v12232, %v12232
    %v12340 = vunpack.c.l.s4 1935823168
    %v12341 = vunpack.c.0.s8 %v12340
    %v12342 = vlaneseq
    %v12343 = vshrl.u32 %v12342, 7
    %v12344 = vsub.s32 %v12341, %v12343
    %v12345 = vrot.slane %v12337, %v12344
    %v12347 = vunpack.c.l.s4 1935823168
    %v12348 = vunpack.c.0.s8 %v12347
    %v12349 = vlaneseq
    %v12350 = vshrl.u32 %v12349, 7
    %v12351 = vsub.s32 %v12348, %v12350
    %v12352 = vrot.slane %v12345, %v12351
    %v12354 = vunpack.c.l.s4 1935823168
    %v12355 = vunpack.c.0.s8 %v12354
    %v12356 = vlaneseq
    %v12357 = vshrl.u32 %v12356, 7
    %v12358 = vsub.s32 %v12355, %v12357
    %v12359 = vrot.slane %v12338, %v12358
    %v12361 = vunpack.c.l.s4 1935823168
    %v12362 = vunpack.c.0.s8 %v12361
    %v12363 = vlaneseq
    %v12364 = vshrl.u32 %v12363, 7
    %v12365 = vsub.s32 %v12362, %v12364
    %v12366 = vrot.slane %v12359, %v12365
    %v12367 = vunpack.c.l.b16 %v12352
    %v12368 = vunpack.c.l.b16 %v12366
    %v12369 = vrot.slane %v12368, 7
    %v12370 = vsel %vm11664, %v12369, %v12367
    %v12371 = vpack.c.b16 %v12370, %v12370
    %v12373 = vunpack.c.l.s4 1966171168
    %v12374 = vunpack.c.0.s8 %v12373
    %v12375 = vlaneseq
    %v12376 = vshrl.u32 %v12375, 7
    %v12377 = vsub.s32 %v12374, %v12376
    %v12378 = vrot.slane %v12371, %v12377
    %v12380 = vunpack.c.l.s4 1966171168
    %v12381 = vunpack.c.0.s8 %v12380
    %v12382 = vlaneseq
    %v12383 = vshrl.u32 %v12382, 7
    %v12384 = vsub.s32 %v12381, %v12383
    %v12385 = vrot.slane %v12378, %v12384
    %12386 = vrot.lane.b32.xlu0 %v12385, 48
    %v12387 = vpop.permute.xlu0 %12386
    %12389 = vst.msk [vmem:[#allocation4 + $0x1] sm:$0x1] %vm11858, %v12387
    %v12392 = vrot.slane %v11591, 1
    %v12393 = vrot.slane %v11592, 1
    %v12396 = vmax.f32 %v11591, %v12392
    %v12397 = vmax.f32 %v11592, %v12393
    %v12398 = vpack.c.bf16 %v12396, %v12396
    %v12399 = vpack.c.bf16 %v12397, %v12397
    %v12403 = vunpack.c.l.s4 1966171168
    %v12404 = vunpack.c.0.s8 %v12403
    %v12405 = vlaneseq
    %v12406 = vshrl.u32 %v12405, 7
    %v12407 = vsub.s32 %v12404, %v12406
    %v12408 = vrot.slane %v12398, %v12407
    %v12410 = vunpack.c.l.s4 1966171168
    %v12411 = vunpack.c.0.s8 %v12410
    %v12412 = vlaneseq
    %v12413 = vshrl.u32 %v12412, 7
    %v12414 = vsub.s32 %v12411, %v12413
    %v12415 = vrot.slane %v12408, %v12414
    %v12417 = vunpack.c.l.s4 1966171168
    %v12418 = vunpack.c.0.s8 %v12417
    %v12419 = vlaneseq
    %v12420 = vshrl.u32 %v12419, 7
    %v12421 = vsub.s32 %v12418, %v12420
    %v12422 = vrot.slane %v12399, %v12421
    %v12424 = vunpack.c.l.s4 1966171168
    %v12425 = vunpack.c.0.s8 %v12424
    %v12426 = vlaneseq
    %v12427 = vshrl.u32 %v12426, 7
    %v12428 = vsub.s32 %v12425, %v12427
    %v12429 = vrot.slane %v12422, %v12428
    %v12431 = vunpack.c.l.s4 1935823168
    %v12432 = vunpack.c.0.s8 %v12431
    %v12433 = vlaneseq
    %v12434 = vshrl.u32 %v12433, 7
    %v12435 = vsub.s32 %v12432, %v12434
    %v12436 = vrot.slane %v12415, %v12435
    %v12438 = vunpack.c.l.s4 1935823168
    %v12439 = vunpack.c.0.s8 %v12438
    %v12440 = vlaneseq
    %v12441 = vshrl.u32 %v12440, 7
    %v12442 = vsub.s32 %v12439, %v12441
    %v12443 = vrot.slane %v12436, %v12442
    %v12445 = vunpack.c.l.s4 1935823168
    %v12446 = vunpack.c.0.s8 %v12445
    %v12447 = vlaneseq
    %v12448 = vshrl.u32 %v12447, 7
    %v12449 = vsub.s32 %v12446, %v12448
    %v12450 = vrot.slane %v12429, %v12449
    %v12452 = vunpack.c.l.s4 1935823168
    %v12453 = vunpack.c.0.s8 %v12452
    %v12454 = vlaneseq
    %v12455 = vshrl.u32 %v12454, 7
    %v12456 = vsub.s32 %v12453, %v12455
    %v12457 = vrot.slane %v12450, %v12456
    %v12458 = vunpack.c.l.b16 %v12443
    %v12459 = vunpack.c.l.b16 %v12457
    %v12460 = vrot.slane %v12459, 7
    %v12461 = vsel %vm11664, %v12460, %v12458
    %v12462 = vpack.c.b16 %v12461, %v12461
    %v12464 = vunpack.c.l.s4 1966171168
    %v12465 = vunpack.c.0.s8 %v12464
    %v12466 = vlaneseq
    %v12467 = vshrl.u32 %v12466, 7
    %v12468 = vsub.s32 %v12465, %v12467
    %v12469 = vrot.slane %v12462, %v12468
    %v12471 = vunpack.c.l.s4 1966171168
    %v12472 = vunpack.c.0.s8 %v12471
    %v12473 = vlaneseq
    %v12474 = vshrl.u32 %v12473, 7
    %v12475 = vsub.s32 %v12472, %v12474
    %v12476 = vrot.slane %v12469, %v12475
    %12477 = vrot.lane.b32.xlu0 %v12476, 64
    %v12478 = vpop.permute.xlu0 %12477
    %12480 = vst.msk [vmem:[#allocation4 + $0x1] sm:$0x1] %vm11950, %v12478
    %v12481 = vcombine.high %v12408, %v12408
    %v12483 = vunpack.c.l.s4 1966171168
    %v12484 = vunpack.c.0.s8 %v12483
    %v12485 = vlaneseq
    %v12486 = vshrl.u32 %v12485, 7
    %v12487 = vsub.s32 %v12484, %v12486
    %v12488 = vrot.slane %v12481, %v12487
    %v12489 = vcombine.high %v12422, %v12422
    %v12491 = vunpack.c.l.s4 1966171168
    %v12492 = vunpack.c.0.s8 %v12491
    %v12493 = vlaneseq
    %v12494 = vshrl.u32 %v12493, 7
    %v12495 = vsub.s32 %v12492, %v12494
    %v12496 = vrot.slane %v12489, %v12495
    %v12498 = vunpack.c.l.s4 1935823168
    %v12499 = vunpack.c.0.s8 %v12498
    %v12500 = vlaneseq
    %v12501 = vshrl.u32 %v12500, 7
    %v12502 = vsub.s32 %v12499, %v12501
    %v12503 = vrot.slane %v12488, %v12502
    %v12505 = vunpack.c.l.s4 1935823168
    %v12506 = vunpack.c.0.s8 %v12505
    %v12507 = vlaneseq
    %v12508 = vshrl.u32 %v12507, 7
    %v12509 = vsub.s32 %v12506, %v12508
    %v12510 = vrot.slane %v12503, %v12509
    %v12512 = vunpack.c.l.s4 1935823168
    %v12513 = vunpack.c.0.s8 %v12512
    %v12514 = vlaneseq
    %v12515 = vshrl.u32 %v12514, 7
    %v12516 = vsub.s32 %v12513, %v12515
    %v12517 = vrot.slane %v12496, %v12516
    %v12519 = vunpack.c.l.s4 1935823168
    %v12520 = vunpack.c.0.s8 %v12519
    %v12521 = vlaneseq
    %v12522 = vshrl.u32 %v12521, 7
    %v12523 = vsub.s32 %v12520, %v12522
    %v12524 = vrot.slane %v12517, %v12523
    %v12525 = vunpack.c.l.b16 %v12510
    %v12526 = vunpack.c.l.b16 %v12524
    %v12527 = vrot.slane %v12526, 7
    %v12528 = vsel %vm11664, %v12527, %v12525
    %v12529 = vpack.c.b16 %v12528, %v12528
    %v12531 = vunpack.c.l.s4 1966171168
    %v12532 = vunpack.c.0.s8 %v12531
    %v12533 = vlaneseq
    %v12534 = vshrl.u32 %v12533, 7
    %v12535 = vsub.s32 %v12532, %v12534
    %v12536 = vrot.slane %v12529, %v12535
    %v12538 = vunpack.c.l.s4 1966171168
    %v12539 = vunpack.c.0.s8 %v12538
    %v12540 = vlaneseq
    %v12541 = vshrl.u32 %v12540, 7
    %v12542 = vsub.s32 %v12539, %v12541
    %v12543 = vrot.slane %v12536, %v12542
    %12544 = vrot.lane.b32.xlu0 %v12543, 80
    %v12545 = vpop.permute.xlu0 %12544
    %12547 = vst.msk [vmem:[#allocation4 + $0x1] sm:$0x1] %vm12018, %v12545
    %v12548 = vcombine.high %v12415, %v12415
    %v12549 = vcombine.high %v12429, %v12429
    %v12551 = vunpack.c.l.s4 1935823168
    %v12552 = vunpack.c.0.s8 %v12551
    %v12553 = vlaneseq
    %v12554 = vshrl.u32 %v12553, 7
    %v12555 = vsub.s32 %v12552, %v12554
    %v12556 = vrot.slane %v12548, %v12555
    %v12558 = vunpack.c.l.s4 1935823168
    %v12559 = vunpack.c.0.s8 %v12558
    %v12560 = vlaneseq
    %v12561 = vshrl.u32 %v12560, 7
    %v12562 = vsub.s32 %v12559, %v12561
    %v12563 = vrot.slane %v12556, %v12562
    %v12565 = vunpack.c.l.s4 1935823168
    %v12566 = vunpack.c.0.s8 %v12565
    %v12567 = vlaneseq
    %v12568 = vshrl.u32 %v12567, 7
    %v12569 = vsub.s32 %v12566, %v12568
    %v12570 = vrot.slane %v12549, %v12569
    %v12572 = vunpack.c.l.s4 1935823168
    %v12573 = vunpack.c.0.s8 %v12572
    %v12574 = vlaneseq
    %v12575 = vshrl.u32 %v12574, 7
    %v12576 = vsub.s32 %v12573, %v12575
    %v12577 = vrot.slane %v12570, %v12576
    %v12578 = vunpack.c.l.b16 %v12563
    %v12579 = vunpack.c.l.b16 %v12577
    %v12580 = vrot.slane %v12579, 7
    %v12581 = vsel %vm11664, %v12580, %v12578
    %v12582 = vpack.c.b16 %v12581, %v12581
    %v12584 = vunpack.c.l.s4 1966171168
    %v12585 = vunpack.c.0.s8 %v12584
    %v12586 = vlaneseq
    %v12587 = vshrl.u32 %v12586, 7
    %v12588 = vsub.s32 %v12585, %v12587
    %v12589 = vrot.slane %v12582, %v12588
    %v12591 = vunpack.c.l.s4 1966171168
    %v12592 = vunpack.c.0.s8 %v12591
    %v12593 = vlaneseq
    %v12594 = vshrl.u32 %v12593, 7
    %v12595 = vsub.s32 %v12592, %v12594
    %v12596 = vrot.slane %v12589, %v12595
    %12597 = vrot.lane.b32.xlu0 %v12596, 96
    %v12598 = vpop.permute.xlu0 %12597
    %12600 = vst.msk [vmem:[#allocation4 + $0x1] sm:$0x1] %vm12072, %v12598
    %v12601 = vcombine.high %v12488, %v12488
    %v12602 = vcombine.high %v12496, %v12496
    %v12604 = vunpack.c.l.s4 1935823168
    %v12605 = vunpack.c.0.s8 %v12604
    %v12606 = vlaneseq
    %v12607 = vshrl.u32 %v12606, 7
    %v12608 = vsub.s32 %v12605, %v12607
    %v12609 = vrot.slane %v12601, %v12608
    %v12611 = vunpack.c.l.s4 1935823168
    %v12612 = vunpack.c.0.s8 %v12611
    %v12613 = vlaneseq
    %v12614 = vshrl.u32 %v12613, 7
    %v12615 = vsub.s32 %v12612, %v12614
    %v12616 = vrot.slane %v12609, %v12615
    %v12618 = vunpack.c.l.s4 1935823168
    %v12619 = vunpack.c.0.s8 %v12618
    %v12620 = vlaneseq
    %v12621 = vshrl.u32 %v12620, 7
    %v12622 = vsub.s32 %v12619, %v12621
    %v12623 = vrot.slane %v12602, %v12622
    %v12625 = vunpack.c.l.s4 1935823168
    %v12626 = vunpack.c.0.s8 %v12625
    %v12627 = vlaneseq
    %v12628 = vshrl.u32 %v12627, 7
    %v12629 = vsub.s32 %v12626, %v12628
    %v12630 = vrot.slane %v12623, %v12629
    %v12631 = vunpack.c.l.b16 %v12616
    %v12632 = vunpack.c.l.b16 %v12630
    %v12633 = vrot.slane %v12632, 7
    %v12634 = vsel %vm11664, %v12633, %v12631
    %v12635 = vpack.c.b16 %v12634, %v12634
    %v12637 = vunpack.c.l.s4 1966171168
    %v12638 = vunpack.c.0.s8 %v12637
    %v12639 = vlaneseq
    %v12640 = vshrl.u32 %v12639, 7
    %v12641 = vsub.s32 %v12638, %v12640
    %v12642 = vrot.slane %v12635, %v12641
    %v12644 = vunpack.c.l.s4 1966171168
    %v12645 = vunpack.c.0.s8 %v12644
    %v12646 = vlaneseq
    %v12647 = vshrl.u32 %v12646, 7
    %v12648 = vsub.s32 %v12645, %v12647
    %v12649 = vrot.slane %v12642, %v12648
    %12650 = vrot.lane.b32.xlu0 %v12649, 112
    %v12651 = vpop.permute.xlu0 %12650
    %12653 = vst.msk [vmem:[#allocation4 + $0x1] sm:$0x1] %vm12126, %v12651
    %v12654 = vld [vmem:[#allocation4] sm:$0x3]
    %v12655 = vld [vmem:[%s5] sm:$0xf]
    %v12656 = vld [vmem:[%s5 + $0x4] sm:$0xf]
    %v12657 = vld [vmem:[%s5 + $0x8] sm:$0xf]
    %v12658 = vld [vmem:[%s5 + $0xc] sm:$0xf]
    %v12659 = vld [vmem:[%s5 + $0x10] sm:$0xf]
    %v12660 = vld [vmem:[%s5 + $0x14] sm:$0xf]
    %v12661 = vld [vmem:[%s5 + $0x18] sm:$0xf]
    %v12662 = vld [vmem:[%s5 + $0x1c] sm:$0xf]
    %v12663 = vld [vmem:[%s5 + $0x20] sm:$0xf]
    %v12664 = vld [vmem:[%s5 + $0x24] sm:$0xf]
    %v12665 = vld [vmem:[%s5 + $0x28] sm:$0xf]
    %v12666 = vld [vmem:[%s5 + $0x2c] sm:$0xf]
    %v12667 = vld [vmem:[%s5 + $0x30] sm:$0xf]
    %v12668 = vld [vmem:[%s5 + $0x34] sm:$0xf]
    %v12669 = vld [vmem:[%s5 + $0x38] sm:$0xf]
    %v12670 = vld [vmem:[%s5 + $0x3c] sm:$0xf]
    %v12671 = vld [vmem:[%s5 + $0x40] sm:$0xf]
    %v12672 = vld [vmem:[%s5 + $0x44] sm:$0xf]
    %v12673 = vld [vmem:[%s5 + $0x48] sm:$0xf]
    %v12674 = vld [vmem:[%s5 + $0x4c] sm:$0xf]
    %v12675 = vld [vmem:[%s5 + $0x50] sm:$0xf]
    %v12676 = vld [vmem:[%s5 + $0x54] sm:$0xf]
    %v12677 = vld [vmem:[%s5 + $0x58] sm:$0xf]
    %v12678 = vld [vmem:[%s5 + $0x5c] sm:$0xf]
    %v12679 = vld [vmem:[%s5 + $0x60] sm:$0xf]
    %v12680 = vld [vmem:[%s5 + $0x64] sm:$0xf]
    %v12681 = vld [vmem:[%s5 + $0x68] sm:$0xf]
    %v12682 = vld [vmem:[%s5 + $0x6c] sm:$0xf]
    %v12683 = vld [vmem:[%s5 + $0x70] sm:$0xf]
    %v12684 = vld [vmem:[%s5 + $0x74] sm:$0xf]
    %v12685 = vld [vmem:[%s5 + $0x78] sm:$0xf]
    %v12686 = vld [vmem:[%s5 + $0x7c] sm:$0xf]
    %v12687 = vld [vmem:[%s6] sm:$0x1]
    %v12689 = vlaneseq
    %v12690 = vshrl.u32 %v12689, 7
    %v12691 = vsub.s32 0, %v12690
    %v12692 = vrot.slane %v12687, %v12691
    %v12696 = vunpack.c.l.s4 1966171168
    %v12697 = vunpack.c.0.s8 %v12696
    %v12698 = vlaneseq
    %v12699 = vshrl.u32 %v12698, 7
    %v12700 = vsub.s32 %v12697, %v12699
    %v12701 = vrot.slane %v12654, %v12700
    %v12702 = vcombine.high %v12701, %v12701
    %v12704 = vunpack.c.l.s4 1966171168
    %v12705 = vunpack.c.0.s8 %v12704
    %v12706 = vlaneseq
    %v12707 = vshrl.u32 %v12706, 7
    %v12708 = vsub.s32 %v12705, %v12707
    %v12709 = vrot.slane %v12701, %v12708
    %v12711 = vunpack.c.l.s4 1966171168
    %v12712 = vunpack.c.0.s8 %v12711
    %v12713 = vlaneseq
    %v12714 = vshrl.u32 %v12713, 7
    %v12715 = vsub.s32 %v12712, %v12714
    %v12716 = vrot.slane %v12702, %v12715
    %v12751 = vunpack.c.l.b16 %v12655
    %v12752 = vunpack.c.l.b16 %v12656
    %v12753 = vunpack.c.l.b16 %v12657
    %v12754 = vunpack.c.l.b16 %v12658
    %v12755 = vunpack.c.l.b16 %v12659
    %v12756 = vunpack.c.l.b16 %v12660
    %v12757 = vunpack.c.l.b16 %v12661
    %v12758 = vunpack.c.l.b16 %v12662
    %v12759 = vunpack.c.l.b16 %v12663
    %v12760 = vunpack.c.l.b16 %v12664
    %v12761 = vunpack.c.l.b16 %v12665
    %v12762 = vunpack.c.l.b16 %v12666
    %v12763 = vunpack.c.l.b16 %v12667
    %v12764 = vunpack.c.l.b16 %v12668
    %v12765 = vunpack.c.l.b16 %v12669
    %v12766 = vunpack.c.l.b16 %v12670
    %v12767 = vunpack.c.l.b16 %v12671
    %v12768 = vunpack.c.l.b16 %v12672
    %v12769 = vunpack.c.l.b16 %v12673
    %v12770 = vunpack.c.l.b16 %v12674
    %v12771 = vunpack.c.l.b16 %v12675
    %v12772 = vunpack.c.l.b16 %v12676
    %v12773 = vunpack.c.l.b16 %v12677
    %v12774 = vunpack.c.l.b16 %v12678
    %v12775 = vunpack.c.l.b16 %v12679
    %v12776 = vunpack.c.l.b16 %v12680
    %v12777 = vunpack.c.l.b16 %v12681
    %v12778 = vunpack.c.l.b16 %v12682
    %v12779 = vunpack.c.l.b16 %v12683
    %v12780 = vunpack.c.l.b16 %v12684
    %v12781 = vunpack.c.l.b16 %v12685
    %v12782 = vunpack.c.l.b16 %v12686
    %v12783 = vpack.c.b16 %v12752, %v12751
    %v12784 = vpack.c.b16 %v12754, %v12753
    %v12785 = vpack.c.b16 %v12756, %v12755
    %v12786 = vpack.c.b16 %v12758, %v12757
    %v12787 = vpack.c.b16 %v12760, %v12759
    %v12788 = vpack.c.b16 %v12762, %v12761
    %v12789 = vpack.c.b16 %v12764, %v12763
    %v12790 = vpack.c.b16 %v12766, %v12765
    %v12791 = vpack.c.b16 %v12768, %v12767
    %v12792 = vpack.c.b16 %v12770, %v12769
    %v12793 = vpack.c.b16 %v12772, %v12771
    %v12794 = vpack.c.b16 %v12774, %v12773
    %v12795 = vpack.c.b16 %v12776, %v12775
    %v12796 = vpack.c.b16 %v12778, %v12777
    %v12797 = vpack.c.b16 %v12780, %v12779
    %v12798 = vpack.c.b16 %v12782, %v12781
    %12815 = vmatprep.subr.bf16.mxu0 0
    %12816 = vmatpush1.bf16.msra.mxu0 %v12790
    %12817 = vmatprep.subr.bf16.mxu0 0
    %12818 = vmatpush1.bf16.msra.mxu0 %v12789
    %12819 = vmatprep.subr.bf16.mxu0 0
    %12820 = vmatpush1.bf16.msra.mxu0 %v12788
    %12821 = vmatprep.subr.bf16.mxu0 0
    %12822 = vmatpush1.bf16.msra.mxu0 %v12787
    %12823 = vmatprep.subr.bf16.mxu0 0
    %12824 = vmatpush1.bf16.msra.mxu0 %v12786
    %12825 = vmatprep.subr.bf16.mxu0 0
    %12826 = vmatpush1.bf16.msra.mxu0 %v12785
    %12827 = vmatprep.subr.bf16.mxu0 0
    %12828 = vmatpush1.bf16.msra.mxu0 %v12784
    %12829 = vmatprep.subr.bf16.mxu0 0
    %12830 = vmatpush1.bf16.msra.mxu0 %v12783
    %12831 = vmatprep.subr.bf16.mxu0 0
    %12832 = vmatpush2.bf16.msra.mxu0 %v12798
    %12833 = vmatprep.subr.bf16.mxu0 0
    %12834 = vmatpush2.bf16.msra.mxu0 %v12797
    %12835 = vmatprep.subr.bf16.mxu0 0
    %12836 = vmatpush2.bf16.msra.mxu0 %v12796
    %12837 = vmatprep.subr.bf16.mxu0 0
    %12838 = vmatpush2.bf16.msra.mxu0 %v12795
    %12839 = vmatprep.subr.bf16.mxu0 0
    %12840 = vmatpush2.bf16.msra.mxu0 %v12794
    %12841 = vmatprep.subr.bf16.mxu0 0
    %12842 = vmatpush2.bf16.msra.mxu0 %v12793
    %12843 = vmatprep.subr.bf16.mxu0 0
    %12844 = vmatpush2.bf16.msra.mxu0 %v12792
    %12845 = vmatprep.subr.bf16.mxu0 0
    %12846 = vmatpush2.bf16.msra.mxu0 %v12791
    %12847 = vmatprep.mubr.bf16.mxu0 %v12716
    %12848 = vmatmul.mubr.bf16.gmra.mxu0 %v12709
    %v12849 = vpop.f32.mrf.mxu0
    %v12850 = vadd.f32 %v12692, %v12849
    %v12851 = vpop.f32.mrf.mxu0
    %v12852 = vpop.f32.mrf.mxu0
    %v12853 = vpop.f32.mrf.mxu0
    %12854 = vdwg.mxu0
    %v12855 = vmax.f32 %v12850, 0.0
    %v12856 = vpack.c.bf16 %v12855, %v12855
    %v12857 = vld [vmem:[%s7] sm:$0xf]
    %v12858 = vld [vmem:[%s7 + $0x4] sm:$0xf]
    %v12859 = vld [vmem:[%s7 + $0x8] sm:$0xf]
    %v12860 = vld [vmem:[%s7 + $0xc] sm:$0xf]
    %v12861 = vld [vmem:[%s7 + $0x10] sm:$0xf]
    %v12862 = vld [vmem:[%s7 + $0x14] sm:$0xf]
    %v12863 = vld [vmem:[%s7 + $0x18] sm:$0xf]
    %v12864 = vld [vmem:[%s7 + $0x1c] sm:$0xf]
    %v12865 = vld [vmem:[%s7 + $0x20] sm:$0xf]
    %v12866 = vld [vmem:[%s7 + $0x24] sm:$0xf]
    %v12867 = vld [vmem:[%s7 + $0x28] sm:$0xf]
    %v12868 = vld [vmem:[%s7 + $0x2c] sm:$0xf]
    %v12869 = vld [vmem:[%s7 + $0x30] sm:$0xf]
    %v12870 = vld [vmem:[%s7 + $0x34] sm:$0xf]
    %v12871 = vld [vmem:[%s7 + $0x38] sm:$0xf]
    %v12872 = vld [vmem:[%s7 + $0x3c] sm:$0xf]
    %v12873 = vld [vmem:[%s8] sm:$0x1]
    %v12875 = vlaneseq
    %v12876 = vshrl.u32 %v12875, 7
    %v12877 = vsub.s32 0, %v12876
    %v12878 = vrot.slane %v12873, %v12877
    %v12896 = vunpack.c.l.b16 %v12857
    %v12897 = vunpack.c.l.b16 %v12858
    %v12898 = vunpack.c.l.b16 %v12859
    %v12899 = vunpack.c.l.b16 %v12860
    %v12900 = vunpack.c.l.b16 %v12861
    %v12901 = vunpack.c.l.b16 %v12862
    %v12902 = vunpack.c.l.b16 %v12863
    %v12903 = vunpack.c.l.b16 %v12864
    %v12904 = vunpack.c.l.b16 %v12865
    %v12905 = vunpack.c.l.b16 %v12866
    %v12906 = vunpack.c.l.b16 %v12867
    %v12907 = vunpack.c.l.b16 %v12868
    %v12908 = vunpack.c.l.b16 %v12869
    %v12909 = vunpack.c.l.b16 %v12870
    %v12910 = vunpack.c.l.b16 %v12871
    %v12911 = vunpack.c.l.b16 %v12872
    %v12912 = vpack.c.b16 %v12897, %v12896
    %v12913 = vpack.c.b16 %v12899, %v12898
    %v12914 = vpack.c.b16 %v12901, %v12900
    %v12915 = vpack.c.b16 %v12903, %v12902
    %v12916 = vpack.c.b16 %v12905, %v12904
    %v12917 = vpack.c.b16 %v12907, %v12906
    %v12918 = vpack.c.b16 %v12909, %v12908
    %v12919 = vpack.c.b16 %v12911, %v12910
    %12928 = vmatprep.subr.bf16.mxu0 0
    %12929 = vmatpush1.bf16.msra.mxu0 %v12919
    %12930 = vmatprep.subr.bf16.mxu0 0
    %12931 = vmatpush1.bf16.msra.mxu0 %v12918
    %12932 = vmatprep.subr.bf16.mxu0 0
    %12933 = vmatpush1.bf16.msra.mxu0 %v12917
    %12934 = vmatprep.subr.bf16.mxu0 0
    %12935 = vmatpush1.bf16.msra.mxu0 %v12916
    %12936 = vmatprep.subr.bf16.mxu0 0
    %12937 = vmatpush1.bf16.msra.mxu0 %v12915
    %12938 = vmatprep.subr.bf16.mxu0 0
    %12939 = vmatpush1.bf16.msra.mxu0 %v12914
    %12940 = vmatprep.subr.bf16.mxu0 0
    %12941 = vmatpush1.bf16.msra.mxu0 %v12913
    %12942 = vmatprep.subr.bf16.mxu0 0
    %12943 = vmatpush1.bf16.msra.mxu0 %v12912
    %12944 = vmatprep.subr.bf16.mxu0 0
    %12945 = vmatpush2.bf16.msra.mxu0 0
    %12946 = vmatprep.subr.bf16.mxu0 0
    %12947 = vmatpush2.bf16.msra.mxu0 0
    %12948 = vmatprep.subr.bf16.mxu0 0
    %12949 = vmatpush2.bf16.msra.mxu0 0
    %12950 = vmatprep.subr.bf16.mxu0 0
    %12951 = vmatpush2.bf16.msra.mxu0 0
    %12952 = vmatprep.subr.bf16.mxu0 0
    %12953 = vmatpush2.bf16.msra.mxu0 0
    %12954 = vmatprep.subr.bf16.mxu0 0
    %12955 = vmatpush2.bf16.msra.mxu0 0
    %12956 = vmatprep.subr.bf16.mxu0 0
    %12957 = vmatpush2.bf16.msra.mxu0 0
    %12958 = vmatprep.subr.bf16.mxu0 0
    %12959 = vmatpush2.bf16.msra.mxu0 0
    %12960 = vmatprep.mubr.bf16.mxu0 0
    %12961 = vmatmul.mubr.bf16.gmra.mxu0 %v12856
    %v12962 = vpop.f32.mrf.mxu0
    %v12963 = vadd.f32 %v12878, %v12962
    %v12964 = vpop.f32.mrf.mxu0
    %v12965 = vpop.f32.mrf.mxu0
    %v12966 = vpop.f32.mrf.mxu0
    %12967 = vdwg.mxu0
    %v12968 = vmax.f32 %v12963, 0.0
    %v12969 = vpack.c.bf16 %v12968, %v12968
    %v12970 = vld [vmem:[%s9] sm:$0xf]
    %v12971 = vld [vmem:[%s9 + $0x4] sm:$0xf]
    %v12972 = vld [vmem:[%s9 + $0x8] sm:$0xf]
    %v12973 = vld [vmem:[%s9 + $0xc] sm:$0xf]
    %v12974 = vld [vmem:[%s9 + $0x10] sm:$0xf]
    %v12975 = vld [vmem:[%s9 + $0x14] sm:$0xf]
    %v12976 = vld [vmem:[%s9 + $0x18] sm:$0xf]
    %v12977 = vld [vmem:[%s9 + $0x1c] sm:$0xf]
    %v12978 = vld [vmem:[%s9 + $0x20] sm:$0xf]
    %v12979 = vld [vmem:[%s9 + $0x24] sm:$0xf]
    %v12980 = vld [vmem:[%s9 + $0x28] sm:$0xf]
    %v12981 = vld [vmem:[%s9 + $0x2c] sm:$0xf]
    %v12982 = vld [vmem:[%s9 + $0x30] sm:$0xf]
    %v12983 = vld [vmem:[%s9 + $0x34] sm:$0xf]
    %v12984 = vld [vmem:[%s9 + $0x38] sm:$0xf]
    %v12985 = vld [vmem:[%s9 + $0x3c] sm:$0xf]
    %v12986 = vld [vmem:[%s10] sm:$0x1]
    %v12988 = vlaneseq
    %v12989 = vshrl.u32 %v12988, 7
    %v12990 = vsub.s32 0, %v12989
    %v12991 = vrot.slane %v12986, %v12990
    %v13009 = vunpack.c.l.b16 %v12970
    %v13010 = vunpack.c.l.b16 %v12971
    %v13011 = vunpack.c.l.b16 %v12972
    %v13012 = vunpack.c.l.b16 %v12973
    %v13013 = vunpack.c.l.b16 %v12974
    %v13014 = vunpack.c.l.b16 %v12975
    %v13015 = vunpack.c.l.b16 %v12976
    %v13016 = vunpack.c.l.b16 %v12977
    %v13017 = vunpack.c.l.b16 %v12978
    %v13018 = vunpack.c.l.b16 %v12979
    %v13019 = vunpack.c.l.b16 %v12980
    %v13020 = vunpack.c.l.b16 %v12981
    %v13021 = vunpack.c.l.b16 %v12982
    %v13022 = vunpack.c.l.b16 %v12983
    %v13023 = vunpack.c.l.b16 %v12984
    %v13024 = vunpack.c.l.b16 %v12985
    %v13025 = vpack.c.b16 %v13010, %v13009
    %v13026 = vpack.c.b16 %v13012, %v13011
    %v13027 = vpack.c.b16 %v13014, %v13013
    %v13028 = vpack.c.b16 %v13016, %v13015
    %v13029 = vpack.c.b16 %v13018, %v13017
    %v13030 = vpack.c.b16 %v13020, %v13019
    %v13031 = vpack.c.b16 %v13022, %v13021
    %v13032 = vpack.c.b16 %v13024, %v13023
    %13041 = vmatprep.subr.bf16.mxu0 0
    %13042 = vmatpush1.bf16.msra.mxu0 %v13032
    %13043 = vmatprep.subr.bf16.mxu0 0
    %13044 = vmatpush1.bf16.msra.mxu0 %v13031
    %13045 = vmatprep.subr.bf16.mxu0 0
    %13046 = vmatpush1.bf16.msra.mxu0 %v13030
    %13047 = vmatprep.subr.bf16.mxu0 0
    %13048 = vmatpush1.bf16.msra.mxu0 %v13029
    %13049 = vmatprep.subr.bf16.mxu0 0
    %13050 = vmatpush1.bf16.msra.mxu0 %v13028
    %13051 = vmatprep.subr.bf16.mxu0 0
    %13052 = vmatpush1.bf16.msra.mxu0 %v13027
    %13053 = vmatprep.subr.bf16.mxu0 0
    %13054 = vmatpush1.bf16.msra.mxu0 %v13026
    %13055 = vmatprep.subr.bf16.mxu0 0
    %13056 = vmatpush1.bf16.msra.mxu0 %v13025
    %13057 = vmatprep.subr.bf16.mxu0 0
    %13058 = vmatpush2.bf16.msra.mxu0 0
    %13059 = vmatprep.subr.bf16.mxu0 0
    %13060 = vmatpush2.bf16.msra.mxu0 0
    %13061 = vmatprep.subr.bf16.mxu0 0
    %13062 = vmatpush2.bf16.msra.mxu0 0
    %13063 = vmatprep.subr.bf16.mxu0 0
    %13064 = vmatpush2.bf16.msra.mxu0 0
    %13065 = vmatprep.subr.bf16.mxu0 0
    %13066 = vmatpush2.bf16.msra.mxu0 0
    %13067 = vmatprep.subr.bf16.mxu0 0
    %13068 = vmatpush2.bf16.msra.mxu0 0
    %13069 = vmatprep.subr.bf16.mxu0 0
    %13070 = vmatpush2.bf16.msra.mxu0 0
    %13071 = vmatprep.subr.bf16.mxu0 0
    %13072 = vmatpush2.bf16.msra.mxu0 0
    %13073 = vmatprep.mubr.bf16.mxu0 0
    %13074 = vmatmul.mubr.bf16.gmra.mxu0 %v12969
    %v13075 = vpop.f32.mrf.mxu0
    %v13076 = vadd.f32 %v12991, %v13075
    %v13077 = vpop.f32.mrf.mxu0
    %v13078 = vpop.f32.mrf.mxu0
    %v13079 = vpop.f32.mrf.mxu0
    %13080 = vdwg.mxu0
    %13081 = vst [vmem:[#allocation5] sm:$0x3] %v13076
    // Predicated region
    $region46: #{lenet_forward.1} parent=1 // pred_check
      _
    $region47: #{lenet_forward.1} parent=1 // pred_check_branch
      %13083 = sbr.rel (0) target = $region49
    $region48: #{lenet_forward.1} parent=1 // pred_region
      %s13085 = ssub.s32 32, 32
      %13086 = vsyncadd [#allocation6], %s13085
      %s13088 = sshll.u32 [#allocation5], 4
      %s13089 = int_to_ptr.vmem [resolvable:$true] %s13088
      %13091 = dma.vmem_to_hbm [thread:$0]  %s13089, 32, %s11, [#allocation6]
    $region49: #{lenet_forward.1} parent=1 // pred_fallthru
      _
    // Predicated region
    $region50: #{lenet_forward.1} parent=1 // pred_check
      _
    $region51: #{lenet_forward.1} parent=1 // pred_check_branch
      %13093 = sbr.rel (0) target = $region53
    $region52: #{lenet_forward.1} parent=1 // pred_region
      %13094 = dma.done [#allocation6], 32
    $region53: #{lenet_forward.1} parent=1 // pred_fallthru
      _
    %13095 = vsyncpa [#allocation6], 1

</llo_original>
